<compile_context>
chip_gen: v6e
topology: v6e:2x2x1
jax: 0.10.0
libtpu: 0.0.40
codegen_flags: <defaults>
</compile_context>

<pallas_src>
import math

import jax
import jax.numpy as jnp
from jax import lax
from jax.experimental import pallas as pl
from jax.experimental.pallas import tpu as pltpu

PARENTS = (-1, 0, 1, 1, 1)        # 5-joint kinematic tree used by LBS()


def _choose_tile(num):
    """Largest row tile in {128..1024} that still leaves >=2 grid steps (v7x: 2 TCs/chip)."""
    for t in (1024, 512, 256):
        if num >= 2 * t:
            return t
    return 128


# ----------------------------------------------------------------------------
# Kernel 1: trunk MLP + all per-point heads that only depend on the features.
#   outputs: jl_out  (tile, 16)  = [ relu(jr)(5) | softmax(lbsW)(5) | delta_xyz(3) | 0 ]
#            epd_out (tile, 128) = [ pose_basis(108) | v_shaped(3) | 0 ]
# ----------------------------------------------------------------------------
def _backbone_kernel(x_ref,
                     wb0, bb0, wb1, bb1, wb2, bb2,     # trunk 3 -> 256 -> 256 -> 256
                     wpost, bpost,                     # fused [jr0 | lbsW0 | pose | dxyz] (256, 623)
                     wjl1, bjl1,                       # block-diag [jr1 ; lbsW1] (512, 16)
                     wbl, bbl,                         # betas-folded exp basis (256, 3) f32
                     jl_out, epd_out):
    def lin(h, w_ref, b_ref):
        w = w_ref[...]
        y = jnp.dot(h.astype(w.dtype), w, preferred_element_type=jnp.float32) + b_ref[...]
        return jnp.maximum(y, 0.0)

    x = x_ref[...]                                     # (T, 3) f32
    h = lin(x, wb0, bb0)
    h = lin(h, wb1, bb1)
    h = lin(h, wb2, bb2)                               # (T, 256) f32

    # One lane-dense matmul covering the jr / lbsW first layers + pose basis + delta_xyz.
    wp_ = wpost[...]
    y = jnp.dot(h.astype(wp_.dtype), wp_,
                preferred_element_type=jnp.float32) + bpost[...]      # (T, 623)

    # Expression blend shapes, already contracted with betas outside (tiny f32 dot, N=3).
    blend = jnp.dot(h, wbl[...], preferred_element_type=jnp.float32) + bbl[...]   # (T, 3)
    dxyz = y[:, 620:623]                               # delta_xyz (no relu, as in torch)
    vshaped = x + dxyz + blend                         # xyz_init + delta_xyz + blend

    T = x.shape[0]
    # Single 128-lane packed store: pose(108) | v_shaped(3) | zeros(17).
    epd_out[...] = jnp.concatenate(
        [y[:, 512:620], vshaped, jnp.zeros((T, 17), jnp.float32)], axis=1)

    # jr / lbsW second layers as one block-diagonal matmul.
    y1 = jnp.maximum(y[:, :512], 0.0)                  # relu([jr_hidden | lw_hidden])
    w1 = wjl1[...]
    y2 = jnp.maximum(
        jnp.dot(y1.astype(w1.dtype), w1, preferred_element_type=jnp.float32) + bjl1[...],
        0.0)                                           # (T,16): relu(jr) in [0:5), relu(lw) in [5:10), 0 else

    # Lane-masked softmax over the 5 lbs weights (lanes 5..9) — no narrow slices.
    lane = lax.broadcasted_iota(jnp.int32, y2.shape, 1)
    is_lw = (lane >= 5) & (lane < 10)
    ym = jnp.where(is_lw, y2, -jnp.inf)
    m = jnp.max(ym, axis=1, keepdims=True)
    e = jnp.exp(ym - m)                                # exactly 0 outside the lw lanes
    s = jnp.sum(e, axis=1, keepdims=True)
    soft = e * pl.reciprocal(s, approx=True)           # EUP
    jl = jnp.where(is_lw, soft, y2)                    # jr | softmax(lw) | 0

    # Pack delta_xyz into lanes 10:13 (kernel 2 reads it from here — no extra input).
    dxyz16 = jnp.concatenate(
        [jnp.zeros((T, 10), jnp.float32), dxyz, jnp.zeros((T, 3), jnp.float32)], axis=1)
    jl_out[...] = jl + dxyz16                          # single packed store


# ----------------------------------------------------------------------------
# Kernel 2: per-point skinning + front MLP + fused scale/rotation heads.
#   output: out (tile, 16) = [ xyz_def/100 (3) | d_scaling (3) | d_rotation (4) | 0 ]
# ----------------------------------------------------------------------------
def _head_kernel(jl_ref, A_ref, vp_ref, xi_ref,
                 wf0, bf0, wf1, bf1, wf2, bf2,         # linear_front 9 -> 64 -> 64 -> 64
                 wsr0, bsr0, wsr1, bsr1, wsr2, bsr2,   # fused scale|rot heads
                 out_ref):
    def lin(h, w_ref, b_ref):
        w = w_ref[...]
        y = jnp.dot(h.astype(w.dtype), w, preferred_element_type=jnp.float32) + b_ref[...]
        return jnp.maximum(y, 0.0)

    jl = jl_ref[...]                                   # (T,16): jr | lw(soft) | dxyz | 0
    # Per-point flattened 4x4 skinning transform: lanes 5:10 hold the softmaxed lbs
    # weights, rows 5:10 of A_ref hold A (5,16); all other rows of A_ref are zero so the
    # jr / dxyz lanes do not contribute.  Kept f32 (tiny dot) for geometric fidelity.
    Tm = jnp.dot(jl, A_ref[...], preferred_element_type=jnp.float32)            # (T, 16)

    vp = vp_ref[...]                                   # (T, 3) v_posed
    vx, vy, vz = vp[:, 0:1], vp[:, 1:2], vp[:, 2:3]
    cols = [Tm[:, 4 * k + 0:4 * k + 1] * vx + Tm[:, 4 * k + 1:4 * k + 2] * vy
            + Tm[:, 4 * k + 2:4 * k + 3] * vz + Tm[:, 4 * k + 3:4 * k + 4] for k in range(3)]
    xdef = jnp.concatenate(cols, axis=1)               # (T, 3) UN-scaled xyz_deformed (torch feeds this)

    # linear_front on concat([xyz_deformed, xyz_init, delta_xyz]) — built once, one dot.
    fx = jnp.concatenate([xdef, xi_ref[...], jl[:, 10:13]], axis=1)   # (T, 9)
    f = lin(fx, wf0, bf0)
    f = lin(f, wf1, bf1)
    f = lin(f, wf2, bf2)                               # (T, 64)

    # Fused scale/rotation heads: (64,128) concat, (128,128) block-diag, (128,16) block-diag.
    g = lin(f, wsr0, bsr0)
    g = lin(g, wsr1, bsr1)
    y3 = lin(g, wsr2, bsr2)                            # (T,16): scale pre-act in [3:6), rot in [6:10)

    lane = lax.broadcasted_iota(jnp.int32, y3.shape, 1)
    is_s = (lane >= 3) & (lane < 6)
    is_r = (lane >= 6) & (lane < 10)
    rr = jnp.where(is_r, y3, 0.0)
    inv_nrm = lax.rsqrt(jnp.sum(rr * rr, axis=1, keepdims=True) + 1e-24)   # EUP
    vals = jnp.where(is_s, jax.nn.sigmoid(y3), rr * inv_nrm)  # zero outside lanes [3:10)

    xdef16 = jnp.concatenate([xdef, jnp.zeros((xdef.shape[0], 13), jnp.float32)], axis=1)
    out_ref[...] = (xdef16 + vals) * 0.01              # one packed store


# ----------------------------------------------------------------------------
# pallas_call wrappers
# ----------------------------------------------------------------------------
def _row_spec(d, tile):
    return pl.BlockSpec((tile, d), lambda i: (i, 0))


def _full_spec(a):
    # Constant block index => the weight block is fetched once and stays VMEM-resident.
    return pl.BlockSpec(a.shape, lambda i: (0,) * a.ndim)


def run_backbone(x_pad, backbone_params, w_blend, b_blend, tile):
    Np = x_pad.shape[0]
    ins = list(backbone_params) + [w_blend, b_blend]
    return pl.pallas_call(
        _backbone_kernel,
        out_shape=(jax.ShapeDtypeStruct((Np, 16), jnp.float32),
                   jax.ShapeDtypeStruct((Np, 128), jnp.float32)),
        grid=(Np // tile,),
        in_specs=[_row_spec(3, tile)] + [_full_spec(w) for w in ins],
        out_specs=(_row_spec(16, tile), _row_spec(128, tile)),
        compiler_params=pltpu.CompilerParams(dimension_semantics=("parallel",)),
    )(x_pad, *ins)


def run_heads(jl_pad, A_pad, vp_pad, xi_pad, head_params, tile):
    Np = jl_pad.shape[0]
    in_specs = [_row_spec(16, tile), _full_spec(A_pad),
                _row_spec(3, tile), _row_spec(3, tile)]
    in_specs += [_full_spec(w) for w in head_params]
    return pl.pallas_call(
        _head_kernel,
        out_shape=jax.ShapeDtypeStruct((Np, 16), jnp.float32),
        grid=(Np // tile,),
        in_specs=in_specs,
        out_specs=_row_spec(16, tile),
        compiler_params=pltpu.CompilerParams(dimension_semantics=("parallel",)),
    )(jl_pad, A_pad, vp_pad, xi_pad, *head_params)


# ----------------------------------------------------------------------------
# Small global LBS kinematics (plain JAX glue — 5 joints, trivially cheap).
# ----------------------------------------------------------------------------
def batch_rodrigues(rot_vecs, eps=1e-8):
    # rot_vecs: (J, 3) axis-angle -> (J, 3, 3) rotation matrices
    angle = jnp.linalg.norm(rot_vecs + eps, axis=1, keepdims=True)   # (J, 1)
    rot_dir = rot_vecs / angle
    cos = jnp.cos(angle)[:, None, :]                                 # (J, 1, 1)
    sin = jnp.sin(angle)[:, None, :]
    rx, ry, rz = rot_dir[:, 0], rot_dir[:, 1], rot_dir[:, 2]
    zeros = jnp.zeros_like(rx)
    K = jnp.stack([zeros, -rz, ry, rz, zeros, -rx, -ry, rx, zeros], axis=1).reshape(-1, 3, 3)
    ident = jnp.eye(3, dtype=rot_vecs.dtype)[None]
    return ident + sin * K + (1.0 - cos) * jnp.matmul(K, K)


def batch_rigid_transform(rot_mats, joints, parents):
    # rot_mats: (B, J, 3, 3); joints: (B, J, 3) -> relative transforms A: (B, J, 4, 4)
    joints = joints[..., None]                                       # (B, J, 3, 1)
    parent_idx = jnp.array(parents[1:], dtype=jnp.int32)
    rel_joints = joints.at[:, 1:].set(joints[:, 1:] - joints[:, parent_idx])
    top = jnp.concatenate([rot_mats, rel_joints], axis=-1)           # (B, J, 3, 4)
    bottom = jnp.broadcast_to(jnp.array([0.0, 0.0, 0.0, 1.0], dtype=jnp.float32),
                              rot_mats.shape[:2] + (1, 4))
    transforms_mat = jnp.concatenate([top, bottom], axis=-2)         # (B, J, 4, 4)
    chain = [transforms_mat[:, 0]]
    for i in range(1, len(parents)):
        chain.append(jnp.matmul(chain[parents[i]], transforms_mat[:, i]))
    transforms = jnp.stack(chain, axis=1)                            # (B, J, 4, 4)
    joints_hom = jnp.concatenate([joints, jnp.zeros_like(joints[:, :, :1])], axis=2)
    tj = jnp.matmul(transforms, joints_hom)                          # (B, J, 4, 1)
    rel = transforms - jnp.pad(tj, ((0, 0), (0, 0), (0, 0), (3, 0)))
    return rel


# ----------------------------------------------------------------------------
# Full forward pass (matches MyDeformNetwork.forward semantics).
# ----------------------------------------------------------------------------
def _pad_rows(a, n_pad):
    return jnp.pad(a, ((0, n_pad - a.shape[0]), (0, 0)))


def my_deform_forward(x, expression_params, pose_params, params):
    Num = x.shape[0]
    tile = _choose_tile(Num)
    Np = ((Num + tile - 1) // tile) * tile
    x_pad = _pad_rows(x, Np)

    # Fold betas into the exp-basis weights once per call (256x150 matvec — negligible):
    #   blend[m,k] = sum_l betas[l] * exp_basis[m, 3k+l...] == h[m] @ w_blend[:,k] + b_blend[k]
    betas = expression_params.reshape(50)
    we, be = params["exp_w"], params["exp_b"]
    w_blend = jnp.einsum("dkl,l->dk", we.reshape(256, 3, 50), betas)      # (256, 3) f32
    b_blend = jnp.einsum("kl,l->k", be.reshape(3, 50), betas)[None, :]    # (1, 3) f32

    jl_p, epd_p = run_backbone(x_pad, params["backbone"], w_blend, b_blend, tile)
    jr = jl_p[:Num, 0:5]                      # relu'd joint-regressor head
    pb = epd_p[:Num, 0:108]                   # pose basis
    v_shaped = epd_p[:Num, 108:111]           # xyz_init + delta_xyz + blend (from kernel 1)

    # joint regression: reshape(Num,5) -> (5,Num) row-major (NOT a transpose), as in torch
    J = jnp.einsum("ik,ji->jk", v_shaped, jr.reshape(5, Num))                # (5, 3)

    rot_mats = batch_rodrigues(pose_params.reshape(-1, 3))                   # (5, 3, 3)
    pose_feature = (rot_mats[1:] - jnp.eye(3, dtype=jnp.float32)).reshape(1, 36)
    # pose_basis.reshape(36, 3*Num) mixes values across points (faithful to torch).
    pose_offsets = jnp.matmul(pose_feature, pb.reshape(36, 3 * Num)).reshape(Num, 3)
    v_posed = v_shaped + pose_offsets

    A = batch_rigid_transform(rot_mats[None], J[None], PARENTS)[0]           # (5, 4, 4)
    A_pad = jnp.zeros((16, 16), jnp.float32).at[5:10].set(A.reshape(5, 16))

    # jl_p (lbs weights + delta_xyz) flows Np-padded straight into kernel 2.
    out_p = run_heads(jl_p, A_pad, _pad_rows(v_posed, Np), x_pad, params["heads"], tile)
    out = out_p[:Num]
    return out[:, 0:3], out[:, 3:6], out[:, 6:10]


# ----------------------------------------------------------------------------
# Parameter init (PyTorch Linear-style) + packing into the fused kernel layout.
# ----------------------------------------------------------------------------
def init_raw_params(key):
    keys = iter(jax.random.split(key, 40))

    def lin(in_d, out_d):
        kw, kb = jax.random.split(next(keys))
        bound = 1.0 / math.sqrt(in_d)
        W = jax.random.uniform(kw, (in_d, out_d), jnp.float32, -bound, bound)
        b = jax.random.uniform(kb, (1, out_d), jnp.float32, -bound, bound)
        return W, b

    return {
        "linear_back": [lin(3, 256), lin(256, 256), lin(256, 256)],
        "jr_net": [lin(256, 256), lin(256, 5)],
        "lbsW_net": [lin(256, 256), lin(256, 5)],
        "exp_basis_net": lin(256, 150),
        "pose_basis_net": lin(256, 108),
        "delta_xyz_net": lin(256, 3),
        "linear_front": [lin(9, 64), lin(64, 64), lin(64, 64)],
        "scale_head": [lin(64, 64), lin(64, 64), lin(64, 3)],
        "rotation_head": [lin(64, 64), lin(64, 64), lin(64, 4)],
    }


def pack_params(raw):
    """Fuse / pad per-layer weights into the kernels' packed layout (big W's -> bf16)."""
    bf = lambda a: a.astype(jnp.bfloat16)

    (wb0, bb0), (wb1, bb1), (wb2, bb2) = raw["linear_back"]
    (wj0, bj0), (wj1, bj1) = raw["jr_net"]
    (wl0, bl0), (wl1, bl1) = raw["lbsW_net"]
    we, be = raw["exp_basis_net"]
    wp, bp_ = raw["pose_basis_net"]
    wd, bd = raw["delta_xyz_net"]

    # Post-trunk first layers fused along the output dim: jr0 | lbsW0 | pose | dxyz.
    # (exp basis is folded with betas at call time -> passed as a separate (256,3) weight.)
    wpost = jnp.concatenate([wj0, wl0, wp, wd], axis=1)               # (256, 623)
    bpost = jnp.concatenate([bj0, bl0, bp_, bd], axis=1)              # (1, 623)

    # jr/lbsW second layers as one block-diagonal weight: jr -> lanes [0:5), lw -> [5:10).
    wjl1 = (jnp.zeros((512, 16), jnp.float32)
            .at[0:256, 0:5].set(wj1).at[256:512, 5:10].set(wl1))
    bjl1 = jnp.zeros((1, 16), jnp.float32).at[:, 0:5].set(bj1).at[:, 5:10].set(bl1)

    backbone = [wb0, bb0, bf(wb1), bb1, bf(wb2), bb2,
                bf(wpost), bpost, bf(wjl1), bjl1]

    (wf0, bf0_), (wf1, bf1_), (wf2, bf2_) = raw["linear_front"]
    (ws0, bs0), (ws1, bs1), (ws2, bs2) = raw["scale_head"]
    (wr0, br0), (wr1, br1), (wr2, br2) = raw["rotation_head"]

    wsr0 = jnp.concatenate([ws0, wr0], axis=1)                        # (64, 128)
    bsr0 = jnp.concatenate([bs0, br0], axis=1)
    wsr1 = (jnp.zeros((128, 128), jnp.float32)
            .at[0:64, 0:64].set(ws1).at[64:128, 64:128].set(wr1))     # block-diag
    bsr1 = jnp.concatenate([bs1, br1], axis=1)
    # Final fused layer: scale pre-acts -> lanes [3:6), rot pre-acts -> lanes [6:10).
    wsr2 = (jnp.zeros((128, 16), jnp.float32)
            .at[0:64, 3:6].set(ws2).at[64:128, 6:10].set(wr2))
    bsr2 = jnp.zeros((1, 16), jnp.float32).at[:, 3:6].set(bs2).at[:, 6:10].set(br2)

    heads = [wf0, bf0_, bf(wf1), bf1_, bf(wf2), bf2_,
             bf(wsr0), bsr0, bf(wsr1), bsr1, bf(wsr2), bsr2]

    # exp-basis weights kept in f32; contracted with betas per call in the wrapper.
    return {"backbone": backbone, "heads": heads, "exp_w": we, "exp_b": be}


if __name__ == "__main__":
    key = jax.random.PRNGKey(0)
    kx, ke, kp, kparam = jax.random.split(key, 4)

    Num = 200
    x = jax.random.normal(kx, (Num, 3), dtype=jnp.float32)
    expression_params = 0.1 * jax.random.normal(ke, (50,), dtype=jnp.float32)
    # forward() reshapes pose_params to (1, 15) => 5 joints x 3 axis-angle params.
    pose_params = 0.1 * jax.random.normal(kp, (15,), dtype=jnp.float32)

    params = pack_params(init_raw_params(kparam))

    fwd = jax.jit(my_deform_forward)
    xyz_deformed, d_scaling, d_rotation = fwd(x, expression_params, pose_params, params)
    jax.block_until_ready((xyz_deformed, d_scaling, d_rotation))

    assert xyz_deformed.shape == (Num, 3)
    assert d_scaling.shape == (Num, 3)
    assert d_rotation.shape == (Num, 4)
    assert bool(jnp.all(jnp.isfinite(xyz_deformed)))
    assert bool(jnp.all(jnp.isfinite(d_scaling)))
    assert bool(jnp.all(jnp.isfinite(d_rotation)))
    print("KERNEL_OK")
</pallas_src>

<mosaic_0001>
module attributes {stable_mosaic.version = 11 : i64} {
  func.func @_backbone_kernel(%arg0: i32, %arg1: memref<128x3xf32, #tpu.memory_space<vmem>>, %arg2: memref<3x256xf32, #tpu.memory_space<vmem>>, %arg3: memref<1x256xf32, #tpu.memory_space<vmem>>, %arg4: memref<256x256xbf16, #tpu.memory_space<vmem>>, %arg5: memref<1x256xf32, #tpu.memory_space<vmem>>, %arg6: memref<256x256xbf16, #tpu.memory_space<vmem>>, %arg7: memref<1x256xf32, #tpu.memory_space<vmem>>, %arg8: memref<256x623xbf16, #tpu.memory_space<vmem>>, %arg9: memref<1x623xf32, #tpu.memory_space<vmem>>, %arg10: memref<512x16xbf16, #tpu.memory_space<vmem>>, %arg11: memref<1x16xf32, #tpu.memory_space<vmem>>, %arg12: memref<256x3xf32, #tpu.memory_space<vmem>>, %arg13: memref<1x3xf32, #tpu.memory_space<vmem>>, %arg14: memref<128x16xf32, #tpu.memory_space<vmem>>, %arg15: memref<128x128xf32, #tpu.memory_space<vmem>>) attributes {dimension_semantics = [#tpu.dimension_semantics<parallel>], iteration_bounds = array<i64: 2>, scalar_prefetch = 0 : i64, scratch_operands = 0 : i64, tpu.core_type = #tpu.core_type<tc>, window_params = [{transform_indices = @transform_0, window_bounds = array<i64: 128, 3>}, {pipeline_mode = #tpu.pipeline_mode<synchronous>, transform_indices = @transform_1, window_bounds = array<i64: 3, 256>}, {pipeline_mode = #tpu.pipeline_mode<synchronous>, transform_indices = @transform_2, window_bounds = array<i64: 1, 256>}, {pipeline_mode = #tpu.pipeline_mode<synchronous>, transform_indices = @transform_3, window_bounds = array<i64: 256, 256>}, {pipeline_mode = #tpu.pipeline_mode<synchronous>, transform_indices = @transform_4, window_bounds = array<i64: 1, 256>}, {pipeline_mode = #tpu.pipeline_mode<synchronous>, transform_indices = @transform_5, window_bounds = array<i64: 256, 256>}, {pipeline_mode = #tpu.pipeline_mode<synchronous>, transform_indices = @transform_6, window_bounds = array<i64: 1, 256>}, {pipeline_mode = #tpu.pipeline_mode<synchronous>, transform_indices = @transform_7, window_bounds = array<i64: 256, 623>}, {pipeline_mode = #tpu.pipeline_mode<synchronous>, transform_indices = @transform_8, window_bounds = array<i64: 1, 623>}, {pipeline_mode = #tpu.pipeline_mode<synchronous>, transform_indices = @transform_9, window_bounds = array<i64: 512, 16>}, {pipeline_mode = #tpu.pipeline_mode<synchronous>, transform_indices = @transform_10, window_bounds = array<i64: 1, 16>}, {pipeline_mode = #tpu.pipeline_mode<synchronous>, transform_indices = @transform_11, window_bounds = array<i64: 256, 3>}, {pipeline_mode = #tpu.pipeline_mode<synchronous>, transform_indices = @transform_12, window_bounds = array<i64: 1, 3>}, {transform_indices = @transform_13, window_bounds = array<i64: 128, 16>}, {transform_indices = @transform_14, window_bounds = array<i64: 128, 128>}]} {
    %c0 = arith.constant 0 : index
    %c0_0 = arith.constant 0 : index
    %0 = vector.load %arg1[%c0, %c0_0] : memref<128x3xf32, #tpu.memory_space<vmem>>, vector<128x3xf32>
    %c0_1 = arith.constant 0 : index
    %c0_2 = arith.constant 0 : index
    %1 = vector.load %arg2[%c0_1, %c0_2] : memref<3x256xf32, #tpu.memory_space<vmem>>, vector<3x256xf32>
    %cst = arith.constant dense<0.000000e+00> : vector<128x256xf32>
    %2 = tpu.matmul %0, %1, %cst {dimension_numbers = #tpu.dot_dimension_numbers<[1], [0], [0], [1], [0, 0, 1, 1], [], []>} : vector<128x3xf32>, vector<3x256xf32>, vector<128x256xf32> -> vector<128x256xf32>
    %c0_3 = arith.constant 0 : index
    %c0_4 = arith.constant 0 : index
    %3 = vector.load %arg3[%c0_3, %c0_4] : memref<1x256xf32, #tpu.memory_space<vmem>>, vector<1x256xf32>
    %4 = vector.broadcast %3 : vector<1x256xf32> to vector<128x256xf32>
    %5 = arith.addf %2, %4 : vector<128x256xf32>
    %cst_5 = arith.constant 0.000000e+00 : f32
    %6 = vector.broadcast %cst_5 : f32 to vector<128x256xf32>
    %7 = arith.maximumf %5, %6 : vector<128x256xf32>
    %c0_6 = arith.constant 0 : index
    %c0_7 = arith.constant 0 : index
    %8 = vector.load %arg4[%c0_6, %c0_7] : memref<256x256xbf16, #tpu.memory_space<vmem>>, vector<256x256xbf16>
    %9 = arith.truncf %7 : vector<128x256xf32> to vector<128x256xbf16>
    %cst_8 = arith.constant dense<0.000000e+00> : vector<128x256xf32>
    %10 = tpu.matmul %9, %8, %cst_8 {dimension_numbers = #tpu.dot_dimension_numbers<[1], [0], [0], [1], [0, 0, 1, 1], [], []>} : vector<128x256xbf16>, vector<256x256xbf16>, vector<128x256xf32> -> vector<128x256xf32>
    %c0_9 = arith.constant 0 : index
    %c0_10 = arith.constant 0 : index
    %11 = vector.load %arg5[%c0_9, %c0_10] : memref<1x256xf32, #tpu.memory_space<vmem>>, vector<1x256xf32>
    %12 = vector.broadcast %11 : vector<1x256xf32> to vector<128x256xf32>
    %13 = arith.addf %10, %12 : vector<128x256xf32>
    %cst_11 = arith.constant 0.000000e+00 : f32
    %14 = vector.broadcast %cst_11 : f32 to vector<128x256xf32>
    %15 = arith.maximumf %13, %14 : vector<128x256xf32>
    %c0_12 = arith.constant 0 : index
    %c0_13 = arith.constant 0 : index
    %16 = vector.load %arg6[%c0_12, %c0_13] : memref<256x256xbf16, #tpu.memory_space<vmem>>, vector<256x256xbf16>
    %17 = arith.truncf %15 : vector<128x256xf32> to vector<128x256xbf16>
    %cst_14 = arith.constant dense<0.000000e+00> : vector<128x256xf32>
    %18 = tpu.matmul %17, %16, %cst_14 {dimension_numbers = #tpu.dot_dimension_numbers<[1], [0], [0], [1], [0, 0, 1, 1], [], []>} : vector<128x256xbf16>, vector<256x256xbf16>, vector<128x256xf32> -> vector<128x256xf32>
    %c0_15 = arith.constant 0 : index
    %c0_16 = arith.constant 0 : index
    %19 = vector.load %arg7[%c0_15, %c0_16] : memref<1x256xf32, #tpu.memory_space<vmem>>, vector<1x256xf32>
    %20 = vector.broadcast %19 : vector<1x256xf32> to vector<128x256xf32>
    %21 = arith.addf %18, %20 : vector<128x256xf32>
    %cst_17 = arith.constant 0.000000e+00 : f32
    %22 = vector.broadcast %cst_17 : f32 to vector<128x256xf32>
    %23 = arith.maximumf %21, %22 : vector<128x256xf32>
    %c0_18 = arith.constant 0 : index
    %c0_19 = arith.constant 0 : index
    %24 = vector.load %arg8[%c0_18, %c0_19] : memref<256x623xbf16, #tpu.memory_space<vmem>>, vector<256x623xbf16>
    %25 = arith.truncf %23 : vector<128x256xf32> to vector<128x256xbf16>
    %cst_20 = arith.constant dense<0.000000e+00> : vector<128x623xf32>
    %26 = tpu.matmul %25, %24, %cst_20 {dimension_numbers = #tpu.dot_dimension_numbers<[1], [0], [0], [1], [0, 0, 1, 1], [], []>} : vector<128x256xbf16>, vector<256x623xbf16>, vector<128x623xf32> -> vector<128x623xf32>
    %c0_21 = arith.constant 0 : index
    %c0_22 = arith.constant 0 : index
    %27 = vector.load %arg9[%c0_21, %c0_22] : memref<1x623xf32, #tpu.memory_space<vmem>>, vector<1x623xf32>
    %28 = vector.broadcast %27 : vector<1x623xf32> to vector<128x623xf32>
    %29 = arith.addf %26, %28 : vector<128x623xf32>
    %c0_23 = arith.constant 0 : index
    %c0_24 = arith.constant 0 : index
    %30 = vector.load %arg12[%c0_23, %c0_24] : memref<256x3xf32, #tpu.memory_space<vmem>>, vector<256x3xf32>
    %cst_25 = arith.constant dense<0.000000e+00> : vector<128x3xf32>
    %31 = tpu.matmul %23, %30, %cst_25 {dimension_numbers = #tpu.dot_dimension_numbers<[1], [0], [0], [1], [0, 0, 1, 1], [], []>} : vector<128x256xf32>, vector<256x3xf32>, vector<128x3xf32> -> vector<128x3xf32>
    %c0_26 = arith.constant 0 : index
    %c0_27 = arith.constant 0 : index
    %32 = vector.load %arg13[%c0_26, %c0_27] : memref<1x3xf32, #tpu.memory_space<vmem>>, vector<1x3xf32>
    %33 = vector.broadcast %32 : vector<1x3xf32> to vector<128x3xf32>
    %34 = arith.addf %31, %33 : vector<128x3xf32>
    %35 = vector.extract_strided_slice %29 {offsets = [0, 620], sizes = [128, 3], strides = [1, 1]} : vector<128x623xf32> to vector<128x3xf32>
    %36 = arith.addf %0, %35 : vector<128x3xf32>
    %37 = arith.addf %36, %34 : vector<128x3xf32>
    %38 = vector.extract_strided_slice %29 {offsets = [0, 512], sizes = [128, 108], strides = [1, 1]} : vector<128x623xf32> to vector<128x108xf32>
    %cst_28 = arith.constant 0.000000e+00 : f32
    %39 = vector.broadcast %cst_28 : f32 to vector<128x17xf32>
    %40 = tpu.concatenate %38, %37, %39 in 1 : vector<128x108xf32>, vector<128x3xf32>, vector<128x17xf32> -> vector<128x128xf32>
    %c0_29 = arith.constant 0 : index
    %c0_30 = arith.constant 0 : index
    %41 = vector.load %arg15[%c0_29, %c0_30] : memref<128x128xf32, #tpu.memory_space<vmem>>, vector<128x128xf32>
    tpu.vector_store %arg15[%c0_29, %c0_30], %40 {strides = array<i32>} : memref<128x128xf32, #tpu.memory_space<vmem>>, vector<128x128xf32>,
    %42 = vector.extract_strided_slice %29 {offsets = [0, 0], sizes = [128, 512], strides = [1, 1]} : vector<128x623xf32> to vector<128x512xf32>
    %cst_31 = arith.constant 0.000000e+00 : f32
    %43 = vector.broadcast %cst_31 : f32 to vector<128x512xf32>
    %44 = arith.maximumf %42, %43 : vector<128x512xf32>
    %c0_32 = arith.constant 0 : index
    %c0_33 = arith.constant 0 : index
    %45 = vector.load %arg10[%c0_32, %c0_33] : memref<512x16xbf16, #tpu.memory_space<vmem>>, vector<512x16xbf16>
    %46 = arith.truncf %44 : vector<128x512xf32> to vector<128x512xbf16>
    %cst_34 = arith.constant dense<0.000000e+00> : vector<128x16xf32>
    %47 = tpu.matmul %46, %45, %cst_34 {dimension_numbers = #tpu.dot_dimension_numbers<[1], [0], [0], [1], [0, 0, 1, 1], [], []>} : vector<128x512xbf16>, vector<512x16xbf16>, vector<128x16xf32> -> vector<128x16xf32>
    %c0_35 = arith.constant 0 : index
    %c0_36 = arith.constant 0 : index
    %48 = vector.load %arg11[%c0_35, %c0_36] : memref<1x16xf32, #tpu.memory_space<vmem>>, vector<1x16xf32>
    %49 = vector.broadcast %48 : vector<1x16xf32> to vector<128x16xf32>
    %50 = arith.addf %47, %49 : vector<128x16xf32>
    %cst_37 = arith.constant 0.000000e+00 : f32
    %51 = vector.broadcast %cst_37 : f32 to vector<128x16xf32>
    %52 = arith.maximumf %50, %51 : vector<128x16xf32>
    %53 = tpu.iota {dimensions = array<i32: 1>} : vector<128x16xi32>
    %c5_i32 = arith.constant 5 : i32
    %54 = vector.broadcast %c5_i32 : i32 to vector<128x16xi32>
    %55 = arith.cmpi sge, %53, %54 : vector<128x16xi32>
    %c10_i32 = arith.constant 10 : i32
    %56 = vector.broadcast %c10_i32 : i32 to vector<128x16xi32>
    %57 = arith.cmpi slt, %53, %56 : vector<128x16xi32>
    %58 = arith.andi %55, %57 : vector<128x16xi1>
    %cst_38 = arith.constant 0xFF800000 : f32
    %59 = vector.broadcast %cst_38 : f32 to vector<128x16xf32>
    %60 = arith.select %58, %52, %59 : vector<128x16xi1>, vector<128x16xf32>
    %cst_39 = arith.constant dense<0xFF800000> : vector<128xf32>
    %61 = vector.multi_reduction <maximumf>, %60, %cst_39 [1] : vector<128x16xf32> to vector<128xf32>
    %62 = vector.shape_cast %61 : vector<128xf32> to vector<128x1xf32>
    %63 = vector.broadcast %62 : vector<128x1xf32> to vector<128x16xf32>
    %64 = arith.subf %60, %63 : vector<128x16xf32>
    %65 = math.exp %64 : vector<128x16xf32>
    %cst_40 = arith.constant dense<0.000000e+00> : vector<128xf32>
    %66 = vector.multi_reduction <add>, %65, %cst_40 [1] : vector<128x16xf32> to vector<128xf32>
    %67 = vector.shape_cast %66 : vector<128xf32> to vector<128x1xf32>
    %68 = tpu.reciprocal %67 {approx = true} : vector<128x1xf32> -> vector<128x1xf32>
    %69 = vector.broadcast %68 : vector<128x1xf32> to vector<128x16xf32>
    %70 = arith.mulf %65, %69 : vector<128x16xf32>
    %71 = arith.select %58, %70, %52 : vector<128x16xi1>, vector<128x16xf32>
    %cst_41 = arith.constant 0.000000e+00 : f32
    %72 = vector.broadcast %cst_41 : f32 to vector<128x10xf32>
    %cst_42 = arith.constant 0.000000e+00 : f32
    %73 = vector.broadcast %cst_42 : f32 to vector<128x3xf32>
    %74 = tpu.concatenate %72, %35, %73 in 1 : vector<128x10xf32>, vector<128x3xf32>, vector<128x3xf32> -> vector<128x16xf32>
    %75 = arith.addf %71, %74 : vector<128x16xf32>
    %c0_43 = arith.constant 0 : index
    %c0_44 = arith.constant 0 : index
    %76 = vector.load %arg14[%c0_43, %c0_44] : memref<128x16xf32, #tpu.memory_space<vmem>>, vector<128x16xf32>
    tpu.vector_store %arg14[%c0_43, %c0_44], %75 {strides = array<i32>} : memref<128x16xf32, #tpu.memory_space<vmem>>, vector<128x16xf32>,
    return
  }
  func.func @transform_0(%arg0: i32) -> (i32, i32) {
    %c0_i32 = arith.constant 0 : i32
    %c0_i32_0 = arith.constant 0 : i32
    return %arg0, %c0_i32 : i32, i32
  }
  func.func @transform_1(%arg0: i32) -> (i32, i32) {
    %c0_i32 = arith.constant 0 : i32
    %c0_i32_0 = arith.constant 0 : i32
    %c0_i32_1 = arith.constant 0 : i32
    return %c0_i32, %c0_i32_0 : i32, i32
  }
  func.func @transform_2(%arg0: i32) -> (i32, i32) {
    %c0_i32 = arith.constant 0 : i32
    %c0_i32_0 = arith.constant 0 : i32
    %c0_i32_1 = arith.constant 0 : i32
    return %c0_i32, %c0_i32_0 : i32, i32
  }
  func.func @transform_3(%arg0: i32) -> (i32, i32) {
    %c0_i32 = arith.constant 0 : i32
    %c0_i32_0 = arith.constant 0 : i32
    %c0_i32_1 = arith.constant 0 : i32
    return %c0_i32, %c0_i32_0 : i32, i32
  }
  func.func @transform_4(%arg0: i32) -> (i32, i32) {
    %c0_i32 = arith.constant 0 : i32
    %c0_i32_0 = arith.constant 0 : i32
    %c0_i32_1 = arith.constant 0 : i32
    return %c0_i32, %c0_i32_0 : i32, i32
  }
  func.func @transform_5(%arg0: i32) -> (i32, i32) {
    %c0_i32 = arith.constant 0 : i32
    %c0_i32_0 = arith.constant 0 : i32
    %c0_i32_1 = arith.constant 0 : i32
    return %c0_i32, %c0_i32_0 : i32, i32
  }
  func.func @transform_6(%arg0: i32) -> (i32, i32) {
    %c0_i32 = arith.constant 0 : i32
    %c0_i32_0 = arith.constant 0 : i32
    %c0_i32_1 = arith.constant 0 : i32
    return %c0_i32, %c0_i32_0 : i32, i32
  }
  func.func @transform_7(%arg0: i32) -> (i32, i32) {
    %c0_i32 = arith.constant 0 : i32
    %c0_i32_0 = arith.constant 0 : i32
    %c0_i32_1 = arith.constant 0 : i32
    return %c0_i32, %c0_i32_0 : i32, i32
  }
  func.func @transform_8(%arg0: i32) -> (i32, i32) {
    %c0_i32 = arith.constant 0 : i32
    %c0_i32_0 = arith.constant 0 : i32
    %c0_i32_1 = arith.constant 0 : i32
    return %c0_i32, %c0_i32_0 : i32, i32
  }
  func.func @transform_9(%arg0: i32) -> (i32, i32) {
    %c0_i32 = arith.constant 0 : i32
    %c0_i32_0 = arith.constant 0 : i32
    %c0_i32_1 = arith.constant 0 : i32
    return %c0_i32, %c0_i32_0 : i32, i32
  }
  func.func @transform_10(%arg0: i32) -> (i32, i32) {
    %c0_i32 = arith.constant 0 : i32
    %c0_i32_0 = arith.constant 0 : i32
    %c0_i32_1 = arith.constant 0 : i32
    return %c0_i32, %c0_i32_0 : i32, i32
  }
  func.func @transform_11(%arg0: i32) -> (i32, i32) {
    %c0_i32 = arith.constant 0 : i32
    %c0_i32_0 = arith.constant 0 : i32
    %c0_i32_1 = arith.constant 0 : i32
    return %c0_i32, %c0_i32_0 : i32, i32
  }
  func.func @transform_12(%arg0: i32) -> (i32, i32) {
    %c0_i32 = arith.constant 0 : i32
    %c0_i32_0 = arith.constant 0 : i32
    %c0_i32_1 = arith.constant 0 : i32
    return %c0_i32, %c0_i32_0 : i32, i32
  }
  func.func @transform_13(%arg0: i32) -> (i32, i32) {
    %c0_i32 = arith.constant 0 : i32
    %c0_i32_0 = arith.constant 0 : i32
    return %arg0, %c0_i32 : i32, i32
  }
  func.func @transform_14(%arg0: i32) -> (i32, i32) {
    %c0_i32 = arith.constant 0 : i32
    %c0_i32_0 = arith.constant 0 : i32
    return %arg0, %c0_i32 : i32, i32
  }
}

module attributes {stable_mosaic.version = 11 : i64} {
  func.func @_head_kernel(%arg0: i32, %arg1: memref<128x16xf32, #tpu.memory_space<vmem>>, %arg2: memref<16x16xf32, #tpu.memory_space<vmem>>, %arg3: memref<128x3xf32, #tpu.memory_space<vmem>>, %arg4: memref<128x3xf32, #tpu.memory_space<vmem>>, %arg5: memref<9x64xf32, #tpu.memory_space<vmem>>, %arg6: memref<1x64xf32, #tpu.memory_space<vmem>>, %arg7: memref<64x64xbf16, #tpu.memory_space<vmem>>, %arg8: memref<1x64xf32, #tpu.memory_space<vmem>>, %arg9: memref<64x64xbf16, #tpu.memory_space<vmem>>, %arg10: memref<1x64xf32, #tpu.memory_space<vmem>>, %arg11: memref<64x128xbf16, #tpu.memory_space<vmem>>, %arg12: memref<1x128xf32, #tpu.memory_space<vmem>>, %arg13: memref<128x128xbf16, #tpu.memory_space<vmem>>, %arg14: memref<1x128xf32, #tpu.memory_space<vmem>>, %arg15: memref<128x16xbf16, #tpu.memory_space<vmem>>, %arg16: memref<1x16xf32, #tpu.memory_space<vmem>>, %arg17: memref<128x16xf32, #tpu.memory_space<vmem>>) attributes {dimension_semantics = [#tpu.dimension_semantics<parallel>], iteration_bounds = array<i64: 2>, scalar_prefetch = 0 : i64, scratch_operands = 0 : i64, tpu.core_type = #tpu.core_type<tc>, window_params = [{transform_indices = @transform_0, window_bounds = array<i64: 128, 16>}, {pipeline_mode = #tpu.pipeline_mode<synchronous>, transform_indices = @transform_1, window_bounds = array<i64: 16, 16>}, {transform_indices = @transform_2, window_bounds = array<i64: 128, 3>}, {transform_indices = @transform_3, window_bounds = array<i64: 128, 3>}, {pipeline_mode = #tpu.pipeline_mode<synchronous>, transform_indices = @transform_4, window_bounds = array<i64: 9, 64>}, {pipeline_mode = #tpu.pipeline_mode<synchronous>, transform_indices = @transform_5, window_bounds = array<i64: 1, 64>}, {pipeline_mode = #tpu.pipeline_mode<synchronous>, transform_indices = @transform_6, window_bounds = array<i64: 64, 64>}, {pipeline_mode = #tpu.pipeline_mode<synchronous>, transform_indices = @transform_7, window_bounds = array<i64: 1, 64>}, {pipeline_mode = #tpu.pipeline_mode<synchronous>, transform_indices = @transform_8, window_bounds = array<i64: 64, 64>}, {pipeline_mode = #tpu.pipeline_mode<synchronous>, transform_indices = @transform_9, window_bounds = array<i64: 1, 64>}, {pipeline_mode = #tpu.pipeline_mode<synchronous>, transform_indices = @transform_10, window_bounds = array<i64: 64, 128>}, {pipeline_mode = #tpu.pipeline_mode<synchronous>, transform_indices = @transform_11, window_bounds = array<i64: 1, 128>}, {pipeline_mode = #tpu.pipeline_mode<synchronous>, transform_indices = @transform_12, window_bounds = array<i64: 128, 128>}, {pipeline_mode = #tpu.pipeline_mode<synchronous>, transform_indices = @transform_13, window_bounds = array<i64: 1, 128>}, {pipeline_mode = #tpu.pipeline_mode<synchronous>, transform_indices = @transform_14, window_bounds = array<i64: 128, 16>}, {pipeline_mode = #tpu.pipeline_mode<synchronous>, transform_indices = @transform_15, window_bounds = array<i64: 1, 16>}, {transform_indices = @transform_16, window_bounds = array<i64: 128, 16>}]} {
    %c0 = arith.constant 0 : index
    %c0_0 = arith.constant 0 : index
    %0 = vector.load %arg1[%c0, %c0_0] : memref<128x16xf32, #tpu.memory_space<vmem>>, vector<128x16xf32>
    %c0_1 = arith.constant 0 : index
    %c0_2 = arith.constant 0 : index
    %1 = vector.load %arg2[%c0_1, %c0_2] : memref<16x16xf32, #tpu.memory_space<vmem>>, vector<16x16xf32>
    %cst = arith.constant dense<0.000000e+00> : vector<128x16xf32>
    %2 = tpu.matmul %0, %1, %cst {dimension_numbers = #tpu.dot_dimension_numbers<[1], [0], [0], [1], [0, 0, 1, 1], [], []>} : vector<128x16xf32>, vector<16x16xf32>, vector<128x16xf32> -> vector<128x16xf32>
    %c0_3 = arith.constant 0 : index
    %c0_4 = arith.constant 0 : index
    %3 = vector.load %arg3[%c0_3, %c0_4] : memref<128x3xf32, #tpu.memory_space<vmem>>, vector<128x3xf32>
    %4 = vector.extract_strided_slice %3 {offsets = [0, 0], sizes = [128, 1], strides = [1, 1]} : vector<128x3xf32> to vector<128x1xf32>
    %5 = vector.extract_strided_slice %3 {offsets = [0, 1], sizes = [128, 1], strides = [1, 1]} : vector<128x3xf32> to vector<128x1xf32>
    %6 = vector.extract_strided_slice %3 {offsets = [0, 2], sizes = [128, 1], strides = [1, 1]} : vector<128x3xf32> to vector<128x1xf32>
    %7 = vector.extract_strided_slice %2 {offsets = [0, 0], sizes = [128, 1], strides = [1, 1]} : vector<128x16xf32> to vector<128x1xf32>
    %8 = arith.mulf %7, %4 : vector<128x1xf32>
    %9 = vector.extract_strided_slice %2 {offsets = [0, 1], sizes = [128, 1], strides = [1, 1]} : vector<128x16xf32> to vector<128x1xf32>
    %10 = arith.mulf %9, %5 : vector<128x1xf32>
    %11 = arith.addf %8, %10 : vector<128x1xf32>
    %12 = vector.extract_strided_slice %2 {offsets = [0, 2], sizes = [128, 1], strides = [1, 1]} : vector<128x16xf32> to vector<128x1xf32>
    %13 = arith.mulf %12, %6 : vector<128x1xf32>
    %14 = arith.addf %11, %13 : vector<128x1xf32>
    %15 = vector.extract_strided_slice %2 {offsets = [0, 3], sizes = [128, 1], strides = [1, 1]} : vector<128x16xf32> to vector<128x1xf32>
    %16 = arith.addf %14, %15 : vector<128x1xf32>
    %17 = vector.extract_strided_slice %2 {offsets = [0, 4], sizes = [128, 1], strides = [1, 1]} : vector<128x16xf32> to vector<128x1xf32>
    %18 = arith.mulf %17, %4 : vector<128x1xf32>
    %19 = vector.extract_strided_slice %2 {offsets = [0, 5], sizes = [128, 1], strides = [1, 1]} : vector<128x16xf32> to vector<128x1xf32>
    %20 = arith.mulf %19, %5 : vector<128x1xf32>
    %21 = arith.addf %18, %20 : vector<128x1xf32>
    %22 = vector.extract_strided_slice %2 {offsets = [0, 6], sizes = [128, 1], strides = [1, 1]} : vector<128x16xf32> to vector<128x1xf32>
    %23 = arith.mulf %22, %6 : vector<128x1xf32>
    %24 = arith.addf %21, %23 : vector<128x1xf32>
    %25 = vector.extract_strided_slice %2 {offsets = [0, 7], sizes = [128, 1], strides = [1, 1]} : vector<128x16xf32> to vector<128x1xf32>
    %26 = arith.addf %24, %25 : vector<128x1xf32>
    %27 = vector.extract_strided_slice %2 {offsets = [0, 8], sizes = [128, 1], strides = [1, 1]} : vector<128x16xf32> to vector<128x1xf32>
    %28 = arith.mulf %27, %4 : vector<128x1xf32>
    %29 = vector.extract_strided_slice %2 {offsets = [0, 9], sizes = [128, 1], strides = [1, 1]} : vector<128x16xf32> to vector<128x1xf32>
    %30 = arith.mulf %29, %5 : vector<128x1xf32>
    %31 = arith.addf %28, %30 : vector<128x1xf32>
    %32 = vector.extract_strided_slice %2 {offsets = [0, 10], sizes = [128, 1], strides = [1, 1]} : vector<128x16xf32> to vector<128x1xf32>
    %33 = arith.mulf %32, %6 : vector<128x1xf32>
    %34 = arith.addf %31, %33 : vector<128x1xf32>
    %35 = vector.extract_strided_slice %2 {offsets = [0, 11], sizes = [128, 1], strides = [1, 1]} : vector<128x16xf32> to vector<128x1xf32>
    %36 = arith.addf %34, %35 : vector<128x1xf32>
    %37 = tpu.concatenate %16, %26, %36 in 1 : vector<128x1xf32>, vector<128x1xf32>, vector<128x1xf32> -> vector<128x3xf32>
    %c0_5 = arith.constant 0 : index
    %c0_6 = arith.constant 0 : index
    %38 = vector.load %arg4[%c0_5, %c0_6] : memref<128x3xf32, #tpu.memory_space<vmem>>, vector<128x3xf32>
    %39 = vector.extract_strided_slice %0 {offsets = [0, 10], sizes = [128, 3], strides = [1, 1]} : vector<128x16xf32> to vector<128x3xf32>
    %40 = tpu.concatenate %37, %38, %39 in 1 : vector<128x3xf32>, vector<128x3xf32>, vector<128x3xf32> -> vector<128x9xf32>
    %c0_7 = arith.constant 0 : index
    %c0_8 = arith.constant 0 : index
    %41 = vector.load %arg5[%c0_7, %c0_8] : memref<9x64xf32, #tpu.memory_space<vmem>>, vector<9x64xf32>
    %cst_9 = arith.constant dense<0.000000e+00> : vector<128x64xf32>
    %42 = tpu.matmul %40, %41, %cst_9 {dimension_numbers = #tpu.dot_dimension_numbers<[1], [0], [0], [1], [0, 0, 1, 1], [], []>} : vector<128x9xf32>, vector<9x64xf32>, vector<128x64xf32> -> vector<128x64xf32>
    %c0_10 = arith.constant 0 : index
    %c0_11 = arith.constant 0 : index
    %43 = vector.load %arg6[%c0_10, %c0_11] : memref<1x64xf32, #tpu.memory_space<vmem>>, vector<1x64xf32>
    %44 = vector.broadcast %43 : vector<1x64xf32> to vector<128x64xf32>
    %45 = arith.addf %42, %44 : vector<128x64xf32>
    %cst_12 = arith.constant 0.000000e+00 : f32
    %46 = vector.broadcast %cst_12 : f32 to vector<128x64xf32>
    %47 = arith.maximumf %45, %46 : vector<128x64xf32>
    %c0_13 = arith.constant 0 : index
    %c0_14 = arith.constant 0 : index
    %48 = vector.load %arg7[%c0_13, %c0_14] : memref<64x64xbf16, #tpu.memory_space<vmem>>, vector<64x64xbf16>
    %49 = arith.truncf %47 : vector<128x64xf32> to vector<128x64xbf16>
    %cst_15 = arith.constant dense<0.000000e+00> : vector<128x64xf32>
    %50 = tpu.matmul %49, %48, %cst_15 {dimension_numbers = #tpu.dot_dimension_numbers<[1], [0], [0], [1], [0, 0, 1, 1], [], []>} : vector<128x64xbf16>, vector<64x64xbf16>, vector<128x64xf32> -> vector<128x64xf32>
    %c0_16 = arith.constant 0 : index
    %c0_17 = arith.constant 0 : index
    %51 = vector.load %arg8[%c0_16, %c0_17] : memref<1x64xf32, #tpu.memory_space<vmem>>, vector<1x64xf32>
    %52 = vector.broadcast %51 : vector<1x64xf32> to vector<128x64xf32>
    %53 = arith.addf %50, %52 : vector<128x64xf32>
    %cst_18 = arith.constant 0.000000e+00 : f32
    %54 = vector.broadcast %cst_18 : f32 to vector<128x64xf32>
    %55 = arith.maximumf %53, %54 : vector<128x64xf32>
    %c0_19 = arith.constant 0 : index
    %c0_20 = arith.constant 0 : index
    %56 = vector.load %arg9[%c0_19, %c0_20] : memref<64x64xbf16, #tpu.memory_space<vmem>>, vector<64x64xbf16>
    %57 = arith.truncf %55 : vector<128x64xf32> to vector<128x64xbf16>
    %cst_21 = arith.constant dense<0.000000e+00> : vector<128x64xf32>
    %58 = tpu.matmul %57, %56, %cst_21 {dimension_numbers = #tpu.dot_dimension_numbers<[1], [0], [0], [1], [0, 0, 1, 1], [], []>} : vector<128x64xbf16>, vector<64x64xbf16>, vector<128x64xf32> -> vector<128x64xf32>
    %c0_22 = arith.constant 0 : index
    %c0_23 = arith.constant 0 : index
    %59 = vector.load %arg10[%c0_22, %c0_23] : memref<1x64xf32, #tpu.memory_space<vmem>>, vector<1x64xf32>
    %60 = vector.broadcast %59 : vector<1x64xf32> to vector<128x64xf32>
    %61 = arith.addf %58, %60 : vector<128x64xf32>
    %cst_24 = arith.constant 0.000000e+00 : f32
    %62 = vector.broadcast %cst_24 : f32 to vector<128x64xf32>
    %63 = arith.maximumf %61, %62 : vector<128x64xf32>
    %c0_25 = arith.constant 0 : index
    %c0_26 = arith.constant 0 : index
    %64 = vector.load %arg11[%c0_25, %c0_26] : memref<64x128xbf16, #tpu.memory_space<vmem>>, vector<64x128xbf16>
    %65 = arith.truncf %63 : vector<128x64xf32> to vector<128x64xbf16>
    %cst_27 = arith.constant dense<0.000000e+00> : vector<128x128xf32>
    %66 = tpu.matmul %65, %64, %cst_27 {dimension_numbers = #tpu.dot_dimension_numbers<[1], [0], [0], [1], [0, 0, 1, 1], [], []>} : vector<128x64xbf16>, vector<64x128xbf16>, vector<128x128xf32> -> vector<128x128xf32>
    %c0_28 = arith.constant 0 : index
    %c0_29 = arith.constant 0 : index
    %67 = vector.load %arg12[%c0_28, %c0_29] : memref<1x128xf32, #tpu.memory_space<vmem>>, vector<1x128xf32>
    %68 = vector.broadcast %67 : vector<1x128xf32> to vector<128x128xf32>
    %69 = arith.addf %66, %68 : vector<128x128xf32>
    %cst_30 = arith.constant 0.000000e+00 : f32
    %70 = vector.broadcast %cst_30 : f32 to vector<128x128xf32>
    %71 = arith.maximumf %69, %70 : vector<128x128xf32>
    %c0_31 = arith.constant 0 : index
    %c0_32 = arith.constant 0 : index
    %72 = vector.load %arg13[%c0_31, %c0_32] : memref<128x128xbf16, #tpu.memory_space<vmem>>, vector<128x128xbf16>
    %73 = arith.truncf %71 : vector<128x128xf32> to vector<128x128xbf16>
    %cst_33 = arith.constant dense<0.000000e+00> : vector<128x128xf32>
    %74 = tpu.matmul %73, %72, %cst_33 {dimension_numbers = #tpu.dot_dimension_numbers<[1], [0], [0], [1], [0, 0, 1, 1], [], []>} : vector<128x128xbf16>, vector<128x128xbf16>, vector<128x128xf32> -> vector<128x128xf32>
    %c0_34 = arith.constant 0 : index
    %c0_35 = arith.constant 0 : index
    %75 = vector.load %arg14[%c0_34, %c0_35] : memref<1x128xf32, #tpu.memory_space<vmem>>, vector<1x128xf32>
    %76 = vector.broadcast %75 : vector<1x128xf32> to vector<128x128xf32>
    %77 = arith.addf %74, %76 : vector<128x128xf32>
    %cst_36 = arith.constant 0.000000e+00 : f32
    %78 = vector.broadcast %cst_36 : f32 to vector<128x128xf32>
    %79 = arith.maximumf %77, %78 : vector<128x128xf32>
    %c0_37 = arith.constant 0 : index
    %c0_38 = arith.constant 0 : index
    %80 = vector.load %arg15[%c0_37, %c0_38] : memref<128x16xbf16, #tpu.memory_space<vmem>>, vector<128x16xbf16>
    %81 = arith.truncf %79 : vector<128x128xf32> to vector<128x128xbf16>
    %cst_39 = arith.constant dense<0.000000e+00> : vector<128x16xf32>
    %82 = tpu.matmul %81, %80, %cst_39 {dimension_numbers = #tpu.dot_dimension_numbers<[1], [0], [0], [1], [0, 0, 1, 1], [], []>} : vector<128x128xbf16>, vector<128x16xbf16>, vector<128x16xf32> -> vector<128x16xf32>
    %c0_40 = arith.constant 0 : index
    %c0_41 = arith.constant 0 : index
    %83 = vector.load %arg16[%c0_40, %c0_41] : memref<1x16xf32, #tpu.memory_space<vmem>>, vector<1x16xf32>
    %84 = vector.broadcast %83 : vector<1x16xf32> to vector<128x16xf32>
    %85 = arith.addf %82, %84 : vector<128x16xf32>
    %cst_42 = arith.constant 0.000000e+00 : f32
    %86 = vector.broadcast %cst_42 : f32 to vector<128x16xf32>
    %87 = arith.maximumf %85, %86 : vector<128x16xf32>
    %88 = tpu.iota {dimensions = array<i32: 1>} : vector<128x16xi32>
    %c3_i32 = arith.constant 3 : i32
    %89 = vector.broadcast %c3_i32 : i32 to vector<128x16xi32>
    %90 = arith.cmpi sge, %88, %89 : vector<128x16xi32>
    %c6_i32 = arith.constant 6 : i32
    %91 = vector.broadcast %c6_i32 : i32 to vector<128x16xi32>
    %92 = arith.cmpi slt, %88, %91 : vector<128x16xi32>
    %93 = arith.andi %90, %92 : vector<128x16xi1>
    %c6_i32_43 = arith.constant 6 : i32
    %94 = vector.broadcast %c6_i32_43 : i32 to vector<128x16xi32>
    %95 = arith.cmpi sge, %88, %94 : vector<128x16xi32>
    %c10_i32 = arith.constant 10 : i32
    %96 = vector.broadcast %c10_i32 : i32 to vector<128x16xi32>
    %97 = arith.cmpi slt, %88, %96 : vector<128x16xi32>
    %98 = arith.andi %95, %97 : vector<128x16xi1>
    %cst_44 = arith.constant 0.000000e+00 : f32
    %99 = vector.broadcast %cst_44 : f32 to vector<128x16xf32>
    %100 = arith.select %98, %87, %99 : vector<128x16xi1>, vector<128x16xf32>
    %101 = arith.mulf %100, %100 : vector<128x16xf32>
    %cst_45 = arith.constant dense<0.000000e+00> : vector<128xf32>
    %102 = vector.multi_reduction <add>, %101, %cst_45 [1] : vector<128x16xf32> to vector<128xf32>
    %103 = vector.shape_cast %102 : vector<128xf32> to vector<128x1xf32>
    %cst_46 = arith.constant 1.000000e-24 : f32
    %104 = vector.broadcast %cst_46 : f32 to vector<128x1xf32>
    %105 = arith.addf %103, %104 : vector<128x1xf32>
    %106 = math.rsqrt %105 : vector<128x1xf32>
    %107 = arith.negf %87 : vector<128x16xf32>
    %108 = math.exp %107 : vector<128x16xf32>
    %cst_47 = arith.constant 1.000000e+00 : f32
    %109 = vector.broadcast %cst_47 : f32 to vector<128x16xf32>
    %110 = arith.addf %109, %108 : vector<128x16xf32>
    %111 = arith.divf %109, %110 : vector<128x16xf32>
    %112 = vector.broadcast %106 : vector<128x1xf32> to vector<128x16xf32>
    %113 = arith.mulf %100, %112 : vector<128x16xf32>
    %114 = arith.select %93, %111, %113 : vector<128x16xi1>, vector<128x16xf32>
    %cst_48 = arith.constant 0.000000e+00 : f32
    %115 = vector.broadcast %cst_48 : f32 to vector<128x13xf32>
    %116 = tpu.concatenate %37, %115 in 1 : vector<128x3xf32>, vector<128x13xf32> -> vector<128x16xf32>
    %117 = arith.addf %116, %114 : vector<128x16xf32>
    %cst_49 = arith.constant 0.00999999977 : f32
    %118 = vector.broadcast %cst_49 : f32 to vector<128x16xf32>
    %119 = arith.mulf %117, %118 : vector<128x16xf32>
    %c0_50 = arith.constant 0 : index
    %c0_51 = arith.constant 0 : index
    %120 = vector.load %arg17[%c0_50, %c0_51] : memref<128x16xf32, #tpu.memory_space<vmem>>, vector<128x16xf32>
    tpu.vector_store %arg17[%c0_50, %c0_51], %119 {strides = array<i32>} : memref<128x16xf32, #tpu.memory_space<vmem>>, vector<128x16xf32>,
    return
  }
  func.func @transform_0(%arg0: i32) -> (i32, i32) {
    %c0_i32 = arith.constant 0 : i32
    %c0_i32_0 = arith.constant 0 : i32
    return %arg0, %c0_i32 : i32, i32
  }
  func.func @transform_1(%arg0: i32) -> (i32, i32) {
    %c0_i32 = arith.constant 0 : i32
    %c0_i32_0 = arith.constant 0 : i32
    %c0_i32_1 = arith.constant 0 : i32
    return %c0_i32, %c0_i32_0 : i32, i32
  }
  func.func @transform_2(%arg0: i32) -> (i32, i32) {
    %c0_i32 = arith.constant 0 : i32
    %c0_i32_0 = arith.constant 0 : i32
    return %arg0, %c0_i32 : i32, i32
  }
  func.func @transform_3(%arg0: i32) -> (i32, i32) {
    %c0_i32 = arith.constant 0 : i32
    %c0_i32_0 = arith.constant 0 : i32
    return %arg0, %c0_i32 : i32, i32
  }
  func.func @transform_4(%arg0: i32) -> (i32, i32) {
    %c0_i32 = arith.constant 0 : i32
    %c0_i32_0 = arith.constant 0 : i32
    %c0_i32_1 = arith.constant 0 : i32
    return %c0_i32, %c0_i32_0 : i32, i32
  }
  func.func @transform_5(%arg0: i32) -> (i32, i32) {
    %c0_i32 = arith.constant 0 : i32
    %c0_i32_0 = arith.constant 0 : i32
    %c0_i32_1 = arith.constant 0 : i32
    return %c0_i32, %c0_i32_0 : i32, i32
  }
  func.func @transform_6(%arg0: i32) -> (i32, i32) {
    %c0_i32 = arith.constant 0 : i32
    %c0_i32_0 = arith.constant 0 : i32
    %c0_i32_1 = arith.constant 0 : i32
    return %c0_i32, %c0_i32_0 : i32, i32
  }
  func.func @transform_7(%arg0: i32) -> (i32, i32) {
    %c0_i32 = arith.constant 0 : i32
    %c0_i32_0 = arith.constant 0 : i32
    %c0_i32_1 = arith.constant 0 : i32
    return %c0_i32, %c0_i32_0 : i32, i32
  }
  func.func @transform_8(%arg0: i32) -> (i32, i32) {
    %c0_i32 = arith.constant 0 : i32
    %c0_i32_0 = arith.constant 0 : i32
    %c0_i32_1 = arith.constant 0 : i32
    return %c0_i32, %c0_i32_0 : i32, i32
  }
  func.func @transform_9(%arg0: i32) -> (i32, i32) {
    %c0_i32 = arith.constant 0 : i32
    %c0_i32_0 = arith.constant 0 : i32
    %c0_i32_1 = arith.constant 0 : i32
    return %c0_i32, %c0_i32_0 : i32, i32
  }
  func.func @transform_10(%arg0: i32) -> (i32, i32) {
    %c0_i32 = arith.constant 0 : i32
    %c0_i32_0 = arith.constant 0 : i32
    %c0_i32_1 = arith.constant 0 : i32
    return %c0_i32, %c0_i32_0 : i32, i32
  }
  func.func @transform_11(%arg0: i32) -> (i32, i32) {
    %c0_i32 = arith.constant 0 : i32
    %c0_i32_0 = arith.constant 0 : i32
    %c0_i32_1 = arith.constant 0 : i32
    return %c0_i32, %c0_i32_0 : i32, i32
  }
  func.func @transform_12(%arg0: i32) -> (i32, i32) {
    %c0_i32 = arith.constant 0 : i32
    %c0_i32_0 = arith.constant 0 : i32
    %c0_i32_1 = arith.constant 0 : i32
    return %c0_i32, %c0_i32_0 : i32, i32
  }
  func.func @transform_13(%arg0: i32) -> (i32, i32) {
    %c0_i32 = arith.constant 0 : i32
    %c0_i32_0 = arith.constant 0 : i32
    %c0_i32_1 = arith.constant 0 : i32
    return %c0_i32, %c0_i32_0 : i32, i32
  }
  func.func @transform_14(%arg0: i32) -> (i32, i32) {
    %c0_i32 = arith.constant 0 : i32
    %c0_i32_0 = arith.constant 0 : i32
    %c0_i32_1 = arith.constant 0 : i32
    return %c0_i32, %c0_i32_0 : i32, i32
  }
  func.func @transform_15(%arg0: i32) -> (i32, i32) {
    %c0_i32 = arith.constant 0 : i32
    %c0_i32_0 = arith.constant 0 : i32
    %c0_i32_1 = arith.constant 0 : i32
    return %c0_i32, %c0_i32_0 : i32, i32
  }
  func.func @transform_16(%arg0: i32) -> (i32, i32) {
    %c0_i32 = arith.constant 0 : i32
    %c0_i32_0 = arith.constant 0 : i32
    return %arg0, %c0_i32 : i32, i32
  }
}

</mosaic_0001>

<llo_original>
// kernel: my_deform_forward.2
$region0: #{my_deform_forward.2}
  #allocation0 [shape = 'u32[]', space=smem, size = 0x4, offset = 0x4, fixed_abs, tag = 'smem constant byte address 0x4 - core index']
  #allocation1 [shape = 'u32[144,128]{1,0:T(1,128)}', space=vmem, size = 0x12000, scoped, tag = 'internal scratch']
  %s0 = inlined_call_operand.vmem [shape: f32[256,3], index: 0, kind: input, shape index: {}]
  %s1 = inlined_call_operand.vmem [shape: f32[3,256], index: 1, kind: input, shape index: {}]
  %s2 = inlined_call_operand.vmem [shape: f32[1,256], index: 2, kind: input, shape index: {}]
  %s3 = inlined_call_operand.vmem [shape: bf16[256,256], index: 3, kind: input, shape index: {}]
  %s4 = inlined_call_operand.vmem [shape: f32[1,256], index: 4, kind: input, shape index: {}]
  %s5 = inlined_call_operand.vmem [shape: bf16[256,256], index: 5, kind: input, shape index: {}]
  %s6 = inlined_call_operand.vmem [shape: f32[1,256], index: 6, kind: input, shape index: {}]
  %s7 = inlined_call_operand.vmem [shape: bf16[256,623], index: 7, kind: input, shape index: {}]
  %s8 = inlined_call_operand.vmem [shape: f32[1,623], index: 8, kind: input, shape index: {}]
  %s9 = inlined_call_operand.vmem [shape: bf16[512,16], index: 9, kind: input, shape index: {}]
  %s10 = inlined_call_operand.vmem [shape: f32[1,16], index: 10, kind: input, shape index: {}]
  %s11 = inlined_call_operand.vmem [shape: f32[256,3], index: 11, kind: input, shape index: {}]
  %s12 = inlined_call_operand.vmem [shape: f32[1,3], index: 12, kind: input, shape index: {}]
  %s13 = inlined_call_operand.vmem [shape: f32[256,16], index: 13, kind: output, shape index: {0}]
  %s14 = inlined_call_operand.vmem [shape: f32[256,128], index: 14, kind: output, shape index: {1}]
  %15 = xla_tuple %s13, %s14
  %s16 = sld [smem:[#allocation0]]
  $region93: #{my_deform_forward.2} parent=0
    _
  %s18 = ssub.s32 1, %s16
  %s19 = scalar_select 0, %s18, %s16
  loop: start=0, step=1, limit=4
  $region2: #{my_deform_forward.2} parent=0 // loop_pre_header
    _
  $region3: #{my_deform_forward.2} parent=0 // loop_header
    %s21 = sphi 0, %s25
    %p22 = scmp.ge.s32.totalorder %s21, 4
    %s31 = sphi 0, %s33
    %s34 = sphi 0, %s31
    %s35 = sphi 0, %s34
    %s51 = sphi 0, %s35
    %s55 = sphi 0, %s55
    %s57 = sphi 0, %s55
    %s58 = sphi 0, %s57
    %s72 = sphi 0, %s58
    %s76 = sphi 0, %s76
    %s78 = sphi 0, %s76
    %s79 = sphi 0, %s78
    %s93 = sphi 0, %s79
    %s97 = sphi 0, %s97
    %s99 = sphi 0, %s97
    %s100 = sphi 0, %s99
    %s114 = sphi 0, %s100
    %s118 = sphi 0, %s118
    %s120 = sphi 0, %s118
    %s121 = sphi 0, %s120
    %s135 = sphi 0, %s121
    %s139 = sphi 0, %s139
    %s141 = sphi 0, %s139
    %s142 = sphi 0, %s141
    %s156 = sphi 0, %s142
    %s160 = sphi 0, %s160
    %s162 = sphi 0, %s160
    %s163 = sphi 0, %s162
    %s177 = sphi 0, %s163
    %s181 = sphi 0, %s181
    %s183 = sphi 0, %s181
    %s184 = sphi 0, %s183
    %s198 = sphi 0, %s184
    %s202 = sphi 0, %s202
    %s204 = sphi 0, %s202
    %s205 = sphi 0, %s204
    %s219 = sphi 0, %s205
    %s223 = sphi 0, %s223
    %s225 = sphi 0, %s223
    %s226 = sphi 0, %s225
    %s240 = sphi 0, %s226
    %s244 = sphi 0, %s244
    %s246 = sphi 0, %s244
    %s247 = sphi 0, %s246
    %s261 = sphi 0, %s247
    %s265 = sphi 0, %s265
    %s267 = sphi 0, %s265
    %s268 = sphi 0, %s267
    %s282 = sphi 0, %s268
    %s286 = sphi 0, %s286
    %s288 = sphi 0, %s286
    %s289 = sphi 0, %s288
    %s303 = sphi 0, %s289
    %s309 = sphi 0, %s311
    %s312 = sphi 0, %s309
    %s313 = sphi 0, %s312
    %s329 = sphi 0, %s313
    %s335 = sphi 0, %s337
    %s338 = sphi 0, %s335
    %s339 = sphi 0, %s338
    %s355 = sphi 0, %s339
  $region4: #{my_deform_forward.2} parent=0 // loop_header_branch
    %24 = sbr.rel (%p22) target = $region8
  $region5: #{my_deform_forward.2} parent=0 // loop_body
    %s26 = ssub.s32 %s21, 1
    %s27 = ssub.s32 %s21, 2
    %s28 = sadd.s32 %s21, 1
    %s29 = ssub.s32 %s21, %s28
    %p30 = scmp.eq.s32.totalorder %s29, 0
    %s32 = sadd.s32 %s31, 1
    %s33 = scalar_select %p30, %s31, %s32
    %p36 = pneg %p30
    %p37 = scmp.eq.s32.totalorder %s21, 1
    %p38 = por %p36, %p37
    %p39 = scmp.ne.s32.totalorder %s31, %s34
    %p40 = scmp.eq.s32.totalorder %s21, 0
    %p41 = por %p39, %p40
    %p42 = scmp.ne.s32.totalorder %s31, %s34
    %p43 = scmp.eq.s32.totalorder %s26, 1
    %p44 = por %p42, %p43
    %p45 = scmp.ne.s32.totalorder %s34, %s35
    %p46 = scmp.eq.s32.totalorder %s26, 0
    %p47 = por %p45, %p46
    %p48 = scmp.ne.s32.totalorder %s34, %s35
    %p49 = scmp.eq.s32.totalorder %s27, 1
    %p50 = por %p48, %p49
    %p52 = scmp.ne.s32.totalorder %s35, %s51
    %p53 = scmp.eq.s32.totalorder %s27, 0
    %p54 = por %p52, %p53
    %s56 = sadd.s32 %s55, 1
    %p59 = scmp.eq.s32.totalorder %s21, 1
    %p60 = scmp.ne.s32.totalorder %s55, %s57
    %p61 = scmp.eq.s32.totalorder %s21, 0
    %p62 = por %p60, %p61
    %p63 = scmp.ne.s32.totalorder %s55, %s57
    %p64 = scmp.eq.s32.totalorder %s26, 1
    %p65 = por %p63, %p64
    %p66 = scmp.ne.s32.totalorder %s57, %s58
    %p67 = scmp.eq.s32.totalorder %s26, 0
    %p68 = por %p66, %p67
    %p69 = scmp.ne.s32.totalorder %s57, %s58
    %p70 = scmp.eq.s32.totalorder %s27, 1
    %p71 = por %p69, %p70
    %p73 = scmp.ne.s32.totalorder %s58, %s72
    %p74 = scmp.eq.s32.totalorder %s27, 0
    %p75 = por %p73, %p74
    %s77 = sadd.s32 %s76, 1
    %p80 = scmp.eq.s32.totalorder %s21, 1
    %p81 = scmp.ne.s32.totalorder %s76, %s78
    %p82 = scmp.eq.s32.totalorder %s21, 0
    %p83 = por %p81, %p82
    %p84 = scmp.ne.s32.totalorder %s76, %s78
    %p85 = scmp.eq.s32.totalorder %s26, 1
    %p86 = por %p84, %p85
    %p87 = scmp.ne.s32.totalorder %s78, %s79
    %p88 = scmp.eq.s32.totalorder %s26, 0
    %p89 = por %p87, %p88
    %p90 = scmp.ne.s32.totalorder %s78, %s79
    %p91 = scmp.eq.s32.totalorder %s27, 1
    %p92 = por %p90, %p91
    %p94 = scmp.ne.s32.totalorder %s79, %s93
    %p95 = scmp.eq.s32.totalorder %s27, 0
    %p96 = por %p94, %p95
    %s98 = sadd.s32 %s97, 1
    %p101 = scmp.eq.s32.totalorder %s21, 1
    %p102 = scmp.ne.s32.totalorder %s97, %s99
    %p103 = scmp.eq.s32.totalorder %s21, 0
    %p104 = por %p102, %p103
    %p105 = scmp.ne.s32.totalorder %s97, %s99
    %p106 = scmp.eq.s32.totalorder %s26, 1
    %p107 = por %p105, %p106
    %p108 = scmp.ne.s32.totalorder %s99, %s100
    %p109 = scmp.eq.s32.totalorder %s26, 0
    %p110 = por %p108, %p109
    %p111 = scmp.ne.s32.totalorder %s99, %s100
    %p112 = scmp.eq.s32.totalorder %s27, 1
    %p113 = por %p111, %p112
    %p115 = scmp.ne.s32.totalorder %s100, %s114
    %p116 = scmp.eq.s32.totalorder %s27, 0
    %p117 = por %p115, %p116
    %s119 = sadd.s32 %s118, 1
    %p122 = scmp.eq.s32.totalorder %s21, 1
    %p123 = scmp.ne.s32.totalorder %s118, %s120
    %p124 = scmp.eq.s32.totalorder %s21, 0
    %p125 = por %p123, %p124
    %p126 = scmp.ne.s32.totalorder %s118, %s120
    %p127 = scmp.eq.s32.totalorder %s26, 1
    %p128 = por %p126, %p127
    %p129 = scmp.ne.s32.totalorder %s120, %s121
    %p130 = scmp.eq.s32.totalorder %s26, 0
    %p131 = por %p129, %p130
    %p132 = scmp.ne.s32.totalorder %s120, %s121
    %p133 = scmp.eq.s32.totalorder %s27, 1
    %p134 = por %p132, %p133
    %p136 = scmp.ne.s32.totalorder %s121, %s135
    %p137 = scmp.eq.s32.totalorder %s27, 0
    %p138 = por %p136, %p137
    %s140 = sadd.s32 %s139, 1
    %p143 = scmp.eq.s32.totalorder %s21, 1
    %p144 = scmp.ne.s32.totalorder %s139, %s141
    %p145 = scmp.eq.s32.totalorder %s21, 0
    %p146 = por %p144, %p145
    %p147 = scmp.ne.s32.totalorder %s139, %s141
    %p148 = scmp.eq.s32.totalorder %s26, 1
    %p149 = por %p147, %p148
    %p150 = scmp.ne.s32.totalorder %s141, %s142
    %p151 = scmp.eq.s32.totalorder %s26, 0
    %p152 = por %p150, %p151
    %p153 = scmp.ne.s32.totalorder %s141, %s142
    %p154 = scmp.eq.s32.totalorder %s27, 1
    %p155 = por %p153, %p154
    %p157 = scmp.ne.s32.totalorder %s142, %s156
    %p158 = scmp.eq.s32.totalorder %s27, 0
    %p159 = por %p157, %p158
    %s161 = sadd.s32 %s160, 1
    %p164 = scmp.eq.s32.totalorder %s21, 1
    %p165 = scmp.ne.s32.totalorder %s160, %s162
    %p166 = scmp.eq.s32.totalorder %s21, 0
    %p167 = por %p165, %p166
    %p168 = scmp.ne.s32.totalorder %s160, %s162
    %p169 = scmp.eq.s32.totalorder %s26, 1
    %p170 = por %p168, %p169
    %p171 = scmp.ne.s32.totalorder %s162, %s163
    %p172 = scmp.eq.s32.totalorder %s26, 0
    %p173 = por %p171, %p172
    %p174 = scmp.ne.s32.totalorder %s162, %s163
    %p175 = scmp.eq.s32.totalorder %s27, 1
    %p176 = por %p174, %p175
    %p178 = scmp.ne.s32.totalorder %s163, %s177
    %p179 = scmp.eq.s32.totalorder %s27, 0
    %p180 = por %p178, %p179
    %s182 = sadd.s32 %s181, 1
    %p185 = scmp.eq.s32.totalorder %s21, 1
    %p186 = scmp.ne.s32.totalorder %s181, %s183
    %p187 = scmp.eq.s32.totalorder %s21, 0
    %p188 = por %p186, %p187
    %p189 = scmp.ne.s32.totalorder %s181, %s183
    %p190 = scmp.eq.s32.totalorder %s26, 1
    %p191 = por %p189, %p190
    %p192 = scmp.ne.s32.totalorder %s183, %s184
    %p193 = scmp.eq.s32.totalorder %s26, 0
    %p194 = por %p192, %p193
    %p195 = scmp.ne.s32.totalorder %s183, %s184
    %p196 = scmp.eq.s32.totalorder %s27, 1
    %p197 = por %p195, %p196
    %p199 = scmp.ne.s32.totalorder %s184, %s198
    %p200 = scmp.eq.s32.totalorder %s27, 0
    %p201 = por %p199, %p200
    %s203 = sadd.s32 %s202, 1
    %p206 = scmp.eq.s32.totalorder %s21, 1
    %p207 = scmp.ne.s32.totalorder %s202, %s204
    %p208 = scmp.eq.s32.totalorder %s21, 0
    %p209 = por %p207, %p208
    %p210 = scmp.ne.s32.totalorder %s202, %s204
    %p211 = scmp.eq.s32.totalorder %s26, 1
    %p212 = por %p210, %p211
    %p213 = scmp.ne.s32.totalorder %s204, %s205
    %p214 = scmp.eq.s32.totalorder %s26, 0
    %p215 = por %p213, %p214
    %p216 = scmp.ne.s32.totalorder %s204, %s205
    %p217 = scmp.eq.s32.totalorder %s27, 1
    %p218 = por %p216, %p217
    %p220 = scmp.ne.s32.totalorder %s205, %s219
    %p221 = scmp.eq.s32.totalorder %s27, 0
    %p222 = por %p220, %p221
    %s224 = sadd.s32 %s223, 1
    %p227 = scmp.eq.s32.totalorder %s21, 1
    %p228 = scmp.ne.s32.totalorder %s223, %s225
    %p229 = scmp.eq.s32.totalorder %s21, 0
    %p230 = por %p228, %p229
    %p231 = scmp.ne.s32.totalorder %s223, %s225
    %p232 = scmp.eq.s32.totalorder %s26, 1
    %p233 = por %p231, %p232
    %p234 = scmp.ne.s32.totalorder %s225, %s226
    %p235 = scmp.eq.s32.totalorder %s26, 0
    %p236 = por %p234, %p235
    %p237 = scmp.ne.s32.totalorder %s225, %s226
    %p238 = scmp.eq.s32.totalorder %s27, 1
    %p239 = por %p237, %p238
    %p241 = scmp.ne.s32.totalorder %s226, %s240
    %p242 = scmp.eq.s32.totalorder %s27, 0
    %p243 = por %p241, %p242
    %s245 = sadd.s32 %s244, 1
    %p248 = scmp.eq.s32.totalorder %s21, 1
    %p249 = scmp.ne.s32.totalorder %s244, %s246
    %p250 = scmp.eq.s32.totalorder %s21, 0
    %p251 = por %p249, %p250
    %p252 = scmp.ne.s32.totalorder %s244, %s246
    %p253 = scmp.eq.s32.totalorder %s26, 1
    %p254 = por %p252, %p253
    %p255 = scmp.ne.s32.totalorder %s246, %s247
    %p256 = scmp.eq.s32.totalorder %s26, 0
    %p257 = por %p255, %p256
    %p258 = scmp.ne.s32.totalorder %s246, %s247
    %p259 = scmp.eq.s32.totalorder %s27, 1
    %p260 = por %p258, %p259
    %p262 = scmp.ne.s32.totalorder %s247, %s261
    %p263 = scmp.eq.s32.totalorder %s27, 0
    %p264 = por %p262, %p263
    %s266 = sadd.s32 %s265, 1
    %p269 = scmp.eq.s32.totalorder %s21, 1
    %p270 = scmp.ne.s32.totalorder %s265, %s267
    %p271 = scmp.eq.s32.totalorder %s21, 0
    %p272 = por %p270, %p271
    %p273 = scmp.ne.s32.totalorder %s265, %s267
    %p274 = scmp.eq.s32.totalorder %s26, 1
    %p275 = por %p273, %p274
    %p276 = scmp.ne.s32.totalorder %s267, %s268
    %p277 = scmp.eq.s32.totalorder %s26, 0
    %p278 = por %p276, %p277
    %p279 = scmp.ne.s32.totalorder %s267, %s268
    %p280 = scmp.eq.s32.totalorder %s27, 1
    %p281 = por %p279, %p280
    %p283 = scmp.ne.s32.totalorder %s268, %s282
    %p284 = scmp.eq.s32.totalorder %s27, 0
    %p285 = por %p283, %p284
    %s287 = sadd.s32 %s286, 1
    %p290 = scmp.eq.s32.totalorder %s21, 1
    %p291 = scmp.ne.s32.totalorder %s286, %s288
    %p292 = scmp.eq.s32.totalorder %s21, 0
    %p293 = por %p291, %p292
    %p294 = scmp.ne.s32.totalorder %s286, %s288
    %p295 = scmp.eq.s32.totalorder %s26, 1
    %p296 = por %p294, %p295
    %p297 = scmp.ne.s32.totalorder %s288, %s289
    %p298 = scmp.eq.s32.totalorder %s26, 0
    %p299 = por %p297, %p298
    %p300 = scmp.ne.s32.totalorder %s288, %s289
    %p301 = scmp.eq.s32.totalorder %s27, 1
    %p302 = por %p300, %p301
    %p304 = scmp.ne.s32.totalorder %s289, %s303
    %p305 = scmp.eq.s32.totalorder %s27, 0
    %p306 = por %p304, %p305
    %s307 = ssub.s32 %s21, %s28
    %p308 = scmp.eq.s32.totalorder %s307, 0
    %s310 = sadd.s32 %s309, 1
    %s311 = scalar_select %p308, %s309, %s310
    %p314 = pneg %p308
    %p315 = scmp.eq.s32.totalorder %s21, 1
    %p316 = por %p314, %p315
    %p317 = scmp.ne.s32.totalorder %s309, %s312
    %p318 = scmp.eq.s32.totalorder %s21, 0
    %p319 = por %p317, %p318
    %p320 = scmp.ne.s32.totalorder %s309, %s312
    %p321 = scmp.eq.s32.totalorder %s26, 1
    %p322 = por %p320, %p321
    %p323 = scmp.ne.s32.totalorder %s312, %s313
    %p324 = scmp.eq.s32.totalorder %s26, 0
    %p325 = por %p323, %p324
    %p326 = scmp.ne.s32.totalorder %s312, %s313
    %p327 = scmp.eq.s32.totalorder %s27, 1
    %p328 = por %p326, %p327
    %p330 = scmp.ne.s32.totalorder %s313, %s329
    %p331 = scmp.eq.s32.totalorder %s27, 0
    %p332 = por %p330, %p331
    %s333 = ssub.s32 %s21, %s28
    %p334 = scmp.eq.s32.totalorder %s333, 0
    %s336 = sadd.s32 %s335, 1
    %s337 = scalar_select %p334, %s335, %s336
    %p340 = pneg %p334
    %p341 = scmp.eq.s32.totalorder %s21, 1
    %p342 = por %p340, %p341
    %p343 = scmp.ne.s32.totalorder %s335, %s338
    %p344 = scmp.eq.s32.totalorder %s21, 0
    %p345 = por %p343, %p344
    %p346 = scmp.ne.s32.totalorder %s335, %s338
    %p347 = scmp.eq.s32.totalorder %s26, 1
    %p348 = por %p346, %p347
    %p349 = scmp.ne.s32.totalorder %s338, %s339
    %p350 = scmp.eq.s32.totalorder %s26, 0
    %p351 = por %p349, %p350
    %p352 = scmp.ne.s32.totalorder %s338, %s339
    %p353 = scmp.eq.s32.totalorder %s27, 1
    %p354 = por %p352, %p353
    %p356 = scmp.ne.s32.totalorder %s339, %s355
    %p357 = scmp.eq.s32.totalorder %s27, 0
    %p358 = por %p356, %p357
    %p359 = scmp.le.s32.totalorder 1, %s21
    %p360 = scmp.lt.s32.totalorder %s21, 3
    %p361 = pnand %p359, %p360
    %p362 = pneg %p361
    // Predicated region
    $region9: #{my_deform_forward.2} parent=5 // pred_check
      _
    $region10: #{my_deform_forward.2} parent=5 // pred_check_branch
      %364 = sbr.rel (%p361) target = $region12
    $region11: #{my_deform_forward.2} parent=5 // pred_region
      %s365 = ssub.s32 %s21, 1
      // Predicated region
      $region13: #{my_deform_forward.2} parent=11 // pred_check
        %p366 = pneg %p68
      $region14: #{my_deform_forward.2} parent=11 // pred_check_branch
        %368 = sbr.rel (%p366) target = $region16
      $region15: #{my_deform_forward.2} parent=11 // pred_region
        _
      $region16: #{my_deform_forward.2} parent=11 // pred_fallthru
        _
      // Predicated region
      $region17: #{my_deform_forward.2} parent=11 // pred_check
        %p369 = pneg %p89
      $region18: #{my_deform_forward.2} parent=11 // pred_check_branch
        %371 = sbr.rel (%p369) target = $region20
      $region19: #{my_deform_forward.2} parent=11 // pred_region
        _
      $region20: #{my_deform_forward.2} parent=11 // pred_fallthru
        _
      // Predicated region
      $region21: #{my_deform_forward.2} parent=11 // pred_check
        %p372 = pneg %p110
      $region22: #{my_deform_forward.2} parent=11 // pred_check_branch
        %374 = sbr.rel (%p372) target = $region24
      $region23: #{my_deform_forward.2} parent=11 // pred_region
        _
      $region24: #{my_deform_forward.2} parent=11 // pred_fallthru
        _
      // Predicated region
      $region25: #{my_deform_forward.2} parent=11 // pred_check
        %p375 = pneg %p131
      $region26: #{my_deform_forward.2} parent=11 // pred_check_branch
        %377 = sbr.rel (%p375) target = $region28
      $region27: #{my_deform_forward.2} parent=11 // pred_region
        _
      $region28: #{my_deform_forward.2} parent=11 // pred_fallthru
        _
      // Predicated region
      $region29: #{my_deform_forward.2} parent=11 // pred_check
        %p378 = pneg %p152
      $region30: #{my_deform_forward.2} parent=11 // pred_check_branch
        %380 = sbr.rel (%p378) target = $region32
      $region31: #{my_deform_forward.2} parent=11 // pred_region
        _
      $region32: #{my_deform_forward.2} parent=11 // pred_fallthru
        _
      // Predicated region
      $region33: #{my_deform_forward.2} parent=11 // pred_check
        %p381 = pneg %p173
      $region34: #{my_deform_forward.2} parent=11 // pred_check_branch
        %383 = sbr.rel (%p381) target = $region36
      $region35: #{my_deform_forward.2} parent=11 // pred_region
        _
      $region36: #{my_deform_forward.2} parent=11 // pred_fallthru
        _
      // Predicated region
      $region37: #{my_deform_forward.2} parent=11 // pred_check
        %p384 = pneg %p194
      $region38: #{my_deform_forward.2} parent=11 // pred_check_branch
        %386 = sbr.rel (%p384) target = $region40
      $region39: #{my_deform_forward.2} parent=11 // pred_region
        _
      $region40: #{my_deform_forward.2} parent=11 // pred_fallthru
        _
      // Predicated region
      $region41: #{my_deform_forward.2} parent=11 // pred_check
        %p387 = pneg %p215
      $region42: #{my_deform_forward.2} parent=11 // pred_check_branch
        %389 = sbr.rel (%p387) target = $region44
      $region43: #{my_deform_forward.2} parent=11 // pred_region
        _
      $region44: #{my_deform_forward.2} parent=11 // pred_fallthru
        _
      // Predicated region
      $region45: #{my_deform_forward.2} parent=11 // pred_check
        %p390 = pneg %p236
      $region46: #{my_deform_forward.2} parent=11 // pred_check_branch
        %392 = sbr.rel (%p390) target = $region48
      $region47: #{my_deform_forward.2} parent=11 // pred_region
        _
      $region48: #{my_deform_forward.2} parent=11 // pred_fallthru
        _
      // Predicated region
      $region49: #{my_deform_forward.2} parent=11 // pred_check
        %p393 = pneg %p257
      $region50: #{my_deform_forward.2} parent=11 // pred_check_branch
        %395 = sbr.rel (%p393) target = $region52
      $region51: #{my_deform_forward.2} parent=11 // pred_region
        _
      $region52: #{my_deform_forward.2} parent=11 // pred_fallthru
        _
      // Predicated region
      $region53: #{my_deform_forward.2} parent=11 // pred_check
        %p396 = pneg %p278
      $region54: #{my_deform_forward.2} parent=11 // pred_check_branch
        %398 = sbr.rel (%p396) target = $region56
      $region55: #{my_deform_forward.2} parent=11 // pred_region
        _
      $region56: #{my_deform_forward.2} parent=11 // pred_fallthru
        _
      // Predicated region
      $region57: #{my_deform_forward.2} parent=11 // pred_check
        %p399 = pneg %p299
      $region58: #{my_deform_forward.2} parent=11 // pred_check_branch
        %401 = sbr.rel (%p399) target = $region60
      $region59: #{my_deform_forward.2} parent=11 // pred_region
        _
      $region60: #{my_deform_forward.2} parent=11 // pred_fallthru
        _
    $region12: #{my_deform_forward.2} parent=5 // pred_fallthru
      _
    %p402 = scmp.lt.s32.totalorder %s21, 2
    // Predicated region
    $region61: #{my_deform_forward.2} parent=5 // pred_check
      %p403 = pneg %p402
    $region62: #{my_deform_forward.2} parent=5 // pred_check_branch
      %405 = sbr.rel (%p403) target = $region64
    $region63: #{my_deform_forward.2} parent=5 // pred_region
      // Predicated region
      $region65: #{my_deform_forward.2} parent=63 // pred_check
        %p406 = pneg %p41
      $region66: #{my_deform_forward.2} parent=63 // pred_check_branch
        %408 = sbr.rel (%p406) target = $region68
      $region67: #{my_deform_forward.2} parent=63 // pred_region
        %s409 = smul.u32 16, %s21
        %p410 = scmp.lt.s32.totalorder %s409, 31
        %s411 = scalar_select %p410, %s409, 31
        %s412 = smul.addr %s411, 8
        %s413 = scalar_lea.vmem %s0, %s412
        %s414 = smul.u32 16, %s21
      $region68: #{my_deform_forward.2} parent=63 // pred_fallthru
        _
    $region64: #{my_deform_forward.2} parent=5 // pred_fallthru
      _
    %p415 = scmp.le.s32.totalorder 1, %s21
    %p416 = scmp.lt.s32.totalorder %s21, 3
    %p417 = pnand %p415, %p416
    %p418 = pneg %p417
    // Predicated region
    $region69: #{my_deform_forward.2} parent=5 // pred_check
      _
    $region70: #{my_deform_forward.2} parent=5 // pred_check_branch
      %420 = sbr.rel (%p417) target = $region72
    $region71: #{my_deform_forward.2} parent=5 // pred_region
      %s421 = ssub.s32 %s21, 1
      %s422 = smul.u32 16, %s26
      %p423 = scmp.lt.s32.totalorder %s422, 31
      %s424 = scalar_select %p423, %s422, 31
      %s425 = smul.addr %s424, 8
      %s426 = scalar_lea.vmem %s0, %s425
      %p427 = pneg %p47
      %p428 = pneg %p44
      %p429 = pneg %p68
      %p430 = pneg %p65
      %p431 = pneg %p89
      %p432 = pneg %p86
      %p433 = pneg %p110
      %p434 = pneg %p107
      %p435 = pneg %p131
      %p436 = pneg %p128
      %p437 = pneg %p152
      %p438 = pneg %p149
      %p439 = pneg %p173
      %p440 = pneg %p170
      %p441 = pneg %p194
      %p442 = pneg %p191
      %p443 = pneg %p215
      %p444 = pneg %p212
      %p445 = pneg %p236
      %p446 = pneg %p233
      %p447 = pneg %p257
      %p448 = pneg %p254
      %p449 = pneg %p278
      %p450 = pneg %p275
      %p451 = pneg %p299
      %p452 = pneg %p296
      %p453 = pneg %p325
      %p454 = pneg %p322
      %s455 = smul.u32 16, %s26
      %p456 = scmp.lt.s32.totalorder %s455, 31
      %s457 = scalar_select %p456, %s455, 31
      %s458 = smul.addr %s457, 8
      %s459 = scalar_lea.vmem %s13, %s458
      %p460 = pneg %p351
      %p461 = pneg %p348
      %s462 = smul.u32 16, %s26
      %p463 = scmp.lt.s32.totalorder %s462, 31
      %s464 = scalar_select %p463, %s462, 31
      %s465 = smul.addr %s464, 8
      %s466 = scalar_lea.vmem %s14, %s465
      %s467 = smul.u32 16, %s26
      %p468 = scmp.lt.s32.totalorder %s467, 31
      %s469 = scalar_select %p468, %s467, 31
      %s470 = smul.addr %s469, 8
      %s471 = scalar_lea.vmem %s0, %s470
      %s472 = smul.u32 16, %s26
      %s473 = smul.u32 16, %s26
      %p474 = scmp.lt.s32.totalorder %s473, 31
      %s475 = scalar_select %p474, %s473, 31
      %s476 = smul.addr %s475, 8
      %s477 = scalar_lea.vmem %s13, %s476
      %s478 = smul.u32 16, %s26
      %s479 = smul.u32 16, %s26
      %p480 = scmp.lt.s32.totalorder %s479, 31
      %s481 = scalar_select %p480, %s479, 31
      %s482 = smul.addr %s481, 8
      %s483 = scalar_lea.vmem %s14, %s482
      %s484 = smul.u32 16, %s26
      %v486 = vld [vmem:[%s471] sm:$0xff]
      %v487 = vld [vmem:[%s471 + $0x8] sm:$0xff]
      %v488 = vld [vmem:[%s471 + $0x10] sm:$0xff]
      %v489 = vld [vmem:[%s471 + $0x18] sm:$0xff]
      %v490 = vld [vmem:[%s471 + $0x20] sm:$0xff]
      %v491 = vld [vmem:[%s471 + $0x28] sm:$0xff]
      %v492 = vld [vmem:[%s471 + $0x30] sm:$0xff]
      %v493 = vld [vmem:[%s471 + $0x38] sm:$0xff]
      %v494 = vld [vmem:[%s471 + $0x40] sm:$0xff]
      %v495 = vld [vmem:[%s471 + $0x48] sm:$0xff]
      %v496 = vld [vmem:[%s471 + $0x50] sm:$0xff]
      %v497 = vld [vmem:[%s471 + $0x58] sm:$0xff]
      %v498 = vld [vmem:[%s471 + $0x60] sm:$0xff]
      %v499 = vld [vmem:[%s471 + $0x68] sm:$0xff]
      %v500 = vld [vmem:[%s471 + $0x70] sm:$0xff]
      %v501 = vld [vmem:[%s471 + $0x78] sm:$0xff]
      %v502 = vld [vmem:[%s1] sm:$0x77]
      %v503 = vld [vmem:[%s2] sm:$0x3]
      %v505 = vlaneseq
      %v506 = vshrl.u32 %v505, 7
      %v507 = vsub.s32 0, %v506
      %v508 = vrot.slane %v503, %v507
      %v509 = vlaneseq
      %v510 = vshrl.u32 %v509, 7
      %v511 = vsub.s32 1, %v510
      %v512 = vrot.slane %v503, %v511
      %v516 = vcombine.high %v502, %v502
      %vm517 = vcmask 23552
      %v519 = vsel %vm517, %v486, 0
      %v522 = vsel %vm517, %v487, 0
      %v525 = vsel %vm517, %v488, 0
      %v528 = vsel %vm517, %v489, 0
      %v531 = vsel %vm517, %v490, 0
      %v534 = vsel %vm517, %v491, 0
      %v537 = vsel %vm517, %v492, 0
      %v540 = vsel %vm517, %v493, 0
      %v543 = vsel %vm517, %v494, 0
      %v546 = vsel %vm517, %v495, 0
      %v549 = vsel %vm517, %v496, 0
      %v552 = vsel %vm517, %v497, 0
      %v555 = vsel %vm517, %v498, 0
      %v558 = vsel %vm517, %v499, 0
      %v561 = vsel %vm517, %v500, 0
      %v564 = vsel %vm517, %v501, 0
      %vm566 = vcmask 1042432
      %v567 = vsel %vm566, %v502, 0
      %v569 = vsel %vm566, %v516, 0
      %571 = vmatprep.subr.mxu0 0.0
      %572 = vmatpush1.msra.mxu0 0.0
      %573 = vmatprep.subr.mxu0 0.0
      %574 = vmatpush1.msra.mxu0 0.0
      %575 = vmatprep.subr.mxu0 0.0
      %576 = vmatpush1.msra.mxu0 0.0
      %577 = vmatprep.subr.mxu0 0.0
      %578 = vmatpush1.msra.mxu0 0.0
      %579 = vmatprep.subr.mxu0 0.0
      %580 = vmatpush1.msra.mxu0 0.0
      %581 = vmatprep.subr.mxu0 0.0
      %582 = vmatpush1.msra.mxu0 0.0
      %583 = vmatprep.subr.mxu0 0.0
      %584 = vmatpush1.msra.mxu0 0.0
      %585 = vmatprep.subr.mxu0 0.0
      %586 = vmatpush1.msra.mxu0 0.0
      %587 = vmatprep.subr.mxu0 0.0
      %588 = vmatpush1.msra.mxu0 0.0
      %589 = vmatprep.subr.mxu0 0.0
      %590 = vmatpush1.msra.mxu0 0.0
      %591 = vmatprep.subr.mxu0 0.0
      %592 = vmatpush1.msra.mxu0 0.0
      %593 = vmatprep.subr.mxu0 0.0
      %594 = vmatpush1.msra.mxu0 0.0
      %595 = vmatprep.subr.mxu0 0.0
      %596 = vmatpush1.msra.mxu0 0.0
      %597 = vmatprep.subr.mxu0 0.0
      %598 = vmatpush1.msra.mxu0 0.0
      %599 = vmatprep.subr.mxu0 0.0
      %600 = vmatpush1.msra.mxu0 0.0
      %601 = vmatprep.subr.mxu0 %v569
      %602 = vmatpush1.msra.mxu0 %v567
      %603 = vmatprep.subr.mxu0 0.0
      %604 = vmatpush2.msra.mxu0 0.0
      %605 = vmatprep.subr.mxu0 0.0
      %606 = vmatpush2.msra.mxu0 0.0
      %607 = vmatprep.subr.mxu0 0.0
      %608 = vmatpush2.msra.mxu0 0.0
      %609 = vmatprep.subr.mxu0 0.0
      %610 = vmatpush2.msra.mxu0 0.0
      %611 = vmatprep.subr.mxu0 0.0
      %612 = vmatpush2.msra.mxu0 0.0
      %613 = vmatprep.subr.mxu0 0.0
      %614 = vmatpush2.msra.mxu0 0.0
      %615 = vmatprep.subr.mxu0 0.0
      %616 = vmatpush2.msra.mxu0 0.0
      %617 = vmatprep.subr.mxu0 0.0
      %618 = vmatpush2.msra.mxu0 0.0
      %619 = vmatprep.subr.mxu0 0.0
      %620 = vmatpush2.msra.mxu0 0.0
      %621 = vmatprep.subr.mxu0 0.0
      %622 = vmatpush2.msra.mxu0 0.0
      %623 = vmatprep.subr.mxu0 0.0
      %624 = vmatpush2.msra.mxu0 0.0
      %625 = vmatprep.subr.mxu0 0.0
      %626 = vmatpush2.msra.mxu0 0.0
      %627 = vmatprep.subr.mxu0 0.0
      %628 = vmatpush2.msra.mxu0 0.0
      %629 = vmatprep.subr.mxu0 0.0
      %630 = vmatpush2.msra.mxu0 0.0
      %631 = vmatprep.subr.mxu0 0.0
      %632 = vmatpush2.msra.mxu0 0.0
      %633 = vmatprep.subr.mxu0 0.0
      %634 = vmatpush2.msra.mxu0 0.0
      %635 = vmatprep.mubr.f32.mxu0 0.0
      %636 = vmatmul.mubr.f32.gmra.mxu0 %v519
      %v637 = vpop.f32.mrf.mxu0
      %v638 = vadd.f32 %v508, %v637
      %v639 = vpop.f32.mrf.mxu0
      %v640 = vadd.f32 %v512, %v639
      %641 = vmatprep.mubr.f32.mxu0 0.0
      %642 = vmatmul.mubr.f32.gmra.mxu0 %v522
      %v643 = vpop.f32.mrf.mxu0
      %v644 = vadd.f32 %v508, %v643
      %v645 = vpop.f32.mrf.mxu0
      %v646 = vadd.f32 %v512, %v645
      %647 = vmatprep.mubr.f32.mxu0 0.0
      %648 = vmatmul.mubr.f32.gmra.mxu0 %v525
      %v649 = vpop.f32.mrf.mxu0
      %v650 = vadd.f32 %v508, %v649
      %v651 = vpop.f32.mrf.mxu0
      %v652 = vadd.f32 %v512, %v651
      %653 = vmatprep.mubr.f32.mxu0 0.0
      %654 = vmatmul.mubr.f32.gmra.mxu0 %v528
      %v655 = vpop.f32.mrf.mxu0
      %v656 = vadd.f32 %v508, %v655
      %v657 = vpop.f32.mrf.mxu0
      %v658 = vadd.f32 %v512, %v657
      %659 = vmatprep.mubr.f32.mxu0 0.0
      %660 = vmatmul.mubr.f32.gmra.mxu0 %v531
      %v661 = vpop.f32.mrf.mxu0
      %v662 = vadd.f32 %v508, %v661
      %v663 = vpop.f32.mrf.mxu0
      %v664 = vadd.f32 %v512, %v663
      %665 = vmatprep.mubr.f32.mxu0 0.0
      %666 = vmatmul.mubr.f32.gmra.mxu0 %v534
      %v667 = vpop.f32.mrf.mxu0
      %v668 = vadd.f32 %v508, %v667
      %v669 = vpop.f32.mrf.mxu0
      %v670 = vadd.f32 %v512, %v669
      %671 = vmatprep.mubr.f32.mxu0 0.0
      %672 = vmatmul.mubr.f32.gmra.mxu0 %v537
      %v673 = vpop.f32.mrf.mxu0
      %v674 = vadd.f32 %v508, %v673
      %v675 = vpop.f32.mrf.mxu0
      %v676 = vadd.f32 %v512, %v675
      %677 = vmatprep.mubr.f32.mxu0 0.0
      %678 = vmatmul.mubr.f32.gmra.mxu0 %v540
      %v679 = vpop.f32.mrf.mxu0
      %v680 = vadd.f32 %v508, %v679
      %v681 = vpop.f32.mrf.mxu0
      %v682 = vadd.f32 %v512, %v681
      %683 = vmatprep.mubr.f32.mxu0 0.0
      %684 = vmatmul.mubr.f32.gmra.mxu0 %v543
      %v685 = vpop.f32.mrf.mxu0
      %v686 = vadd.f32 %v508, %v685
      %v687 = vpop.f32.mrf.mxu0
      %v688 = vadd.f32 %v512, %v687
      %689 = vmatprep.mubr.f32.mxu0 0.0
      %690 = vmatmul.mubr.f32.gmra.mxu0 %v546
      %v691 = vpop.f32.mrf.mxu0
      %v692 = vadd.f32 %v508, %v691
      %v693 = vpop.f32.mrf.mxu0
      %v694 = vadd.f32 %v512, %v693
      %695 = vmatprep.mubr.f32.mxu0 0.0
      %696 = vmatmul.mubr.f32.gmra.mxu0 %v549
      %v697 = vpop.f32.mrf.mxu0
      %v698 = vadd.f32 %v508, %v697
      %v699 = vpop.f32.mrf.mxu0
      %v700 = vadd.f32 %v512, %v699
      %701 = vmatprep.mubr.f32.mxu0 0.0
      %702 = vmatmul.mubr.f32.gmra.mxu0 %v552
      %v703 = vpop.f32.mrf.mxu0
      %v704 = vadd.f32 %v508, %v703
      %v705 = vpop.f32.mrf.mxu0
      %v706 = vadd.f32 %v512, %v705
      %707 = vmatprep.mubr.f32.mxu0 0.0
      %708 = vmatmul.mubr.f32.gmra.mxu0 %v555
      %v709 = vpop.f32.mrf.mxu0
      %v710 = vadd.f32 %v508, %v709
      %v711 = vpop.f32.mrf.mxu0
      %v712 = vadd.f32 %v512, %v711
      %713 = vmatprep.mubr.f32.mxu0 0.0
      %714 = vmatmul.mubr.f32.gmra.mxu0 %v558
      %v715 = vpop.f32.mrf.mxu0
      %v716 = vadd.f32 %v508, %v715
      %v717 = vpop.f32.mrf.mxu0
      %v718 = vadd.f32 %v512, %v717
      %719 = vmatprep.mubr.f32.mxu0 0.0
      %720 = vmatmul.mubr.f32.gmra.mxu0 %v561
      %v721 = vpop.f32.mrf.mxu0
      %v722 = vadd.f32 %v508, %v721
      %v723 = vpop.f32.mrf.mxu0
      %v724 = vadd.f32 %v512, %v723
      %725 = vmatprep.mubr.f32.mxu0 0.0
      %726 = vmatmul.mubr.f32.gmra.mxu0 %v564
      %v727 = vpop.f32.mrf.mxu0
      %v728 = vadd.f32 %v508, %v727
      %v729 = vpop.f32.mrf.mxu0
      %v730 = vadd.f32 %v512, %v729
      %731 = vdwg.mxu0
      %v732 = vmax.f32 %v638, 0.0
      %v733 = vmax.f32 %v640, 0.0
      %v734 = vmax.f32 %v644, 0.0
      %v735 = vmax.f32 %v646, 0.0
      %v736 = vmax.f32 %v650, 0.0
      %v737 = vmax.f32 %v652, 0.0
      %v738 = vmax.f32 %v656, 0.0
      %v739 = vmax.f32 %v658, 0.0
      %v740 = vmax.f32 %v662, 0.0
      %v741 = vmax.f32 %v664, 0.0
      %v742 = vmax.f32 %v668, 0.0
      %v743 = vmax.f32 %v670, 0.0
      %v744 = vmax.f32 %v674, 0.0
      %v745 = vmax.f32 %v676, 0.0
      %v746 = vmax.f32 %v680, 0.0
      %v747 = vmax.f32 %v682, 0.0
      %v748 = vmax.f32 %v686, 0.0
      %v749 = vmax.f32 %v688, 0.0
      %v750 = vmax.f32 %v692, 0.0
      %v751 = vmax.f32 %v694, 0.0
      %v752 = vmax.f32 %v698, 0.0
      %v753 = vmax.f32 %v700, 0.0
      %v754 = vmax.f32 %v704, 0.0
      %v755 = vmax.f32 %v706, 0.0
      %v756 = vmax.f32 %v710, 0.0
      %v757 = vmax.f32 %v712, 0.0
      %v758 = vmax.f32 %v716, 0.0
      %v759 = vmax.f32 %v718, 0.0
      %v760 = vmax.f32 %v722, 0.0
      %v761 = vmax.f32 %v724, 0.0
      %v762 = vmax.f32 %v728, 0.0
      %v763 = vmax.f32 %v730, 0.0
      %v764 = vld [vmem:[%s3] sm:$0xff]
      %v765 = vld [vmem:[%s3 + $0x8] sm:$0xff]
      %v766 = vld [vmem:[%s3 + $0x10] sm:$0xff]
      %v767 = vld [vmem:[%s3 + $0x18] sm:$0xff]
      %v768 = vld [vmem:[%s3 + $0x20] sm:$0xff]
      %v769 = vld [vmem:[%s3 + $0x28] sm:$0xff]
      %v770 = vld [vmem:[%s3 + $0x30] sm:$0xff]
      %v771 = vld [vmem:[%s3 + $0x38] sm:$0xff]
      %v772 = vld [vmem:[%s3 + $0x40] sm:$0xff]
      %v773 = vld [vmem:[%s3 + $0x48] sm:$0xff]
      %v774 = vld [vmem:[%s3 + $0x50] sm:$0xff]
      %v775 = vld [vmem:[%s3 + $0x58] sm:$0xff]
      %v776 = vld [vmem:[%s3 + $0x60] sm:$0xff]
      %v777 = vld [vmem:[%s3 + $0x68] sm:$0xff]
      %v778 = vld [vmem:[%s3 + $0x70] sm:$0xff]
      %v779 = vld [vmem:[%s3 + $0x78] sm:$0xff]
      %v780 = vld [vmem:[%s3 + $0x80] sm:$0xff]
      %v781 = vld [vmem:[%s3 + $0x88] sm:$0xff]
      %v782 = vld [vmem:[%s3 + $0x90] sm:$0xff]
      %v783 = vld [vmem:[%s3 + $0x98] sm:$0xff]
      %v784 = vld [vmem:[%s3 + $0xa0] sm:$0xff]
      %v785 = vld [vmem:[%s3 + $0xa8] sm:$0xff]
      %v786 = vld [vmem:[%s3 + $0xb0] sm:$0xff]
      %v787 = vld [vmem:[%s3 + $0xb8] sm:$0xff]
      %v788 = vld [vmem:[%s3 + $0xc0] sm:$0xff]
      %v789 = vld [vmem:[%s3 + $0xc8] sm:$0xff]
      %v790 = vld [vmem:[%s3 + $0xd0] sm:$0xff]
      %v791 = vld [vmem:[%s3 + $0xd8] sm:$0xff]
      %v792 = vld [vmem:[%s3 + $0xe0] sm:$0xff]
      %v793 = vld [vmem:[%s3 + $0xe8] sm:$0xff]
      %v794 = vld [vmem:[%s3 + $0xf0] sm:$0xff]
      %v795 = vld [vmem:[%s3 + $0xf8] sm:$0xff]
      %v796 = vpack.c.bf16 %v734, %v732
      %v797 = vpack.c.bf16 %v735, %v733
      %v798 = vpack.c.bf16 %v738, %v736
      %v799 = vpack.c.bf16 %v739, %v737
      %v800 = vpack.c.bf16 %v742, %v740
      %v801 = vpack.c.bf16 %v743, %v741
      %v802 = vpack.c.bf16 %v746, %v744
      %v803 = vpack.c.bf16 %v747, %v745
      %v804 = vpack.c.bf16 %v750, %v748
      %v805 = vpack.c.bf16 %v751, %v749
      %v806 = vpack.c.bf16 %v754, %v752
      %v807 = vpack.c.bf16 %v755, %v753
      %v808 = vpack.c.bf16 %v758, %v756
      %v809 = vpack.c.bf16 %v759, %v757
      %v810 = vpack.c.bf16 %v762, %v760
      %v811 = vpack.c.bf16 %v763, %v761
      %v812 = vld [vmem:[%s4] sm:$0x3]
      %v814 = vlaneseq
      %v815 = vshrl.u32 %v814, 7
      %v816 = vsub.s32 0, %v815
      %v817 = vrot.slane %v812, %v816
      %v818 = vlaneseq
      %v819 = vshrl.u32 %v818, 7
      %v820 = vsub.s32 1, %v819
      %v821 = vrot.slane %v812, %v820
      %v856 = vunpack.c.l.b16 %v764
      %v857 = vunpack.c.h.b16 %v764
      %v858 = vunpack.c.l.b16 %v765
      %v859 = vunpack.c.h.b16 %v765
      %v860 = vunpack.c.l.b16 %v766
      %v861 = vunpack.c.h.b16 %v766
      %v862 = vunpack.c.l.b16 %v767
      %v863 = vunpack.c.h.b16 %v767
      %v864 = vunpack.c.l.b16 %v768
      %v865 = vunpack.c.h.b16 %v768
      %v866 = vunpack.c.l.b16 %v769
      %v867 = vunpack.c.h.b16 %v769
      %v868 = vunpack.c.l.b16 %v770
      %v869 = vunpack.c.h.b16 %v770
      %v870 = vunpack.c.l.b16 %v771
      %v871 = vunpack.c.h.b16 %v771
      %v872 = vunpack.c.l.b16 %v772
      %v873 = vunpack.c.h.b16 %v772
      %v874 = vunpack.c.l.b16 %v773
      %v875 = vunpack.c.h.b16 %v773
      %v876 = vunpack.c.l.b16 %v774
      %v877 = vunpack.c.h.b16 %v774
      %v878 = vunpack.c.l.b16 %v775
      %v879 = vunpack.c.h.b16 %v775
      %v880 = vunpack.c.l.b16 %v776
      %v881 = vunpack.c.h.b16 %v776
      %v882 = vunpack.c.l.b16 %v777
      %v883 = vunpack.c.h.b16 %v777
      %v884 = vunpack.c.l.b16 %v778
      %v885 = vunpack.c.h.b16 %v778
      %v886 = vunpack.c.l.b16 %v779
      %v887 = vunpack.c.h.b16 %v779
      %v888 = vunpack.c.l.b16 %v780
      %v889 = vunpack.c.h.b16 %v780
      %v890 = vunpack.c.l.b16 %v781
      %v891 = vunpack.c.h.b16 %v781
      %v892 = vunpack.c.l.b16 %v782
      %v893 = vunpack.c.h.b16 %v782
      %v894 = vunpack.c.l.b16 %v783
      %v895 = vunpack.c.h.b16 %v783
      %v896 = vunpack.c.l.b16 %v784
      %v897 = vunpack.c.h.b16 %v784
      %v898 = vunpack.c.l.b16 %v785
      %v899 = vunpack.c.h.b16 %v785
      %v900 = vunpack.c.l.b16 %v786
      %v901 = vunpack.c.h.b16 %v786
      %v902 = vunpack.c.l.b16 %v787
      %v903 = vunpack.c.h.b16 %v787
      %v904 = vunpack.c.l.b16 %v788
      %v905 = vunpack.c.h.b16 %v788
      %v906 = vunpack.c.l.b16 %v789
      %v907 = vunpack.c.h.b16 %v789
      %v908 = vunpack.c.l.b16 %v790
      %v909 = vunpack.c.h.b16 %v790
      %v910 = vunpack.c.l.b16 %v791
      %v911 = vunpack.c.h.b16 %v791
      %v912 = vunpack.c.l.b16 %v792
      %v913 = vunpack.c.h.b16 %v792
      %v914 = vunpack.c.l.b16 %v793
      %v915 = vunpack.c.h.b16 %v793
      %v916 = vunpack.c.l.b16 %v794
      %v917 = vunpack.c.h.b16 %v794
      %v918 = vunpack.c.l.b16 %v795
      %v919 = vunpack.c.h.b16 %v795
      %v920 = vpack.c.b16 %v858, %v856
      %v921 = vpack.c.b16 %v859, %v857
      %v922 = vpack.c.b16 %v862, %v860
      %v923 = vpack.c.b16 %v863, %v861
      %v924 = vpack.c.b16 %v866, %v864
      %v925 = vpack.c.b16 %v867, %v865
      %v926 = vpack.c.b16 %v870, %v868
      %v927 = vpack.c.b16 %v871, %v869
      %v928 = vpack.c.b16 %v874, %v872
      %v929 = vpack.c.b16 %v875, %v873
      %v930 = vpack.c.b16 %v878, %v876
      %v931 = vpack.c.b16 %v879, %v877
      %v932 = vpack.c.b16 %v882, %v880
      %v933 = vpack.c.b16 %v883, %v881
      %v934 = vpack.c.b16 %v886, %v884
      %v935 = vpack.c.b16 %v887, %v885
      %v936 = vpack.c.b16 %v890, %v888
      %v937 = vpack.c.b16 %v891, %v889
      %v938 = vpack.c.b16 %v894, %v892
      %v939 = vpack.c.b16 %v895, %v893
      %v940 = vpack.c.b16 %v898, %v896
      %v941 = vpack.c.b16 %v899, %v897
      %v942 = vpack.c.b16 %v902, %v900
      %v943 = vpack.c.b16 %v903, %v901
      %v944 = vpack.c.b16 %v906, %v904
      %v945 = vpack.c.b16 %v907, %v905
      %v946 = vpack.c.b16 %v910, %v908
      %v947 = vpack.c.b16 %v911, %v909
      %v948 = vpack.c.b16 %v914, %v912
      %v949 = vpack.c.b16 %v915, %v913
      %v950 = vpack.c.b16 %v918, %v916
      %v951 = vpack.c.b16 %v919, %v917
      %984 = vmatprep.subr.bf16.mxu0 %v935
      %985 = vmatpush1.bf16.msra.mxu0 %v934
      %986 = vmatprep.subr.bf16.mxu0 %v933
      %987 = vmatpush1.bf16.msra.mxu0 %v932
      %988 = vmatprep.subr.bf16.mxu0 %v931
      %989 = vmatpush1.bf16.msra.mxu0 %v930
      %990 = vmatprep.subr.bf16.mxu0 %v929
      %991 = vmatpush1.bf16.msra.mxu0 %v928
      %992 = vmatprep.subr.bf16.mxu0 %v927
      %993 = vmatpush1.bf16.msra.mxu0 %v926
      %994 = vmatprep.subr.bf16.mxu0 %v925
      %995 = vmatpush1.bf16.msra.mxu0 %v924
      %996 = vmatprep.subr.bf16.mxu0 %v923
      %997 = vmatpush1.bf16.msra.mxu0 %v922
      %998 = vmatprep.subr.bf16.mxu0 %v921
      %999 = vmatpush1.bf16.msra.mxu0 %v920
      %1000 = vmatprep.subr.bf16.mxu0 %v951
      %1001 = vmatpush2.bf16.msra.mxu0 %v950
      %1002 = vmatprep.subr.bf16.mxu0 %v949
      %1003 = vmatpush2.bf16.msra.mxu0 %v948
      %1004 = vmatprep.subr.bf16.mxu0 %v947
      %1005 = vmatpush2.bf16.msra.mxu0 %v946
      %1006 = vmatprep.subr.bf16.mxu0 %v945
      %1007 = vmatpush2.bf16.msra.mxu0 %v944
      %1008 = vmatprep.subr.bf16.mxu0 %v943
      %1009 = vmatpush2.bf16.msra.mxu0 %v942
      %1010 = vmatprep.subr.bf16.mxu0 %v941
      %1011 = vmatpush2.bf16.msra.mxu0 %v940
      %1012 = vmatprep.subr.bf16.mxu0 %v939
      %1013 = vmatpush2.bf16.msra.mxu0 %v938
      %1014 = vmatprep.subr.bf16.mxu0 %v937
      %1015 = vmatpush2.bf16.msra.mxu0 %v936
      %1016 = vmatprep.mubr.bf16.mxu0 %v797
      %1017 = vmatmul.mubr.bf16.gmra.mxu0 %v796
      %v1018 = vpop.f32.mrf.mxu0
      %v1019 = vadd.f32 %v817, %v1018
      %v1020 = vpop.f32.mrf.mxu0
      %v1021 = vadd.f32 %v821, %v1020
      %v1022 = vpop.f32.mrf.mxu0
      %v1023 = vadd.f32 %v817, %v1022
      %v1024 = vpop.f32.mrf.mxu0
      %v1025 = vadd.f32 %v821, %v1024
      %1026 = vmatprep.mubr.bf16.mxu0 %v799
      %1027 = vmatmul.mubr.bf16.gmra.mxu0 %v798
      %v1028 = vpop.f32.mrf.mxu0
      %v1029 = vadd.f32 %v817, %v1028
      %v1030 = vpop.f32.mrf.mxu0
      %v1031 = vadd.f32 %v821, %v1030
      %v1032 = vpop.f32.mrf.mxu0
      %v1033 = vadd.f32 %v817, %v1032
      %v1034 = vpop.f32.mrf.mxu0
      %v1035 = vadd.f32 %v821, %v1034
      %1036 = vmatprep.mubr.bf16.mxu0 %v801
      %1037 = vmatmul.mubr.bf16.gmra.mxu0 %v800
      %v1038 = vpop.f32.mrf.mxu0
      %v1039 = vadd.f32 %v817, %v1038
      %v1040 = vpop.f32.mrf.mxu0
      %v1041 = vadd.f32 %v821, %v1040
      %v1042 = vpop.f32.mrf.mxu0
      %v1043 = vadd.f32 %v817, %v1042
      %v1044 = vpop.f32.mrf.mxu0
      %v1045 = vadd.f32 %v821, %v1044
      %1046 = vmatprep.mubr.bf16.mxu0 %v803
      %1047 = vmatmul.mubr.bf16.gmra.mxu0 %v802
      %v1048 = vpop.f32.mrf.mxu0
      %v1049 = vadd.f32 %v817, %v1048
      %v1050 = vpop.f32.mrf.mxu0
      %v1051 = vadd.f32 %v821, %v1050
      %v1052 = vpop.f32.mrf.mxu0
      %v1053 = vadd.f32 %v817, %v1052
      %v1054 = vpop.f32.mrf.mxu0
      %v1055 = vadd.f32 %v821, %v1054
      %1056 = vmatprep.mubr.bf16.mxu0 %v805
      %1057 = vmatmul.mubr.bf16.gmra.mxu0 %v804
      %v1058 = vpop.f32.mrf.mxu0
      %v1059 = vadd.f32 %v817, %v1058
      %v1060 = vpop.f32.mrf.mxu0
      %v1061 = vadd.f32 %v821, %v1060
      %v1062 = vpop.f32.mrf.mxu0
      %v1063 = vadd.f32 %v817, %v1062
      %v1064 = vpop.f32.mrf.mxu0
      %v1065 = vadd.f32 %v821, %v1064
      %1066 = vmatprep.mubr.bf16.mxu0 %v807
      %1067 = vmatmul.mubr.bf16.gmra.mxu0 %v806
      %v1068 = vpop.f32.mrf.mxu0
      %v1069 = vadd.f32 %v817, %v1068
      %v1070 = vpop.f32.mrf.mxu0
      %v1071 = vadd.f32 %v821, %v1070
      %v1072 = vpop.f32.mrf.mxu0
      %v1073 = vadd.f32 %v817, %v1072
      %v1074 = vpop.f32.mrf.mxu0
      %v1075 = vadd.f32 %v821, %v1074
      %1076 = vmatprep.mubr.bf16.mxu0 %v809
      %1077 = vmatmul.mubr.bf16.gmra.mxu0 %v808
      %v1078 = vpop.f32.mrf.mxu0
      %v1079 = vadd.f32 %v817, %v1078
      %v1080 = vpop.f32.mrf.mxu0
      %v1081 = vadd.f32 %v821, %v1080
      %v1082 = vpop.f32.mrf.mxu0
      %v1083 = vadd.f32 %v817, %v1082
      %v1084 = vpop.f32.mrf.mxu0
      %v1085 = vadd.f32 %v821, %v1084
      %1086 = vmatprep.mubr.bf16.mxu0 %v811
      %1087 = vmatmul.mubr.bf16.gmra.mxu0 %v810
      %v1088 = vpop.f32.mrf.mxu0
      %v1089 = vadd.f32 %v817, %v1088
      %v1090 = vpop.f32.mrf.mxu0
      %v1091 = vadd.f32 %v821, %v1090
      %v1092 = vpop.f32.mrf.mxu0
      %v1093 = vadd.f32 %v817, %v1092
      %v1094 = vpop.f32.mrf.mxu0
      %v1095 = vadd.f32 %v821, %v1094
      %1096 = vdwg.mxu0
      %v1097 = vmax.f32 %v1019, 0.0
      %v1098 = vmax.f32 %v1021, 0.0
      %v1099 = vmax.f32 %v1023, 0.0
      %v1100 = vmax.f32 %v1025, 0.0
      %v1101 = vmax.f32 %v1029, 0.0
      %v1102 = vmax.f32 %v1031, 0.0
      %v1103 = vmax.f32 %v1033, 0.0
      %v1104 = vmax.f32 %v1035, 0.0
      %v1105 = vmax.f32 %v1039, 0.0
      %v1106 = vmax.f32 %v1041, 0.0
      %v1107 = vmax.f32 %v1043, 0.0
      %v1108 = vmax.f32 %v1045, 0.0
      %v1109 = vmax.f32 %v1049, 0.0
      %v1110 = vmax.f32 %v1051, 0.0
      %v1111 = vmax.f32 %v1053, 0.0
      %v1112 = vmax.f32 %v1055, 0.0
      %v1113 = vmax.f32 %v1059, 0.0
      %v1114 = vmax.f32 %v1061, 0.0
      %v1115 = vmax.f32 %v1063, 0.0
      %v1116 = vmax.f32 %v1065, 0.0
      %v1117 = vmax.f32 %v1069, 0.0
      %v1118 = vmax.f32 %v1071, 0.0
      %v1119 = vmax.f32 %v1073, 0.0
      %v1120 = vmax.f32 %v1075, 0.0
      %v1121 = vmax.f32 %v1079, 0.0
      %v1122 = vmax.f32 %v1081, 0.0
      %v1123 = vmax.f32 %v1083, 0.0
      %v1124 = vmax.f32 %v1085, 0.0
      %v1125 = vmax.f32 %v1089, 0.0
      %v1126 = vmax.f32 %v1091, 0.0
      %v1127 = vmax.f32 %v1093, 0.0
      %v1128 = vmax.f32 %v1095, 0.0
      %v1129 = vld [vmem:[%s5] sm:$0xff]
      %v1130 = vld [vmem:[%s5 + $0x8] sm:$0xff]
      %v1131 = vld [vmem:[%s5 + $0x10] sm:$0xff]
      %v1132 = vld [vmem:[%s5 + $0x18] sm:$0xff]
      %v1133 = vld [vmem:[%s5 + $0x20] sm:$0xff]
      %v1134 = vld [vmem:[%s5 + $0x28] sm:$0xff]
      %v1135 = vld [vmem:[%s5 + $0x30] sm:$0xff]
      %v1136 = vld [vmem:[%s5 + $0x38] sm:$0xff]
      %v1137 = vld [vmem:[%s5 + $0x40] sm:$0xff]
      %v1138 = vld [vmem:[%s5 + $0x48] sm:$0xff]
      %v1139 = vld [vmem:[%s5 + $0x50] sm:$0xff]
      %v1140 = vld [vmem:[%s5 + $0x58] sm:$0xff]
      %v1141 = vld [vmem:[%s5 + $0x60] sm:$0xff]
      %v1142 = vld [vmem:[%s5 + $0x68] sm:$0xff]
      %v1143 = vld [vmem:[%s5 + $0x70] sm:$0xff]
      %v1144 = vld [vmem:[%s5 + $0x78] sm:$0xff]
      %v1145 = vld [vmem:[%s5 + $0x80] sm:$0xff]
      %v1146 = vld [vmem:[%s5 + $0x88] sm:$0xff]
      %v1147 = vld [vmem:[%s5 + $0x90] sm:$0xff]
      %v1148 = vld [vmem:[%s5 + $0x98] sm:$0xff]
      %v1149 = vld [vmem:[%s5 + $0xa0] sm:$0xff]
      %v1150 = vld [vmem:[%s5 + $0xa8] sm:$0xff]
      %v1151 = vld [vmem:[%s5 + $0xb0] sm:$0xff]
      %v1152 = vld [vmem:[%s5 + $0xb8] sm:$0xff]
      %v1153 = vld [vmem:[%s5 + $0xc0] sm:$0xff]
      %v1154 = vld [vmem:[%s5 + $0xc8] sm:$0xff]
      %v1155 = vld [vmem:[%s5 + $0xd0] sm:$0xff]
      %v1156 = vld [vmem:[%s5 + $0xd8] sm:$0xff]
      %v1157 = vld [vmem:[%s5 + $0xe0] sm:$0xff]
      %v1158 = vld [vmem:[%s5 + $0xe8] sm:$0xff]
      %v1159 = vld [vmem:[%s5 + $0xf0] sm:$0xff]
      %v1160 = vld [vmem:[%s5 + $0xf8] sm:$0xff]
      %v1161 = vpack.c.bf16 %v1099, %v1097
      %v1162 = vpack.c.bf16 %v1100, %v1098
      %v1163 = vpack.c.bf16 %v1103, %v1101
      %v1164 = vpack.c.bf16 %v1104, %v1102
      %v1165 = vpack.c.bf16 %v1107, %v1105
      %v1166 = vpack.c.bf16 %v1108, %v1106
      %v1167 = vpack.c.bf16 %v1111, %v1109
      %v1168 = vpack.c.bf16 %v1112, %v1110
      %v1169 = vpack.c.bf16 %v1115, %v1113
      %v1170 = vpack.c.bf16 %v1116, %v1114
      %v1171 = vpack.c.bf16 %v1119, %v1117
      %v1172 = vpack.c.bf16 %v1120, %v1118
      %v1173 = vpack.c.bf16 %v1123, %v1121
      %v1174 = vpack.c.bf16 %v1124, %v1122
      %v1175 = vpack.c.bf16 %v1127, %v1125
      %v1176 = vpack.c.bf16 %v1128, %v1126
      %v1177 = vld [vmem:[%s6] sm:$0x3]
      %v1179 = vlaneseq
      %v1180 = vshrl.u32 %v1179, 7
      %v1181 = vsub.s32 0, %v1180
      %v1182 = vrot.slane %v1177, %v1181
      %v1183 = vlaneseq
      %v1184 = vshrl.u32 %v1183, 7
      %v1185 = vsub.s32 1, %v1184
      %v1186 = vrot.slane %v1177, %v1185
      %v1221 = vunpack.c.l.b16 %v1129
      %v1222 = vunpack.c.h.b16 %v1129
      %v1223 = vunpack.c.l.b16 %v1130
      %v1224 = vunpack.c.h.b16 %v1130
      %v1225 = vunpack.c.l.b16 %v1131
      %v1226 = vunpack.c.h.b16 %v1131
      %v1227 = vunpack.c.l.b16 %v1132
      %v1228 = vunpack.c.h.b16 %v1132
      %v1229 = vunpack.c.l.b16 %v1133
      %v1230 = vunpack.c.h.b16 %v1133
      %v1231 = vunpack.c.l.b16 %v1134
      %v1232 = vunpack.c.h.b16 %v1134
      %v1233 = vunpack.c.l.b16 %v1135
      %v1234 = vunpack.c.h.b16 %v1135
      %v1235 = vunpack.c.l.b16 %v1136
      %v1236 = vunpack.c.h.b16 %v1136
      %v1237 = vunpack.c.l.b16 %v1137
      %v1238 = vunpack.c.h.b16 %v1137
      %v1239 = vunpack.c.l.b16 %v1138
      %v1240 = vunpack.c.h.b16 %v1138
      %v1241 = vunpack.c.l.b16 %v1139
      %v1242 = vunpack.c.h.b16 %v1139
      %v1243 = vunpack.c.l.b16 %v1140
      %v1244 = vunpack.c.h.b16 %v1140
      %v1245 = vunpack.c.l.b16 %v1141
      %v1246 = vunpack.c.h.b16 %v1141
      %v1247 = vunpack.c.l.b16 %v1142
      %v1248 = vunpack.c.h.b16 %v1142
      %v1249 = vunpack.c.l.b16 %v1143
      %v1250 = vunpack.c.h.b16 %v1143
      %v1251 = vunpack.c.l.b16 %v1144
      %v1252 = vunpack.c.h.b16 %v1144
      %v1253 = vunpack.c.l.b16 %v1145
      %v1254 = vunpack.c.h.b16 %v1145
      %v1255 = vunpack.c.l.b16 %v1146
      %v1256 = vunpack.c.h.b16 %v1146
      %v1257 = vunpack.c.l.b16 %v1147
      %v1258 = vunpack.c.h.b16 %v1147
      %v1259 = vunpack.c.l.b16 %v1148
      %v1260 = vunpack.c.h.b16 %v1148
      %v1261 = vunpack.c.l.b16 %v1149
      %v1262 = vunpack.c.h.b16 %v1149
      %v1263 = vunpack.c.l.b16 %v1150
      %v1264 = vunpack.c.h.b16 %v1150
      %v1265 = vunpack.c.l.b16 %v1151
      %v1266 = vunpack.c.h.b16 %v1151
      %v1267 = vunpack.c.l.b16 %v1152
      %v1268 = vunpack.c.h.b16 %v1152
      %v1269 = vunpack.c.l.b16 %v1153
      %v1270 = vunpack.c.h.b16 %v1153
      %v1271 = vunpack.c.l.b16 %v1154
      %v1272 = vunpack.c.h.b16 %v1154
      %v1273 = vunpack.c.l.b16 %v1155
      %v1274 = vunpack.c.h.b16 %v1155
      %v1275 = vunpack.c.l.b16 %v1156
      %v1276 = vunpack.c.h.b16 %v1156
      %v1277 = vunpack.c.l.b16 %v1157
      %v1278 = vunpack.c.h.b16 %v1157
      %v1279 = vunpack.c.l.b16 %v1158
      %v1280 = vunpack.c.h.b16 %v1158
      %v1281 = vunpack.c.l.b16 %v1159
      %v1282 = vunpack.c.h.b16 %v1159
      %v1283 = vunpack.c.l.b16 %v1160
      %v1284 = vunpack.c.h.b16 %v1160
      %v1285 = vpack.c.b16 %v1223, %v1221
      %v1286 = vpack.c.b16 %v1224, %v1222
      %v1287 = vpack.c.b16 %v1227, %v1225
      %v1288 = vpack.c.b16 %v1228, %v1226
      %v1289 = vpack.c.b16 %v1231, %v1229
      %v1290 = vpack.c.b16 %v1232, %v1230
      %v1291 = vpack.c.b16 %v1235, %v1233
      %v1292 = vpack.c.b16 %v1236, %v1234
      %v1293 = vpack.c.b16 %v1239, %v1237
      %v1294 = vpack.c.b16 %v1240, %v1238
      %v1295 = vpack.c.b16 %v1243, %v1241
      %v1296 = vpack.c.b16 %v1244, %v1242
      %v1297 = vpack.c.b16 %v1247, %v1245
      %v1298 = vpack.c.b16 %v1248, %v1246
      %v1299 = vpack.c.b16 %v1251, %v1249
      %v1300 = vpack.c.b16 %v1252, %v1250
      %v1301 = vpack.c.b16 %v1255, %v1253
      %v1302 = vpack.c.b16 %v1256, %v1254
      %v1303 = vpack.c.b16 %v1259, %v1257
      %v1304 = vpack.c.b16 %v1260, %v1258
      %v1305 = vpack.c.b16 %v1263, %v1261
      %v1306 = vpack.c.b16 %v1264, %v1262
      %v1307 = vpack.c.b16 %v1267, %v1265
      %v1308 = vpack.c.b16 %v1268, %v1266
      %v1309 = vpack.c.b16 %v1271, %v1269
      %v1310 = vpack.c.b16 %v1272, %v1270
      %v1311 = vpack.c.b16 %v1275, %v1273
      %v1312 = vpack.c.b16 %v1276, %v1274
      %v1313 = vpack.c.b16 %v1279, %v1277
      %v1314 = vpack.c.b16 %v1280, %v1278
      %v1315 = vpack.c.b16 %v1283, %v1281
      %v1316 = vpack.c.b16 %v1284, %v1282
      %1349 = vmatprep.subr.bf16.mxu0 %v1300
      %1350 = vmatpush1.bf16.msra.mxu0 %v1299
      %1351 = vmatprep.subr.bf16.mxu0 %v1298
      %1352 = vmatpush1.bf16.msra.mxu0 %v1297
      %1353 = vmatprep.subr.bf16.mxu0 %v1296
      %1354 = vmatpush1.bf16.msra.mxu0 %v1295
      %1355 = vmatprep.subr.bf16.mxu0 %v1294
      %1356 = vmatpush1.bf16.msra.mxu0 %v1293
      %1357 = vmatprep.subr.bf16.mxu0 %v1292
      %1358 = vmatpush1.bf16.msra.mxu0 %v1291
      %1359 = vmatprep.subr.bf16.mxu0 %v1290
      %1360 = vmatpush1.bf16.msra.mxu0 %v1289
      %1361 = vmatprep.subr.bf16.mxu0 %v1288
      %1362 = vmatpush1.bf16.msra.mxu0 %v1287
      %1363 = vmatprep.subr.bf16.mxu0 %v1286
      %1364 = vmatpush1.bf16.msra.mxu0 %v1285
      %1365 = vmatprep.subr.bf16.mxu0 %v1316
      %1366 = vmatpush2.bf16.msra.mxu0 %v1315
      %1367 = vmatprep.subr.bf16.mxu0 %v1314
      %1368 = vmatpush2.bf16.msra.mxu0 %v1313
      %1369 = vmatprep.subr.bf16.mxu0 %v1312
      %1370 = vmatpush2.bf16.msra.mxu0 %v1311
      %1371 = vmatprep.subr.bf16.mxu0 %v1310
      %1372 = vmatpush2.bf16.msra.mxu0 %v1309
      %1373 = vmatprep.subr.bf16.mxu0 %v1308
      %1374 = vmatpush2.bf16.msra.mxu0 %v1307
      %1375 = vmatprep.subr.bf16.mxu0 %v1306
      %1376 = vmatpush2.bf16.msra.mxu0 %v1305
      %1377 = vmatprep.subr.bf16.mxu0 %v1304
      %1378 = vmatpush2.bf16.msra.mxu0 %v1303
      %1379 = vmatprep.subr.bf16.mxu0 %v1302
      %1380 = vmatpush2.bf16.msra.mxu0 %v1301
      %1381 = vmatprep.mubr.bf16.mxu0 %v1162
      %1382 = vmatmul.mubr.bf16.gmra.mxu0 %v1161
      %v1383 = vpop.f32.mrf.mxu0
      %v1384 = vadd.f32 %v1182, %v1383
      %v1385 = vpop.f32.mrf.mxu0
      %v1386 = vadd.f32 %v1186, %v1385
      %v1387 = vpop.f32.mrf.mxu0
      %v1388 = vadd.f32 %v1182, %v1387
      %v1389 = vpop.f32.mrf.mxu0
      %v1390 = vadd.f32 %v1186, %v1389
      %1391 = vmatprep.mubr.bf16.mxu0 %v1164
      %1392 = vmatmul.mubr.bf16.gmra.mxu0 %v1163
      %v1393 = vpop.f32.mrf.mxu0
      %v1394 = vadd.f32 %v1182, %v1393
      %v1395 = vpop.f32.mrf.mxu0
      %v1396 = vadd.f32 %v1186, %v1395
      %v1397 = vpop.f32.mrf.mxu0
      %v1398 = vadd.f32 %v1182, %v1397
      %v1399 = vpop.f32.mrf.mxu0
      %v1400 = vadd.f32 %v1186, %v1399
      %1401 = vmatprep.mubr.bf16.mxu0 %v1166
      %1402 = vmatmul.mubr.bf16.gmra.mxu0 %v1165
      %v1403 = vpop.f32.mrf.mxu0
      %v1404 = vadd.f32 %v1182, %v1403
      %v1405 = vpop.f32.mrf.mxu0
      %v1406 = vadd.f32 %v1186, %v1405
      %v1407 = vpop.f32.mrf.mxu0
      %v1408 = vadd.f32 %v1182, %v1407
      %v1409 = vpop.f32.mrf.mxu0
      %v1410 = vadd.f32 %v1186, %v1409
      %1411 = vmatprep.mubr.bf16.mxu0 %v1168
      %1412 = vmatmul.mubr.bf16.gmra.mxu0 %v1167
      %v1413 = vpop.f32.mrf.mxu0
      %v1414 = vadd.f32 %v1182, %v1413
      %v1415 = vpop.f32.mrf.mxu0
      %v1416 = vadd.f32 %v1186, %v1415
      %v1417 = vpop.f32.mrf.mxu0
      %v1418 = vadd.f32 %v1182, %v1417
      %v1419 = vpop.f32.mrf.mxu0
      %v1420 = vadd.f32 %v1186, %v1419
      %1421 = vmatprep.mubr.bf16.mxu0 %v1170
      %1422 = vmatmul.mubr.bf16.gmra.mxu0 %v1169
      %v1423 = vpop.f32.mrf.mxu0
      %v1424 = vadd.f32 %v1182, %v1423
      %v1425 = vpop.f32.mrf.mxu0
      %v1426 = vadd.f32 %v1186, %v1425
      %v1427 = vpop.f32.mrf.mxu0
      %v1428 = vadd.f32 %v1182, %v1427
      %v1429 = vpop.f32.mrf.mxu0
      %v1430 = vadd.f32 %v1186, %v1429
      %1431 = vmatprep.mubr.bf16.mxu0 %v1172
      %1432 = vmatmul.mubr.bf16.gmra.mxu0 %v1171
      %v1433 = vpop.f32.mrf.mxu0
      %v1434 = vadd.f32 %v1182, %v1433
      %v1435 = vpop.f32.mrf.mxu0
      %v1436 = vadd.f32 %v1186, %v1435
      %v1437 = vpop.f32.mrf.mxu0
      %v1438 = vadd.f32 %v1182, %v1437
      %v1439 = vpop.f32.mrf.mxu0
      %v1440 = vadd.f32 %v1186, %v1439
      %1441 = vmatprep.mubr.bf16.mxu0 %v1174
      %1442 = vmatmul.mubr.bf16.gmra.mxu0 %v1173
      %v1443 = vpop.f32.mrf.mxu0
      %v1444 = vadd.f32 %v1182, %v1443
      %v1445 = vpop.f32.mrf.mxu0
      %v1446 = vadd.f32 %v1186, %v1445
      %v1447 = vpop.f32.mrf.mxu0
      %v1448 = vadd.f32 %v1182, %v1447
      %v1449 = vpop.f32.mrf.mxu0
      %v1450 = vadd.f32 %v1186, %v1449
      %1451 = vmatprep.mubr.bf16.mxu0 %v1176
      %1452 = vmatmul.mubr.bf16.gmra.mxu0 %v1175
      %v1453 = vpop.f32.mrf.mxu0
      %v1454 = vadd.f32 %v1182, %v1453
      %v1455 = vpop.f32.mrf.mxu0
      %v1456 = vadd.f32 %v1186, %v1455
      %v1457 = vpop.f32.mrf.mxu0
      %v1458 = vadd.f32 %v1182, %v1457
      %v1459 = vpop.f32.mrf.mxu0
      %v1460 = vadd.f32 %v1186, %v1459
      %1461 = vdwg.mxu0
      %v1462 = vmax.f32 %v1384, 0.0
      %v1463 = vmax.f32 %v1386, 0.0
      %v1464 = vmax.f32 %v1388, 0.0
      %v1465 = vmax.f32 %v1390, 0.0
      %v1466 = vmax.f32 %v1394, 0.0
      %v1467 = vmax.f32 %v1396, 0.0
      %v1468 = vmax.f32 %v1398, 0.0
      %v1469 = vmax.f32 %v1400, 0.0
      %v1470 = vmax.f32 %v1404, 0.0
      %v1471 = vmax.f32 %v1406, 0.0
      %v1472 = vmax.f32 %v1408, 0.0
      %v1473 = vmax.f32 %v1410, 0.0
      %v1474 = vmax.f32 %v1414, 0.0
      %v1475 = vmax.f32 %v1416, 0.0
      %v1476 = vmax.f32 %v1418, 0.0
      %v1477 = vmax.f32 %v1420, 0.0
      %v1478 = vmax.f32 %v1424, 0.0
      %v1479 = vmax.f32 %v1426, 0.0
      %v1480 = vmax.f32 %v1428, 0.0
      %v1481 = vmax.f32 %v1430, 0.0
      %v1482 = vmax.f32 %v1434, 0.0
      %v1483 = vmax.f32 %v1436, 0.0
      %v1484 = vmax.f32 %v1438, 0.0
      %v1485 = vmax.f32 %v1440, 0.0
      %v1486 = vmax.f32 %v1444, 0.0
      %v1487 = vmax.f32 %v1446, 0.0
      %v1488 = vmax.f32 %v1448, 0.0
      %v1489 = vmax.f32 %v1450, 0.0
      %v1490 = vmax.f32 %v1454, 0.0
      %v1491 = vmax.f32 %v1456, 0.0
      %v1492 = vmax.f32 %v1458, 0.0
      %v1493 = vmax.f32 %v1460, 0.0
      %v1494 = vld [vmem:[%s7] sm:$0xff]
      %v1495 = vld [vmem:[%s7 + $0x8] sm:$0xff]
      %v1496 = vld [vmem:[%s7 + $0x10] sm:$0xf]
      %v1497 = vld [vmem:[%s7 + $0x14] sm:$0xff]
      %v1498 = vld [vmem:[%s7 + $0x1c] sm:$0xff]
      %v1499 = vld [vmem:[%s7 + $0x24] sm:$0xf]
      %v1500 = vld [vmem:[%s7 + $0x28] sm:$0xff]
      %v1501 = vld [vmem:[%s7 + $0x30] sm:$0xff]
      %v1502 = vld [vmem:[%s7 + $0x38] sm:$0xf]
      %v1503 = vld [vmem:[%s7 + $0x3c] sm:$0xff]
      %v1504 = vld [vmem:[%s7 + $0x44] sm:$0xff]
      %v1505 = vld [vmem:[%s7 + $0x4c] sm:$0xf]
      %v1506 = vld [vmem:[%s7 + $0x50] sm:$0xff]
      %v1507 = vld [vmem:[%s7 + $0x58] sm:$0xff]
      %v1508 = vld [vmem:[%s7 + $0x60] sm:$0xf]
      %v1509 = vld [vmem:[%s7 + $0x64] sm:$0xff]
      %v1510 = vld [vmem:[%s7 + $0x6c] sm:$0xff]
      %v1511 = vld [vmem:[%s7 + $0x74] sm:$0xf]
      %v1512 = vld [vmem:[%s7 + $0x78] sm:$0xff]
      %v1513 = vld [vmem:[%s7 + $0x80] sm:$0xff]
      %v1514 = vld [vmem:[%s7 + $0x88] sm:$0xf]
      %v1515 = vld [vmem:[%s7 + $0x8c] sm:$0xff]
      %v1516 = vld [vmem:[%s7 + $0x94] sm:$0xff]
      %v1517 = vld [vmem:[%s7 + $0x9c] sm:$0xf]
      %v1518 = vld [vmem:[%s7 + $0xa0] sm:$0xff]
      %v1519 = vld [vmem:[%s7 + $0xa8] sm:$0xff]
      %v1520 = vld [vmem:[%s7 + $0xb0] sm:$0xf]
      %v1521 = vld [vmem:[%s7 + $0xb4] sm:$0xff]
      %v1522 = vld [vmem:[%s7 + $0xbc] sm:$0xff]
      %v1523 = vld [vmem:[%s7 + $0xc4] sm:$0xf]
      %v1524 = vld [vmem:[%s7 + $0xc8] sm:$0xff]
      %v1525 = vld [vmem:[%s7 + $0xd0] sm:$0xff]
      %v1526 = vld [vmem:[%s7 + $0xd8] sm:$0xf]
      %v1527 = vld [vmem:[%s7 + $0xdc] sm:$0xff]
      %v1528 = vld [vmem:[%s7 + $0xe4] sm:$0xff]
      %v1529 = vld [vmem:[%s7 + $0xec] sm:$0xf]
      %v1530 = vld [vmem:[%s7 + $0xf0] sm:$0xff]
      %v1531 = vld [vmem:[%s7 + $0xf8] sm:$0xff]
      %v1532 = vld [vmem:[%s7 + $0x100] sm:$0xf]
      %v1533 = vld [vmem:[%s7 + $0x104] sm:$0xff]
      %v1534 = vld [vmem:[%s7 + $0x10c] sm:$0xff]
      %v1535 = vld [vmem:[%s7 + $0x114] sm:$0xf]
      %v1536 = vld [vmem:[%s7 + $0x118] sm:$0xff]
      %v1537 = vld [vmem:[%s7 + $0x120] sm:$0xff]
      %v1538 = vld [vmem:[%s7 + $0x128] sm:$0xf]
      %v1539 = vld [vmem:[%s7 + $0x12c] sm:$0xff]
      %v1540 = vld [vmem:[%s7 + $0x134] sm:$0xff]
      %v1541 = vld [vmem:[%s7 + $0x13c] sm:$0xf]
      %v1542 = vld [vmem:[%s7 + $0x140] sm:$0xff]
      %v1543 = vld [vmem:[%s7 + $0x148] sm:$0xff]
      %v1544 = vld [vmem:[%s7 + $0x150] sm:$0xf]
      %v1545 = vld [vmem:[%s7 + $0x154] sm:$0xff]
      %v1546 = vld [vmem:[%s7 + $0x15c] sm:$0xff]
      %v1547 = vld [vmem:[%s7 + $0x164] sm:$0xf]
      %v1548 = vld [vmem:[%s7 + $0x168] sm:$0xff]
      %v1549 = vld [vmem:[%s7 + $0x170] sm:$0xff]
      %v1550 = vld [vmem:[%s7 + $0x178] sm:$0xf]
      %v1551 = vld [vmem:[%s7 + $0x17c] sm:$0xff]
      %v1552 = vld [vmem:[%s7 + $0x184] sm:$0xff]
      %v1553 = vld [vmem:[%s7 + $0x18c] sm:$0xf]
      %v1554 = vld [vmem:[%s7 + $0x190] sm:$0xff]
      %v1555 = vld [vmem:[%s7 + $0x198] sm:$0xff]
      %v1556 = vld [vmem:[%s7 + $0x1a0] sm:$0xf]
      %v1557 = vld [vmem:[%s7 + $0x1a4] sm:$0xff]
      %v1558 = vld [vmem:[%s7 + $0x1ac] sm:$0xff]
      %v1559 = vld [vmem:[%s7 + $0x1b4] sm:$0xf]
      %v1560 = vld [vmem:[%s7 + $0x1b8] sm:$0xff]
      %v1561 = vld [vmem:[%s7 + $0x1c0] sm:$0xff]
      %v1562 = vld [vmem:[%s7 + $0x1c8] sm:$0xf]
      %v1563 = vld [vmem:[%s7 + $0x1cc] sm:$0xff]
      %v1564 = vld [vmem:[%s7 + $0x1d4] sm:$0xff]
      %v1565 = vld [vmem:[%s7 + $0x1dc] sm:$0xf]
      %v1566 = vld [vmem:[%s7 + $0x1e0] sm:$0xff]
      %v1567 = vld [vmem:[%s7 + $0x1e8] sm:$0xff]
      %v1568 = vld [vmem:[%s7 + $0x1f0] sm:$0xf]
      %v1569 = vld [vmem:[%s7 + $0x1f4] sm:$0xff]
      %v1570 = vld [vmem:[%s7 + $0x1fc] sm:$0xff]
      %v1571 = vld [vmem:[%s7 + $0x204] sm:$0xf]
      %v1572 = vld [vmem:[%s7 + $0x208] sm:$0xff]
      %v1573 = vld [vmem:[%s7 + $0x210] sm:$0xff]
      %v1574 = vld [vmem:[%s7 + $0x218] sm:$0xf]
      %v1575 = vld [vmem:[%s7 + $0x21c] sm:$0xff]
      %v1576 = vld [vmem:[%s7 + $0x224] sm:$0xff]
      %v1577 = vld [vmem:[%s7 + $0x22c] sm:$0xf]
      %v1578 = vld [vmem:[%s7 + $0x230] sm:$0xff]
      %v1579 = vld [vmem:[%s7 + $0x238] sm:$0xff]
      %v1580 = vld [vmem:[%s7 + $0x240] sm:$0xf]
      %v1581 = vld [vmem:[%s7 + $0x244] sm:$0xff]
      %v1582 = vld [vmem:[%s7 + $0x24c] sm:$0xff]
      %v1583 = vld [vmem:[%s7 + $0x254] sm:$0xf]
      %v1584 = vld [vmem:[%s7 + $0x258] sm:$0xff]
      %v1585 = vld [vmem:[%s7 + $0x260] sm:$0xff]
      %v1586 = vld [vmem:[%s7 + $0x268] sm:$0xf]
      %v1587 = vld [vmem:[%s7 + $0x26c] sm:$0xff]
      %v1588 = vld [vmem:[%s7 + $0x274] sm:$0xff]
      %v1589 = vld [vmem:[%s7 + $0x27c] sm:$0xf]
      %v1590 = vpack.c.bf16 %v1464, %v1462
      %v1591 = vpack.c.bf16 %v1465, %v1463
      %v1592 = vpack.c.bf16 %v1468, %v1466
      %v1593 = vpack.c.bf16 %v1469, %v1467
      %v1594 = vpack.c.bf16 %v1472, %v1470
      %v1595 = vpack.c.bf16 %v1473, %v1471
      %v1596 = vpack.c.bf16 %v1476, %v1474
      %v1597 = vpack.c.bf16 %v1477, %v1475
      %v1598 = vpack.c.bf16 %v1480, %v1478
      %v1599 = vpack.c.bf16 %v1481, %v1479
      %v1600 = vpack.c.bf16 %v1484, %v1482
      %v1601 = vpack.c.bf16 %v1485, %v1483
      %v1602 = vpack.c.bf16 %v1488, %v1486
      %v1603 = vpack.c.bf16 %v1489, %v1487
      %v1604 = vpack.c.bf16 %v1492, %v1490
      %v1605 = vpack.c.bf16 %v1493, %v1491
      %v1606 = vld [vmem:[%s8] sm:$0x1f]
      %v1608 = vlaneseq
      %v1609 = vshrl.u32 %v1608, 7
      %v1610 = vsub.s32 0, %v1609
      %v1611 = vrot.slane %v1606, %v1610
      %v1612 = vlaneseq
      %v1613 = vshrl.u32 %v1612, 7
      %v1614 = vsub.s32 1, %v1613
      %v1615 = vrot.slane %v1606, %v1614
      %v1616 = vlaneseq
      %v1617 = vshrl.u32 %v1616, 7
      %v1618 = vsub.s32 2, %v1617
      %v1619 = vrot.slane %v1606, %v1618
      %v1620 = vlaneseq
      %v1621 = vshrl.u32 %v1620, 7
      %v1622 = vsub.s32 3, %v1621
      %v1623 = vrot.slane %v1606, %v1622
      %v1624 = vlaneseq
      %v1625 = vshrl.u32 %v1624, 7
      %v1626 = vsub.s32 4, %v1625
      %v1627 = vrot.slane %v1606, %v1626
      %v1729 = vunpack.c.l.b16 %v1494
      %v1730 = vunpack.c.h.b16 %v1494
      %v1731 = vunpack.c.l.b16 %v1495
      %v1732 = vunpack.c.h.b16 %v1495
      %v1733 = vunpack.c.l.b16 %v1496
      %v1734 = vunpack.c.l.b16 %v1497
      %v1735 = vunpack.c.h.b16 %v1497
      %v1736 = vunpack.c.l.b16 %v1498
      %v1737 = vunpack.c.h.b16 %v1498
      %v1738 = vunpack.c.l.b16 %v1499
      %v1739 = vunpack.c.l.b16 %v1500
      %v1740 = vunpack.c.h.b16 %v1500
      %v1741 = vunpack.c.l.b16 %v1501
      %v1742 = vunpack.c.h.b16 %v1501
      %v1743 = vunpack.c.l.b16 %v1502
      %v1744 = vunpack.c.l.b16 %v1503
      %v1745 = vunpack.c.h.b16 %v1503
      %v1746 = vunpack.c.l.b16 %v1504
      %v1747 = vunpack.c.h.b16 %v1504
      %v1748 = vunpack.c.l.b16 %v1505
      %v1749 = vunpack.c.l.b16 %v1506
      %v1750 = vunpack.c.h.b16 %v1506
      %v1751 = vunpack.c.l.b16 %v1507
      %v1752 = vunpack.c.h.b16 %v1507
      %v1753 = vunpack.c.l.b16 %v1508
      %v1754 = vunpack.c.l.b16 %v1509
      %v1755 = vunpack.c.h.b16 %v1509
      %v1756 = vunpack.c.l.b16 %v1510
      %v1757 = vunpack.c.h.b16 %v1510
      %v1758 = vunpack.c.l.b16 %v1511
      %v1759 = vunpack.c.l.b16 %v1512
      %v1760 = vunpack.c.h.b16 %v1512
      %v1761 = vunpack.c.l.b16 %v1513
      %v1762 = vunpack.c.h.b16 %v1513
      %v1763 = vunpack.c.l.b16 %v1514
      %v1764 = vunpack.c.l.b16 %v1515
      %v1765 = vunpack.c.h.b16 %v1515
      %v1766 = vunpack.c.l.b16 %v1516
      %v1767 = vunpack.c.h.b16 %v1516
      %v1768 = vunpack.c.l.b16 %v1517
      %v1769 = vunpack.c.l.b16 %v1518
      %v1770 = vunpack.c.h.b16 %v1518
      %v1771 = vunpack.c.l.b16 %v1519
      %v1772 = vunpack.c.h.b16 %v1519
      %v1773 = vunpack.c.l.b16 %v1520
      %v1774 = vunpack.c.l.b16 %v1521
      %v1775 = vunpack.c.h.b16 %v1521
      %v1776 = vunpack.c.l.b16 %v1522
      %v1777 = vunpack.c.h.b16 %v1522
      %v1778 = vunpack.c.l.b16 %v1523
      %v1779 = vunpack.c.l.b16 %v1524
      %v1780 = vunpack.c.h.b16 %v1524
      %v1781 = vunpack.c.l.b16 %v1525
      %v1782 = vunpack.c.h.b16 %v1525
      %v1783 = vunpack.c.l.b16 %v1526
      %v1784 = vunpack.c.l.b16 %v1527
      %v1785 = vunpack.c.h.b16 %v1527
      %v1786 = vunpack.c.l.b16 %v1528
      %v1787 = vunpack.c.h.b16 %v1528
      %v1788 = vunpack.c.l.b16 %v1529
      %v1789 = vunpack.c.l.b16 %v1530
      %v1790 = vunpack.c.h.b16 %v1530
      %v1791 = vunpack.c.l.b16 %v1531
      %v1792 = vunpack.c.h.b16 %v1531
      %v1793 = vunpack.c.l.b16 %v1532
      %v1794 = vunpack.c.l.b16 %v1533
      %v1795 = vunpack.c.h.b16 %v1533
      %v1796 = vunpack.c.l.b16 %v1534
      %v1797 = vunpack.c.h.b16 %v1534
      %v1798 = vunpack.c.l.b16 %v1535
      %v1799 = vunpack.c.l.b16 %v1536
      %v1800 = vunpack.c.h.b16 %v1536
      %v1801 = vunpack.c.l.b16 %v1537
      %v1802 = vunpack.c.h.b16 %v1537
      %v1803 = vunpack.c.l.b16 %v1538
      %v1804 = vunpack.c.l.b16 %v1539
      %v1805 = vunpack.c.h.b16 %v1539
      %v1806 = vunpack.c.l.b16 %v1540
      %v1807 = vunpack.c.h.b16 %v1540
      %v1808 = vunpack.c.l.b16 %v1541
      %v1809 = vunpack.c.l.b16 %v1542
      %v1810 = vunpack.c.h.b16 %v1542
      %v1811 = vunpack.c.l.b16 %v1543
      %v1812 = vunpack.c.h.b16 %v1543
      %v1813 = vunpack.c.l.b16 %v1544
      %v1814 = vunpack.c.l.b16 %v1545
      %v1815 = vunpack.c.h.b16 %v1545
      %v1816 = vunpack.c.l.b16 %v1546
      %v1817 = vunpack.c.h.b16 %v1546
      %v1818 = vunpack.c.l.b16 %v1547
      %v1819 = vunpack.c.l.b16 %v1548
      %v1820 = vunpack.c.h.b16 %v1548
      %v1821 = vunpack.c.l.b16 %v1549
      %v1822 = vunpack.c.h.b16 %v1549
      %v1823 = vunpack.c.l.b16 %v1550
      %v1824 = vunpack.c.l.b16 %v1551
      %v1825 = vunpack.c.h.b16 %v1551
      %v1826 = vunpack.c.l.b16 %v1552
      %v1827 = vunpack.c.h.b16 %v1552
      %v1828 = vunpack.c.l.b16 %v1553
      %v1829 = vunpack.c.l.b16 %v1554
      %v1830 = vunpack.c.h.b16 %v1554
      %v1831 = vunpack.c.l.b16 %v1555
      %v1832 = vunpack.c.h.b16 %v1555
      %v1833 = vunpack.c.l.b16 %v1556
      %v1834 = vunpack.c.l.b16 %v1557
      %v1835 = vunpack.c.h.b16 %v1557
      %v1836 = vunpack.c.l.b16 %v1558
      %v1837 = vunpack.c.h.b16 %v1558
      %v1838 = vunpack.c.l.b16 %v1559
      %v1839 = vunpack.c.l.b16 %v1560
      %v1840 = vunpack.c.h.b16 %v1560
      %v1841 = vunpack.c.l.b16 %v1561
      %v1842 = vunpack.c.h.b16 %v1561
      %v1843 = vunpack.c.l.b16 %v1562
      %v1844 = vunpack.c.l.b16 %v1563
      %v1845 = vunpack.c.h.b16 %v1563
      %v1846 = vunpack.c.l.b16 %v1564
      %v1847 = vunpack.c.h.b16 %v1564
      %v1848 = vunpack.c.l.b16 %v1565
      %v1849 = vunpack.c.l.b16 %v1566
      %v1850 = vunpack.c.h.b16 %v1566
      %v1851 = vunpack.c.l.b16 %v1567
      %v1852 = vunpack.c.h.b16 %v1567
      %v1853 = vunpack.c.l.b16 %v1568
      %v1854 = vunpack.c.l.b16 %v1569
      %v1855 = vunpack.c.h.b16 %v1569
      %v1856 = vunpack.c.l.b16 %v1570
      %v1857 = vunpack.c.h.b16 %v1570
      %v1858 = vunpack.c.l.b16 %v1571
      %v1859 = vunpack.c.l.b16 %v1572
      %v1860 = vunpack.c.h.b16 %v1572
      %v1861 = vunpack.c.l.b16 %v1573
      %v1862 = vunpack.c.h.b16 %v1573
      %v1863 = vunpack.c.l.b16 %v1574
      %v1864 = vunpack.c.l.b16 %v1575
      %v1865 = vunpack.c.h.b16 %v1575
      %v1866 = vunpack.c.l.b16 %v1576
      %v1867 = vunpack.c.h.b16 %v1576
      %v1868 = vunpack.c.l.b16 %v1577
      %v1869 = vunpack.c.l.b16 %v1578
      %v1870 = vunpack.c.h.b16 %v1578
      %v1871 = vunpack.c.l.b16 %v1579
      %v1872 = vunpack.c.h.b16 %v1579
      %v1873 = vunpack.c.l.b16 %v1580
      %v1874 = vunpack.c.l.b16 %v1581
      %v1875 = vunpack.c.h.b16 %v1581
      %v1876 = vunpack.c.l.b16 %v1582
      %v1877 = vunpack.c.h.b16 %v1582
      %v1878 = vunpack.c.l.b16 %v1583
      %v1879 = vunpack.c.l.b16 %v1584
      %v1880 = vunpack.c.h.b16 %v1584
      %v1881 = vunpack.c.l.b16 %v1585
      %v1882 = vunpack.c.h.b16 %v1585
      %v1883 = vunpack.c.l.b16 %v1586
      %v1884 = vunpack.c.l.b16 %v1587
      %v1885 = vunpack.c.h.b16 %v1587
      %v1886 = vunpack.c.l.b16 %v1588
      %v1887 = vunpack.c.h.b16 %v1588
      %v1888 = vunpack.c.l.b16 %v1589
      %v1889 = vpack.c.b16 %v1734, %v1729
      %v1890 = vpack.c.b16 %v1735, %v1730
      %v1891 = vpack.c.b16 %v1736, %v1731
      %v1892 = vpack.c.b16 %v1737, %v1732
      %v1893 = vpack.c.b16 %v1738, %v1733
      %v1894 = vpack.c.b16 %v1744, %v1739
      %v1895 = vpack.c.b16 %v1745, %v1740
      %v1896 = vpack.c.b16 %v1746, %v1741
      %v1897 = vpack.c.b16 %v1747, %v1742
      %v1898 = vpack.c.b16 %v1748, %v1743
      %v1899 = vpack.c.b16 %v1754, %v1749
      %v1900 = vpack.c.b16 %v1755, %v1750
      %v1901 = vpack.c.b16 %v1756, %v1751
      %v1902 = vpack.c.b16 %v1757, %v1752
      %v1903 = vpack.c.b16 %v1758, %v1753
      %v1904 = vpack.c.b16 %v1764, %v1759
      %v1905 = vpack.c.b16 %v1765, %v1760
      %v1906 = vpack.c.b16 %v1766, %v1761
      %v1907 = vpack.c.b16 %v1767, %v1762
      %v1908 = vpack.c.b16 %v1768, %v1763
      %v1909 = vpack.c.b16 %v1774, %v1769
      %v1910 = vpack.c.b16 %v1775, %v1770
      %v1911 = vpack.c.b16 %v1776, %v1771
      %v1912 = vpack.c.b16 %v1777, %v1772
      %v1913 = vpack.c.b16 %v1778, %v1773
      %v1914 = vpack.c.b16 %v1784, %v1779
      %v1915 = vpack.c.b16 %v1785, %v1780
      %v1916 = vpack.c.b16 %v1786, %v1781
      %v1917 = vpack.c.b16 %v1787, %v1782
      %v1918 = vpack.c.b16 %v1788, %v1783
      %v1919 = vpack.c.b16 %v1794, %v1789
      %v1920 = vpack.c.b16 %v1795, %v1790
      %v1921 = vpack.c.b16 %v1796, %v1791
      %v1922 = vpack.c.b16 %v1797, %v1792
      %v1923 = vpack.c.b16 %v1798, %v1793
      %v1924 = vpack.c.b16 %v1804, %v1799
      %v1925 = vpack.c.b16 %v1805, %v1800
      %v1926 = vpack.c.b16 %v1806, %v1801
      %v1927 = vpack.c.b16 %v1807, %v1802
      %v1928 = vpack.c.b16 %v1808, %v1803
      %v1929 = vpack.c.b16 %v1814, %v1809
      %v1930 = vpack.c.b16 %v1815, %v1810
      %v1931 = vpack.c.b16 %v1816, %v1811
      %v1932 = vpack.c.b16 %v1817, %v1812
      %v1933 = vpack.c.b16 %v1818, %v1813
      %v1934 = vpack.c.b16 %v1824, %v1819
      %v1935 = vpack.c.b16 %v1825, %v1820
      %v1936 = vpack.c.b16 %v1826, %v1821
      %v1937 = vpack.c.b16 %v1827, %v1822
      %v1938 = vpack.c.b16 %v1828, %v1823
      %v1939 = vpack.c.b16 %v1834, %v1829
      %v1940 = vpack.c.b16 %v1835, %v1830
      %v1941 = vpack.c.b16 %v1836, %v1831
      %v1942 = vpack.c.b16 %v1837, %v1832
      %v1943 = vpack.c.b16 %v1838, %v1833
      %v1944 = vpack.c.b16 %v1844, %v1839
      %v1945 = vpack.c.b16 %v1845, %v1840
      %v1946 = vpack.c.b16 %v1846, %v1841
      %v1947 = vpack.c.b16 %v1847, %v1842
      %v1948 = vpack.c.b16 %v1848, %v1843
      %v1949 = vpack.c.b16 %v1854, %v1849
      %v1950 = vpack.c.b16 %v1855, %v1850
      %v1951 = vpack.c.b16 %v1856, %v1851
      %v1952 = vpack.c.b16 %v1857, %v1852
      %v1953 = vpack.c.b16 %v1858, %v1853
      %v1954 = vpack.c.b16 %v1864, %v1859
      %v1955 = vpack.c.b16 %v1865, %v1860
      %v1956 = vpack.c.b16 %v1866, %v1861
      %v1957 = vpack.c.b16 %v1867, %v1862
      %v1958 = vpack.c.b16 %v1868, %v1863
      %v1959 = vpack.c.b16 %v1874, %v1869
      %v1960 = vpack.c.b16 %v1875, %v1870
      %v1961 = vpack.c.b16 %v1876, %v1871
      %v1962 = vpack.c.b16 %v1877, %v1872
      %v1963 = vpack.c.b16 %v1878, %v1873
      %v1964 = vpack.c.b16 %v1884, %v1879
      %v1965 = vpack.c.b16 %v1885, %v1880
      %v1966 = vpack.c.b16 %v1886, %v1881
      %v1967 = vpack.c.b16 %v1887, %v1882
      %v1968 = vpack.c.b16 %v1888, %v1883
      %2049 = vmatprep.subr.bf16.mxu0 %v1925
      %2050 = vmatpush1.bf16.msra.mxu0 %v1924
      %2051 = vmatprep.subr.bf16.mxu0 %v1920
      %2052 = vmatpush1.bf16.msra.mxu0 %v1919
      %2053 = vmatprep.subr.bf16.mxu0 %v1915
      %2054 = vmatpush1.bf16.msra.mxu0 %v1914
      %2055 = vmatprep.subr.bf16.mxu0 %v1910
      %2056 = vmatpush1.bf16.msra.mxu0 %v1909
      %2057 = vmatprep.subr.bf16.mxu0 %v1905
      %2058 = vmatpush1.bf16.msra.mxu0 %v1904
      %2059 = vmatprep.subr.bf16.mxu0 %v1900
      %2060 = vmatpush1.bf16.msra.mxu0 %v1899
      %2061 = vmatprep.subr.bf16.mxu0 %v1895
      %2062 = vmatpush1.bf16.msra.mxu0 %v1894
      %2063 = vmatprep.subr.bf16.mxu0 %v1890
      %2064 = vmatpush1.bf16.msra.mxu0 %v1889
      %2065 = vmatprep.subr.bf16.mxu0 %v1965
      %2066 = vmatpush2.bf16.msra.mxu0 %v1964
      %2067 = vmatprep.subr.bf16.mxu0 %v1960
      %2068 = vmatpush2.bf16.msra.mxu0 %v1959
      %2069 = vmatprep.subr.bf16.mxu0 %v1955
      %2070 = vmatpush2.bf16.msra.mxu0 %v1954
      %2071 = vmatprep.subr.bf16.mxu0 %v1950
      %2072 = vmatpush2.bf16.msra.mxu0 %v1949
      %2073 = vmatprep.subr.bf16.mxu0 %v1945
      %2074 = vmatpush2.bf16.msra.mxu0 %v1944
      %2075 = vmatprep.subr.bf16.mxu0 %v1940
      %2076 = vmatpush2.bf16.msra.mxu0 %v1939
      %2077 = vmatprep.subr.bf16.mxu0 %v1935
      %2078 = vmatpush2.bf16.msra.mxu0 %v1934
      %2079 = vmatprep.subr.bf16.mxu0 %v1930
      %2080 = vmatpush2.bf16.msra.mxu0 %v1929
      %2081 = vmatprep.mubr.bf16.mxu0 %v1591
      %2082 = vmatmul.mubr.bf16.gmra.mxu0 %v1590
      %v2083 = vpop.f32.mrf.mxu0
      %v2084 = vadd.f32 %v1611, %v2083
      %v2085 = vpop.f32.mrf.mxu0
      %v2086 = vadd.f32 %v1615, %v2085
      %v2087 = vpop.f32.mrf.mxu0
      %v2088 = vadd.f32 %v1611, %v2087
      %v2089 = vpop.f32.mrf.mxu0
      %v2090 = vadd.f32 %v1615, %v2089
      %2091 = vmatprep.mubr.bf16.mxu0 %v1593
      %2092 = vmatmul.mubr.bf16.gmra.mxu0 %v1592
      %v2093 = vpop.f32.mrf.mxu0
      %v2094 = vadd.f32 %v1611, %v2093
      %v2095 = vpop.f32.mrf.mxu0
      %v2096 = vadd.f32 %v1615, %v2095
      %v2097 = vpop.f32.mrf.mxu0
      %v2098 = vadd.f32 %v1611, %v2097
      %v2099 = vpop.f32.mrf.mxu0
      %v2100 = vadd.f32 %v1615, %v2099
      %2101 = vmatprep.mubr.bf16.mxu0 %v1595
      %2102 = vmatmul.mubr.bf16.gmra.mxu0 %v1594
      %v2103 = vpop.f32.mrf.mxu0
      %v2104 = vadd.f32 %v1611, %v2103
      %v2105 = vpop.f32.mrf.mxu0
      %v2106 = vadd.f32 %v1615, %v2105
      %v2107 = vpop.f32.mrf.mxu0
      %v2108 = vadd.f32 %v1611, %v2107
      %v2109 = vpop.f32.mrf.mxu0
      %v2110 = vadd.f32 %v1615, %v2109
      %2111 = vmatprep.mubr.bf16.mxu0 %v1597
      %2112 = vmatmul.mubr.bf16.gmra.mxu0 %v1596
      %v2113 = vpop.f32.mrf.mxu0
      %v2114 = vadd.f32 %v1611, %v2113
      %v2115 = vpop.f32.mrf.mxu0
      %v2116 = vadd.f32 %v1615, %v2115
      %v2117 = vpop.f32.mrf.mxu0
      %v2118 = vadd.f32 %v1611, %v2117
      %v2119 = vpop.f32.mrf.mxu0
      %v2120 = vadd.f32 %v1615, %v2119
      %2121 = vmatprep.mubr.bf16.mxu0 %v1599
      %2122 = vmatmul.mubr.bf16.gmra.mxu0 %v1598
      %v2123 = vpop.f32.mrf.mxu0
      %v2124 = vadd.f32 %v1611, %v2123
      %v2125 = vpop.f32.mrf.mxu0
      %v2126 = vadd.f32 %v1615, %v2125
      %v2127 = vpop.f32.mrf.mxu0
      %v2128 = vadd.f32 %v1611, %v2127
      %v2129 = vpop.f32.mrf.mxu0
      %v2130 = vadd.f32 %v1615, %v2129
      %2131 = vmatprep.mubr.bf16.mxu0 %v1601
      %2132 = vmatmul.mubr.bf16.gmra.mxu0 %v1600
      %v2133 = vpop.f32.mrf.mxu0
      %v2134 = vadd.f32 %v1611, %v2133
      %v2135 = vpop.f32.mrf.mxu0
      %v2136 = vadd.f32 %v1615, %v2135
      %v2137 = vpop.f32.mrf.mxu0
      %v2138 = vadd.f32 %v1611, %v2137
      %v2139 = vpop.f32.mrf.mxu0
      %v2140 = vadd.f32 %v1615, %v2139
      %2141 = vmatprep.mubr.bf16.mxu0 %v1603
      %2142 = vmatmul.mubr.bf16.gmra.mxu0 %v1602
      %v2143 = vpop.f32.mrf.mxu0
      %v2144 = vadd.f32 %v1611, %v2143
      %v2145 = vpop.f32.mrf.mxu0
      %v2146 = vadd.f32 %v1615, %v2145
      %v2147 = vpop.f32.mrf.mxu0
      %v2148 = vadd.f32 %v1611, %v2147
      %v2149 = vpop.f32.mrf.mxu0
      %v2150 = vadd.f32 %v1615, %v2149
      %2151 = vmatprep.mubr.bf16.mxu0 %v1605
      %2152 = vmatmul.mubr.bf16.gmra.mxu0 %v1604
      %v2153 = vpop.f32.mrf.mxu0
      %v2154 = vadd.f32 %v1611, %v2153
      %v2155 = vpop.f32.mrf.mxu0
      %v2156 = vadd.f32 %v1615, %v2155
      %v2157 = vpop.f32.mrf.mxu0
      %v2158 = vadd.f32 %v1611, %v2157
      %v2159 = vpop.f32.mrf.mxu0
      %v2160 = vadd.f32 %v1615, %v2159
      %2161 = vdwg.mxu0
      %2162 = vmatprep.subr.bf16.mxu0 %v1927
      %2163 = vmatpush1.bf16.msra.mxu0 %v1926
      %2164 = vmatprep.subr.bf16.mxu0 %v1922
      %2165 = vmatpush1.bf16.msra.mxu0 %v1921
      %2166 = vmatprep.subr.bf16.mxu0 %v1917
      %2167 = vmatpush1.bf16.msra.mxu0 %v1916
      %2168 = vmatprep.subr.bf16.mxu0 %v1912
      %2169 = vmatpush1.bf16.msra.mxu0 %v1911
      %2170 = vmatprep.subr.bf16.mxu0 %v1907
      %2171 = vmatpush1.bf16.msra.mxu0 %v1906
      %2172 = vmatprep.subr.bf16.mxu0 %v1902
      %2173 = vmatpush1.bf16.msra.mxu0 %v1901
      %2174 = vmatprep.subr.bf16.mxu0 %v1897
      %2175 = vmatpush1.bf16.msra.mxu0 %v1896
      %2176 = vmatprep.subr.bf16.mxu0 %v1892
      %2177 = vmatpush1.bf16.msra.mxu0 %v1891
      %2178 = vmatprep.subr.bf16.mxu0 %v1967
      %2179 = vmatpush2.bf16.msra.mxu0 %v1966
      %2180 = vmatprep.subr.bf16.mxu0 %v1962
      %2181 = vmatpush2.bf16.msra.mxu0 %v1961
      %2182 = vmatprep.subr.bf16.mxu0 %v1957
      %2183 = vmatpush2.bf16.msra.mxu0 %v1956
      %2184 = vmatprep.subr.bf16.mxu0 %v1952
      %2185 = vmatpush2.bf16.msra.mxu0 %v1951
      %2186 = vmatprep.subr.bf16.mxu0 %v1947
      %2187 = vmatpush2.bf16.msra.mxu0 %v1946
      %2188 = vmatprep.subr.bf16.mxu0 %v1942
      %2189 = vmatpush2.bf16.msra.mxu0 %v1941
      %2190 = vmatprep.subr.bf16.mxu0 %v1937
      %2191 = vmatpush2.bf16.msra.mxu0 %v1936
      %2192 = vmatprep.subr.bf16.mxu0 %v1932
      %2193 = vmatpush2.bf16.msra.mxu0 %v1931
      %2194 = vmatprep.mubr.bf16.mxu0 %v1591
      %2195 = vmatmul.mubr.bf16.gmra.mxu0 %v1590
      %v2196 = vpop.f32.mrf.mxu0
      %v2197 = vadd.f32 %v1619, %v2196
      %v2198 = vpop.f32.mrf.mxu0
      %v2199 = vadd.f32 %v1623, %v2198
      %v2200 = vpop.f32.mrf.mxu0
      %v2201 = vadd.f32 %v1619, %v2200
      %v2202 = vpop.f32.mrf.mxu0
      %v2203 = vadd.f32 %v1623, %v2202
      %2204 = vmatprep.mubr.bf16.mxu0 %v1593
      %2205 = vmatmul.mubr.bf16.gmra.mxu0 %v1592
      %v2206 = vpop.f32.mrf.mxu0
      %v2207 = vadd.f32 %v1619, %v2206
      %v2208 = vpop.f32.mrf.mxu0
      %v2209 = vadd.f32 %v1623, %v2208
      %v2210 = vpop.f32.mrf.mxu0
      %v2211 = vadd.f32 %v1619, %v2210
      %v2212 = vpop.f32.mrf.mxu0
      %v2213 = vadd.f32 %v1623, %v2212
      %2214 = vmatprep.mubr.bf16.mxu0 %v1595
      %2215 = vmatmul.mubr.bf16.gmra.mxu0 %v1594
      %v2216 = vpop.f32.mrf.mxu0
      %v2217 = vadd.f32 %v1619, %v2216
      %v2218 = vpop.f32.mrf.mxu0
      %v2219 = vadd.f32 %v1623, %v2218
      %v2220 = vpop.f32.mrf.mxu0
      %v2221 = vadd.f32 %v1619, %v2220
      %v2222 = vpop.f32.mrf.mxu0
      %v2223 = vadd.f32 %v1623, %v2222
      %2224 = vmatprep.mubr.bf16.mxu0 %v1597
      %2225 = vmatmul.mubr.bf16.gmra.mxu0 %v1596
      %v2226 = vpop.f32.mrf.mxu0
      %v2227 = vadd.f32 %v1619, %v2226
      %v2228 = vpop.f32.mrf.mxu0
      %v2229 = vadd.f32 %v1623, %v2228
      %v2230 = vpop.f32.mrf.mxu0
      %v2231 = vadd.f32 %v1619, %v2230
      %v2232 = vpop.f32.mrf.mxu0
      %v2233 = vadd.f32 %v1623, %v2232
      %2234 = vmatprep.mubr.bf16.mxu0 %v1599
      %2235 = vmatmul.mubr.bf16.gmra.mxu0 %v1598
      %v2236 = vpop.f32.mrf.mxu0
      %v2237 = vadd.f32 %v1619, %v2236
      %v2238 = vpop.f32.mrf.mxu0
      %v2239 = vadd.f32 %v1623, %v2238
      %v2240 = vpop.f32.mrf.mxu0
      %v2241 = vadd.f32 %v1619, %v2240
      %v2242 = vpop.f32.mrf.mxu0
      %v2243 = vadd.f32 %v1623, %v2242
      %2244 = vmatprep.mubr.bf16.mxu0 %v1601
      %2245 = vmatmul.mubr.bf16.gmra.mxu0 %v1600
      %v2246 = vpop.f32.mrf.mxu0
      %v2247 = vadd.f32 %v1619, %v2246
      %v2248 = vpop.f32.mrf.mxu0
      %v2249 = vadd.f32 %v1623, %v2248
      %v2250 = vpop.f32.mrf.mxu0
      %v2251 = vadd.f32 %v1619, %v2250
      %v2252 = vpop.f32.mrf.mxu0
      %v2253 = vadd.f32 %v1623, %v2252
      %2254 = vmatprep.mubr.bf16.mxu0 %v1603
      %2255 = vmatmul.mubr.bf16.gmra.mxu0 %v1602
      %v2256 = vpop.f32.mrf.mxu0
      %v2257 = vadd.f32 %v1619, %v2256
      %v2258 = vpop.f32.mrf.mxu0
      %v2259 = vadd.f32 %v1623, %v2258
      %v2260 = vpop.f32.mrf.mxu0
      %v2261 = vadd.f32 %v1619, %v2260
      %v2262 = vpop.f32.mrf.mxu0
      %v2263 = vadd.f32 %v1623, %v2262
      %2264 = vmatprep.mubr.bf16.mxu0 %v1605
      %2265 = vmatmul.mubr.bf16.gmra.mxu0 %v1604
      %v2266 = vpop.f32.mrf.mxu0
      %v2267 = vadd.f32 %v1619, %v2266
      %v2268 = vpop.f32.mrf.mxu0
      %v2269 = vadd.f32 %v1623, %v2268
      %v2270 = vpop.f32.mrf.mxu0
      %v2271 = vadd.f32 %v1619, %v2270
      %v2272 = vpop.f32.mrf.mxu0
      %v2273 = vadd.f32 %v1623, %v2272
      %2274 = vdwg.mxu0
      %2275 = vmatprep.subr.bf16.mxu0 0
      %2276 = vmatpush1.bf16.msra.mxu0 %v1928
      %2277 = vmatprep.subr.bf16.mxu0 0
      %2278 = vmatpush1.bf16.msra.mxu0 %v1923
      %2279 = vmatprep.subr.bf16.mxu0 0
      %2280 = vmatpush1.bf16.msra.mxu0 %v1918
      %2281 = vmatprep.subr.bf16.mxu0 0
      %2282 = vmatpush1.bf16.msra.mxu0 %v1913
      %2283 = vmatprep.subr.bf16.mxu0 0
      %2284 = vmatpush1.bf16.msra.mxu0 %v1908
      %2285 = vmatprep.subr.bf16.mxu0 0
      %2286 = vmatpush1.bf16.msra.mxu0 %v1903
      %2287 = vmatprep.subr.bf16.mxu0 0
      %2288 = vmatpush1.bf16.msra.mxu0 %v1898
      %2289 = vmatprep.subr.bf16.mxu0 0
      %2290 = vmatpush1.bf16.msra.mxu0 %v1893
      %2291 = vmatprep.subr.bf16.mxu0 0
      %2292 = vmatpush2.bf16.msra.mxu0 %v1968
      %2293 = vmatprep.subr.bf16.mxu0 0
      %2294 = vmatpush2.bf16.msra.mxu0 %v1963
      %2295 = vmatprep.subr.bf16.mxu0 0
      %2296 = vmatpush2.bf16.msra.mxu0 %v1958
      %2297 = vmatprep.subr.bf16.mxu0 0
      %2298 = vmatpush2.bf16.msra.mxu0 %v1953
      %2299 = vmatprep.subr.bf16.mxu0 0
      %2300 = vmatpush2.bf16.msra.mxu0 %v1948
      %2301 = vmatprep.subr.bf16.mxu0 0
      %2302 = vmatpush2.bf16.msra.mxu0 %v1943
      %2303 = vmatprep.subr.bf16.mxu0 0
      %2304 = vmatpush2.bf16.msra.mxu0 %v1938
      %2305 = vmatprep.subr.bf16.mxu0 0
      %2306 = vmatpush2.bf16.msra.mxu0 %v1933
      %2307 = vmatprep.mubr.bf16.mxu0 %v1591
      %2308 = vmatmul.mubr.bf16.gmra.mxu0 %v1590
      %v2309 = vpop.f32.mrf.mxu0
      %v2310 = vadd.f32 %v1627, %v2309
      %v2311 = vpop.f32.mrf.mxu0
      %v2312 = vpop.f32.mrf.mxu0
      %v2313 = vadd.f32 %v1627, %v2312
      %v2314 = vpop.f32.mrf.mxu0
      %2315 = vmatprep.mubr.bf16.mxu0 %v1593
      %2316 = vmatmul.mubr.bf16.gmra.mxu0 %v1592
      %v2317 = vpop.f32.mrf.mxu0
      %v2318 = vadd.f32 %v1627, %v2317
      %v2319 = vpop.f32.mrf.mxu0
      %v2320 = vpop.f32.mrf.mxu0
      %v2321 = vadd.f32 %v1627, %v2320
      %v2322 = vpop.f32.mrf.mxu0
      %2323 = vmatprep.mubr.bf16.mxu0 %v1595
      %2324 = vmatmul.mubr.bf16.gmra.mxu0 %v1594
      %v2325 = vpop.f32.mrf.mxu0
      %v2326 = vadd.f32 %v1627, %v2325
      %v2327 = vpop.f32.mrf.mxu0
      %v2328 = vpop.f32.mrf.mxu0
      %v2329 = vadd.f32 %v1627, %v2328
      %v2330 = vpop.f32.mrf.mxu0
      %2331 = vmatprep.mubr.bf16.mxu0 %v1597
      %2332 = vmatmul.mubr.bf16.gmra.mxu0 %v1596
      %v2333 = vpop.f32.mrf.mxu0
      %v2334 = vadd.f32 %v1627, %v2333
      %v2335 = vpop.f32.mrf.mxu0
      %v2336 = vpop.f32.mrf.mxu0
      %v2337 = vadd.f32 %v1627, %v2336
      %v2338 = vpop.f32.mrf.mxu0
      %2339 = vmatprep.mubr.bf16.mxu0 %v1599
      %2340 = vmatmul.mubr.bf16.gmra.mxu0 %v1598
      %v2341 = vpop.f32.mrf.mxu0
      %v2342 = vadd.f32 %v1627, %v2341
      %v2343 = vpop.f32.mrf.mxu0
      %v2344 = vpop.f32.mrf.mxu0
      %v2345 = vadd.f32 %v1627, %v2344
      %v2346 = vpop.f32.mrf.mxu0
      %2347 = vmatprep.mubr.bf16.mxu0 %v1601
      %2348 = vmatmul.mubr.bf16.gmra.mxu0 %v1600
      %v2349 = vpop.f32.mrf.mxu0
      %v2350 = vadd.f32 %v1627, %v2349
      %v2351 = vpop.f32.mrf.mxu0
      %v2352 = vpop.f32.mrf.mxu0
      %v2353 = vadd.f32 %v1627, %v2352
      %v2354 = vpop.f32.mrf.mxu0
      %2355 = vmatprep.mubr.bf16.mxu0 %v1603
      %2356 = vmatmul.mubr.bf16.gmra.mxu0 %v1602
      %v2357 = vpop.f32.mrf.mxu0
      %v2358 = vadd.f32 %v1627, %v2357
      %v2359 = vpop.f32.mrf.mxu0
      %v2360 = vpop.f32.mrf.mxu0
      %v2361 = vadd.f32 %v1627, %v2360
      %v2362 = vpop.f32.mrf.mxu0
      %2363 = vmatprep.mubr.bf16.mxu0 %v1605
      %2364 = vmatmul.mubr.bf16.gmra.mxu0 %v1604
      %v2365 = vpop.f32.mrf.mxu0
      %v2366 = vadd.f32 %v1627, %v2365
      %v2367 = vpop.f32.mrf.mxu0
      %v2368 = vpop.f32.mrf.mxu0
      %v2369 = vadd.f32 %v1627, %v2368
      %v2370 = vpop.f32.mrf.mxu0
      %2371 = vdwg.mxu0
      %v2372 = vld [vmem:[%s11] sm:$0xff]
      %v2373 = vld [vmem:[%s11 + $0x8] sm:$0xff]
      %v2374 = vld [vmem:[%s11 + $0x10] sm:$0xff]
      %v2375 = vld [vmem:[%s11 + $0x18] sm:$0xff]
      %v2376 = vld [vmem:[%s11 + $0x20] sm:$0xff]
      %v2377 = vld [vmem:[%s11 + $0x28] sm:$0xff]
      %v2378 = vld [vmem:[%s11 + $0x30] sm:$0xff]
      %v2379 = vld [vmem:[%s11 + $0x38] sm:$0xff]
      %v2380 = vld [vmem:[%s11 + $0x40] sm:$0xff]
      %v2381 = vld [vmem:[%s11 + $0x48] sm:$0xff]
      %v2382 = vld [vmem:[%s11 + $0x50] sm:$0xff]
      %v2383 = vld [vmem:[%s11 + $0x58] sm:$0xff]
      %v2384 = vld [vmem:[%s11 + $0x60] sm:$0xff]
      %v2385 = vld [vmem:[%s11 + $0x68] sm:$0xff]
      %v2386 = vld [vmem:[%s11 + $0x70] sm:$0xff]
      %v2387 = vld [vmem:[%s11 + $0x78] sm:$0xff]
      %v2388 = vld [vmem:[%s11 + $0x80] sm:$0xff]
      %v2389 = vld [vmem:[%s11 + $0x88] sm:$0xff]
      %v2390 = vld [vmem:[%s11 + $0x90] sm:$0xff]
      %v2391 = vld [vmem:[%s11 + $0x98] sm:$0xff]
      %v2392 = vld [vmem:[%s11 + $0xa0] sm:$0xff]
      %v2393 = vld [vmem:[%s11 + $0xa8] sm:$0xff]
      %v2394 = vld [vmem:[%s11 + $0xb0] sm:$0xff]
      %v2395 = vld [vmem:[%s11 + $0xb8] sm:$0xff]
      %v2396 = vld [vmem:[%s11 + $0xc0] sm:$0xff]
      %v2397 = vld [vmem:[%s11 + $0xc8] sm:$0xff]
      %v2398 = vld [vmem:[%s11 + $0xd0] sm:$0xff]
      %v2399 = vld [vmem:[%s11 + $0xd8] sm:$0xff]
      %v2400 = vld [vmem:[%s11 + $0xe0] sm:$0xff]
      %v2401 = vld [vmem:[%s11 + $0xe8] sm:$0xff]
      %v2402 = vld [vmem:[%s11 + $0xf0] sm:$0xff]
      %v2403 = vld [vmem:[%s11 + $0xf8] sm:$0xff]
      %v2404 = vld [vmem:[%s12] sm:$0x1]
      %v2406 = vlaneseq
      %v2407 = vshrl.u32 %v2406, 7
      %v2408 = vsub.s32 0, %v2407
      %v2409 = vrot.slane %v2404, %v2408
      %2411 = vmatprep.subr.mxu0 0.0
      %2412 = vmatpush1.msra.mxu0 %v2387
      %2413 = vmatprep.subr.mxu0 0.0
      %2414 = vmatpush1.msra.mxu0 %v2386
      %2415 = vmatprep.subr.mxu0 0.0
      %2416 = vmatpush1.msra.mxu0 %v2385
      %2417 = vmatprep.subr.mxu0 0.0
      %2418 = vmatpush1.msra.mxu0 %v2384
      %2419 = vmatprep.subr.mxu0 0.0
      %2420 = vmatpush1.msra.mxu0 %v2383
      %2421 = vmatprep.subr.mxu0 0.0
      %2422 = vmatpush1.msra.mxu0 %v2382
      %2423 = vmatprep.subr.mxu0 0.0
      %2424 = vmatpush1.msra.mxu0 %v2381
      %2425 = vmatprep.subr.mxu0 0.0
      %2426 = vmatpush1.msra.mxu0 %v2380
      %2427 = vmatprep.subr.mxu0 0.0
      %2428 = vmatpush1.msra.mxu0 %v2379
      %2429 = vmatprep.subr.mxu0 0.0
      %2430 = vmatpush1.msra.mxu0 %v2378
      %2431 = vmatprep.subr.mxu0 0.0
      %2432 = vmatpush1.msra.mxu0 %v2377
      %2433 = vmatprep.subr.mxu0 0.0
      %2434 = vmatpush1.msra.mxu0 %v2376
      %2435 = vmatprep.subr.mxu0 0.0
      %2436 = vmatpush1.msra.mxu0 %v2375
      %2437 = vmatprep.subr.mxu0 0.0
      %2438 = vmatpush1.msra.mxu0 %v2374
      %2439 = vmatprep.subr.mxu0 0.0
      %2440 = vmatpush1.msra.mxu0 %v2373
      %2441 = vmatprep.subr.mxu0 0.0
      %2442 = vmatpush1.msra.mxu0 %v2372
      %2443 = vmatprep.subr.mxu0 0.0
      %2444 = vmatpush2.msra.mxu0 %v2403
      %2445 = vmatprep.subr.mxu0 0.0
      %2446 = vmatpush2.msra.mxu0 %v2402
      %2447 = vmatprep.subr.mxu0 0.0
      %2448 = vmatpush2.msra.mxu0 %v2401
      %2449 = vmatprep.subr.mxu0 0.0
      %2450 = vmatpush2.msra.mxu0 %v2400
      %2451 = vmatprep.subr.mxu0 0.0
      %2452 = vmatpush2.msra.mxu0 %v2399
      %2453 = vmatprep.subr.mxu0 0.0
      %2454 = vmatpush2.msra.mxu0 %v2398
      %2455 = vmatprep.subr.mxu0 0.0
      %2456 = vmatpush2.msra.mxu0 %v2397
      %2457 = vmatprep.subr.mxu0 0.0
      %2458 = vmatpush2.msra.mxu0 %v2396
      %2459 = vmatprep.subr.mxu0 0.0
      %2460 = vmatpush2.msra.mxu0 %v2395
      %2461 = vmatprep.subr.mxu0 0.0
      %2462 = vmatpush2.msra.mxu0 %v2394
      %2463 = vmatprep.subr.mxu0 0.0
      %2464 = vmatpush2.msra.mxu0 %v2393
      %2465 = vmatprep.subr.mxu0 0.0
      %2466 = vmatpush2.msra.mxu0 %v2392
      %2467 = vmatprep.subr.mxu0 0.0
      %2468 = vmatpush2.msra.mxu0 %v2391
      %2469 = vmatprep.subr.mxu0 0.0
      %2470 = vmatpush2.msra.mxu0 %v2390
      %2471 = vmatprep.subr.mxu0 0.0
      %2472 = vmatpush2.msra.mxu0 %v2389
      %2473 = vmatprep.subr.mxu0 0.0
      %2474 = vmatpush2.msra.mxu0 %v2388
      %2475 = vmatprep.mubr.f32.mxu0 %v1463
      %2476 = vmatmul.mubr.f32.gmra.mxu0 %v1462
      %v2477 = vpop.f32.mrf.mxu0
      %v2478 = vadd.f32 %v2409, %v2477
      %v2479 = vpop.f32.mrf.mxu0
      %2480 = vmatprep.mubr.f32.mxu0 %v1465
      %2481 = vmatmul.mubr.f32.gmra.mxu0 %v1464
      %v2482 = vpop.f32.mrf.mxu0
      %v2483 = vadd.f32 %v2409, %v2482
      %v2484 = vpop.f32.mrf.mxu0
      %2485 = vmatprep.mubr.f32.mxu0 %v1467
      %2486 = vmatmul.mubr.f32.gmra.mxu0 %v1466
      %v2487 = vpop.f32.mrf.mxu0
      %v2488 = vadd.f32 %v2409, %v2487
      %v2489 = vpop.f32.mrf.mxu0
      %2490 = vmatprep.mubr.f32.mxu0 %v1469
      %2491 = vmatmul.mubr.f32.gmra.mxu0 %v1468
      %v2492 = vpop.f32.mrf.mxu0
      %v2493 = vadd.f32 %v2409, %v2492
      %v2494 = vpop.f32.mrf.mxu0
      %2495 = vmatprep.mubr.f32.mxu0 %v1471
      %2496 = vmatmul.mubr.f32.gmra.mxu0 %v1470
      %v2497 = vpop.f32.mrf.mxu0
      %v2498 = vadd.f32 %v2409, %v2497
      %v2499 = vpop.f32.mrf.mxu0
      %2500 = vmatprep.mubr.f32.mxu0 %v1473
      %2501 = vmatmul.mubr.f32.gmra.mxu0 %v1472
      %v2502 = vpop.f32.mrf.mxu0
      %v2503 = vadd.f32 %v2409, %v2502
      %v2504 = vpop.f32.mrf.mxu0
      %2505 = vmatprep.mubr.f32.mxu0 %v1475
      %2506 = vmatmul.mubr.f32.gmra.mxu0 %v1474
      %v2507 = vpop.f32.mrf.mxu0
      %v2508 = vadd.f32 %v2409, %v2507
      %v2509 = vpop.f32.mrf.mxu0
      %2510 = vmatprep.mubr.f32.mxu0 %v1477
      %2511 = vmatmul.mubr.f32.gmra.mxu0 %v1476
      %v2512 = vpop.f32.mrf.mxu0
      %v2513 = vadd.f32 %v2409, %v2512
      %v2514 = vpop.f32.mrf.mxu0
      %2515 = vmatprep.mubr.f32.mxu0 %v1479
      %2516 = vmatmul.mubr.f32.gmra.mxu0 %v1478
      %v2517 = vpop.f32.mrf.mxu0
      %v2518 = vadd.f32 %v2409, %v2517
      %v2519 = vpop.f32.mrf.mxu0
      %2520 = vmatprep.mubr.f32.mxu0 %v1481
      %2521 = vmatmul.mubr.f32.gmra.mxu0 %v1480
      %v2522 = vpop.f32.mrf.mxu0
      %v2523 = vadd.f32 %v2409, %v2522
      %v2524 = vpop.f32.mrf.mxu0
      %2525 = vmatprep.mubr.f32.mxu0 %v1483
      %2526 = vmatmul.mubr.f32.gmra.mxu0 %v1482
      %v2527 = vpop.f32.mrf.mxu0
      %v2528 = vadd.f32 %v2409, %v2527
      %v2529 = vpop.f32.mrf.mxu0
      %2530 = vmatprep.mubr.f32.mxu0 %v1485
      %2531 = vmatmul.mubr.f32.gmra.mxu0 %v1484
      %v2532 = vpop.f32.mrf.mxu0
      %v2533 = vadd.f32 %v2409, %v2532
      %v2534 = vpop.f32.mrf.mxu0
      %2535 = vmatprep.mubr.f32.mxu0 %v1487
      %2536 = vmatmul.mubr.f32.gmra.mxu0 %v1486
      %v2537 = vpop.f32.mrf.mxu0
      %v2538 = vadd.f32 %v2409, %v2537
      %v2539 = vpop.f32.mrf.mxu0
      %2540 = vmatprep.mubr.f32.mxu0 %v1489
      %2541 = vmatmul.mubr.f32.gmra.mxu0 %v1488
      %v2542 = vpop.f32.mrf.mxu0
      %v2543 = vadd.f32 %v2409, %v2542
      %v2544 = vpop.f32.mrf.mxu0
      %2545 = vmatprep.mubr.f32.mxu0 %v1491
      %2546 = vmatmul.mubr.f32.gmra.mxu0 %v1490
      %v2547 = vpop.f32.mrf.mxu0
      %v2548 = vadd.f32 %v2409, %v2547
      %v2549 = vpop.f32.mrf.mxu0
      %2550 = vmatprep.mubr.f32.mxu0 %v1493
      %2551 = vmatmul.mubr.f32.gmra.mxu0 %v1492
      %v2552 = vpop.f32.mrf.mxu0
      %v2553 = vadd.f32 %v2409, %v2552
      %v2554 = vpop.f32.mrf.mxu0
      %2555 = vdwg.mxu0
      %2572 = vrot.lane.b32.xlu0 %v2310, 20
      %v2573 = vpop.permute.xlu0 %2572
      %2574 = vrot.lane.b32.xlu0 %v2313, 20
      %v2575 = vpop.permute.xlu0 %2574
      %2576 = vrot.lane.b32.xlu0 %v2318, 20
      %v2577 = vpop.permute.xlu0 %2576
      %2578 = vrot.lane.b32.xlu0 %v2321, 20
      %v2579 = vpop.permute.xlu0 %2578
      %2580 = vrot.lane.b32.xlu0 %v2326, 20
      %v2581 = vpop.permute.xlu0 %2580
      %2582 = vrot.lane.b32.xlu0 %v2329, 20
      %v2583 = vpop.permute.xlu0 %2582
      %2584 = vrot.lane.b32.xlu0 %v2334, 20
      %v2585 = vpop.permute.xlu0 %2584
      %2586 = vrot.lane.b32.xlu0 %v2337, 20
      %v2587 = vpop.permute.xlu0 %2586
      %2588 = vrot.lane.b32.xlu0 %v2342, 20
      %v2589 = vpop.permute.xlu0 %2588
      %2590 = vrot.lane.b32.xlu0 %v2345, 20
      %v2591 = vpop.permute.xlu0 %2590
      %2592 = vrot.lane.b32.xlu0 %v2350, 20
      %v2593 = vpop.permute.xlu0 %2592
      %2594 = vrot.lane.b32.xlu0 %v2353, 20
      %v2595 = vpop.permute.xlu0 %2594
      %2596 = vrot.lane.b32.xlu0 %v2358, 20
      %v2597 = vpop.permute.xlu0 %2596
      %2598 = vrot.lane.b32.xlu0 %v2361, 20
      %v2599 = vpop.permute.xlu0 %2598
      %2600 = vrot.lane.b32.xlu0 %v2366, 20
      %v2601 = vpop.permute.xlu0 %2600
      %2602 = vrot.lane.b32.xlu0 %v2369, 20
      %v2603 = vpop.permute.xlu0 %2602
      %v2620 = vadd.f32 %v486, %v2573
      %v2621 = vadd.f32 %v487, %v2575
      %v2622 = vadd.f32 %v488, %v2577
      %v2623 = vadd.f32 %v489, %v2579
      %v2624 = vadd.f32 %v490, %v2581
      %v2625 = vadd.f32 %v491, %v2583
      %v2626 = vadd.f32 %v492, %v2585
      %v2627 = vadd.f32 %v493, %v2587
      %v2628 = vadd.f32 %v494, %v2589
      %v2629 = vadd.f32 %v495, %v2591
      %v2630 = vadd.f32 %v496, %v2593
      %v2631 = vadd.f32 %v497, %v2595
      %v2632 = vadd.f32 %v498, %v2597
      %v2633 = vadd.f32 %v499, %v2599
      %v2634 = vadd.f32 %v500, %v2601
      %v2635 = vadd.f32 %v501, %v2603
      %v2636 = vadd.f32 %v2620, %v2478
      %v2637 = vadd.f32 %v2621, %v2483
      %v2638 = vadd.f32 %v2622, %v2488
      %v2639 = vadd.f32 %v2623, %v2493
      %v2640 = vadd.f32 %v2624, %v2498
      %v2641 = vadd.f32 %v2625, %v2503
      %v2642 = vadd.f32 %v2626, %v2508
      %v2643 = vadd.f32 %v2627, %v2513
      %v2644 = vadd.f32 %v2628, %v2518
      %v2645 = vadd.f32 %v2629, %v2523
      %v2646 = vadd.f32 %v2630, %v2528
      %v2647 = vadd.f32 %v2631, %v2533
      %v2648 = vadd.f32 %v2632, %v2538
      %v2649 = vadd.f32 %v2633, %v2543
      %v2650 = vadd.f32 %v2634, %v2548
      %v2651 = vadd.f32 %v2635, %v2553
      %2668 = vrot.lane.b32.xlu0 %v2636, 108
      %v2669 = vpop.permute.xlu0 %2668
      %2670 = vrot.lane.b32.xlu0 %v2637, 108
      %v2671 = vpop.permute.xlu0 %2670
      %2672 = vrot.lane.b32.xlu0 %v2638, 108
      %v2673 = vpop.permute.xlu0 %2672
      %2674 = vrot.lane.b32.xlu0 %v2639, 108
      %v2675 = vpop.permute.xlu0 %2674
      %2676 = vrot.lane.b32.xlu0 %v2640, 108
      %v2677 = vpop.permute.xlu0 %2676
      %2678 = vrot.lane.b32.xlu0 %v2641, 108
      %v2679 = vpop.permute.xlu0 %2678
      %2680 = vrot.lane.b32.xlu0 %v2642, 108
      %v2681 = vpop.permute.xlu0 %2680
      %2682 = vrot.lane.b32.xlu0 %v2643, 108
      %v2683 = vpop.permute.xlu0 %2682
      %2684 = vrot.lane.b32.xlu0 %v2644, 108
      %v2685 = vpop.permute.xlu0 %2684
      %2686 = vrot.lane.b32.xlu0 %v2645, 108
      %v2687 = vpop.permute.xlu0 %2686
      %2688 = vrot.lane.b32.xlu0 %v2646, 108
      %v2689 = vpop.permute.xlu0 %2688
      %2690 = vrot.lane.b32.xlu0 %v2647, 108
      %v2691 = vpop.permute.xlu0 %2690
      %2692 = vrot.lane.b32.xlu0 %v2648, 108
      %v2693 = vpop.permute.xlu0 %2692
      %2694 = vrot.lane.b32.xlu0 %v2649, 108
      %v2695 = vpop.permute.xlu0 %2694
      %2696 = vrot.lane.b32.xlu0 %v2650, 108
      %v2697 = vpop.permute.xlu0 %2696
      %2698 = vrot.lane.b32.xlu0 %v2651, 108
      %v2699 = vpop.permute.xlu0 %2698
      %vm2716 = vcmask 883712
      %v2717 = vsel %vm2716, %v2310, %v2669
      %v2718 = vsel %vm2716, %v2313, %v2671
      %v2719 = vsel %vm2716, %v2318, %v2673
      %v2720 = vsel %vm2716, %v2321, %v2675
      %v2721 = vsel %vm2716, %v2326, %v2677
      %v2722 = vsel %vm2716, %v2329, %v2679
      %v2723 = vsel %vm2716, %v2334, %v2681
      %v2724 = vsel %vm2716, %v2337, %v2683
      %v2725 = vsel %vm2716, %v2342, %v2685
      %v2726 = vsel %vm2716, %v2345, %v2687
      %v2727 = vsel %vm2716, %v2350, %v2689
      %v2728 = vsel %vm2716, %v2353, %v2691
      %v2729 = vsel %vm2716, %v2358, %v2693
      %v2730 = vsel %vm2716, %v2361, %v2695
      %v2731 = vsel %vm2716, %v2366, %v2697
      %v2732 = vsel %vm2716, %v2369, %v2699
      %vm2733 = vcmask 908288
      %v2734 = vsel %vm2733, %v2717, 0.0
      %v2735 = vsel %vm2733, %v2718, 0.0
      %v2736 = vsel %vm2733, %v2719, 0.0
      %v2737 = vsel %vm2733, %v2720, 0.0
      %v2738 = vsel %vm2733, %v2721, 0.0
      %v2739 = vsel %vm2733, %v2722, 0.0
      %v2740 = vsel %vm2733, %v2723, 0.0
      %v2741 = vsel %vm2733, %v2724, 0.0
      %v2742 = vsel %vm2733, %v2725, 0.0
      %v2743 = vsel %vm2733, %v2726, 0.0
      %v2744 = vsel %vm2733, %v2727, 0.0
      %v2745 = vsel %vm2733, %v2728, 0.0
      %v2746 = vsel %vm2733, %v2729, 0.0
      %v2747 = vsel %vm2733, %v2730, 0.0
      %v2748 = vsel %vm2733, %v2731, 0.0
      %v2749 = vsel %vm2733, %v2732, 0.0
      %2750 = vst [vmem:[%s483] sm:$0xff] %v2734
      %2751 = vst [vmem:[%s483 + $0x8] sm:$0xff] %v2735
      %2752 = vst [vmem:[%s483 + $0x10] sm:$0xff] %v2736
      %2753 = vst [vmem:[%s483 + $0x18] sm:$0xff] %v2737
      %2754 = vst [vmem:[%s483 + $0x20] sm:$0xff] %v2738
      %2755 = vst [vmem:[%s483 + $0x28] sm:$0xff] %v2739
      %2756 = vst [vmem:[%s483 + $0x30] sm:$0xff] %v2740
      %2757 = vst [vmem:[%s483 + $0x38] sm:$0xff] %v2741
      %2758 = vst [vmem:[%s483 + $0x40] sm:$0xff] %v2742
      %2759 = vst [vmem:[%s483 + $0x48] sm:$0xff] %v2743
      %2760 = vst [vmem:[%s483 + $0x50] sm:$0xff] %v2744
      %2761 = vst [vmem:[%s483 + $0x58] sm:$0xff] %v2745
      %2762 = vst [vmem:[%s483 + $0x60] sm:$0xff] %v2746
      %2763 = vst [vmem:[%s483 + $0x68] sm:$0xff] %v2747
      %2764 = vst [vmem:[%s483 + $0x70] sm:$0xff] %v2748
      %2765 = vst [vmem:[%s483 + $0x78] sm:$0xff] %v2749
      %v2766 = vmax.f32 %v2084, 0.0
      %v2767 = vmax.f32 %v2086, 0.0
      %v2768 = vmax.f32 %v2197, 0.0
      %v2769 = vmax.f32 %v2199, 0.0
      %v2770 = vmax.f32 %v2088, 0.0
      %v2771 = vmax.f32 %v2090, 0.0
      %v2772 = vmax.f32 %v2201, 0.0
      %v2773 = vmax.f32 %v2203, 0.0
      %v2774 = vmax.f32 %v2094, 0.0
      %v2775 = vmax.f32 %v2096, 0.0
      %v2776 = vmax.f32 %v2207, 0.0
      %v2777 = vmax.f32 %v2209, 0.0
      %v2778 = vmax.f32 %v2098, 0.0
      %v2779 = vmax.f32 %v2100, 0.0
      %v2780 = vmax.f32 %v2211, 0.0
      %v2781 = vmax.f32 %v2213, 0.0
      %v2782 = vmax.f32 %v2104, 0.0
      %v2783 = vmax.f32 %v2106, 0.0
      %v2784 = vmax.f32 %v2217, 0.0
      %v2785 = vmax.f32 %v2219, 0.0
      %v2786 = vmax.f32 %v2108, 0.0
      %v2787 = vmax.f32 %v2110, 0.0
      %v2788 = vmax.f32 %v2221, 0.0
      %v2789 = vmax.f32 %v2223, 0.0
      %v2790 = vmax.f32 %v2114, 0.0
      %v2791 = vmax.f32 %v2116, 0.0
      %v2792 = vmax.f32 %v2227, 0.0
      %v2793 = vmax.f32 %v2229, 0.0
      %v2794 = vmax.f32 %v2118, 0.0
      %v2795 = vmax.f32 %v2120, 0.0
      %v2796 = vmax.f32 %v2231, 0.0
      %v2797 = vmax.f32 %v2233, 0.0
      %v2798 = vmax.f32 %v2124, 0.0
      %v2799 = vmax.f32 %v2126, 0.0
      %v2800 = vmax.f32 %v2237, 0.0
      %v2801 = vmax.f32 %v2239, 0.0
      %v2802 = vmax.f32 %v2128, 0.0
      %v2803 = vmax.f32 %v2130, 0.0
      %v2804 = vmax.f32 %v2241, 0.0
      %v2805 = vmax.f32 %v2243, 0.0
      %v2806 = vmax.f32 %v2134, 0.0
      %v2807 = vmax.f32 %v2136, 0.0
      %v2808 = vmax.f32 %v2247, 0.0
      %v2809 = vmax.f32 %v2249, 0.0
      %v2810 = vmax.f32 %v2138, 0.0
      %v2811 = vmax.f32 %v2140, 0.0
      %v2812 = vmax.f32 %v2251, 0.0
      %v2813 = vmax.f32 %v2253, 0.0
      %v2814 = vmax.f32 %v2144, 0.0
      %v2815 = vmax.f32 %v2146, 0.0
      %v2816 = vmax.f32 %v2257, 0.0
      %v2817 = vmax.f32 %v2259, 0.0
      %v2818 = vmax.f32 %v2148, 0.0
      %v2819 = vmax.f32 %v2150, 0.0
      %v2820 = vmax.f32 %v2261, 0.0
      %v2821 = vmax.f32 %v2263, 0.0
      %v2822 = vmax.f32 %v2154, 0.0
      %v2823 = vmax.f32 %v2156, 0.0
      %v2824 = vmax.f32 %v2267, 0.0
      %v2825 = vmax.f32 %v2269, 0.0
      %v2826 = vmax.f32 %v2158, 0.0
      %v2827 = vmax.f32 %v2160, 0.0
      %v2828 = vmax.f32 %v2271, 0.0
      %v2829 = vmax.f32 %v2273, 0.0
      %v2830 = vld [vmem:[%s9] sm:$0xf]
      %v2831 = vld [vmem:[%s9 + $0x4] sm:$0xf]
      %v2832 = vld [vmem:[%s9 + $0x8] sm:$0xf]
      %v2833 = vld [vmem:[%s9 + $0xc] sm:$0xf]
      %v2834 = vld [vmem:[%s9 + $0x10] sm:$0xf]
      %v2835 = vld [vmem:[%s9 + $0x14] sm:$0xf]
      %v2836 = vld [vmem:[%s9 + $0x18] sm:$0xf]
      %v2837 = vld [vmem:[%s9 + $0x1c] sm:$0xf]
      %v2838 = vld [vmem:[%s9 + $0x20] sm:$0xf]
      %v2839 = vld [vmem:[%s9 + $0x24] sm:$0xf]
      %v2840 = vld [vmem:[%s9 + $0x28] sm:$0xf]
      %v2841 = vld [vmem:[%s9 + $0x2c] sm:$0xf]
      %v2842 = vld [vmem:[%s9 + $0x30] sm:$0xf]
      %v2843 = vld [vmem:[%s9 + $0x34] sm:$0xf]
      %v2844 = vld [vmem:[%s9 + $0x38] sm:$0xf]
      %v2845 = vld [vmem:[%s9 + $0x3c] sm:$0xf]
      %v2846 = vld [vmem:[%s9 + $0x40] sm:$0xf]
      %v2847 = vld [vmem:[%s9 + $0x44] sm:$0xf]
      %v2848 = vld [vmem:[%s9 + $0x48] sm:$0xf]
      %v2849 = vld [vmem:[%s9 + $0x4c] sm:$0xf]
      %v2850 = vld [vmem:[%s9 + $0x50] sm:$0xf]
      %v2851 = vld [vmem:[%s9 + $0x54] sm:$0xf]
      %v2852 = vld [vmem:[%s9 + $0x58] sm:$0xf]
      %v2853 = vld [vmem:[%s9 + $0x5c] sm:$0xf]
      %v2854 = vld [vmem:[%s9 + $0x60] sm:$0xf]
      %v2855 = vld [vmem:[%s9 + $0x64] sm:$0xf]
      %v2856 = vld [vmem:[%s9 + $0x68] sm:$0xf]
      %v2857 = vld [vmem:[%s9 + $0x6c] sm:$0xf]
      %v2858 = vld [vmem:[%s9 + $0x70] sm:$0xf]
      %v2859 = vld [vmem:[%s9 + $0x74] sm:$0xf]
      %v2860 = vld [vmem:[%s9 + $0x78] sm:$0xf]
      %v2861 = vld [vmem:[%s9 + $0x7c] sm:$0xf]
      %v2862 = vld [vmem:[%s9 + $0x80] sm:$0xf]
      %v2863 = vld [vmem:[%s9 + $0x84] sm:$0xf]
      %v2864 = vld [vmem:[%s9 + $0x88] sm:$0xf]
      %v2865 = vld [vmem:[%s9 + $0x8c] sm:$0xf]
      %v2866 = vld [vmem:[%s9 + $0x90] sm:$0xf]
      %v2867 = vld [vmem:[%s9 + $0x94] sm:$0xf]
      %v2868 = vld [vmem:[%s9 + $0x98] sm:$0xf]
      %v2869 = vld [vmem:[%s9 + $0x9c] sm:$0xf]
      %v2870 = vld [vmem:[%s9 + $0xa0] sm:$0xf]
      %v2871 = vld [vmem:[%s9 + $0xa4] sm:$0xf]
      %v2872 = vld [vmem:[%s9 + $0xa8] sm:$0xf]
      %v2873 = vld [vmem:[%s9 + $0xac] sm:$0xf]
      %v2874 = vld [vmem:[%s9 + $0xb0] sm:$0xf]
      %v2875 = vld [vmem:[%s9 + $0xb4] sm:$0xf]
      %v2876 = vld [vmem:[%s9 + $0xb8] sm:$0xf]
      %v2877 = vld [vmem:[%s9 + $0xbc] sm:$0xf]
      %v2878 = vld [vmem:[%s9 + $0xc0] sm:$0xf]
      %v2879 = vld [vmem:[%s9 + $0xc4] sm:$0xf]
      %v2880 = vld [vmem:[%s9 + $0xc8] sm:$0xf]
      %v2881 = vld [vmem:[%s9 + $0xcc] sm:$0xf]
      %v2882 = vld [vmem:[%s9 + $0xd0] sm:$0xf]
      %v2883 = vld [vmem:[%s9 + $0xd4] sm:$0xf]
      %v2884 = vld [vmem:[%s9 + $0xd8] sm:$0xf]
      %v2885 = vld [vmem:[%s9 + $0xdc] sm:$0xf]
      %v2886 = vld [vmem:[%s9 + $0xe0] sm:$0xf]
      %v2887 = vld [vmem:[%s9 + $0xe4] sm:$0xf]
      %v2888 = vld [vmem:[%s9 + $0xe8] sm:$0xf]
      %v2889 = vld [vmem:[%s9 + $0xec] sm:$0xf]
      %v2890 = vld [vmem:[%s9 + $0xf0] sm:$0xf]
      %v2891 = vld [vmem:[%s9 + $0xf4] sm:$0xf]
      %v2892 = vld [vmem:[%s9 + $0xf8] sm:$0xf]
      %v2893 = vld [vmem:[%s9 + $0xfc] sm:$0xf]
      %v2894 = vpack.c.bf16 %v2770, %v2766
      %v2895 = vpack.c.bf16 %v2771, %v2767
      %v2896 = vpack.c.bf16 %v2772, %v2768
      %v2897 = vpack.c.bf16 %v2773, %v2769
      %v2898 = vpack.c.bf16 %v2778, %v2774
      %v2899 = vpack.c.bf16 %v2779, %v2775
      %v2900 = vpack.c.bf16 %v2780, %v2776
      %v2901 = vpack.c.bf16 %v2781, %v2777
      %v2902 = vpack.c.bf16 %v2786, %v2782
      %v2903 = vpack.c.bf16 %v2787, %v2783
      %v2904 = vpack.c.bf16 %v2788, %v2784
      %v2905 = vpack.c.bf16 %v2789, %v2785
      %v2906 = vpack.c.bf16 %v2794, %v2790
      %v2907 = vpack.c.bf16 %v2795, %v2791
      %v2908 = vpack.c.bf16 %v2796, %v2792
      %v2909 = vpack.c.bf16 %v2797, %v2793
      %v2910 = vpack.c.bf16 %v2802, %v2798
      %v2911 = vpack.c.bf16 %v2803, %v2799
      %v2912 = vpack.c.bf16 %v2804, %v2800
      %v2913 = vpack.c.bf16 %v2805, %v2801
      %v2914 = vpack.c.bf16 %v2810, %v2806
      %v2915 = vpack.c.bf16 %v2811, %v2807
      %v2916 = vpack.c.bf16 %v2812, %v2808
      %v2917 = vpack.c.bf16 %v2813, %v2809
      %v2918 = vpack.c.bf16 %v2818, %v2814
      %v2919 = vpack.c.bf16 %v2819, %v2815
      %v2920 = vpack.c.bf16 %v2820, %v2816
      %v2921 = vpack.c.bf16 %v2821, %v2817
      %v2922 = vpack.c.bf16 %v2826, %v2822
      %v2923 = vpack.c.bf16 %v2827, %v2823
      %v2924 = vpack.c.bf16 %v2828, %v2824
      %v2925 = vpack.c.bf16 %v2829, %v2825
      %v2926 = vld [vmem:[%s10] sm:$0x1]
      %v2928 = vlaneseq
      %v2929 = vshrl.u32 %v2928, 7
      %v2930 = vsub.s32 0, %v2929
      %v2931 = vrot.slane %v2926, %v2930
      %v2997 = vunpack.c.l.b16 %v2830
      %v2998 = vunpack.c.l.b16 %v2831
      %v2999 = vunpack.c.l.b16 %v2832
      %v3000 = vunpack.c.l.b16 %v2833
      %v3001 = vunpack.c.l.b16 %v2834
      %v3002 = vunpack.c.l.b16 %v2835
      %v3003 = vunpack.c.l.b16 %v2836
      %v3004 = vunpack.c.l.b16 %v2837
      %v3005 = vunpack.c.l.b16 %v2838
      %v3006 = vunpack.c.l.b16 %v2839
      %v3007 = vunpack.c.l.b16 %v2840
      %v3008 = vunpack.c.l.b16 %v2841
      %v3009 = vunpack.c.l.b16 %v2842
      %v3010 = vunpack.c.l.b16 %v2843
      %v3011 = vunpack.c.l.b16 %v2844
      %v3012 = vunpack.c.l.b16 %v2845
      %v3013 = vunpack.c.l.b16 %v2846
      %v3014 = vunpack.c.l.b16 %v2847
      %v3015 = vunpack.c.l.b16 %v2848
      %v3016 = vunpack.c.l.b16 %v2849
      %v3017 = vunpack.c.l.b16 %v2850
      %v3018 = vunpack.c.l.b16 %v2851
      %v3019 = vunpack.c.l.b16 %v2852
      %v3020 = vunpack.c.l.b16 %v2853
      %v3021 = vunpack.c.l.b16 %v2854
      %v3022 = vunpack.c.l.b16 %v2855
      %v3023 = vunpack.c.l.b16 %v2856
      %v3024 = vunpack.c.l.b16 %v2857
      %v3025 = vunpack.c.l.b16 %v2858
      %v3026 = vunpack.c.l.b16 %v2859
      %v3027 = vunpack.c.l.b16 %v2860
      %v3028 = vunpack.c.l.b16 %v2861
      %v3029 = vunpack.c.l.b16 %v2862
      %v3030 = vunpack.c.l.b16 %v2863
      %v3031 = vunpack.c.l.b16 %v2864
      %v3032 = vunpack.c.l.b16 %v2865
      %v3033 = vunpack.c.l.b16 %v2866
      %v3034 = vunpack.c.l.b16 %v2867
      %v3035 = vunpack.c.l.b16 %v2868
      %v3036 = vunpack.c.l.b16 %v2869
      %v3037 = vunpack.c.l.b16 %v2870
      %v3038 = vunpack.c.l.b16 %v2871
      %v3039 = vunpack.c.l.b16 %v2872
      %v3040 = vunpack.c.l.b16 %v2873
      %v3041 = vunpack.c.l.b16 %v2874
      %v3042 = vunpack.c.l.b16 %v2875
      %v3043 = vunpack.c.l.b16 %v2876
      %v3044 = vunpack.c.l.b16 %v2877
      %v3045 = vunpack.c.l.b16 %v2878
      %v3046 = vunpack.c.l.b16 %v2879
      %v3047 = vunpack.c.l.b16 %v2880
      %v3048 = vunpack.c.l.b16 %v2881
      %v3049 = vunpack.c.l.b16 %v2882
      %v3050 = vunpack.c.l.b16 %v2883
      %v3051 = vunpack.c.l.b16 %v2884
      %v3052 = vunpack.c.l.b16 %v2885
      %v3053 = vunpack.c.l.b16 %v2886
      %v3054 = vunpack.c.l.b16 %v2887
      %v3055 = vunpack.c.l.b16 %v2888
      %v3056 = vunpack.c.l.b16 %v2889
      %v3057 = vunpack.c.l.b16 %v2890
      %v3058 = vunpack.c.l.b16 %v2891
      %v3059 = vunpack.c.l.b16 %v2892
      %v3060 = vunpack.c.l.b16 %v2893
      %v3061 = vpack.c.b16 %v2998, %v2997
      %v3062 = vpack.c.b16 %v3000, %v2999
      %v3063 = vpack.c.b16 %v3002, %v3001
      %v3064 = vpack.c.b16 %v3004, %v3003
      %v3065 = vpack.c.b16 %v3006, %v3005
      %v3066 = vpack.c.b16 %v3008, %v3007
      %v3067 = vpack.c.b16 %v3010, %v3009
      %v3068 = vpack.c.b16 %v3012, %v3011
      %v3069 = vpack.c.b16 %v3014, %v3013
      %v3070 = vpack.c.b16 %v3016, %v3015
      %v3071 = vpack.c.b16 %v3018, %v3017
      %v3072 = vpack.c.b16 %v3020, %v3019
      %v3073 = vpack.c.b16 %v3022, %v3021
      %v3074 = vpack.c.b16 %v3024, %v3023
      %v3075 = vpack.c.b16 %v3026, %v3025
      %v3076 = vpack.c.b16 %v3028, %v3027
      %v3077 = vpack.c.b16 %v3030, %v3029
      %v3078 = vpack.c.b16 %v3032, %v3031
      %v3079 = vpack.c.b16 %v3034, %v3033
      %v3080 = vpack.c.b16 %v3036, %v3035
      %v3081 = vpack.c.b16 %v3038, %v3037
      %v3082 = vpack.c.b16 %v3040, %v3039
      %v3083 = vpack.c.b16 %v3042, %v3041
      %v3084 = vpack.c.b16 %v3044, %v3043
      %v3085 = vpack.c.b16 %v3046, %v3045
      %v3086 = vpack.c.b16 %v3048, %v3047
      %v3087 = vpack.c.b16 %v3050, %v3049
      %v3088 = vpack.c.b16 %v3052, %v3051
      %v3089 = vpack.c.b16 %v3054, %v3053
      %v3090 = vpack.c.b16 %v3056, %v3055
      %v3091 = vpack.c.b16 %v3058, %v3057
      %v3092 = vpack.c.b16 %v3060, %v3059
      %3125 = vmatprep.subr.bf16.mxu0 0
      %3126 = vmatpush1.bf16.msra.mxu0 %v3068
      %3127 = vmatprep.subr.bf16.mxu0 0
      %3128 = vmatpush1.bf16.msra.mxu0 %v3067
      %3129 = vmatprep.subr.bf16.mxu0 0
      %3130 = vmatpush1.bf16.msra.mxu0 %v3066
      %3131 = vmatprep.subr.bf16.mxu0 0
      %3132 = vmatpush1.bf16.msra.mxu0 %v3065
      %3133 = vmatprep.subr.bf16.mxu0 0
      %3134 = vmatpush1.bf16.msra.mxu0 %v3064
      %3135 = vmatprep.subr.bf16.mxu0 0
      %3136 = vmatpush1.bf16.msra.mxu0 %v3063
      %3137 = vmatprep.subr.bf16.mxu0 0
      %3138 = vmatpush1.bf16.msra.mxu0 %v3062
      %3139 = vmatprep.subr.bf16.mxu0 0
      %3140 = vmatpush1.bf16.msra.mxu0 %v3061
      %3141 = vmatprep.subr.bf16.mxu0 0
      %3142 = vmatpush2.bf16.msra.mxu0 %v3076
      %3143 = vmatprep.subr.bf16.mxu0 0
      %3144 = vmatpush2.bf16.msra.mxu0 %v3075
      %3145 = vmatprep.subr.bf16.mxu0 0
      %3146 = vmatpush2.bf16.msra.mxu0 %v3074
      %3147 = vmatprep.subr.bf16.mxu0 0
      %3148 = vmatpush2.bf16.msra.mxu0 %v3073
      %3149 = vmatprep.subr.bf16.mxu0 0
      %3150 = vmatpush2.bf16.msra.mxu0 %v3072
      %3151 = vmatprep.subr.bf16.mxu0 0
      %3152 = vmatpush2.bf16.msra.mxu0 %v3071
      %3153 = vmatprep.subr.bf16.mxu0 0
      %3154 = vmatpush2.bf16.msra.mxu0 %v3070
      %3155 = vmatprep.subr.bf16.mxu0 0
      %3156 = vmatpush2.bf16.msra.mxu0 %v3069
      %3157 = vmatprep.mubr.bf16.mxu0 %v2895
      %3158 = vmatmul.mubr.bf16.gmra.mxu0 %v2894
      %v3159 = vpop.f32.mrf.mxu0
      %v3160 = vadd.f32 %v2931, %v3159
      %v3161 = vpop.f32.mrf.mxu0
      %v3162 = vpop.f32.mrf.mxu0
      %v3163 = vadd.f32 %v2931, %v3162
      %v3164 = vpop.f32.mrf.mxu0
      %3165 = vmatprep.mubr.bf16.mxu0 %v2899
      %3166 = vmatmul.mubr.bf16.gmra.mxu0 %v2898
      %v3167 = vpop.f32.mrf.mxu0
      %v3168 = vadd.f32 %v2931, %v3167
      %v3169 = vpop.f32.mrf.mxu0
      %v3170 = vpop.f32.mrf.mxu0
      %v3171 = vadd.f32 %v2931, %v3170
      %v3172 = vpop.f32.mrf.mxu0
      %3173 = vmatprep.mubr.bf16.mxu0 %v2903
      %3174 = vmatmul.mubr.bf16.gmra.mxu0 %v2902
      %v3175 = vpop.f32.mrf.mxu0
      %v3176 = vadd.f32 %v2931, %v3175
      %v3177 = vpop.f32.mrf.mxu0
      %v3178 = vpop.f32.mrf.mxu0
      %v3179 = vadd.f32 %v2931, %v3178
      %v3180 = vpop.f32.mrf.mxu0
      %3181 = vmatprep.mubr.bf16.mxu0 %v2907
      %3182 = vmatmul.mubr.bf16.gmra.mxu0 %v2906
      %v3183 = vpop.f32.mrf.mxu0
      %v3184 = vadd.f32 %v2931, %v3183
      %v3185 = vpop.f32.mrf.mxu0
      %v3186 = vpop.f32.mrf.mxu0
      %v3187 = vadd.f32 %v2931, %v3186
      %v3188 = vpop.f32.mrf.mxu0
      %3189 = vmatprep.mubr.bf16.mxu0 %v2911
      %3190 = vmatmul.mubr.bf16.gmra.mxu0 %v2910
      %v3191 = vpop.f32.mrf.mxu0
      %v3192 = vadd.f32 %v2931, %v3191
      %v3193 = vpop.f32.mrf.mxu0
      %v3194 = vpop.f32.mrf.mxu0
      %v3195 = vadd.f32 %v2931, %v3194
      %v3196 = vpop.f32.mrf.mxu0
      %3197 = vmatprep.mubr.bf16.mxu0 %v2915
      %3198 = vmatmul.mubr.bf16.gmra.mxu0 %v2914
      %v3199 = vpop.f32.mrf.mxu0
      %v3200 = vadd.f32 %v2931, %v3199
      %v3201 = vpop.f32.mrf.mxu0
      %v3202 = vpop.f32.mrf.mxu0
      %v3203 = vadd.f32 %v2931, %v3202
      %v3204 = vpop.f32.mrf.mxu0
      %3205 = vmatprep.mubr.bf16.mxu0 %v2919
      %3206 = vmatmul.mubr.bf16.gmra.mxu0 %v2918
      %v3207 = vpop.f32.mrf.mxu0
      %v3208 = vadd.f32 %v2931, %v3207
      %v3209 = vpop.f32.mrf.mxu0
      %v3210 = vpop.f32.mrf.mxu0
      %v3211 = vadd.f32 %v2931, %v3210
      %v3212 = vpop.f32.mrf.mxu0
      %3213 = vmatprep.mubr.bf16.mxu0 %v2923
      %3214 = vmatmul.mubr.bf16.gmra.mxu0 %v2922
      %v3215 = vpop.f32.mrf.mxu0
      %v3216 = vadd.f32 %v2931, %v3215
      %v3217 = vpop.f32.mrf.mxu0
      %v3218 = vpop.f32.mrf.mxu0
      %v3219 = vadd.f32 %v2931, %v3218
      %v3220 = vpop.f32.mrf.mxu0
      %3221 = vdwg.mxu0
      %3222 = vmatprep.subr.bf16.mxu0 0
      %3223 = vmatpush1.bf16.msra.mxu0 %v3084
      %3224 = vmatprep.subr.bf16.mxu0 0
      %3225 = vmatpush1.bf16.msra.mxu0 %v3083
      %3226 = vmatprep.subr.bf16.mxu0 0
      %3227 = vmatpush1.bf16.msra.mxu0 %v3082
      %3228 = vmatprep.subr.bf16.mxu0 0
      %3229 = vmatpush1.bf16.msra.mxu0 %v3081
      %3230 = vmatprep.subr.bf16.mxu0 0
      %3231 = vmatpush1.bf16.msra.mxu0 %v3080
      %3232 = vmatprep.subr.bf16.mxu0 0
      %3233 = vmatpush1.bf16.msra.mxu0 %v3079
      %3234 = vmatprep.subr.bf16.mxu0 0
      %3235 = vmatpush1.bf16.msra.mxu0 %v3078
      %3236 = vmatprep.subr.bf16.mxu0 0
      %3237 = vmatpush1.bf16.msra.mxu0 %v3077
      %3238 = vmatprep.subr.bf16.mxu0 0
      %3239 = vmatpush2.bf16.msra.mxu0 %v3092
      %3240 = vmatprep.subr.bf16.mxu0 0
      %3241 = vmatpush2.bf16.msra.mxu0 %v3091
      %3242 = vmatprep.subr.bf16.mxu0 0
      %3243 = vmatpush2.bf16.msra.mxu0 %v3090
      %3244 = vmatprep.subr.bf16.mxu0 0
      %3245 = vmatpush2.bf16.msra.mxu0 %v3089
      %3246 = vmatprep.subr.bf16.mxu0 0
      %3247 = vmatpush2.bf16.msra.mxu0 %v3088
      %3248 = vmatprep.subr.bf16.mxu0 0
      %3249 = vmatpush2.bf16.msra.mxu0 %v3087
      %3250 = vmatprep.subr.bf16.mxu0 0
      %3251 = vmatpush2.bf16.msra.mxu0 %v3086
      %3252 = vmatprep.subr.bf16.mxu0 0
      %3253 = vmatpush2.bf16.msra.mxu0 %v3085
      %3254 = vmatprep.mubr.bf16.mxu0 %v2897
      %3255 = vmatmul.mubr.bf16.gmra.mxu0 %v2896
      %v3256 = vpop.f32.mrf.mxu0
      %v3257 = vadd.f32 %v3160, %v3256
      %v3258 = vpop.f32.mrf.mxu0
      %v3259 = vpop.f32.mrf.mxu0
      %v3260 = vadd.f32 %v3163, %v3259
      %v3261 = vpop.f32.mrf.mxu0
      %3262 = vmatprep.mubr.bf16.mxu0 %v2901
      %3263 = vmatmul.mubr.bf16.gmra.mxu0 %v2900
      %v3264 = vpop.f32.mrf.mxu0
      %v3265 = vadd.f32 %v3168, %v3264
      %v3266 = vpop.f32.mrf.mxu0
      %v3267 = vpop.f32.mrf.mxu0
      %v3268 = vadd.f32 %v3171, %v3267
      %v3269 = vpop.f32.mrf.mxu0
      %3270 = vmatprep.mubr.bf16.mxu0 %v2905
      %3271 = vmatmul.mubr.bf16.gmra.mxu0 %v2904
      %v3272 = vpop.f32.mrf.mxu0
      %v3273 = vadd.f32 %v3176, %v3272
      %v3274 = vpop.f32.mrf.mxu0
      %v3275 = vpop.f32.mrf.mxu0
      %v3276 = vadd.f32 %v3179, %v3275
      %v3277 = vpop.f32.mrf.mxu0
      %3278 = vmatprep.mubr.bf16.mxu0 %v2909
      %3279 = vmatmul.mubr.bf16.gmra.mxu0 %v2908
      %v3280 = vpop.f32.mrf.mxu0
      %v3281 = vadd.f32 %v3184, %v3280
      %v3282 = vpop.f32.mrf.mxu0
      %v3283 = vpop.f32.mrf.mxu0
      %v3284 = vadd.f32 %v3187, %v3283
      %v3285 = vpop.f32.mrf.mxu0
      %3286 = vmatprep.mubr.bf16.mxu0 %v2913
      %3287 = vmatmul.mubr.bf16.gmra.mxu0 %v2912
      %v3288 = vpop.f32.mrf.mxu0
      %v3289 = vadd.f32 %v3192, %v3288
      %v3290 = vpop.f32.mrf.mxu0
      %v3291 = vpop.f32.mrf.mxu0
      %v3292 = vadd.f32 %v3195, %v3291
      %v3293 = vpop.f32.mrf.mxu0
      %3294 = vmatprep.mubr.bf16.mxu0 %v2917
      %3295 = vmatmul.mubr.bf16.gmra.mxu0 %v2916
      %v3296 = vpop.f32.mrf.mxu0
      %v3297 = vadd.f32 %v3200, %v3296
      %v3298 = vpop.f32.mrf.mxu0
      %v3299 = vpop.f32.mrf.mxu0
      %v3300 = vadd.f32 %v3203, %v3299
      %v3301 = vpop.f32.mrf.mxu0
      %3302 = vmatprep.mubr.bf16.mxu0 %v2921
      %3303 = vmatmul.mubr.bf16.gmra.mxu0 %v2920
      %v3304 = vpop.f32.mrf.mxu0
      %v3305 = vadd.f32 %v3208, %v3304
      %v3306 = vpop.f32.mrf.mxu0
      %v3307 = vpop.f32.mrf.mxu0
      %v3308 = vadd.f32 %v3211, %v3307
      %v3309 = vpop.f32.mrf.mxu0
      %3310 = vmatprep.mubr.bf16.mxu0 %v2925
      %3311 = vmatmul.mubr.bf16.gmra.mxu0 %v2924
      %v3312 = vpop.f32.mrf.mxu0
      %v3313 = vadd.f32 %v3216, %v3312
      %v3314 = vpop.f32.mrf.mxu0
      %v3315 = vpop.f32.mrf.mxu0
      %v3316 = vadd.f32 %v3219, %v3315
      %v3317 = vpop.f32.mrf.mxu0
      %3318 = vdwg.mxu0
      %v3319 = vmax.f32 %v3257, 0.0
      %v3320 = vmax.f32 %v3260, 0.0
      %v3321 = vmax.f32 %v3265, 0.0
      %v3322 = vmax.f32 %v3268, 0.0
      %v3323 = vmax.f32 %v3273, 0.0
      %v3324 = vmax.f32 %v3276, 0.0
      %v3325 = vmax.f32 %v3281, 0.0
      %v3326 = vmax.f32 %v3284, 0.0
      %v3327 = vmax.f32 %v3289, 0.0
      %v3328 = vmax.f32 %v3292, 0.0
      %v3329 = vmax.f32 %v3297, 0.0
      %v3330 = vmax.f32 %v3300, 0.0
      %v3331 = vmax.f32 %v3305, 0.0
      %v3332 = vmax.f32 %v3308, 0.0
      %v3333 = vmax.f32 %v3313, 0.0
      %v3334 = vmax.f32 %v3316, 0.0
      %v3335 = vlaneseq
      %v3336 = vand.u32 %v3335, 127
      %vm3337 = vcmp.ge.s32.totalorder %v3336, 5
      %vm3338 = vcmp.lt.s32.totalorder %v3336, 10
      %vm3339 = vmand %vm3337, %vm3338
      %v3340 = vsel %vm3339, %v3319, -inf
      %v3341 = vsel %vm3339, %v3320, -inf
      %v3342 = vsel %vm3339, %v3321, -inf
      %v3343 = vsel %vm3339, %v3322, -inf
      %v3344 = vsel %vm3339, %v3323, -inf
      %v3345 = vsel %vm3339, %v3324, -inf
      %v3346 = vsel %vm3339, %v3325, -inf
      %v3347 = vsel %vm3339, %v3326, -inf
      %v3348 = vsel %vm3339, %v3327, -inf
      %v3349 = vsel %vm3339, %v3328, -inf
      %v3350 = vsel %vm3339, %v3329, -inf
      %v3351 = vsel %vm3339, %v3330, -inf
      %v3352 = vsel %vm3339, %v3331, -inf
      %v3353 = vsel %vm3339, %v3332, -inf
      %v3354 = vsel %vm3339, %v3333, -inf
      %v3355 = vsel %vm3339, %v3334, -inf
      %vm3356 = vcmask 130048
      %v3357 = vsel %vm3356, %v3340, -inf
      %3358 = vmax.xlane.f32.xlu0 %v3357
      %v3359 = vpop.xlane.xlu0 %3358
      %v3360 = vsel %vm3356, %v3341, -inf
      %3361 = vmax.xlane.f32.xlu0 %v3360
      %v3362 = vpop.xlane.xlu0 %3361
      %v3363 = vsel %vm3356, %v3342, -inf
      %3364 = vmax.xlane.f32.xlu0 %v3363
      %v3365 = vpop.xlane.xlu0 %3364
      %v3366 = vsel %vm3356, %v3343, -inf
      %3367 = vmax.xlane.f32.xlu0 %v3366
      %v3368 = vpop.xlane.xlu0 %3367
      %v3369 = vsel %vm3356, %v3344, -inf
      %3370 = vmax.xlane.f32.xlu0 %v3369
      %v3371 = vpop.xlane.xlu0 %3370
      %v3372 = vsel %vm3356, %v3345, -inf
      %3373 = vmax.xlane.f32.xlu0 %v3372
      %v3374 = vpop.xlane.xlu0 %3373
      %v3375 = vsel %vm3356, %v3346, -inf
      %3376 = vmax.xlane.f32.xlu0 %v3375
      %v3377 = vpop.xlane.xlu0 %3376
      %v3378 = vsel %vm3356, %v3347, -inf
      %3379 = vmax.xlane.f32.xlu0 %v3378
      %v3380 = vpop.xlane.xlu0 %3379
      %v3381 = vsel %vm3356, %v3348, -inf
      %3382 = vmax.xlane.f32.xlu0 %v3381
      %v3383 = vpop.xlane.xlu0 %3382
      %v3384 = vsel %vm3356, %v3349, -inf
      %3385 = vmax.xlane.f32.xlu0 %v3384
      %v3386 = vpop.xlane.xlu0 %3385
      %v3387 = vsel %vm3356, %v3350, -inf
      %3388 = vmax.xlane.f32.xlu0 %v3387
      %v3389 = vpop.xlane.xlu0 %3388
      %v3390 = vsel %vm3356, %v3351, -inf
      %3391 = vmax.xlane.f32.xlu0 %v3390
      %v3392 = vpop.xlane.xlu0 %3391
      %v3393 = vsel %vm3356, %v3352, -inf
      %3394 = vmax.xlane.f32.xlu0 %v3393
      %v3395 = vpop.xlane.xlu0 %3394
      %v3396 = vsel %vm3356, %v3353, -inf
      %3397 = vmax.xlane.f32.xlu0 %v3396
      %v3398 = vpop.xlane.xlu0 %3397
      %v3399 = vsel %vm3356, %v3354, -inf
      %3400 = vmax.xlane.f32.xlu0 %v3399
      %v3401 = vpop.xlane.xlu0 %3400
      %v3402 = vsel %vm3356, %v3355, -inf
      %3403 = vmax.xlane.f32.xlu0 %v3402
      %v3404 = vpop.xlane.xlu0 %3403
      %v3405 = vsub.f32 %v3340, %v3359
      %v3406 = vsub.f32 %v3341, %v3362
      %v3407 = vsub.f32 %v3342, %v3365
      %v3408 = vsub.f32 %v3343, %v3368
      %v3409 = vsub.f32 %v3344, %v3371
      %v3410 = vsub.f32 %v3345, %v3374
      %v3411 = vsub.f32 %v3346, %v3377
      %v3412 = vsub.f32 %v3347, %v3380
      %v3413 = vsub.f32 %v3348, %v3383
      %v3414 = vsub.f32 %v3349, %v3386
      %v3415 = vsub.f32 %v3350, %v3389
      %v3416 = vsub.f32 %v3351, %v3392
      %v3417 = vsub.f32 %v3352, %v3395
      %v3418 = vsub.f32 %v3353, %v3398
      %v3419 = vsub.f32 %v3354, %v3401
      %v3420 = vsub.f32 %v3355, %v3404
      %v3421 = vmul.f32 %v3405, 1.442695
      %v3422 = vpow.pop %v3421
      %v3423 = vmul.f32 %v3406, 1.442695
      %v3424 = vpow.pop %v3423
      %v3425 = vmul.f32 %v3407, 1.442695
      %v3426 = vpow.pop %v3425
      %v3427 = vmul.f32 %v3408, 1.442695
      %v3428 = vpow.pop %v3427
      %v3429 = vmul.f32 %v3409, 1.442695
      %v3430 = vpow.pop %v3429
      %v3431 = vmul.f32 %v3410, 1.442695
      %v3432 = vpow.pop %v3431
      %v3433 = vmul.f32 %v3411, 1.442695
      %v3434 = vpow.pop %v3433
      %v3435 = vmul.f32 %v3412, 1.442695
      %v3436 = vpow.pop %v3435
      %v3437 = vmul.f32 %v3413, 1.442695
      %v3438 = vpow.pop %v3437
      %v3439 = vmul.f32 %v3414, 1.442695
      %v3440 = vpow.pop %v3439
      %v3441 = vmul.f32 %v3415, 1.442695
      %v3442 = vpow.pop %v3441
      %v3443 = vmul.f32 %v3416, 1.442695
      %v3444 = vpow.pop %v3443
      %v3445 = vmul.f32 %v3417, 1.442695
      %v3446 = vpow.pop %v3445
      %v3447 = vmul.f32 %v3418, 1.442695
      %v3448 = vpow.pop %v3447
      %v3449 = vmul.f32 %v3419, 1.442695
      %v3450 = vpow.pop %v3449
      %v3451 = vmul.f32 %v3420, 1.442695
      %v3452 = vpow.pop %v3451
      %v3453 = vsel %vm3356, %v3422, 0.0
      %3454 = vadd.xlane.f32.xlu0 %v3453
      %v3455 = vpop.xlane.xlu0 %3454
      %v3456 = vsel %vm3356, %v3424, 0.0
      %3457 = vadd.xlane.f32.xlu0 %v3456
      %v3458 = vpop.xlane.xlu0 %3457
      %v3459 = vsel %vm3356, %v3426, 0.0
      %3460 = vadd.xlane.f32.xlu0 %v3459
      %v3461 = vpop.xlane.xlu0 %3460
      %v3462 = vsel %vm3356, %v3428, 0.0
      %3463 = vadd.xlane.f32.xlu0 %v3462
      %v3464 = vpop.xlane.xlu0 %3463
      %v3465 = vsel %vm3356, %v3430, 0.0
      %3466 = vadd.xlane.f32.xlu0 %v3465
      %v3467 = vpop.xlane.xlu0 %3466
      %v3468 = vsel %vm3356, %v3432, 0.0
      %3469 = vadd.xlane.f32.xlu0 %v3468
      %v3470 = vpop.xlane.xlu0 %3469
      %v3471 = vsel %vm3356, %v3434, 0.0
      %3472 = vadd.xlane.f32.xlu0 %v3471
      %v3473 = vpop.xlane.xlu0 %3472
      %v3474 = vsel %vm3356, %v3436, 0.0
      %3475 = vadd.xlane.f32.xlu0 %v3474
      %v3476 = vpop.xlane.xlu0 %3475
      %v3477 = vsel %vm3356, %v3438, 0.0
      %3478 = vadd.xlane.f32.xlu0 %v3477
      %v3479 = vpop.xlane.xlu0 %3478
      %v3480 = vsel %vm3356, %v3440, 0.0
      %3481 = vadd.xlane.f32.xlu0 %v3480
      %v3482 = vpop.xlane.xlu0 %3481
      %v3483 = vsel %vm3356, %v3442, 0.0
      %3484 = vadd.xlane.f32.xlu0 %v3483
      %v3485 = vpop.xlane.xlu0 %3484
      %v3486 = vsel %vm3356, %v3444, 0.0
      %3487 = vadd.xlane.f32.xlu0 %v3486
      %v3488 = vpop.xlane.xlu0 %3487
      %v3489 = vsel %vm3356, %v3446, 0.0
      %3490 = vadd.xlane.f32.xlu0 %v3489
      %v3491 = vpop.xlane.xlu0 %3490
      %v3492 = vsel %vm3356, %v3448, 0.0
      %3493 = vadd.xlane.f32.xlu0 %v3492
      %v3494 = vpop.xlane.xlu0 %3493
      %v3495 = vsel %vm3356, %v3450, 0.0
      %3496 = vadd.xlane.f32.xlu0 %v3495
      %v3497 = vpop.xlane.xlu0 %3496
      %v3498 = vsel %vm3356, %v3452, 0.0
      %3499 = vadd.xlane.f32.xlu0 %v3498
      %v3500 = vpop.xlane.xlu0 %3499
      %v3501 = vrcp.pop %v3455
      %v3502 = vrcp.pop %v3458
      %v3503 = vrcp.pop %v3461
      %v3504 = vrcp.pop %v3464
      %v3505 = vrcp.pop %v3467
      %v3506 = vrcp.pop %v3470
      %v3507 = vrcp.pop %v3473
      %v3508 = vrcp.pop %v3476
      %v3509 = vrcp.pop %v3479
      %v3510 = vrcp.pop %v3482
      %v3511 = vrcp.pop %v3485
      %v3512 = vrcp.pop %v3488
      %v3513 = vrcp.pop %v3491
      %v3514 = vrcp.pop %v3494
      %v3515 = vrcp.pop %v3497
      %v3516 = vrcp.pop %v3500
      %v3517 = vmul.f32 %v3422, %v3501
      %v3518 = vmul.f32 %v3424, %v3502
      %v3519 = vmul.f32 %v3426, %v3503
      %v3520 = vmul.f32 %v3428, %v3504
      %v3521 = vmul.f32 %v3430, %v3505
      %v3522 = vmul.f32 %v3432, %v3506
      %v3523 = vmul.f32 %v3434, %v3507
      %v3524 = vmul.f32 %v3436, %v3508
      %v3525 = vmul.f32 %v3438, %v3509
      %v3526 = vmul.f32 %v3440, %v3510
      %v3527 = vmul.f32 %v3442, %v3511
      %v3528 = vmul.f32 %v3444, %v3512
      %v3529 = vmul.f32 %v3446, %v3513
      %v3530 = vmul.f32 %v3448, %v3514
      %v3531 = vmul.f32 %v3450, %v3515
      %v3532 = vmul.f32 %v3452, %v3516
      %v3533 = vsel %vm3339, %v3517, %v3319
      %v3534 = vsel %vm3339, %v3518, %v3320
      %v3535 = vsel %vm3339, %v3519, %v3321
      %v3536 = vsel %vm3339, %v3520, %v3322
      %v3537 = vsel %vm3339, %v3521, %v3323
      %v3538 = vsel %vm3339, %v3522, %v3324
      %v3539 = vsel %vm3339, %v3523, %v3325
      %v3540 = vsel %vm3339, %v3524, %v3326
      %v3541 = vsel %vm3339, %v3525, %v3327
      %v3542 = vsel %vm3339, %v3526, %v3328
      %v3543 = vsel %vm3339, %v3527, %v3329
      %v3544 = vsel %vm3339, %v3528, %v3330
      %v3545 = vsel %vm3339, %v3529, %v3331
      %v3546 = vsel %vm3339, %v3530, %v3332
      %v3547 = vsel %vm3339, %v3531, %v3333
      %v3548 = vsel %vm3339, %v3532, %v3334
      %3549 = vrot.lane.b32.xlu0 %v2310, 30
      %v3550 = vpop.permute.xlu0 %3549
      %3551 = vrot.lane.b32.xlu0 %v2313, 30
      %v3552 = vpop.permute.xlu0 %3551
      %3553 = vrot.lane.b32.xlu0 %v2318, 30
      %v3554 = vpop.permute.xlu0 %3553
      %3555 = vrot.lane.b32.xlu0 %v2321, 30
      %v3556 = vpop.permute.xlu0 %3555
      %3557 = vrot.lane.b32.xlu0 %v2326, 30
      %v3558 = vpop.permute.xlu0 %3557
      %3559 = vrot.lane.b32.xlu0 %v2329, 30
      %v3560 = vpop.permute.xlu0 %3559
      %3561 = vrot.lane.b32.xlu0 %v2334, 30
      %v3562 = vpop.permute.xlu0 %3561
      %3563 = vrot.lane.b32.xlu0 %v2337, 30
      %v3564 = vpop.permute.xlu0 %3563
      %3565 = vrot.lane.b32.xlu0 %v2342, 30
      %v3566 = vpop.permute.xlu0 %3565
      %3567 = vrot.lane.b32.xlu0 %v2345, 30
      %v3568 = vpop.permute.xlu0 %3567
      %3569 = vrot.lane.b32.xlu0 %v2350, 30
      %v3570 = vpop.permute.xlu0 %3569
      %3571 = vrot.lane.b32.xlu0 %v2353, 30
      %v3572 = vpop.permute.xlu0 %3571
      %3573 = vrot.lane.b32.xlu0 %v2358, 30
      %v3574 = vpop.permute.xlu0 %3573
      %3575 = vrot.lane.b32.xlu0 %v2361, 30
      %v3576 = vpop.permute.xlu0 %3575
      %3577 = vrot.lane.b32.xlu0 %v2366, 30
      %v3578 = vpop.permute.xlu0 %3577
      %3579 = vrot.lane.b32.xlu0 %v2369, 30
      %v3580 = vpop.permute.xlu0 %3579
      %vm3597 = vcmask 80896
      %v3598 = vsel %vm3597, 0.0, %v3550
      %v3599 = vsel %vm3597, 0.0, %v3552
      %v3600 = vsel %vm3597, 0.0, %v3554
      %v3601 = vsel %vm3597, 0.0, %v3556
      %v3602 = vsel %vm3597, 0.0, %v3558
      %v3603 = vsel %vm3597, 0.0, %v3560
      %v3604 = vsel %vm3597, 0.0, %v3562
      %v3605 = vsel %vm3597, 0.0, %v3564
      %v3606 = vsel %vm3597, 0.0, %v3566
      %v3607 = vsel %vm3597, 0.0, %v3568
      %v3608 = vsel %vm3597, 0.0, %v3570
      %v3609 = vsel %vm3597, 0.0, %v3572
      %v3610 = vsel %vm3597, 0.0, %v3574
      %v3611 = vsel %vm3597, 0.0, %v3576
      %v3612 = vsel %vm3597, 0.0, %v3578
      %v3613 = vsel %vm3597, 0.0, %v3580
      %vm3614 = vcmask 105472
      %v3615 = vsel %vm3614, %v3598, 0.0
      %v3616 = vsel %vm3614, %v3599, 0.0
      %v3617 = vsel %vm3614, %v3600, 0.0
      %v3618 = vsel %vm3614, %v3601, 0.0
      %v3619 = vsel %vm3614, %v3602, 0.0
      %v3620 = vsel %vm3614, %v3603, 0.0
      %v3621 = vsel %vm3614, %v3604, 0.0
      %v3622 = vsel %vm3614, %v3605, 0.0
      %v3623 = vsel %vm3614, %v3606, 0.0
      %v3624 = vsel %vm3614, %v3607, 0.0
      %v3625 = vsel %vm3614, %v3608, 0.0
      %v3626 = vsel %vm3614, %v3609, 0.0
      %v3627 = vsel %vm3614, %v3610, 0.0
      %v3628 = vsel %vm3614, %v3611, 0.0
      %v3629 = vsel %vm3614, %v3612, 0.0
      %v3630 = vsel %vm3614, %v3613, 0.0
      %v3631 = vadd.f32 %v3533, %v3615
      %v3632 = vadd.f32 %v3534, %v3616
      %v3633 = vadd.f32 %v3535, %v3617
      %v3634 = vadd.f32 %v3536, %v3618
      %v3635 = vadd.f32 %v3537, %v3619
      %v3636 = vadd.f32 %v3538, %v3620
      %v3637 = vadd.f32 %v3539, %v3621
      %v3638 = vadd.f32 %v3540, %v3622
      %v3639 = vadd.f32 %v3541, %v3623
      %v3640 = vadd.f32 %v3542, %v3624
      %v3641 = vadd.f32 %v3543, %v3625
      %v3642 = vadd.f32 %v3544, %v3626
      %v3643 = vadd.f32 %v3545, %v3627
      %v3644 = vadd.f32 %v3546, %v3628
      %v3645 = vadd.f32 %v3547, %v3629
      %v3646 = vadd.f32 %v3548, %v3630
      %3647 = vst.msk [vmem:[%s477] sm:$0xff] %vm3356, %v3631
      %3648 = vst.msk [vmem:[%s477 + $0x8] sm:$0xff] %vm3356, %v3632
      %3649 = vst.msk [vmem:[%s477 + $0x10] sm:$0xff] %vm3356, %v3633
      %3650 = vst.msk [vmem:[%s477 + $0x18] sm:$0xff] %vm3356, %v3634
      %3651 = vst.msk [vmem:[%s477 + $0x20] sm:$0xff] %vm3356, %v3635
      %3652 = vst.msk [vmem:[%s477 + $0x28] sm:$0xff] %vm3356, %v3636
      %3653 = vst.msk [vmem:[%s477 + $0x30] sm:$0xff] %vm3356, %v3637
      %3654 = vst.msk [vmem:[%s477 + $0x38] sm:$0xff] %vm3356, %v3638
      %3655 = vst.msk [vmem:[%s477 + $0x40] sm:$0xff] %vm3356, %v3639
      %3656 = vst.msk [vmem:[%s477 + $0x48] sm:$0xff] %vm3356, %v3640
      %3657 = vst.msk [vmem:[%s477 + $0x50] sm:$0xff] %vm3356, %v3641
      %3658 = vst.msk [vmem:[%s477 + $0x58] sm:$0xff] %vm3356, %v3642
      %3659 = vst.msk [vmem:[%s477 + $0x60] sm:$0xff] %vm3356, %v3643
      %3660 = vst.msk [vmem:[%s477 + $0x68] sm:$0xff] %vm3356, %v3644
      %3661 = vst.msk [vmem:[%s477 + $0x70] sm:$0xff] %vm3356, %v3645
      %3662 = vst.msk [vmem:[%s477 + $0x78] sm:$0xff] %vm3356, %v3646
      %s3663 = smul.u32 16, %s26
      %p3664 = scmp.lt.s32.totalorder %s3663, 31
      %s3665 = scalar_select %p3664, %s3663, 31
      %s3666 = smul.addr %s3665, 8
      %s3667 = scalar_lea.vmem %s13, %s3666
      %s3668 = smul.u32 16, %s26
      %p3669 = scmp.lt.s32.totalorder %s3668, 31
      %s3670 = scalar_select %p3669, %s3668, 31
      %s3671 = smul.addr %s3670, 8
      %s3672 = scalar_lea.vmem %s14, %s3671
      // Predicated region
      $region73: #{my_deform_forward.2} parent=71 // pred_check
        %p3673 = pneg %p322
      $region74: #{my_deform_forward.2} parent=71 // pred_check_branch
        %3675 = sbr.rel (%p3673) target = $region76
      $region75: #{my_deform_forward.2} parent=71 // pred_region
        %s3676 = smul.u32 16, %s26
      $region76: #{my_deform_forward.2} parent=71 // pred_fallthru
        _
      // Predicated region
      $region77: #{my_deform_forward.2} parent=71 // pred_check
        %p3677 = pneg %p348
      $region78: #{my_deform_forward.2} parent=71 // pred_check_branch
        %3679 = sbr.rel (%p3677) target = $region80
      $region79: #{my_deform_forward.2} parent=71 // pred_region
        %s3680 = smul.u32 16, %s26
      $region80: #{my_deform_forward.2} parent=71 // pred_fallthru
        _
    $region72: #{my_deform_forward.2} parent=5 // pred_fallthru
      _
    %p3681 = scmp.le.s32.totalorder 2, %s21
    // Predicated region
    $region81: #{my_deform_forward.2} parent=5 // pred_check
      %p3682 = pneg %p3681
    $region82: #{my_deform_forward.2} parent=5 // pred_check_branch
      %3684 = sbr.rel (%p3682) target = $region84
    $region83: #{my_deform_forward.2} parent=5 // pred_region
      %s3685 = ssub.s32 %s21, 2
      // Predicated region
      $region85: #{my_deform_forward.2} parent=83 // pred_check
        %p3686 = pneg %p328
      $region86: #{my_deform_forward.2} parent=83 // pred_check_branch
        %3688 = sbr.rel (%p3686) target = $region88
      $region87: #{my_deform_forward.2} parent=83 // pred_region
        %s3689 = smul.u32 16, %s27
        %p3690 = scmp.lt.s32.totalorder %s3689, 31
        %s3691 = scalar_select %p3690, %s3689, 31
        %s3692 = smul.addr %s3691, 8
        %s3693 = scalar_lea.vmem %s13, %s3692
      $region88: #{my_deform_forward.2} parent=83 // pred_fallthru
        _
      // Predicated region
      $region89: #{my_deform_forward.2} parent=83 // pred_check
        %p3694 = pneg %p354
      $region90: #{my_deform_forward.2} parent=83 // pred_check_branch
        %3696 = sbr.rel (%p3694) target = $region92
      $region91: #{my_deform_forward.2} parent=83 // pred_region
        %s3697 = smul.u32 16, %s27
        %p3698 = scmp.lt.s32.totalorder %s3697, 31
        %s3699 = scalar_select %p3698, %s3697, 31
        %s3700 = smul.addr %s3699, 8
        %s3701 = scalar_lea.vmem %s14, %s3700
      $region92: #{my_deform_forward.2} parent=83 // pred_fallthru
        _
    $region84: #{my_deform_forward.2} parent=5 // pred_fallthru
      _
  $region6: #{my_deform_forward.2} parent=0 // loop_footer
    %s25 = sadd.s32 1, %s21
  $region7: #{my_deform_forward.2} parent=0 // loop_footer_branch
    %20 = sbr.rel target = $region3
  $region8: #{my_deform_forward.2} parent=0 // loop_exit
    _

// kernel: my_deform_forward.3
$region0: #{my_deform_forward.3}
  #allocation0 [shape = 'u32[]', space=smem, size = 0x4, offset = 0x4, fixed_abs, tag = 'smem constant byte address 0x4 - core index']
  #allocation1 [shape = 'u32[144,128]{1,0:T(1,128)}', space=vmem, size = 0x12000, scoped, tag = 'internal scratch']
  %s0 = inlined_call_operand.vmem [shape: f32[256,16], index: 0, kind: input, shape index: {}]
  %s1 = inlined_call_operand.vmem [shape: f32[16,16], index: 1, kind: input, shape index: {}]
  %s2 = inlined_call_operand.vmem [shape: f32[256,3], index: 2, kind: input, shape index: {}]
  %s3 = inlined_call_operand.vmem [shape: f32[256,3], index: 3, kind: input, shape index: {}]
  %s4 = inlined_call_operand.vmem [shape: f32[9,64], index: 4, kind: input, shape index: {}]
  %s5 = inlined_call_operand.vmem [shape: f32[1,64], index: 5, kind: input, shape index: {}]
  %s6 = inlined_call_operand.vmem [shape: bf16[64,64], index: 6, kind: input, shape index: {}]
  %s7 = inlined_call_operand.vmem [shape: f32[1,64], index: 7, kind: input, shape index: {}]
  %s8 = inlined_call_operand.vmem [shape: bf16[64,64], index: 8, kind: input, shape index: {}]
  %s9 = inlined_call_operand.vmem [shape: f32[1,64], index: 9, kind: input, shape index: {}]
  %s10 = inlined_call_operand.vmem [shape: bf16[64,128], index: 10, kind: input, shape index: {}]
  %s11 = inlined_call_operand.vmem [shape: f32[1,128], index: 11, kind: input, shape index: {}]
  %s12 = inlined_call_operand.vmem [shape: bf16[128,128], index: 12, kind: input, shape index: {}]
  %s13 = inlined_call_operand.vmem [shape: f32[1,128], index: 13, kind: input, shape index: {}]
  %s14 = inlined_call_operand.vmem [shape: bf16[128,16], index: 14, kind: input, shape index: {}]
  %s15 = inlined_call_operand.vmem [shape: f32[1,16], index: 15, kind: input, shape index: {}]
  %s16 = inlined_call_operand.vmem [shape: f32[256,16], index: 16, kind: output, shape index: {}]
  %s17 = sld [smem:[#allocation0]]
  $region97: #{my_deform_forward.3} parent=0
    _
  %s19 = ssub.s32 1, %s17
  %s20 = scalar_select 0, %s19, %s17
  loop: start=0, step=1, limit=4
  $region2: #{my_deform_forward.3} parent=0 // loop_pre_header
    _
  $region3: #{my_deform_forward.3} parent=0 // loop_header
    %s22 = sphi 0, %s26
    %p23 = scmp.ge.s32.totalorder %s22, 4
    %s32 = sphi 0, %s34
    %s35 = sphi 0, %s32
    %s36 = sphi 0, %s35
    %s52 = sphi 0, %s36
    %s56 = sphi 0, %s56
    %s58 = sphi 0, %s56
    %s59 = sphi 0, %s58
    %s73 = sphi 0, %s59
    %s79 = sphi 0, %s81
    %s82 = sphi 0, %s79
    %s83 = sphi 0, %s82
    %s99 = sphi 0, %s83
    %s105 = sphi 0, %s107
    %s108 = sphi 0, %s105
    %s109 = sphi 0, %s108
    %s125 = sphi 0, %s109
    %s129 = sphi 0, %s129
    %s131 = sphi 0, %s129
    %s132 = sphi 0, %s131
    %s146 = sphi 0, %s132
    %s150 = sphi 0, %s150
    %s152 = sphi 0, %s150
    %s153 = sphi 0, %s152
    %s167 = sphi 0, %s153
    %s171 = sphi 0, %s171
    %s173 = sphi 0, %s171
    %s174 = sphi 0, %s173
    %s188 = sphi 0, %s174
    %s192 = sphi 0, %s192
    %s194 = sphi 0, %s192
    %s195 = sphi 0, %s194
    %s209 = sphi 0, %s195
    %s213 = sphi 0, %s213
    %s215 = sphi 0, %s213
    %s216 = sphi 0, %s215
    %s230 = sphi 0, %s216
    %s234 = sphi 0, %s234
    %s236 = sphi 0, %s234
    %s237 = sphi 0, %s236
    %s251 = sphi 0, %s237
    %s255 = sphi 0, %s255
    %s257 = sphi 0, %s255
    %s258 = sphi 0, %s257
    %s272 = sphi 0, %s258
    %s276 = sphi 0, %s276
    %s278 = sphi 0, %s276
    %s279 = sphi 0, %s278
    %s293 = sphi 0, %s279
    %s297 = sphi 0, %s297
    %s299 = sphi 0, %s297
    %s300 = sphi 0, %s299
    %s314 = sphi 0, %s300
    %s318 = sphi 0, %s318
    %s320 = sphi 0, %s318
    %s321 = sphi 0, %s320
    %s335 = sphi 0, %s321
    %s339 = sphi 0, %s339
    %s341 = sphi 0, %s339
    %s342 = sphi 0, %s341
    %s356 = sphi 0, %s342
    %s360 = sphi 0, %s360
    %s362 = sphi 0, %s360
    %s363 = sphi 0, %s362
    %s377 = sphi 0, %s363
    %s383 = sphi 0, %s385
    %s386 = sphi 0, %s383
    %s387 = sphi 0, %s386
    %s403 = sphi 0, %s387
  $region4: #{my_deform_forward.3} parent=0 // loop_header_branch
    %25 = sbr.rel (%p23) target = $region8
  $region5: #{my_deform_forward.3} parent=0 // loop_body
    %s27 = ssub.s32 %s22, 1
    %s28 = ssub.s32 %s22, 2
    %s29 = sadd.s32 %s22, 1
    %s30 = ssub.s32 %s22, %s29
    %p31 = scmp.eq.s32.totalorder %s30, 0
    %s33 = sadd.s32 %s32, 1
    %s34 = scalar_select %p31, %s32, %s33
    %p37 = pneg %p31
    %p38 = scmp.eq.s32.totalorder %s22, 1
    %p39 = por %p37, %p38
    %p40 = scmp.ne.s32.totalorder %s32, %s35
    %p41 = scmp.eq.s32.totalorder %s22, 0
    %p42 = por %p40, %p41
    %p43 = scmp.ne.s32.totalorder %s32, %s35
    %p44 = scmp.eq.s32.totalorder %s27, 1
    %p45 = por %p43, %p44
    %p46 = scmp.ne.s32.totalorder %s35, %s36
    %p47 = scmp.eq.s32.totalorder %s27, 0
    %p48 = por %p46, %p47
    %p49 = scmp.ne.s32.totalorder %s35, %s36
    %p50 = scmp.eq.s32.totalorder %s28, 1
    %p51 = por %p49, %p50
    %p53 = scmp.ne.s32.totalorder %s36, %s52
    %p54 = scmp.eq.s32.totalorder %s28, 0
    %p55 = por %p53, %p54
    %s57 = sadd.s32 %s56, 1
    %p60 = scmp.eq.s32.totalorder %s22, 1
    %p61 = scmp.ne.s32.totalorder %s56, %s58
    %p62 = scmp.eq.s32.totalorder %s22, 0
    %p63 = por %p61, %p62
    %p64 = scmp.ne.s32.totalorder %s56, %s58
    %p65 = scmp.eq.s32.totalorder %s27, 1
    %p66 = por %p64, %p65
    %p67 = scmp.ne.s32.totalorder %s58, %s59
    %p68 = scmp.eq.s32.totalorder %s27, 0
    %p69 = por %p67, %p68
    %p70 = scmp.ne.s32.totalorder %s58, %s59
    %p71 = scmp.eq.s32.totalorder %s28, 1
    %p72 = por %p70, %p71
    %p74 = scmp.ne.s32.totalorder %s59, %s73
    %p75 = scmp.eq.s32.totalorder %s28, 0
    %p76 = por %p74, %p75
    %s77 = ssub.s32 %s22, %s29
    %p78 = scmp.eq.s32.totalorder %s77, 0
    %s80 = sadd.s32 %s79, 1
    %s81 = scalar_select %p78, %s79, %s80
    %p84 = pneg %p78
    %p85 = scmp.eq.s32.totalorder %s22, 1
    %p86 = por %p84, %p85
    %p87 = scmp.ne.s32.totalorder %s79, %s82
    %p88 = scmp.eq.s32.totalorder %s22, 0
    %p89 = por %p87, %p88
    %p90 = scmp.ne.s32.totalorder %s79, %s82
    %p91 = scmp.eq.s32.totalorder %s27, 1
    %p92 = por %p90, %p91
    %p93 = scmp.ne.s32.totalorder %s82, %s83
    %p94 = scmp.eq.s32.totalorder %s27, 0
    %p95 = por %p93, %p94
    %p96 = scmp.ne.s32.totalorder %s82, %s83
    %p97 = scmp.eq.s32.totalorder %s28, 1
    %p98 = por %p96, %p97
    %p100 = scmp.ne.s32.totalorder %s83, %s99
    %p101 = scmp.eq.s32.totalorder %s28, 0
    %p102 = por %p100, %p101
    %s103 = ssub.s32 %s22, %s29
    %p104 = scmp.eq.s32.totalorder %s103, 0
    %s106 = sadd.s32 %s105, 1
    %s107 = scalar_select %p104, %s105, %s106
    %p110 = pneg %p104
    %p111 = scmp.eq.s32.totalorder %s22, 1
    %p112 = por %p110, %p111
    %p113 = scmp.ne.s32.totalorder %s105, %s108
    %p114 = scmp.eq.s32.totalorder %s22, 0
    %p115 = por %p113, %p114
    %p116 = scmp.ne.s32.totalorder %s105, %s108
    %p117 = scmp.eq.s32.totalorder %s27, 1
    %p118 = por %p116, %p117
    %p119 = scmp.ne.s32.totalorder %s108, %s109
    %p120 = scmp.eq.s32.totalorder %s27, 0
    %p121 = por %p119, %p120
    %p122 = scmp.ne.s32.totalorder %s108, %s109
    %p123 = scmp.eq.s32.totalorder %s28, 1
    %p124 = por %p122, %p123
    %p126 = scmp.ne.s32.totalorder %s109, %s125
    %p127 = scmp.eq.s32.totalorder %s28, 0
    %p128 = por %p126, %p127
    %s130 = sadd.s32 %s129, 1
    %p133 = scmp.eq.s32.totalorder %s22, 1
    %p134 = scmp.ne.s32.totalorder %s129, %s131
    %p135 = scmp.eq.s32.totalorder %s22, 0
    %p136 = por %p134, %p135
    %p137 = scmp.ne.s32.totalorder %s129, %s131
    %p138 = scmp.eq.s32.totalorder %s27, 1
    %p139 = por %p137, %p138
    %p140 = scmp.ne.s32.totalorder %s131, %s132
    %p141 = scmp.eq.s32.totalorder %s27, 0
    %p142 = por %p140, %p141
    %p143 = scmp.ne.s32.totalorder %s131, %s132
    %p144 = scmp.eq.s32.totalorder %s28, 1
    %p145 = por %p143, %p144
    %p147 = scmp.ne.s32.totalorder %s132, %s146
    %p148 = scmp.eq.s32.totalorder %s28, 0
    %p149 = por %p147, %p148
    %s151 = sadd.s32 %s150, 1
    %p154 = scmp.eq.s32.totalorder %s22, 1
    %p155 = scmp.ne.s32.totalorder %s150, %s152
    %p156 = scmp.eq.s32.totalorder %s22, 0
    %p157 = por %p155, %p156
    %p158 = scmp.ne.s32.totalorder %s150, %s152
    %p159 = scmp.eq.s32.totalorder %s27, 1
    %p160 = por %p158, %p159
    %p161 = scmp.ne.s32.totalorder %s152, %s153
    %p162 = scmp.eq.s32.totalorder %s27, 0
    %p163 = por %p161, %p162
    %p164 = scmp.ne.s32.totalorder %s152, %s153
    %p165 = scmp.eq.s32.totalorder %s28, 1
    %p166 = por %p164, %p165
    %p168 = scmp.ne.s32.totalorder %s153, %s167
    %p169 = scmp.eq.s32.totalorder %s28, 0
    %p170 = por %p168, %p169
    %s172 = sadd.s32 %s171, 1
    %p175 = scmp.eq.s32.totalorder %s22, 1
    %p176 = scmp.ne.s32.totalorder %s171, %s173
    %p177 = scmp.eq.s32.totalorder %s22, 0
    %p178 = por %p176, %p177
    %p179 = scmp.ne.s32.totalorder %s171, %s173
    %p180 = scmp.eq.s32.totalorder %s27, 1
    %p181 = por %p179, %p180
    %p182 = scmp.ne.s32.totalorder %s173, %s174
    %p183 = scmp.eq.s32.totalorder %s27, 0
    %p184 = por %p182, %p183
    %p185 = scmp.ne.s32.totalorder %s173, %s174
    %p186 = scmp.eq.s32.totalorder %s28, 1
    %p187 = por %p185, %p186
    %p189 = scmp.ne.s32.totalorder %s174, %s188
    %p190 = scmp.eq.s32.totalorder %s28, 0
    %p191 = por %p189, %p190
    %s193 = sadd.s32 %s192, 1
    %p196 = scmp.eq.s32.totalorder %s22, 1
    %p197 = scmp.ne.s32.totalorder %s192, %s194
    %p198 = scmp.eq.s32.totalorder %s22, 0
    %p199 = por %p197, %p198
    %p200 = scmp.ne.s32.totalorder %s192, %s194
    %p201 = scmp.eq.s32.totalorder %s27, 1
    %p202 = por %p200, %p201
    %p203 = scmp.ne.s32.totalorder %s194, %s195
    %p204 = scmp.eq.s32.totalorder %s27, 0
    %p205 = por %p203, %p204
    %p206 = scmp.ne.s32.totalorder %s194, %s195
    %p207 = scmp.eq.s32.totalorder %s28, 1
    %p208 = por %p206, %p207
    %p210 = scmp.ne.s32.totalorder %s195, %s209
    %p211 = scmp.eq.s32.totalorder %s28, 0
    %p212 = por %p210, %p211
    %s214 = sadd.s32 %s213, 1
    %p217 = scmp.eq.s32.totalorder %s22, 1
    %p218 = scmp.ne.s32.totalorder %s213, %s215
    %p219 = scmp.eq.s32.totalorder %s22, 0
    %p220 = por %p218, %p219
    %p221 = scmp.ne.s32.totalorder %s213, %s215
    %p222 = scmp.eq.s32.totalorder %s27, 1
    %p223 = por %p221, %p222
    %p224 = scmp.ne.s32.totalorder %s215, %s216
    %p225 = scmp.eq.s32.totalorder %s27, 0
    %p226 = por %p224, %p225
    %p227 = scmp.ne.s32.totalorder %s215, %s216
    %p228 = scmp.eq.s32.totalorder %s28, 1
    %p229 = por %p227, %p228
    %p231 = scmp.ne.s32.totalorder %s216, %s230
    %p232 = scmp.eq.s32.totalorder %s28, 0
    %p233 = por %p231, %p232
    %s235 = sadd.s32 %s234, 1
    %p238 = scmp.eq.s32.totalorder %s22, 1
    %p239 = scmp.ne.s32.totalorder %s234, %s236
    %p240 = scmp.eq.s32.totalorder %s22, 0
    %p241 = por %p239, %p240
    %p242 = scmp.ne.s32.totalorder %s234, %s236
    %p243 = scmp.eq.s32.totalorder %s27, 1
    %p244 = por %p242, %p243
    %p245 = scmp.ne.s32.totalorder %s236, %s237
    %p246 = scmp.eq.s32.totalorder %s27, 0
    %p247 = por %p245, %p246
    %p248 = scmp.ne.s32.totalorder %s236, %s237
    %p249 = scmp.eq.s32.totalorder %s28, 1
    %p250 = por %p248, %p249
    %p252 = scmp.ne.s32.totalorder %s237, %s251
    %p253 = scmp.eq.s32.totalorder %s28, 0
    %p254 = por %p252, %p253
    %s256 = sadd.s32 %s255, 1
    %p259 = scmp.eq.s32.totalorder %s22, 1
    %p260 = scmp.ne.s32.totalorder %s255, %s257
    %p261 = scmp.eq.s32.totalorder %s22, 0
    %p262 = por %p260, %p261
    %p263 = scmp.ne.s32.totalorder %s255, %s257
    %p264 = scmp.eq.s32.totalorder %s27, 1
    %p265 = por %p263, %p264
    %p266 = scmp.ne.s32.totalorder %s257, %s258
    %p267 = scmp.eq.s32.totalorder %s27, 0
    %p268 = por %p266, %p267
    %p269 = scmp.ne.s32.totalorder %s257, %s258
    %p270 = scmp.eq.s32.totalorder %s28, 1
    %p271 = por %p269, %p270
    %p273 = scmp.ne.s32.totalorder %s258, %s272
    %p274 = scmp.eq.s32.totalorder %s28, 0
    %p275 = por %p273, %p274
    %s277 = sadd.s32 %s276, 1
    %p280 = scmp.eq.s32.totalorder %s22, 1
    %p281 = scmp.ne.s32.totalorder %s276, %s278
    %p282 = scmp.eq.s32.totalorder %s22, 0
    %p283 = por %p281, %p282
    %p284 = scmp.ne.s32.totalorder %s276, %s278
    %p285 = scmp.eq.s32.totalorder %s27, 1
    %p286 = por %p284, %p285
    %p287 = scmp.ne.s32.totalorder %s278, %s279
    %p288 = scmp.eq.s32.totalorder %s27, 0
    %p289 = por %p287, %p288
    %p290 = scmp.ne.s32.totalorder %s278, %s279
    %p291 = scmp.eq.s32.totalorder %s28, 1
    %p292 = por %p290, %p291
    %p294 = scmp.ne.s32.totalorder %s279, %s293
    %p295 = scmp.eq.s32.totalorder %s28, 0
    %p296 = por %p294, %p295
    %s298 = sadd.s32 %s297, 1
    %p301 = scmp.eq.s32.totalorder %s22, 1
    %p302 = scmp.ne.s32.totalorder %s297, %s299
    %p303 = scmp.eq.s32.totalorder %s22, 0
    %p304 = por %p302, %p303
    %p305 = scmp.ne.s32.totalorder %s297, %s299
    %p306 = scmp.eq.s32.totalorder %s27, 1
    %p307 = por %p305, %p306
    %p308 = scmp.ne.s32.totalorder %s299, %s300
    %p309 = scmp.eq.s32.totalorder %s27, 0
    %p310 = por %p308, %p309
    %p311 = scmp.ne.s32.totalorder %s299, %s300
    %p312 = scmp.eq.s32.totalorder %s28, 1
    %p313 = por %p311, %p312
    %p315 = scmp.ne.s32.totalorder %s300, %s314
    %p316 = scmp.eq.s32.totalorder %s28, 0
    %p317 = por %p315, %p316
    %s319 = sadd.s32 %s318, 1
    %p322 = scmp.eq.s32.totalorder %s22, 1
    %p323 = scmp.ne.s32.totalorder %s318, %s320
    %p324 = scmp.eq.s32.totalorder %s22, 0
    %p325 = por %p323, %p324
    %p326 = scmp.ne.s32.totalorder %s318, %s320
    %p327 = scmp.eq.s32.totalorder %s27, 1
    %p328 = por %p326, %p327
    %p329 = scmp.ne.s32.totalorder %s320, %s321
    %p330 = scmp.eq.s32.totalorder %s27, 0
    %p331 = por %p329, %p330
    %p332 = scmp.ne.s32.totalorder %s320, %s321
    %p333 = scmp.eq.s32.totalorder %s28, 1
    %p334 = por %p332, %p333
    %p336 = scmp.ne.s32.totalorder %s321, %s335
    %p337 = scmp.eq.s32.totalorder %s28, 0
    %p338 = por %p336, %p337
    %s340 = sadd.s32 %s339, 1
    %p343 = scmp.eq.s32.totalorder %s22, 1
    %p344 = scmp.ne.s32.totalorder %s339, %s341
    %p345 = scmp.eq.s32.totalorder %s22, 0
    %p346 = por %p344, %p345
    %p347 = scmp.ne.s32.totalorder %s339, %s341
    %p348 = scmp.eq.s32.totalorder %s27, 1
    %p349 = por %p347, %p348
    %p350 = scmp.ne.s32.totalorder %s341, %s342
    %p351 = scmp.eq.s32.totalorder %s27, 0
    %p352 = por %p350, %p351
    %p353 = scmp.ne.s32.totalorder %s341, %s342
    %p354 = scmp.eq.s32.totalorder %s28, 1
    %p355 = por %p353, %p354
    %p357 = scmp.ne.s32.totalorder %s342, %s356
    %p358 = scmp.eq.s32.totalorder %s28, 0
    %p359 = por %p357, %p358
    %s361 = sadd.s32 %s360, 1
    %p364 = scmp.eq.s32.totalorder %s22, 1
    %p365 = scmp.ne.s32.totalorder %s360, %s362
    %p366 = scmp.eq.s32.totalorder %s22, 0
    %p367 = por %p365, %p366
    %p368 = scmp.ne.s32.totalorder %s360, %s362
    %p369 = scmp.eq.s32.totalorder %s27, 1
    %p370 = por %p368, %p369
    %p371 = scmp.ne.s32.totalorder %s362, %s363
    %p372 = scmp.eq.s32.totalorder %s27, 0
    %p373 = por %p371, %p372
    %p374 = scmp.ne.s32.totalorder %s362, %s363
    %p375 = scmp.eq.s32.totalorder %s28, 1
    %p376 = por %p374, %p375
    %p378 = scmp.ne.s32.totalorder %s363, %s377
    %p379 = scmp.eq.s32.totalorder %s28, 0
    %p380 = por %p378, %p379
    %s381 = ssub.s32 %s22, %s29
    %p382 = scmp.eq.s32.totalorder %s381, 0
    %s384 = sadd.s32 %s383, 1
    %s385 = scalar_select %p382, %s383, %s384
    %p388 = pneg %p382
    %p389 = scmp.eq.s32.totalorder %s22, 1
    %p390 = por %p388, %p389
    %p391 = scmp.ne.s32.totalorder %s383, %s386
    %p392 = scmp.eq.s32.totalorder %s22, 0
    %p393 = por %p391, %p392
    %p394 = scmp.ne.s32.totalorder %s383, %s386
    %p395 = scmp.eq.s32.totalorder %s27, 1
    %p396 = por %p394, %p395
    %p397 = scmp.ne.s32.totalorder %s386, %s387
    %p398 = scmp.eq.s32.totalorder %s27, 0
    %p399 = por %p397, %p398
    %p400 = scmp.ne.s32.totalorder %s386, %s387
    %p401 = scmp.eq.s32.totalorder %s28, 1
    %p402 = por %p400, %p401
    %p404 = scmp.ne.s32.totalorder %s387, %s403
    %p405 = scmp.eq.s32.totalorder %s28, 0
    %p406 = por %p404, %p405
    %p407 = scmp.le.s32.totalorder 1, %s22
    %p408 = scmp.lt.s32.totalorder %s22, 3
    %p409 = pnand %p407, %p408
    %p410 = pneg %p409
    // Predicated region
    $region9: #{my_deform_forward.3} parent=5 // pred_check
      _
    $region10: #{my_deform_forward.3} parent=5 // pred_check_branch
      %412 = sbr.rel (%p409) target = $region12
    $region11: #{my_deform_forward.3} parent=5 // pred_region
      %s413 = ssub.s32 %s22, 1
      // Predicated region
      $region13: #{my_deform_forward.3} parent=11 // pred_check
        %p414 = pneg %p69
      $region14: #{my_deform_forward.3} parent=11 // pred_check_branch
        %416 = sbr.rel (%p414) target = $region16
      $region15: #{my_deform_forward.3} parent=11 // pred_region
        _
      $region16: #{my_deform_forward.3} parent=11 // pred_fallthru
        _
      // Predicated region
      $region17: #{my_deform_forward.3} parent=11 // pred_check
        %p417 = pneg %p142
      $region18: #{my_deform_forward.3} parent=11 // pred_check_branch
        %419 = sbr.rel (%p417) target = $region20
      $region19: #{my_deform_forward.3} parent=11 // pred_region
        _
      $region20: #{my_deform_forward.3} parent=11 // pred_fallthru
        _
      // Predicated region
      $region21: #{my_deform_forward.3} parent=11 // pred_check
        %p420 = pneg %p163
      $region22: #{my_deform_forward.3} parent=11 // pred_check_branch
        %422 = sbr.rel (%p420) target = $region24
      $region23: #{my_deform_forward.3} parent=11 // pred_region
        _
      $region24: #{my_deform_forward.3} parent=11 // pred_fallthru
        _
      // Predicated region
      $region25: #{my_deform_forward.3} parent=11 // pred_check
        %p423 = pneg %p184
      $region26: #{my_deform_forward.3} parent=11 // pred_check_branch
        %425 = sbr.rel (%p423) target = $region28
      $region27: #{my_deform_forward.3} parent=11 // pred_region
        _
      $region28: #{my_deform_forward.3} parent=11 // pred_fallthru
        _
      // Predicated region
      $region29: #{my_deform_forward.3} parent=11 // pred_check
        %p426 = pneg %p205
      $region30: #{my_deform_forward.3} parent=11 // pred_check_branch
        %428 = sbr.rel (%p426) target = $region32
      $region31: #{my_deform_forward.3} parent=11 // pred_region
        _
      $region32: #{my_deform_forward.3} parent=11 // pred_fallthru
        _
      // Predicated region
      $region33: #{my_deform_forward.3} parent=11 // pred_check
        %p429 = pneg %p226
      $region34: #{my_deform_forward.3} parent=11 // pred_check_branch
        %431 = sbr.rel (%p429) target = $region36
      $region35: #{my_deform_forward.3} parent=11 // pred_region
        _
      $region36: #{my_deform_forward.3} parent=11 // pred_fallthru
        _
      // Predicated region
      $region37: #{my_deform_forward.3} parent=11 // pred_check
        %p432 = pneg %p247
      $region38: #{my_deform_forward.3} parent=11 // pred_check_branch
        %434 = sbr.rel (%p432) target = $region40
      $region39: #{my_deform_forward.3} parent=11 // pred_region
        _
      $region40: #{my_deform_forward.3} parent=11 // pred_fallthru
        _
      // Predicated region
      $region41: #{my_deform_forward.3} parent=11 // pred_check
        %p435 = pneg %p268
      $region42: #{my_deform_forward.3} parent=11 // pred_check_branch
        %437 = sbr.rel (%p435) target = $region44
      $region43: #{my_deform_forward.3} parent=11 // pred_region
        _
      $region44: #{my_deform_forward.3} parent=11 // pred_fallthru
        _
      // Predicated region
      $region45: #{my_deform_forward.3} parent=11 // pred_check
        %p438 = pneg %p289
      $region46: #{my_deform_forward.3} parent=11 // pred_check_branch
        %440 = sbr.rel (%p438) target = $region48
      $region47: #{my_deform_forward.3} parent=11 // pred_region
        _
      $region48: #{my_deform_forward.3} parent=11 // pred_fallthru
        _
      // Predicated region
      $region49: #{my_deform_forward.3} parent=11 // pred_check
        %p441 = pneg %p310
      $region50: #{my_deform_forward.3} parent=11 // pred_check_branch
        %443 = sbr.rel (%p441) target = $region52
      $region51: #{my_deform_forward.3} parent=11 // pred_region
        _
      $region52: #{my_deform_forward.3} parent=11 // pred_fallthru
        _
      // Predicated region
      $region53: #{my_deform_forward.3} parent=11 // pred_check
        %p444 = pneg %p331
      $region54: #{my_deform_forward.3} parent=11 // pred_check_branch
        %446 = sbr.rel (%p444) target = $region56
      $region55: #{my_deform_forward.3} parent=11 // pred_region
        _
      $region56: #{my_deform_forward.3} parent=11 // pred_fallthru
        _
      // Predicated region
      $region57: #{my_deform_forward.3} parent=11 // pred_check
        %p447 = pneg %p352
      $region58: #{my_deform_forward.3} parent=11 // pred_check_branch
        %449 = sbr.rel (%p447) target = $region60
      $region59: #{my_deform_forward.3} parent=11 // pred_region
        _
      $region60: #{my_deform_forward.3} parent=11 // pred_fallthru
        _
      // Predicated region
      $region61: #{my_deform_forward.3} parent=11 // pred_check
        %p450 = pneg %p373
      $region62: #{my_deform_forward.3} parent=11 // pred_check_branch
        %452 = sbr.rel (%p450) target = $region64
      $region63: #{my_deform_forward.3} parent=11 // pred_region
        _
      $region64: #{my_deform_forward.3} parent=11 // pred_fallthru
        _
    $region12: #{my_deform_forward.3} parent=5 // pred_fallthru
      _
    %p453 = scmp.lt.s32.totalorder %s22, 2
    // Predicated region
    $region65: #{my_deform_forward.3} parent=5 // pred_check
      %p454 = pneg %p453
    $region66: #{my_deform_forward.3} parent=5 // pred_check_branch
      %456 = sbr.rel (%p454) target = $region68
    $region67: #{my_deform_forward.3} parent=5 // pred_region
      // Predicated region
      $region69: #{my_deform_forward.3} parent=67 // pred_check
        %p457 = pneg %p42
      $region70: #{my_deform_forward.3} parent=67 // pred_check_branch
        %459 = sbr.rel (%p457) target = $region72
      $region71: #{my_deform_forward.3} parent=67 // pred_region
        %s460 = smul.u32 16, %s22
        %p461 = scmp.lt.s32.totalorder %s460, 31
        %s462 = scalar_select %p461, %s460, 31
        %s463 = smul.addr %s462, 8
        %s464 = scalar_lea.vmem %s0, %s463
        %s465 = smul.u32 16, %s22
      $region72: #{my_deform_forward.3} parent=67 // pred_fallthru
        _
      // Predicated region
      $region73: #{my_deform_forward.3} parent=67 // pred_check
        %p466 = pneg %p89
      $region74: #{my_deform_forward.3} parent=67 // pred_check_branch
        %468 = sbr.rel (%p466) target = $region76
      $region75: #{my_deform_forward.3} parent=67 // pred_region
        %s469 = smul.u32 16, %s22
        %p470 = scmp.lt.s32.totalorder %s469, 31
        %s471 = scalar_select %p470, %s469, 31
        %s472 = smul.addr %s471, 8
        %s473 = scalar_lea.vmem %s2, %s472
        %s474 = smul.u32 16, %s22
      $region76: #{my_deform_forward.3} parent=67 // pred_fallthru
        _
      // Predicated region
      $region77: #{my_deform_forward.3} parent=67 // pred_check
        %p475 = pneg %p115
      $region78: #{my_deform_forward.3} parent=67 // pred_check_branch
        %477 = sbr.rel (%p475) target = $region80
      $region79: #{my_deform_forward.3} parent=67 // pred_region
        %s478 = smul.u32 16, %s22
        %p479 = scmp.lt.s32.totalorder %s478, 31
        %s480 = scalar_select %p479, %s478, 31
        %s481 = smul.addr %s480, 8
        %s482 = scalar_lea.vmem %s3, %s481
        %s483 = smul.u32 16, %s22
      $region80: #{my_deform_forward.3} parent=67 // pred_fallthru
        _
    $region68: #{my_deform_forward.3} parent=5 // pred_fallthru
      _
    %p484 = scmp.le.s32.totalorder 1, %s22
    %p485 = scmp.lt.s32.totalorder %s22, 3
    %p486 = pnand %p484, %p485
    %p487 = pneg %p486
    // Predicated region
    $region81: #{my_deform_forward.3} parent=5 // pred_check
      _
    $region82: #{my_deform_forward.3} parent=5 // pred_check_branch
      %489 = sbr.rel (%p486) target = $region84
    $region83: #{my_deform_forward.3} parent=5 // pred_region
      %s490 = ssub.s32 %s22, 1
      %s491 = smul.u32 16, %s27
      %p492 = scmp.lt.s32.totalorder %s491, 31
      %s493 = scalar_select %p492, %s491, 31
      %s494 = smul.addr %s493, 8
      %s495 = scalar_lea.vmem %s0, %s494
      %p496 = pneg %p48
      %p497 = pneg %p45
      %p498 = pneg %p69
      %p499 = pneg %p66
      %s500 = smul.u32 16, %s27
      %p501 = scmp.lt.s32.totalorder %s500, 31
      %s502 = scalar_select %p501, %s500, 31
      %s503 = smul.addr %s502, 8
      %s504 = scalar_lea.vmem %s2, %s503
      %p505 = pneg %p95
      %p506 = pneg %p92
      %s507 = smul.u32 16, %s27
      %p508 = scmp.lt.s32.totalorder %s507, 31
      %s509 = scalar_select %p508, %s507, 31
      %s510 = smul.addr %s509, 8
      %s511 = scalar_lea.vmem %s3, %s510
      %p512 = pneg %p121
      %p513 = pneg %p118
      %p514 = pneg %p142
      %p515 = pneg %p139
      %p516 = pneg %p163
      %p517 = pneg %p160
      %p518 = pneg %p184
      %p519 = pneg %p181
      %p520 = pneg %p205
      %p521 = pneg %p202
      %p522 = pneg %p226
      %p523 = pneg %p223
      %p524 = pneg %p247
      %p525 = pneg %p244
      %p526 = pneg %p268
      %p527 = pneg %p265
      %p528 = pneg %p289
      %p529 = pneg %p286
      %p530 = pneg %p310
      %p531 = pneg %p307
      %p532 = pneg %p331
      %p533 = pneg %p328
      %p534 = pneg %p352
      %p535 = pneg %p349
      %p536 = pneg %p373
      %p537 = pneg %p370
      %p538 = pneg %p399
      %p539 = pneg %p396
      %s540 = smul.u32 16, %s27
      %p541 = scmp.lt.s32.totalorder %s540, 31
      %s542 = scalar_select %p541, %s540, 31
      %s543 = smul.addr %s542, 8
      %s544 = scalar_lea.vmem %s16, %s543
      %s545 = smul.u32 16, %s27
      %p546 = scmp.lt.s32.totalorder %s545, 31
      %s547 = scalar_select %p546, %s545, 31
      %s548 = smul.addr %s547, 8
      %s549 = scalar_lea.vmem %s0, %s548
      %s550 = smul.u32 16, %s27
      %s551 = smul.u32 16, %s27
      %p552 = scmp.lt.s32.totalorder %s551, 31
      %s553 = scalar_select %p552, %s551, 31
      %s554 = smul.addr %s553, 8
      %s555 = scalar_lea.vmem %s2, %s554
      %s556 = smul.u32 16, %s27
      %s557 = smul.u32 16, %s27
      %p558 = scmp.lt.s32.totalorder %s557, 31
      %s559 = scalar_select %p558, %s557, 31
      %s560 = smul.addr %s559, 8
      %s561 = scalar_lea.vmem %s3, %s560
      %s562 = smul.u32 16, %s27
      %s563 = smul.u32 16, %s27
      %p564 = scmp.lt.s32.totalorder %s563, 31
      %s565 = scalar_select %p564, %s563, 31
      %s566 = smul.addr %s565, 8
      %s567 = scalar_lea.vmem %s16, %s566
      %s568 = smul.u32 16, %s27
      %v570 = vld [vmem:[%s549] sm:$0xff]
      %v571 = vld [vmem:[%s549 + $0x8] sm:$0xff]
      %v572 = vld [vmem:[%s549 + $0x10] sm:$0xff]
      %v573 = vld [vmem:[%s549 + $0x18] sm:$0xff]
      %v574 = vld [vmem:[%s549 + $0x20] sm:$0xff]
      %v575 = vld [vmem:[%s549 + $0x28] sm:$0xff]
      %v576 = vld [vmem:[%s549 + $0x30] sm:$0xff]
      %v577 = vld [vmem:[%s549 + $0x38] sm:$0xff]
      %v578 = vld [vmem:[%s549 + $0x40] sm:$0xff]
      %v579 = vld [vmem:[%s549 + $0x48] sm:$0xff]
      %v580 = vld [vmem:[%s549 + $0x50] sm:$0xff]
      %v581 = vld [vmem:[%s549 + $0x58] sm:$0xff]
      %v582 = vld [vmem:[%s549 + $0x60] sm:$0xff]
      %v583 = vld [vmem:[%s549 + $0x68] sm:$0xff]
      %v584 = vld [vmem:[%s549 + $0x70] sm:$0xff]
      %v585 = vld [vmem:[%s549 + $0x78] sm:$0xff]
      %v586 = vld [vmem:[%s1] sm:$0xff]
      %v587 = vld [vmem:[%s1 + $0x8] sm:$0xff]
      %vm588 = vcmask 130048
      %v590 = vsel %vm588, %v570, 0
      %v593 = vsel %vm588, %v571, 0
      %v596 = vsel %vm588, %v572, 0
      %v599 = vsel %vm588, %v573, 0
      %v602 = vsel %vm588, %v574, 0
      %v605 = vsel %vm588, %v575, 0
      %v608 = vsel %vm588, %v576, 0
      %v611 = vsel %vm588, %v577, 0
      %v614 = vsel %vm588, %v578, 0
      %v617 = vsel %vm588, %v579, 0
      %v620 = vsel %vm588, %v580, 0
      %v623 = vsel %vm588, %v581, 0
      %v626 = vsel %vm588, %v582, 0
      %v629 = vsel %vm588, %v583, 0
      %v632 = vsel %vm588, %v584, 0
      %v635 = vsel %vm588, %v585, 0
      %637 = vmatprep.subr.mxu0 0.0
      %638 = vmatpush1.msra.mxu0 0.0
      %639 = vmatprep.subr.mxu0 0.0
      %640 = vmatpush1.msra.mxu0 0.0
      %641 = vmatprep.subr.mxu0 0.0
      %642 = vmatpush1.msra.mxu0 0.0
      %643 = vmatprep.subr.mxu0 0.0
      %644 = vmatpush1.msra.mxu0 0.0
      %645 = vmatprep.subr.mxu0 0.0
      %646 = vmatpush1.msra.mxu0 0.0
      %647 = vmatprep.subr.mxu0 0.0
      %648 = vmatpush1.msra.mxu0 0.0
      %649 = vmatprep.subr.mxu0 0.0
      %650 = vmatpush1.msra.mxu0 0.0
      %651 = vmatprep.subr.mxu0 0.0
      %652 = vmatpush1.msra.mxu0 0.0
      %653 = vmatprep.subr.mxu0 0.0
      %654 = vmatpush1.msra.mxu0 0.0
      %655 = vmatprep.subr.mxu0 0.0
      %656 = vmatpush1.msra.mxu0 0.0
      %657 = vmatprep.subr.mxu0 0.0
      %658 = vmatpush1.msra.mxu0 0.0
      %659 = vmatprep.subr.mxu0 0.0
      %660 = vmatpush1.msra.mxu0 0.0
      %661 = vmatprep.subr.mxu0 0.0
      %662 = vmatpush1.msra.mxu0 0.0
      %663 = vmatprep.subr.mxu0 0.0
      %664 = vmatpush1.msra.mxu0 0.0
      %665 = vmatprep.subr.mxu0 0.0
      %666 = vmatpush1.msra.mxu0 %v587
      %667 = vmatprep.subr.mxu0 0.0
      %668 = vmatpush1.msra.mxu0 %v586
      %669 = vmatprep.subr.mxu0 0.0
      %670 = vmatpush2.msra.mxu0 0.0
      %671 = vmatprep.subr.mxu0 0.0
      %672 = vmatpush2.msra.mxu0 0.0
      %673 = vmatprep.subr.mxu0 0.0
      %674 = vmatpush2.msra.mxu0 0.0
      %675 = vmatprep.subr.mxu0 0.0
      %676 = vmatpush2.msra.mxu0 0.0
      %677 = vmatprep.subr.mxu0 0.0
      %678 = vmatpush2.msra.mxu0 0.0
      %679 = vmatprep.subr.mxu0 0.0
      %680 = vmatpush2.msra.mxu0 0.0
      %681 = vmatprep.subr.mxu0 0.0
      %682 = vmatpush2.msra.mxu0 0.0
      %683 = vmatprep.subr.mxu0 0.0
      %684 = vmatpush2.msra.mxu0 0.0
      %685 = vmatprep.subr.mxu0 0.0
      %686 = vmatpush2.msra.mxu0 0.0
      %687 = vmatprep.subr.mxu0 0.0
      %688 = vmatpush2.msra.mxu0 0.0
      %689 = vmatprep.subr.mxu0 0.0
      %690 = vmatpush2.msra.mxu0 0.0
      %691 = vmatprep.subr.mxu0 0.0
      %692 = vmatpush2.msra.mxu0 0.0
      %693 = vmatprep.subr.mxu0 0.0
      %694 = vmatpush2.msra.mxu0 0.0
      %695 = vmatprep.subr.mxu0 0.0
      %696 = vmatpush2.msra.mxu0 0.0
      %697 = vmatprep.subr.mxu0 0.0
      %698 = vmatpush2.msra.mxu0 0.0
      %699 = vmatprep.subr.mxu0 0.0
      %700 = vmatpush2.msra.mxu0 0.0
      %701 = vmatprep.mubr.f32.mxu0 0.0
      %702 = vmatmul.mubr.f32.gmra.mxu0 %v590
      %v703 = vpop.f32.mrf.mxu0
      %v704 = vadd.f32 0.0, %v703
      %v705 = vpop.f32.mrf.mxu0
      %706 = vmatprep.mubr.f32.mxu0 0.0
      %707 = vmatmul.mubr.f32.gmra.mxu0 %v593
      %v708 = vpop.f32.mrf.mxu0
      %v709 = vadd.f32 0.0, %v708
      %v710 = vpop.f32.mrf.mxu0
      %711 = vmatprep.mubr.f32.mxu0 0.0
      %712 = vmatmul.mubr.f32.gmra.mxu0 %v596
      %v713 = vpop.f32.mrf.mxu0
      %v714 = vadd.f32 0.0, %v713
      %v715 = vpop.f32.mrf.mxu0
      %716 = vmatprep.mubr.f32.mxu0 0.0
      %717 = vmatmul.mubr.f32.gmra.mxu0 %v599
      %v718 = vpop.f32.mrf.mxu0
      %v719 = vadd.f32 0.0, %v718
      %v720 = vpop.f32.mrf.mxu0
      %721 = vmatprep.mubr.f32.mxu0 0.0
      %722 = vmatmul.mubr.f32.gmra.mxu0 %v602
      %v723 = vpop.f32.mrf.mxu0
      %v724 = vadd.f32 0.0, %v723
      %v725 = vpop.f32.mrf.mxu0
      %726 = vmatprep.mubr.f32.mxu0 0.0
      %727 = vmatmul.mubr.f32.gmra.mxu0 %v605
      %v728 = vpop.f32.mrf.mxu0
      %v729 = vadd.f32 0.0, %v728
      %v730 = vpop.f32.mrf.mxu0
      %731 = vmatprep.mubr.f32.mxu0 0.0
      %732 = vmatmul.mubr.f32.gmra.mxu0 %v608
      %v733 = vpop.f32.mrf.mxu0
      %v734 = vadd.f32 0.0, %v733
      %v735 = vpop.f32.mrf.mxu0
      %736 = vmatprep.mubr.f32.mxu0 0.0
      %737 = vmatmul.mubr.f32.gmra.mxu0 %v611
      %v738 = vpop.f32.mrf.mxu0
      %v739 = vadd.f32 0.0, %v738
      %v740 = vpop.f32.mrf.mxu0
      %741 = vmatprep.mubr.f32.mxu0 0.0
      %742 = vmatmul.mubr.f32.gmra.mxu0 %v614
      %v743 = vpop.f32.mrf.mxu0
      %v744 = vadd.f32 0.0, %v743
      %v745 = vpop.f32.mrf.mxu0
      %746 = vmatprep.mubr.f32.mxu0 0.0
      %747 = vmatmul.mubr.f32.gmra.mxu0 %v617
      %v748 = vpop.f32.mrf.mxu0
      %v749 = vadd.f32 0.0, %v748
      %v750 = vpop.f32.mrf.mxu0
      %751 = vmatprep.mubr.f32.mxu0 0.0
      %752 = vmatmul.mubr.f32.gmra.mxu0 %v620
      %v753 = vpop.f32.mrf.mxu0
      %v754 = vadd.f32 0.0, %v753
      %v755 = vpop.f32.mrf.mxu0
      %756 = vmatprep.mubr.f32.mxu0 0.0
      %757 = vmatmul.mubr.f32.gmra.mxu0 %v623
      %v758 = vpop.f32.mrf.mxu0
      %v759 = vadd.f32 0.0, %v758
      %v760 = vpop.f32.mrf.mxu0
      %761 = vmatprep.mubr.f32.mxu0 0.0
      %762 = vmatmul.mubr.f32.gmra.mxu0 %v626
      %v763 = vpop.f32.mrf.mxu0
      %v764 = vadd.f32 0.0, %v763
      %v765 = vpop.f32.mrf.mxu0
      %766 = vmatprep.mubr.f32.mxu0 0.0
      %767 = vmatmul.mubr.f32.gmra.mxu0 %v629
      %v768 = vpop.f32.mrf.mxu0
      %v769 = vadd.f32 0.0, %v768
      %v770 = vpop.f32.mrf.mxu0
      %771 = vmatprep.mubr.f32.mxu0 0.0
      %772 = vmatmul.mubr.f32.gmra.mxu0 %v632
      %v773 = vpop.f32.mrf.mxu0
      %v774 = vadd.f32 0.0, %v773
      %v775 = vpop.f32.mrf.mxu0
      %776 = vmatprep.mubr.f32.mxu0 0.0
      %777 = vmatmul.mubr.f32.gmra.mxu0 %v635
      %v778 = vpop.f32.mrf.mxu0
      %v779 = vadd.f32 0.0, %v778
      %v780 = vpop.f32.mrf.mxu0
      %781 = vdwg.mxu0
      %v782 = vld [vmem:[%s555] sm:$0xff]
      %v783 = vld [vmem:[%s555 + $0x8] sm:$0xff]
      %v784 = vld [vmem:[%s555 + $0x10] sm:$0xff]
      %v785 = vld [vmem:[%s555 + $0x18] sm:$0xff]
      %v786 = vld [vmem:[%s555 + $0x20] sm:$0xff]
      %v787 = vld [vmem:[%s555 + $0x28] sm:$0xff]
      %v788 = vld [vmem:[%s555 + $0x30] sm:$0xff]
      %v789 = vld [vmem:[%s555 + $0x38] sm:$0xff]
      %v790 = vld [vmem:[%s555 + $0x40] sm:$0xff]
      %v791 = vld [vmem:[%s555 + $0x48] sm:$0xff]
      %v792 = vld [vmem:[%s555 + $0x50] sm:$0xff]
      %v793 = vld [vmem:[%s555 + $0x58] sm:$0xff]
      %v794 = vld [vmem:[%s555 + $0x60] sm:$0xff]
      %v795 = vld [vmem:[%s555 + $0x68] sm:$0xff]
      %v796 = vld [vmem:[%s555 + $0x70] sm:$0xff]
      %v797 = vld [vmem:[%s555 + $0x78] sm:$0xff]
      %v798 = vmul.f32 %v704, %v782
      %v799 = vmul.f32 %v709, %v783
      %v800 = vmul.f32 %v714, %v784
      %v801 = vmul.f32 %v719, %v785
      %v802 = vmul.f32 %v724, %v786
      %v803 = vmul.f32 %v729, %v787
      %v804 = vmul.f32 %v734, %v788
      %v805 = vmul.f32 %v739, %v789
      %v806 = vmul.f32 %v744, %v790
      %v807 = vmul.f32 %v749, %v791
      %v808 = vmul.f32 %v754, %v792
      %v809 = vmul.f32 %v759, %v793
      %v810 = vmul.f32 %v764, %v794
      %v811 = vmul.f32 %v769, %v795
      %v812 = vmul.f32 %v774, %v796
      %v813 = vmul.f32 %v779, %v797
      %830 = vrot.lane.b32.xlu0 %v798, 127
      %v831 = vpop.permute.xlu0 %830
      %832 = vrot.lane.b32.xlu0 %v799, 127
      %v833 = vpop.permute.xlu0 %832
      %834 = vrot.lane.b32.xlu0 %v800, 127
      %v835 = vpop.permute.xlu0 %834
      %836 = vrot.lane.b32.xlu0 %v801, 127
      %v837 = vpop.permute.xlu0 %836
      %838 = vrot.lane.b32.xlu0 %v802, 127
      %v839 = vpop.permute.xlu0 %838
      %840 = vrot.lane.b32.xlu0 %v803, 127
      %v841 = vpop.permute.xlu0 %840
      %842 = vrot.lane.b32.xlu0 %v804, 127
      %v843 = vpop.permute.xlu0 %842
      %844 = vrot.lane.b32.xlu0 %v805, 127
      %v845 = vpop.permute.xlu0 %844
      %846 = vrot.lane.b32.xlu0 %v806, 127
      %v847 = vpop.permute.xlu0 %846
      %848 = vrot.lane.b32.xlu0 %v807, 127
      %v849 = vpop.permute.xlu0 %848
      %850 = vrot.lane.b32.xlu0 %v808, 127
      %v851 = vpop.permute.xlu0 %850
      %852 = vrot.lane.b32.xlu0 %v809, 127
      %v853 = vpop.permute.xlu0 %852
      %854 = vrot.lane.b32.xlu0 %v810, 127
      %v855 = vpop.permute.xlu0 %854
      %856 = vrot.lane.b32.xlu0 %v811, 127
      %v857 = vpop.permute.xlu0 %856
      %858 = vrot.lane.b32.xlu0 %v812, 127
      %v859 = vpop.permute.xlu0 %858
      %860 = vrot.lane.b32.xlu0 %v813, 127
      %v861 = vpop.permute.xlu0 %860
      %v878 = vadd.f32 %v798, %v831
      %v879 = vadd.f32 %v799, %v833
      %v880 = vadd.f32 %v800, %v835
      %v881 = vadd.f32 %v801, %v837
      %v882 = vadd.f32 %v802, %v839
      %v883 = vadd.f32 %v803, %v841
      %v884 = vadd.f32 %v804, %v843
      %v885 = vadd.f32 %v805, %v845
      %v886 = vadd.f32 %v806, %v847
      %v887 = vadd.f32 %v807, %v849
      %v888 = vadd.f32 %v808, %v851
      %v889 = vadd.f32 %v809, %v853
      %v890 = vadd.f32 %v810, %v855
      %v891 = vadd.f32 %v811, %v857
      %v892 = vadd.f32 %v812, %v859
      %v893 = vadd.f32 %v813, %v861
      %894 = vrot.lane.b32.xlu0 %v798, 126
      %v895 = vpop.permute.xlu0 %894
      %896 = vrot.lane.b32.xlu0 %v799, 126
      %v897 = vpop.permute.xlu0 %896
      %898 = vrot.lane.b32.xlu0 %v800, 126
      %v899 = vpop.permute.xlu0 %898
      %900 = vrot.lane.b32.xlu0 %v801, 126
      %v901 = vpop.permute.xlu0 %900
      %902 = vrot.lane.b32.xlu0 %v802, 126
      %v903 = vpop.permute.xlu0 %902
      %904 = vrot.lane.b32.xlu0 %v803, 126
      %v905 = vpop.permute.xlu0 %904
      %906 = vrot.lane.b32.xlu0 %v804, 126
      %v907 = vpop.permute.xlu0 %906
      %908 = vrot.lane.b32.xlu0 %v805, 126
      %v909 = vpop.permute.xlu0 %908
      %910 = vrot.lane.b32.xlu0 %v806, 126
      %v911 = vpop.permute.xlu0 %910
      %912 = vrot.lane.b32.xlu0 %v807, 126
      %v913 = vpop.permute.xlu0 %912
      %914 = vrot.lane.b32.xlu0 %v808, 126
      %v915 = vpop.permute.xlu0 %914
      %916 = vrot.lane.b32.xlu0 %v809, 126
      %v917 = vpop.permute.xlu0 %916
      %918 = vrot.lane.b32.xlu0 %v810, 126
      %v919 = vpop.permute.xlu0 %918
      %920 = vrot.lane.b32.xlu0 %v811, 126
      %v921 = vpop.permute.xlu0 %920
      %922 = vrot.lane.b32.xlu0 %v812, 126
      %v923 = vpop.permute.xlu0 %922
      %924 = vrot.lane.b32.xlu0 %v813, 126
      %v925 = vpop.permute.xlu0 %924
      %v942 = vadd.f32 %v878, %v895
      %v943 = vadd.f32 %v879, %v897
      %v944 = vadd.f32 %v880, %v899
      %v945 = vadd.f32 %v881, %v901
      %v946 = vadd.f32 %v882, %v903
      %v947 = vadd.f32 %v883, %v905
      %v948 = vadd.f32 %v884, %v907
      %v949 = vadd.f32 %v885, %v909
      %v950 = vadd.f32 %v886, %v911
      %v951 = vadd.f32 %v887, %v913
      %v952 = vadd.f32 %v888, %v915
      %v953 = vadd.f32 %v889, %v917
      %v954 = vadd.f32 %v890, %v919
      %v955 = vadd.f32 %v891, %v921
      %v956 = vadd.f32 %v892, %v923
      %v957 = vadd.f32 %v893, %v925
      %974 = vrot.lane.b32.xlu0 %v704, 125
      %v975 = vpop.permute.xlu0 %974
      %976 = vrot.lane.b32.xlu0 %v709, 125
      %v977 = vpop.permute.xlu0 %976
      %978 = vrot.lane.b32.xlu0 %v714, 125
      %v979 = vpop.permute.xlu0 %978
      %980 = vrot.lane.b32.xlu0 %v719, 125
      %v981 = vpop.permute.xlu0 %980
      %982 = vrot.lane.b32.xlu0 %v724, 125
      %v983 = vpop.permute.xlu0 %982
      %984 = vrot.lane.b32.xlu0 %v729, 125
      %v985 = vpop.permute.xlu0 %984
      %986 = vrot.lane.b32.xlu0 %v734, 125
      %v987 = vpop.permute.xlu0 %986
      %988 = vrot.lane.b32.xlu0 %v739, 125
      %v989 = vpop.permute.xlu0 %988
      %990 = vrot.lane.b32.xlu0 %v744, 125
      %v991 = vpop.permute.xlu0 %990
      %992 = vrot.lane.b32.xlu0 %v749, 125
      %v993 = vpop.permute.xlu0 %992
      %994 = vrot.lane.b32.xlu0 %v754, 125
      %v995 = vpop.permute.xlu0 %994
      %996 = vrot.lane.b32.xlu0 %v759, 125
      %v997 = vpop.permute.xlu0 %996
      %998 = vrot.lane.b32.xlu0 %v764, 125
      %v999 = vpop.permute.xlu0 %998
      %1000 = vrot.lane.b32.xlu0 %v769, 125
      %v1001 = vpop.permute.xlu0 %1000
      %1002 = vrot.lane.b32.xlu0 %v774, 125
      %v1003 = vpop.permute.xlu0 %1002
      %1004 = vrot.lane.b32.xlu0 %v779, 125
      %v1005 = vpop.permute.xlu0 %1004
      %v1022 = vadd.f32 %v942, %v975
      %v1023 = vadd.f32 %v943, %v977
      %v1024 = vadd.f32 %v944, %v979
      %v1025 = vadd.f32 %v945, %v981
      %v1026 = vadd.f32 %v946, %v983
      %v1027 = vadd.f32 %v947, %v985
      %v1028 = vadd.f32 %v948, %v987
      %v1029 = vadd.f32 %v949, %v989
      %v1030 = vadd.f32 %v950, %v991
      %v1031 = vadd.f32 %v951, %v993
      %v1032 = vadd.f32 %v952, %v995
      %v1033 = vadd.f32 %v953, %v997
      %v1034 = vadd.f32 %v954, %v999
      %v1035 = vadd.f32 %v955, %v1001
      %v1036 = vadd.f32 %v956, %v1003
      %v1037 = vadd.f32 %v957, %v1005
      %1054 = vrot.lane.b32.xlu0 %v782, 4
      %v1055 = vpop.permute.xlu0 %1054
      %1056 = vrot.lane.b32.xlu0 %v783, 4
      %v1057 = vpop.permute.xlu0 %1056
      %1058 = vrot.lane.b32.xlu0 %v784, 4
      %v1059 = vpop.permute.xlu0 %1058
      %1060 = vrot.lane.b32.xlu0 %v785, 4
      %v1061 = vpop.permute.xlu0 %1060
      %1062 = vrot.lane.b32.xlu0 %v786, 4
      %v1063 = vpop.permute.xlu0 %1062
      %1064 = vrot.lane.b32.xlu0 %v787, 4
      %v1065 = vpop.permute.xlu0 %1064
      %1066 = vrot.lane.b32.xlu0 %v788, 4
      %v1067 = vpop.permute.xlu0 %1066
      %1068 = vrot.lane.b32.xlu0 %v789, 4
      %v1069 = vpop.permute.xlu0 %1068
      %1070 = vrot.lane.b32.xlu0 %v790, 4
      %v1071 = vpop.permute.xlu0 %1070
      %1072 = vrot.lane.b32.xlu0 %v791, 4
      %v1073 = vpop.permute.xlu0 %1072
      %1074 = vrot.lane.b32.xlu0 %v792, 4
      %v1075 = vpop.permute.xlu0 %1074
      %1076 = vrot.lane.b32.xlu0 %v793, 4
      %v1077 = vpop.permute.xlu0 %1076
      %1078 = vrot.lane.b32.xlu0 %v794, 4
      %v1079 = vpop.permute.xlu0 %1078
      %1080 = vrot.lane.b32.xlu0 %v795, 4
      %v1081 = vpop.permute.xlu0 %1080
      %1082 = vrot.lane.b32.xlu0 %v796, 4
      %v1083 = vpop.permute.xlu0 %1082
      %1084 = vrot.lane.b32.xlu0 %v797, 4
      %v1085 = vpop.permute.xlu0 %1084
      %v1102 = vmul.f32 %v704, %v1055
      %v1103 = vmul.f32 %v709, %v1057
      %v1104 = vmul.f32 %v714, %v1059
      %v1105 = vmul.f32 %v719, %v1061
      %v1106 = vmul.f32 %v724, %v1063
      %v1107 = vmul.f32 %v729, %v1065
      %v1108 = vmul.f32 %v734, %v1067
      %v1109 = vmul.f32 %v739, %v1069
      %v1110 = vmul.f32 %v744, %v1071
      %v1111 = vmul.f32 %v749, %v1073
      %v1112 = vmul.f32 %v754, %v1075
      %v1113 = vmul.f32 %v759, %v1077
      %v1114 = vmul.f32 %v764, %v1079
      %v1115 = vmul.f32 %v769, %v1081
      %v1116 = vmul.f32 %v774, %v1083
      %v1117 = vmul.f32 %v779, %v1085
      %1134 = vrot.lane.b32.xlu0 %v1102, 127
      %v1135 = vpop.permute.xlu0 %1134
      %1136 = vrot.lane.b32.xlu0 %v1103, 127
      %v1137 = vpop.permute.xlu0 %1136
      %1138 = vrot.lane.b32.xlu0 %v1104, 127
      %v1139 = vpop.permute.xlu0 %1138
      %1140 = vrot.lane.b32.xlu0 %v1105, 127
      %v1141 = vpop.permute.xlu0 %1140
      %1142 = vrot.lane.b32.xlu0 %v1106, 127
      %v1143 = vpop.permute.xlu0 %1142
      %1144 = vrot.lane.b32.xlu0 %v1107, 127
      %v1145 = vpop.permute.xlu0 %1144
      %1146 = vrot.lane.b32.xlu0 %v1108, 127
      %v1147 = vpop.permute.xlu0 %1146
      %1148 = vrot.lane.b32.xlu0 %v1109, 127
      %v1149 = vpop.permute.xlu0 %1148
      %1150 = vrot.lane.b32.xlu0 %v1110, 127
      %v1151 = vpop.permute.xlu0 %1150
      %1152 = vrot.lane.b32.xlu0 %v1111, 127
      %v1153 = vpop.permute.xlu0 %1152
      %1154 = vrot.lane.b32.xlu0 %v1112, 127
      %v1155 = vpop.permute.xlu0 %1154
      %1156 = vrot.lane.b32.xlu0 %v1113, 127
      %v1157 = vpop.permute.xlu0 %1156
      %1158 = vrot.lane.b32.xlu0 %v1114, 127
      %v1159 = vpop.permute.xlu0 %1158
      %1160 = vrot.lane.b32.xlu0 %v1115, 127
      %v1161 = vpop.permute.xlu0 %1160
      %1162 = vrot.lane.b32.xlu0 %v1116, 127
      %v1163 = vpop.permute.xlu0 %1162
      %1164 = vrot.lane.b32.xlu0 %v1117, 127
      %v1165 = vpop.permute.xlu0 %1164
      %v1182 = vadd.f32 %v1102, %v1135
      %v1183 = vadd.f32 %v1103, %v1137
      %v1184 = vadd.f32 %v1104, %v1139
      %v1185 = vadd.f32 %v1105, %v1141
      %v1186 = vadd.f32 %v1106, %v1143
      %v1187 = vadd.f32 %v1107, %v1145
      %v1188 = vadd.f32 %v1108, %v1147
      %v1189 = vadd.f32 %v1109, %v1149
      %v1190 = vadd.f32 %v1110, %v1151
      %v1191 = vadd.f32 %v1111, %v1153
      %v1192 = vadd.f32 %v1112, %v1155
      %v1193 = vadd.f32 %v1113, %v1157
      %v1194 = vadd.f32 %v1114, %v1159
      %v1195 = vadd.f32 %v1115, %v1161
      %v1196 = vadd.f32 %v1116, %v1163
      %v1197 = vadd.f32 %v1117, %v1165
      %1198 = vrot.lane.b32.xlu0 %v1102, 126
      %v1199 = vpop.permute.xlu0 %1198
      %1200 = vrot.lane.b32.xlu0 %v1103, 126
      %v1201 = vpop.permute.xlu0 %1200
      %1202 = vrot.lane.b32.xlu0 %v1104, 126
      %v1203 = vpop.permute.xlu0 %1202
      %1204 = vrot.lane.b32.xlu0 %v1105, 126
      %v1205 = vpop.permute.xlu0 %1204
      %1206 = vrot.lane.b32.xlu0 %v1106, 126
      %v1207 = vpop.permute.xlu0 %1206
      %1208 = vrot.lane.b32.xlu0 %v1107, 126
      %v1209 = vpop.permute.xlu0 %1208
      %1210 = vrot.lane.b32.xlu0 %v1108, 126
      %v1211 = vpop.permute.xlu0 %1210
      %1212 = vrot.lane.b32.xlu0 %v1109, 126
      %v1213 = vpop.permute.xlu0 %1212
      %1214 = vrot.lane.b32.xlu0 %v1110, 126
      %v1215 = vpop.permute.xlu0 %1214
      %1216 = vrot.lane.b32.xlu0 %v1111, 126
      %v1217 = vpop.permute.xlu0 %1216
      %1218 = vrot.lane.b32.xlu0 %v1112, 126
      %v1219 = vpop.permute.xlu0 %1218
      %1220 = vrot.lane.b32.xlu0 %v1113, 126
      %v1221 = vpop.permute.xlu0 %1220
      %1222 = vrot.lane.b32.xlu0 %v1114, 126
      %v1223 = vpop.permute.xlu0 %1222
      %1224 = vrot.lane.b32.xlu0 %v1115, 126
      %v1225 = vpop.permute.xlu0 %1224
      %1226 = vrot.lane.b32.xlu0 %v1116, 126
      %v1227 = vpop.permute.xlu0 %1226
      %1228 = vrot.lane.b32.xlu0 %v1117, 126
      %v1229 = vpop.permute.xlu0 %1228
      %v1246 = vadd.f32 %v1182, %v1199
      %v1247 = vadd.f32 %v1183, %v1201
      %v1248 = vadd.f32 %v1184, %v1203
      %v1249 = vadd.f32 %v1185, %v1205
      %v1250 = vadd.f32 %v1186, %v1207
      %v1251 = vadd.f32 %v1187, %v1209
      %v1252 = vadd.f32 %v1188, %v1211
      %v1253 = vadd.f32 %v1189, %v1213
      %v1254 = vadd.f32 %v1190, %v1215
      %v1255 = vadd.f32 %v1191, %v1217
      %v1256 = vadd.f32 %v1192, %v1219
      %v1257 = vadd.f32 %v1193, %v1221
      %v1258 = vadd.f32 %v1194, %v1223
      %v1259 = vadd.f32 %v1195, %v1225
      %v1260 = vadd.f32 %v1196, %v1227
      %v1261 = vadd.f32 %v1197, %v1229
      %v1262 = vadd.f32 %v1246, %v975
      %v1263 = vadd.f32 %v1247, %v977
      %v1264 = vadd.f32 %v1248, %v979
      %v1265 = vadd.f32 %v1249, %v981
      %v1266 = vadd.f32 %v1250, %v983
      %v1267 = vadd.f32 %v1251, %v985
      %v1268 = vadd.f32 %v1252, %v987
      %v1269 = vadd.f32 %v1253, %v989
      %v1270 = vadd.f32 %v1254, %v991
      %v1271 = vadd.f32 %v1255, %v993
      %v1272 = vadd.f32 %v1256, %v995
      %v1273 = vadd.f32 %v1257, %v997
      %v1274 = vadd.f32 %v1258, %v999
      %v1275 = vadd.f32 %v1259, %v1001
      %v1276 = vadd.f32 %v1260, %v1003
      %v1277 = vadd.f32 %v1261, %v1005
      %1278 = vrot.lane.b32.xlu0 %v782, 8
      %v1279 = vpop.permute.xlu0 %1278
      %1280 = vrot.lane.b32.xlu0 %v783, 8
      %v1281 = vpop.permute.xlu0 %1280
      %1282 = vrot.lane.b32.xlu0 %v784, 8
      %v1283 = vpop.permute.xlu0 %1282
      %1284 = vrot.lane.b32.xlu0 %v785, 8
      %v1285 = vpop.permute.xlu0 %1284
      %1286 = vrot.lane.b32.xlu0 %v786, 8
      %v1287 = vpop.permute.xlu0 %1286
      %1288 = vrot.lane.b32.xlu0 %v787, 8
      %v1289 = vpop.permute.xlu0 %1288
      %1290 = vrot.lane.b32.xlu0 %v788, 8
      %v1291 = vpop.permute.xlu0 %1290
      %1292 = vrot.lane.b32.xlu0 %v789, 8
      %v1293 = vpop.permute.xlu0 %1292
      %1294 = vrot.lane.b32.xlu0 %v790, 8
      %v1295 = vpop.permute.xlu0 %1294
      %1296 = vrot.lane.b32.xlu0 %v791, 8
      %v1297 = vpop.permute.xlu0 %1296
      %1298 = vrot.lane.b32.xlu0 %v792, 8
      %v1299 = vpop.permute.xlu0 %1298
      %1300 = vrot.lane.b32.xlu0 %v793, 8
      %v1301 = vpop.permute.xlu0 %1300
      %1302 = vrot.lane.b32.xlu0 %v794, 8
      %v1303 = vpop.permute.xlu0 %1302
      %1304 = vrot.lane.b32.xlu0 %v795, 8
      %v1305 = vpop.permute.xlu0 %1304
      %1306 = vrot.lane.b32.xlu0 %v796, 8
      %v1307 = vpop.permute.xlu0 %1306
      %1308 = vrot.lane.b32.xlu0 %v797, 8
      %v1309 = vpop.permute.xlu0 %1308
      %v1326 = vmul.f32 %v704, %v1279
      %v1327 = vmul.f32 %v709, %v1281
      %v1328 = vmul.f32 %v714, %v1283
      %v1329 = vmul.f32 %v719, %v1285
      %v1330 = vmul.f32 %v724, %v1287
      %v1331 = vmul.f32 %v729, %v1289
      %v1332 = vmul.f32 %v734, %v1291
      %v1333 = vmul.f32 %v739, %v1293
      %v1334 = vmul.f32 %v744, %v1295
      %v1335 = vmul.f32 %v749, %v1297
      %v1336 = vmul.f32 %v754, %v1299
      %v1337 = vmul.f32 %v759, %v1301
      %v1338 = vmul.f32 %v764, %v1303
      %v1339 = vmul.f32 %v769, %v1305
      %v1340 = vmul.f32 %v774, %v1307
      %v1341 = vmul.f32 %v779, %v1309
      %1358 = vrot.lane.b32.xlu0 %v1326, 127
      %v1359 = vpop.permute.xlu0 %1358
      %1360 = vrot.lane.b32.xlu0 %v1327, 127
      %v1361 = vpop.permute.xlu0 %1360
      %1362 = vrot.lane.b32.xlu0 %v1328, 127
      %v1363 = vpop.permute.xlu0 %1362
      %1364 = vrot.lane.b32.xlu0 %v1329, 127
      %v1365 = vpop.permute.xlu0 %1364
      %1366 = vrot.lane.b32.xlu0 %v1330, 127
      %v1367 = vpop.permute.xlu0 %1366
      %1368 = vrot.lane.b32.xlu0 %v1331, 127
      %v1369 = vpop.permute.xlu0 %1368
      %1370 = vrot.lane.b32.xlu0 %v1332, 127
      %v1371 = vpop.permute.xlu0 %1370
      %1372 = vrot.lane.b32.xlu0 %v1333, 127
      %v1373 = vpop.permute.xlu0 %1372
      %1374 = vrot.lane.b32.xlu0 %v1334, 127
      %v1375 = vpop.permute.xlu0 %1374
      %1376 = vrot.lane.b32.xlu0 %v1335, 127
      %v1377 = vpop.permute.xlu0 %1376
      %1378 = vrot.lane.b32.xlu0 %v1336, 127
      %v1379 = vpop.permute.xlu0 %1378
      %1380 = vrot.lane.b32.xlu0 %v1337, 127
      %v1381 = vpop.permute.xlu0 %1380
      %1382 = vrot.lane.b32.xlu0 %v1338, 127
      %v1383 = vpop.permute.xlu0 %1382
      %1384 = vrot.lane.b32.xlu0 %v1339, 127
      %v1385 = vpop.permute.xlu0 %1384
      %1386 = vrot.lane.b32.xlu0 %v1340, 127
      %v1387 = vpop.permute.xlu0 %1386
      %1388 = vrot.lane.b32.xlu0 %v1341, 127
      %v1389 = vpop.permute.xlu0 %1388
      %v1406 = vadd.f32 %v1326, %v1359
      %v1407 = vadd.f32 %v1327, %v1361
      %v1408 = vadd.f32 %v1328, %v1363
      %v1409 = vadd.f32 %v1329, %v1365
      %v1410 = vadd.f32 %v1330, %v1367
      %v1411 = vadd.f32 %v1331, %v1369
      %v1412 = vadd.f32 %v1332, %v1371
      %v1413 = vadd.f32 %v1333, %v1373
      %v1414 = vadd.f32 %v1334, %v1375
      %v1415 = vadd.f32 %v1335, %v1377
      %v1416 = vadd.f32 %v1336, %v1379
      %v1417 = vadd.f32 %v1337, %v1381
      %v1418 = vadd.f32 %v1338, %v1383
      %v1419 = vadd.f32 %v1339, %v1385
      %v1420 = vadd.f32 %v1340, %v1387
      %v1421 = vadd.f32 %v1341, %v1389
      %1422 = vrot.lane.b32.xlu0 %v1326, 126
      %v1423 = vpop.permute.xlu0 %1422
      %1424 = vrot.lane.b32.xlu0 %v1327, 126
      %v1425 = vpop.permute.xlu0 %1424
      %1426 = vrot.lane.b32.xlu0 %v1328, 126
      %v1427 = vpop.permute.xlu0 %1426
      %1428 = vrot.lane.b32.xlu0 %v1329, 126
      %v1429 = vpop.permute.xlu0 %1428
      %1430 = vrot.lane.b32.xlu0 %v1330, 126
      %v1431 = vpop.permute.xlu0 %1430
      %1432 = vrot.lane.b32.xlu0 %v1331, 126
      %v1433 = vpop.permute.xlu0 %1432
      %1434 = vrot.lane.b32.xlu0 %v1332, 126
      %v1435 = vpop.permute.xlu0 %1434
      %1436 = vrot.lane.b32.xlu0 %v1333, 126
      %v1437 = vpop.permute.xlu0 %1436
      %1438 = vrot.lane.b32.xlu0 %v1334, 126
      %v1439 = vpop.permute.xlu0 %1438
      %1440 = vrot.lane.b32.xlu0 %v1335, 126
      %v1441 = vpop.permute.xlu0 %1440
      %1442 = vrot.lane.b32.xlu0 %v1336, 126
      %v1443 = vpop.permute.xlu0 %1442
      %1444 = vrot.lane.b32.xlu0 %v1337, 126
      %v1445 = vpop.permute.xlu0 %1444
      %1446 = vrot.lane.b32.xlu0 %v1338, 126
      %v1447 = vpop.permute.xlu0 %1446
      %1448 = vrot.lane.b32.xlu0 %v1339, 126
      %v1449 = vpop.permute.xlu0 %1448
      %1450 = vrot.lane.b32.xlu0 %v1340, 126
      %v1451 = vpop.permute.xlu0 %1450
      %1452 = vrot.lane.b32.xlu0 %v1341, 126
      %v1453 = vpop.permute.xlu0 %1452
      %v1470 = vadd.f32 %v1406, %v1423
      %v1471 = vadd.f32 %v1407, %v1425
      %v1472 = vadd.f32 %v1408, %v1427
      %v1473 = vadd.f32 %v1409, %v1429
      %v1474 = vadd.f32 %v1410, %v1431
      %v1475 = vadd.f32 %v1411, %v1433
      %v1476 = vadd.f32 %v1412, %v1435
      %v1477 = vadd.f32 %v1413, %v1437
      %v1478 = vadd.f32 %v1414, %v1439
      %v1479 = vadd.f32 %v1415, %v1441
      %v1480 = vadd.f32 %v1416, %v1443
      %v1481 = vadd.f32 %v1417, %v1445
      %v1482 = vadd.f32 %v1418, %v1447
      %v1483 = vadd.f32 %v1419, %v1449
      %v1484 = vadd.f32 %v1420, %v1451
      %v1485 = vadd.f32 %v1421, %v1453
      %v1486 = vadd.f32 %v1470, %v975
      %v1487 = vadd.f32 %v1471, %v977
      %v1488 = vadd.f32 %v1472, %v979
      %v1489 = vadd.f32 %v1473, %v981
      %v1490 = vadd.f32 %v1474, %v983
      %v1491 = vadd.f32 %v1475, %v985
      %v1492 = vadd.f32 %v1476, %v987
      %v1493 = vadd.f32 %v1477, %v989
      %v1494 = vadd.f32 %v1478, %v991
      %v1495 = vadd.f32 %v1479, %v993
      %v1496 = vadd.f32 %v1480, %v995
      %v1497 = vadd.f32 %v1481, %v997
      %v1498 = vadd.f32 %v1482, %v999
      %v1499 = vadd.f32 %v1483, %v1001
      %v1500 = vadd.f32 %v1484, %v1003
      %v1501 = vadd.f32 %v1485, %v1005
      %1518 = vrot.lane.b32.xlu0 %v1262, 125
      %v1519 = vpop.permute.xlu0 %1518
      %1520 = vrot.lane.b32.xlu0 %v1263, 125
      %v1521 = vpop.permute.xlu0 %1520
      %1522 = vrot.lane.b32.xlu0 %v1264, 125
      %v1523 = vpop.permute.xlu0 %1522
      %1524 = vrot.lane.b32.xlu0 %v1265, 125
      %v1525 = vpop.permute.xlu0 %1524
      %1526 = vrot.lane.b32.xlu0 %v1266, 125
      %v1527 = vpop.permute.xlu0 %1526
      %1528 = vrot.lane.b32.xlu0 %v1267, 125
      %v1529 = vpop.permute.xlu0 %1528
      %1530 = vrot.lane.b32.xlu0 %v1268, 125
      %v1531 = vpop.permute.xlu0 %1530
      %1532 = vrot.lane.b32.xlu0 %v1269, 125
      %v1533 = vpop.permute.xlu0 %1532
      %1534 = vrot.lane.b32.xlu0 %v1270, 125
      %v1535 = vpop.permute.xlu0 %1534
      %1536 = vrot.lane.b32.xlu0 %v1271, 125
      %v1537 = vpop.permute.xlu0 %1536
      %1538 = vrot.lane.b32.xlu0 %v1272, 125
      %v1539 = vpop.permute.xlu0 %1538
      %1540 = vrot.lane.b32.xlu0 %v1273, 125
      %v1541 = vpop.permute.xlu0 %1540
      %1542 = vrot.lane.b32.xlu0 %v1274, 125
      %v1543 = vpop.permute.xlu0 %1542
      %1544 = vrot.lane.b32.xlu0 %v1275, 125
      %v1545 = vpop.permute.xlu0 %1544
      %1546 = vrot.lane.b32.xlu0 %v1276, 125
      %v1547 = vpop.permute.xlu0 %1546
      %1548 = vrot.lane.b32.xlu0 %v1277, 125
      %v1549 = vpop.permute.xlu0 %1548
      %1582 = vrot.lane.b32.xlu0 %v1486, 122
      %v1583 = vpop.permute.xlu0 %1582
      %1584 = vrot.lane.b32.xlu0 %v1487, 122
      %v1585 = vpop.permute.xlu0 %1584
      %1586 = vrot.lane.b32.xlu0 %v1488, 122
      %v1587 = vpop.permute.xlu0 %1586
      %1588 = vrot.lane.b32.xlu0 %v1489, 122
      %v1589 = vpop.permute.xlu0 %1588
      %1590 = vrot.lane.b32.xlu0 %v1490, 122
      %v1591 = vpop.permute.xlu0 %1590
      %1592 = vrot.lane.b32.xlu0 %v1491, 122
      %v1593 = vpop.permute.xlu0 %1592
      %1594 = vrot.lane.b32.xlu0 %v1492, 122
      %v1595 = vpop.permute.xlu0 %1594
      %1596 = vrot.lane.b32.xlu0 %v1493, 122
      %v1597 = vpop.permute.xlu0 %1596
      %1598 = vrot.lane.b32.xlu0 %v1494, 122
      %v1599 = vpop.permute.xlu0 %1598
      %1600 = vrot.lane.b32.xlu0 %v1495, 122
      %v1601 = vpop.permute.xlu0 %1600
      %1602 = vrot.lane.b32.xlu0 %v1496, 122
      %v1603 = vpop.permute.xlu0 %1602
      %1604 = vrot.lane.b32.xlu0 %v1497, 122
      %v1605 = vpop.permute.xlu0 %1604
      %1606 = vrot.lane.b32.xlu0 %v1498, 122
      %v1607 = vpop.permute.xlu0 %1606
      %1608 = vrot.lane.b32.xlu0 %v1499, 122
      %v1609 = vpop.permute.xlu0 %1608
      %1610 = vrot.lane.b32.xlu0 %v1500, 122
      %v1611 = vpop.permute.xlu0 %1610
      %1612 = vrot.lane.b32.xlu0 %v1501, 122
      %v1613 = vpop.permute.xlu0 %1612
      %vm1630 = vcmask 7168
      %v1631 = vsel %vm1630, %v1022, %v1519
      %v1632 = vsel %vm1630, %v1023, %v1521
      %v1633 = vsel %vm1630, %v1024, %v1523
      %v1634 = vsel %vm1630, %v1025, %v1525
      %v1635 = vsel %vm1630, %v1026, %v1527
      %v1636 = vsel %vm1630, %v1027, %v1529
      %v1637 = vsel %vm1630, %v1028, %v1531
      %v1638 = vsel %vm1630, %v1029, %v1533
      %v1639 = vsel %vm1630, %v1030, %v1535
      %v1640 = vsel %vm1630, %v1031, %v1537
      %v1641 = vsel %vm1630, %v1032, %v1539
      %v1642 = vsel %vm1630, %v1033, %v1541
      %v1643 = vsel %vm1630, %v1034, %v1543
      %v1644 = vsel %vm1630, %v1035, %v1545
      %v1645 = vsel %vm1630, %v1036, %v1547
      %v1646 = vsel %vm1630, %v1037, %v1549
      %vm1647 = vcmask 15360
      %v1648 = vsel %vm1647, %v1631, %v1583
      %v1649 = vsel %vm1647, %v1632, %v1585
      %v1650 = vsel %vm1647, %v1633, %v1587
      %v1651 = vsel %vm1647, %v1634, %v1589
      %v1652 = vsel %vm1647, %v1635, %v1591
      %v1653 = vsel %vm1647, %v1636, %v1593
      %v1654 = vsel %vm1647, %v1637, %v1595
      %v1655 = vsel %vm1647, %v1638, %v1597
      %v1656 = vsel %vm1647, %v1639, %v1599
      %v1657 = vsel %vm1647, %v1640, %v1601
      %v1658 = vsel %vm1647, %v1641, %v1603
      %v1659 = vsel %vm1647, %v1642, %v1605
      %v1660 = vsel %vm1647, %v1643, %v1607
      %v1661 = vsel %vm1647, %v1644, %v1609
      %v1662 = vsel %vm1647, %v1645, %v1611
      %v1663 = vsel %vm1647, %v1646, %v1613
      %v1664 = vld [vmem:[%s561] sm:$0xff]
      %v1665 = vld [vmem:[%s561 + $0x8] sm:$0xff]
      %v1666 = vld [vmem:[%s561 + $0x10] sm:$0xff]
      %v1667 = vld [vmem:[%s561 + $0x18] sm:$0xff]
      %v1668 = vld [vmem:[%s561 + $0x20] sm:$0xff]
      %v1669 = vld [vmem:[%s561 + $0x28] sm:$0xff]
      %v1670 = vld [vmem:[%s561 + $0x30] sm:$0xff]
      %v1671 = vld [vmem:[%s561 + $0x38] sm:$0xff]
      %v1672 = vld [vmem:[%s561 + $0x40] sm:$0xff]
      %v1673 = vld [vmem:[%s561 + $0x48] sm:$0xff]
      %v1674 = vld [vmem:[%s561 + $0x50] sm:$0xff]
      %v1675 = vld [vmem:[%s561 + $0x58] sm:$0xff]
      %v1676 = vld [vmem:[%s561 + $0x60] sm:$0xff]
      %v1677 = vld [vmem:[%s561 + $0x68] sm:$0xff]
      %v1678 = vld [vmem:[%s561 + $0x70] sm:$0xff]
      %v1679 = vld [vmem:[%s561 + $0x78] sm:$0xff]
      %1696 = vrot.lane.b32.xlu0 %v1664, 3
      %v1697 = vpop.permute.xlu0 %1696
      %1698 = vrot.lane.b32.xlu0 %v1665, 3
      %v1699 = vpop.permute.xlu0 %1698
      %1700 = vrot.lane.b32.xlu0 %v1666, 3
      %v1701 = vpop.permute.xlu0 %1700
      %1702 = vrot.lane.b32.xlu0 %v1667, 3
      %v1703 = vpop.permute.xlu0 %1702
      %1704 = vrot.lane.b32.xlu0 %v1668, 3
      %v1705 = vpop.permute.xlu0 %1704
      %1706 = vrot.lane.b32.xlu0 %v1669, 3
      %v1707 = vpop.permute.xlu0 %1706
      %1708 = vrot.lane.b32.xlu0 %v1670, 3
      %v1709 = vpop.permute.xlu0 %1708
      %1710 = vrot.lane.b32.xlu0 %v1671, 3
      %v1711 = vpop.permute.xlu0 %1710
      %1712 = vrot.lane.b32.xlu0 %v1672, 3
      %v1713 = vpop.permute.xlu0 %1712
      %1714 = vrot.lane.b32.xlu0 %v1673, 3
      %v1715 = vpop.permute.xlu0 %1714
      %1716 = vrot.lane.b32.xlu0 %v1674, 3
      %v1717 = vpop.permute.xlu0 %1716
      %1718 = vrot.lane.b32.xlu0 %v1675, 3
      %v1719 = vpop.permute.xlu0 %1718
      %1720 = vrot.lane.b32.xlu0 %v1676, 3
      %v1721 = vpop.permute.xlu0 %1720
      %1722 = vrot.lane.b32.xlu0 %v1677, 3
      %v1723 = vpop.permute.xlu0 %1722
      %1724 = vrot.lane.b32.xlu0 %v1678, 3
      %v1725 = vpop.permute.xlu0 %1724
      %1726 = vrot.lane.b32.xlu0 %v1679, 3
      %v1727 = vpop.permute.xlu0 %1726
      %1744 = vrot.lane.b32.xlu0 %v570, 124
      %v1745 = vpop.permute.xlu0 %1744
      %1746 = vrot.lane.b32.xlu0 %v571, 124
      %v1747 = vpop.permute.xlu0 %1746
      %1748 = vrot.lane.b32.xlu0 %v572, 124
      %v1749 = vpop.permute.xlu0 %1748
      %1750 = vrot.lane.b32.xlu0 %v573, 124
      %v1751 = vpop.permute.xlu0 %1750
      %1752 = vrot.lane.b32.xlu0 %v574, 124
      %v1753 = vpop.permute.xlu0 %1752
      %1754 = vrot.lane.b32.xlu0 %v575, 124
      %v1755 = vpop.permute.xlu0 %1754
      %1756 = vrot.lane.b32.xlu0 %v576, 124
      %v1757 = vpop.permute.xlu0 %1756
      %1758 = vrot.lane.b32.xlu0 %v577, 124
      %v1759 = vpop.permute.xlu0 %1758
      %1760 = vrot.lane.b32.xlu0 %v578, 124
      %v1761 = vpop.permute.xlu0 %1760
      %1762 = vrot.lane.b32.xlu0 %v579, 124
      %v1763 = vpop.permute.xlu0 %1762
      %1764 = vrot.lane.b32.xlu0 %v580, 124
      %v1765 = vpop.permute.xlu0 %1764
      %1766 = vrot.lane.b32.xlu0 %v581, 124
      %v1767 = vpop.permute.xlu0 %1766
      %1768 = vrot.lane.b32.xlu0 %v582, 124
      %v1769 = vpop.permute.xlu0 %1768
      %1770 = vrot.lane.b32.xlu0 %v583, 124
      %v1771 = vpop.permute.xlu0 %1770
      %1772 = vrot.lane.b32.xlu0 %v584, 124
      %v1773 = vpop.permute.xlu0 %1772
      %1774 = vrot.lane.b32.xlu0 %v585, 124
      %v1775 = vpop.permute.xlu0 %1774
      %vm1792 = vcmask 23552
      %v1793 = vsel %vm1792, %v1648, %v1697
      %v1794 = vsel %vm1792, %v1649, %v1699
      %v1795 = vsel %vm1792, %v1650, %v1701
      %v1796 = vsel %vm1792, %v1651, %v1703
      %v1797 = vsel %vm1792, %v1652, %v1705
      %v1798 = vsel %vm1792, %v1653, %v1707
      %v1799 = vsel %vm1792, %v1654, %v1709
      %v1800 = vsel %vm1792, %v1655, %v1711
      %v1801 = vsel %vm1792, %v1656, %v1713
      %v1802 = vsel %vm1792, %v1657, %v1715
      %v1803 = vsel %vm1792, %v1658, %v1717
      %v1804 = vsel %vm1792, %v1659, %v1719
      %v1805 = vsel %vm1792, %v1660, %v1721
      %v1806 = vsel %vm1792, %v1661, %v1723
      %v1807 = vsel %vm1792, %v1662, %v1725
      %v1808 = vsel %vm1792, %v1663, %v1727
      %vm1809 = vcmask 48128
      %v1810 = vsel %vm1809, %v1793, %v1745
      %v1811 = vsel %vm1809, %v1794, %v1747
      %v1812 = vsel %vm1809, %v1795, %v1749
      %v1813 = vsel %vm1809, %v1796, %v1751
      %v1814 = vsel %vm1809, %v1797, %v1753
      %v1815 = vsel %vm1809, %v1798, %v1755
      %v1816 = vsel %vm1809, %v1799, %v1757
      %v1817 = vsel %vm1809, %v1800, %v1759
      %v1818 = vsel %vm1809, %v1801, %v1761
      %v1819 = vsel %vm1809, %v1802, %v1763
      %v1820 = vsel %vm1809, %v1803, %v1765
      %v1821 = vsel %vm1809, %v1804, %v1767
      %v1822 = vsel %vm1809, %v1805, %v1769
      %v1823 = vsel %vm1809, %v1806, %v1771
      %v1824 = vsel %vm1809, %v1807, %v1773
      %v1825 = vsel %vm1809, %v1808, %v1775
      %v1826 = vld [vmem:[%s4] sm:$0xff]
      %v1827 = vld [vmem:[%s4 + $0x8] sm:$0x1]
      %v1828 = vld [vmem:[%s5] sm:$0x1]
      %v1830 = vlaneseq
      %v1831 = vshrl.u32 %v1830, 7
      %v1832 = vsub.s32 0, %v1831
      %v1833 = vrot.slane %v1828, %v1832
      %vm1835 = vcmask 72704
      %v1837 = vsel %vm1835, %v1810, 0
      %v1840 = vsel %vm1835, %v1811, 0
      %v1843 = vsel %vm1835, %v1812, 0
      %v1846 = vsel %vm1835, %v1813, 0
      %v1849 = vsel %vm1835, %v1814, 0
      %v1852 = vsel %vm1835, %v1815, 0
      %v1855 = vsel %vm1835, %v1816, 0
      %v1858 = vsel %vm1835, %v1817, 0
      %v1861 = vsel %vm1835, %v1818, 0
      %v1864 = vsel %vm1835, %v1819, 0
      %v1867 = vsel %vm1835, %v1820, 0
      %v1870 = vsel %vm1835, %v1821, 0
      %v1873 = vsel %vm1835, %v1822, 0
      %v1876 = vsel %vm1835, %v1823, 0
      %v1879 = vsel %vm1835, %v1824, 0
      %v1882 = vsel %vm1835, %v1825, 0
      %vm1884 = vcmask 1040384
      %v1886 = vsel %vm1884, %v1827, 0
      %1888 = vmatprep.subr.mxu0 0.0
      %1889 = vmatpush1.msra.mxu0 0.0
      %1890 = vmatprep.subr.mxu0 0.0
      %1891 = vmatpush1.msra.mxu0 0.0
      %1892 = vmatprep.subr.mxu0 0.0
      %1893 = vmatpush1.msra.mxu0 0.0
      %1894 = vmatprep.subr.mxu0 0.0
      %1895 = vmatpush1.msra.mxu0 0.0
      %1896 = vmatprep.subr.mxu0 0.0
      %1897 = vmatpush1.msra.mxu0 0.0
      %1898 = vmatprep.subr.mxu0 0.0
      %1899 = vmatpush1.msra.mxu0 0.0
      %1900 = vmatprep.subr.mxu0 0.0
      %1901 = vmatpush1.msra.mxu0 0.0
      %1902 = vmatprep.subr.mxu0 0.0
      %1903 = vmatpush1.msra.mxu0 0.0
      %1904 = vmatprep.subr.mxu0 0.0
      %1905 = vmatpush1.msra.mxu0 0.0
      %1906 = vmatprep.subr.mxu0 0.0
      %1907 = vmatpush1.msra.mxu0 0.0
      %1908 = vmatprep.subr.mxu0 0.0
      %1909 = vmatpush1.msra.mxu0 0.0
      %1910 = vmatprep.subr.mxu0 0.0
      %1911 = vmatpush1.msra.mxu0 0.0
      %1912 = vmatprep.subr.mxu0 0.0
      %1913 = vmatpush1.msra.mxu0 0.0
      %1914 = vmatprep.subr.mxu0 0.0
      %1915 = vmatpush1.msra.mxu0 0.0
      %1916 = vmatprep.subr.mxu0 0.0
      %1917 = vmatpush1.msra.mxu0 %v1886
      %1918 = vmatprep.subr.mxu0 0.0
      %1919 = vmatpush1.msra.mxu0 %v1826
      %1920 = vmatprep.subr.mxu0 0.0
      %1921 = vmatpush2.msra.mxu0 0.0
      %1922 = vmatprep.subr.mxu0 0.0
      %1923 = vmatpush2.msra.mxu0 0.0
      %1924 = vmatprep.subr.mxu0 0.0
      %1925 = vmatpush2.msra.mxu0 0.0
      %1926 = vmatprep.subr.mxu0 0.0
      %1927 = vmatpush2.msra.mxu0 0.0
      %1928 = vmatprep.subr.mxu0 0.0
      %1929 = vmatpush2.msra.mxu0 0.0
      %1930 = vmatprep.subr.mxu0 0.0
      %1931 = vmatpush2.msra.mxu0 0.0
      %1932 = vmatprep.subr.mxu0 0.0
      %1933 = vmatpush2.msra.mxu0 0.0
      %1934 = vmatprep.subr.mxu0 0.0
      %1935 = vmatpush2.msra.mxu0 0.0
      %1936 = vmatprep.subr.mxu0 0.0
      %1937 = vmatpush2.msra.mxu0 0.0
      %1938 = vmatprep.subr.mxu0 0.0
      %1939 = vmatpush2.msra.mxu0 0.0
      %1940 = vmatprep.subr.mxu0 0.0
      %1941 = vmatpush2.msra.mxu0 0.0
      %1942 = vmatprep.subr.mxu0 0.0
      %1943 = vmatpush2.msra.mxu0 0.0
      %1944 = vmatprep.subr.mxu0 0.0
      %1945 = vmatpush2.msra.mxu0 0.0
      %1946 = vmatprep.subr.mxu0 0.0
      %1947 = vmatpush2.msra.mxu0 0.0
      %1948 = vmatprep.subr.mxu0 0.0
      %1949 = vmatpush2.msra.mxu0 0.0
      %1950 = vmatprep.subr.mxu0 0.0
      %1951 = vmatpush2.msra.mxu0 0.0
      %1952 = vmatprep.mubr.f32.mxu0 0.0
      %1953 = vmatmul.mubr.f32.gmra.mxu0 %v1837
      %v1954 = vpop.f32.mrf.mxu0
      %v1955 = vadd.f32 %v1833, %v1954
      %v1956 = vpop.f32.mrf.mxu0
      %1957 = vmatprep.mubr.f32.mxu0 0.0
      %1958 = vmatmul.mubr.f32.gmra.mxu0 %v1840
      %v1959 = vpop.f32.mrf.mxu0
      %v1960 = vadd.f32 %v1833, %v1959
      %v1961 = vpop.f32.mrf.mxu0
      %1962 = vmatprep.mubr.f32.mxu0 0.0
      %1963 = vmatmul.mubr.f32.gmra.mxu0 %v1843
      %v1964 = vpop.f32.mrf.mxu0
      %v1965 = vadd.f32 %v1833, %v1964
      %v1966 = vpop.f32.mrf.mxu0
      %1967 = vmatprep.mubr.f32.mxu0 0.0
      %1968 = vmatmul.mubr.f32.gmra.mxu0 %v1846
      %v1969 = vpop.f32.mrf.mxu0
      %v1970 = vadd.f32 %v1833, %v1969
      %v1971 = vpop.f32.mrf.mxu0
      %1972 = vmatprep.mubr.f32.mxu0 0.0
      %1973 = vmatmul.mubr.f32.gmra.mxu0 %v1849
      %v1974 = vpop.f32.mrf.mxu0
      %v1975 = vadd.f32 %v1833, %v1974
      %v1976 = vpop.f32.mrf.mxu0
      %1977 = vmatprep.mubr.f32.mxu0 0.0
      %1978 = vmatmul.mubr.f32.gmra.mxu0 %v1852
      %v1979 = vpop.f32.mrf.mxu0
      %v1980 = vadd.f32 %v1833, %v1979
      %v1981 = vpop.f32.mrf.mxu0
      %1982 = vmatprep.mubr.f32.mxu0 0.0
      %1983 = vmatmul.mubr.f32.gmra.mxu0 %v1855
      %v1984 = vpop.f32.mrf.mxu0
      %v1985 = vadd.f32 %v1833, %v1984
      %v1986 = vpop.f32.mrf.mxu0
      %1987 = vmatprep.mubr.f32.mxu0 0.0
      %1988 = vmatmul.mubr.f32.gmra.mxu0 %v1858
      %v1989 = vpop.f32.mrf.mxu0
      %v1990 = vadd.f32 %v1833, %v1989
      %v1991 = vpop.f32.mrf.mxu0
      %1992 = vmatprep.mubr.f32.mxu0 0.0
      %1993 = vmatmul.mubr.f32.gmra.mxu0 %v1861
      %v1994 = vpop.f32.mrf.mxu0
      %v1995 = vadd.f32 %v1833, %v1994
      %v1996 = vpop.f32.mrf.mxu0
      %1997 = vmatprep.mubr.f32.mxu0 0.0
      %1998 = vmatmul.mubr.f32.gmra.mxu0 %v1864
      %v1999 = vpop.f32.mrf.mxu0
      %v2000 = vadd.f32 %v1833, %v1999
      %v2001 = vpop.f32.mrf.mxu0
      %2002 = vmatprep.mubr.f32.mxu0 0.0
      %2003 = vmatmul.mubr.f32.gmra.mxu0 %v1867
      %v2004 = vpop.f32.mrf.mxu0
      %v2005 = vadd.f32 %v1833, %v2004
      %v2006 = vpop.f32.mrf.mxu0
      %2007 = vmatprep.mubr.f32.mxu0 0.0
      %2008 = vmatmul.mubr.f32.gmra.mxu0 %v1870
      %v2009 = vpop.f32.mrf.mxu0
      %v2010 = vadd.f32 %v1833, %v2009
      %v2011 = vpop.f32.mrf.mxu0
      %2012 = vmatprep.mubr.f32.mxu0 0.0
      %2013 = vmatmul.mubr.f32.gmra.mxu0 %v1873
      %v2014 = vpop.f32.mrf.mxu0
      %v2015 = vadd.f32 %v1833, %v2014
      %v2016 = vpop.f32.mrf.mxu0
      %2017 = vmatprep.mubr.f32.mxu0 0.0
      %2018 = vmatmul.mubr.f32.gmra.mxu0 %v1876
      %v2019 = vpop.f32.mrf.mxu0
      %v2020 = vadd.f32 %v1833, %v2019
      %v2021 = vpop.f32.mrf.mxu0
      %2022 = vmatprep.mubr.f32.mxu0 0.0
      %2023 = vmatmul.mubr.f32.gmra.mxu0 %v1879
      %v2024 = vpop.f32.mrf.mxu0
      %v2025 = vadd.f32 %v1833, %v2024
      %v2026 = vpop.f32.mrf.mxu0
      %2027 = vmatprep.mubr.f32.mxu0 0.0
      %2028 = vmatmul.mubr.f32.gmra.mxu0 %v1882
      %v2029 = vpop.f32.mrf.mxu0
      %v2030 = vadd.f32 %v1833, %v2029
      %v2031 = vpop.f32.mrf.mxu0
      %2032 = vdwg.mxu0
      %v2033 = vmax.f32 %v1955, 0.0
      %v2034 = vmax.f32 %v1960, 0.0
      %v2035 = vmax.f32 %v1965, 0.0
      %v2036 = vmax.f32 %v1970, 0.0
      %v2037 = vmax.f32 %v1975, 0.0
      %v2038 = vmax.f32 %v1980, 0.0
      %v2039 = vmax.f32 %v1985, 0.0
      %v2040 = vmax.f32 %v1990, 0.0
      %v2041 = vmax.f32 %v1995, 0.0
      %v2042 = vmax.f32 %v2000, 0.0
      %v2043 = vmax.f32 %v2005, 0.0
      %v2044 = vmax.f32 %v2010, 0.0
      %v2045 = vmax.f32 %v2015, 0.0
      %v2046 = vmax.f32 %v2020, 0.0
      %v2047 = vmax.f32 %v2025, 0.0
      %v2048 = vmax.f32 %v2030, 0.0
      %v2049 = vld [vmem:[%s6] sm:$0xf]
      %v2050 = vld [vmem:[%s6 + $0x4] sm:$0xf]
      %v2051 = vld [vmem:[%s6 + $0x8] sm:$0xf]
      %v2052 = vld [vmem:[%s6 + $0xc] sm:$0xf]
      %v2053 = vld [vmem:[%s6 + $0x10] sm:$0xf]
      %v2054 = vld [vmem:[%s6 + $0x14] sm:$0xf]
      %v2055 = vld [vmem:[%s6 + $0x18] sm:$0xf]
      %v2056 = vld [vmem:[%s6 + $0x1c] sm:$0xf]
      %v2057 = vpack.c.bf16 %v2034, %v2033
      %v2058 = vpack.c.bf16 %v2036, %v2035
      %v2059 = vpack.c.bf16 %v2038, %v2037
      %v2060 = vpack.c.bf16 %v2040, %v2039
      %v2061 = vpack.c.bf16 %v2042, %v2041
      %v2062 = vpack.c.bf16 %v2044, %v2043
      %v2063 = vpack.c.bf16 %v2046, %v2045
      %v2064 = vpack.c.bf16 %v2048, %v2047
      %v2065 = vld [vmem:[%s7] sm:$0x1]
      %v2067 = vlaneseq
      %v2068 = vshrl.u32 %v2067, 7
      %v2069 = vsub.s32 0, %v2068
      %v2070 = vrot.slane %v2065, %v2069
      %v2080 = vunpack.c.l.b16 %v2049
      %v2081 = vunpack.c.l.b16 %v2050
      %v2082 = vunpack.c.l.b16 %v2051
      %v2083 = vunpack.c.l.b16 %v2052
      %v2084 = vunpack.c.l.b16 %v2053
      %v2085 = vunpack.c.l.b16 %v2054
      %v2086 = vunpack.c.l.b16 %v2055
      %v2087 = vunpack.c.l.b16 %v2056
      %v2088 = vpack.c.b16 %v2081, %v2080
      %v2089 = vpack.c.b16 %v2083, %v2082
      %v2090 = vpack.c.b16 %v2085, %v2084
      %v2091 = vpack.c.b16 %v2087, %v2086
      %vm2096 = vcmask 523264
      %v2098 = vsel %vm2096, %v2057, 0
      %v2101 = vsel %vm2096, %v2058, 0
      %v2104 = vsel %vm2096, %v2059, 0
      %v2107 = vsel %vm2096, %v2060, 0
      %v2110 = vsel %vm2096, %v2061, 0
      %v2113 = vsel %vm2096, %v2062, 0
      %v2116 = vsel %vm2096, %v2063, 0
      %v2119 = vsel %vm2096, %v2064, 0
      %2121 = vmatprep.subr.bf16.mxu0 0
      %2122 = vmatpush1.bf16.msra.mxu0 0
      %2123 = vmatprep.subr.bf16.mxu0 0
      %2124 = vmatpush1.bf16.msra.mxu0 0
      %2125 = vmatprep.subr.bf16.mxu0 0
      %2126 = vmatpush1.bf16.msra.mxu0 0
      %2127 = vmatprep.subr.bf16.mxu0 0
      %2128 = vmatpush1.bf16.msra.mxu0 0
      %2129 = vmatprep.subr.bf16.mxu0 0
      %2130 = vmatpush1.bf16.msra.mxu0 %v2091
      %2131 = vmatprep.subr.bf16.mxu0 0
      %2132 = vmatpush1.bf16.msra.mxu0 %v2090
      %2133 = vmatprep.subr.bf16.mxu0 0
      %2134 = vmatpush1.bf16.msra.mxu0 %v2089
      %2135 = vmatprep.subr.bf16.mxu0 0
      %2136 = vmatpush1.bf16.msra.mxu0 %v2088
      %2137 = vmatprep.subr.bf16.mxu0 0
      %2138 = vmatpush2.bf16.msra.mxu0 0
      %2139 = vmatprep.subr.bf16.mxu0 0
      %2140 = vmatpush2.bf16.msra.mxu0 0
      %2141 = vmatprep.subr.bf16.mxu0 0
      %2142 = vmatpush2.bf16.msra.mxu0 0
      %2143 = vmatprep.subr.bf16.mxu0 0
      %2144 = vmatpush2.bf16.msra.mxu0 0
      %2145 = vmatprep.subr.bf16.mxu0 0
      %2146 = vmatpush2.bf16.msra.mxu0 0
      %2147 = vmatprep.subr.bf16.mxu0 0
      %2148 = vmatpush2.bf16.msra.mxu0 0
      %2149 = vmatprep.subr.bf16.mxu0 0
      %2150 = vmatpush2.bf16.msra.mxu0 0
      %2151 = vmatprep.subr.bf16.mxu0 0
      %2152 = vmatpush2.bf16.msra.mxu0 0
      %2153 = vmatprep.mubr.bf16.mxu0 0
      %2154 = vmatmul.mubr.bf16.gmra.mxu0 %v2098
      %v2155 = vpop.f32.mrf.mxu0
      %v2156 = vadd.f32 %v2070, %v2155
      %v2157 = vpop.f32.mrf.mxu0
      %v2158 = vpop.f32.mrf.mxu0
      %v2159 = vadd.f32 %v2070, %v2158
      %v2160 = vpop.f32.mrf.mxu0
      %2161 = vmatprep.mubr.bf16.mxu0 0
      %2162 = vmatmul.mubr.bf16.gmra.mxu0 %v2101
      %v2163 = vpop.f32.mrf.mxu0
      %v2164 = vadd.f32 %v2070, %v2163
      %v2165 = vpop.f32.mrf.mxu0
      %v2166 = vpop.f32.mrf.mxu0
      %v2167 = vadd.f32 %v2070, %v2166
      %v2168 = vpop.f32.mrf.mxu0
      %2169 = vmatprep.mubr.bf16.mxu0 0
      %2170 = vmatmul.mubr.bf16.gmra.mxu0 %v2104
      %v2171 = vpop.f32.mrf.mxu0
      %v2172 = vadd.f32 %v2070, %v2171
      %v2173 = vpop.f32.mrf.mxu0
      %v2174 = vpop.f32.mrf.mxu0
      %v2175 = vadd.f32 %v2070, %v2174
      %v2176 = vpop.f32.mrf.mxu0
      %2177 = vmatprep.mubr.bf16.mxu0 0
      %2178 = vmatmul.mubr.bf16.gmra.mxu0 %v2107
      %v2179 = vpop.f32.mrf.mxu0
      %v2180 = vadd.f32 %v2070, %v2179
      %v2181 = vpop.f32.mrf.mxu0
      %v2182 = vpop.f32.mrf.mxu0
      %v2183 = vadd.f32 %v2070, %v2182
      %v2184 = vpop.f32.mrf.mxu0
      %2185 = vmatprep.mubr.bf16.mxu0 0
      %2186 = vmatmul.mubr.bf16.gmra.mxu0 %v2110
      %v2187 = vpop.f32.mrf.mxu0
      %v2188 = vadd.f32 %v2070, %v2187
      %v2189 = vpop.f32.mrf.mxu0
      %v2190 = vpop.f32.mrf.mxu0
      %v2191 = vadd.f32 %v2070, %v2190
      %v2192 = vpop.f32.mrf.mxu0
      %2193 = vmatprep.mubr.bf16.mxu0 0
      %2194 = vmatmul.mubr.bf16.gmra.mxu0 %v2113
      %v2195 = vpop.f32.mrf.mxu0
      %v2196 = vadd.f32 %v2070, %v2195
      %v2197 = vpop.f32.mrf.mxu0
      %v2198 = vpop.f32.mrf.mxu0
      %v2199 = vadd.f32 %v2070, %v2198
      %v2200 = vpop.f32.mrf.mxu0
      %2201 = vmatprep.mubr.bf16.mxu0 0
      %2202 = vmatmul.mubr.bf16.gmra.mxu0 %v2116
      %v2203 = vpop.f32.mrf.mxu0
      %v2204 = vadd.f32 %v2070, %v2203
      %v2205 = vpop.f32.mrf.mxu0
      %v2206 = vpop.f32.mrf.mxu0
      %v2207 = vadd.f32 %v2070, %v2206
      %v2208 = vpop.f32.mrf.mxu0
      %2209 = vmatprep.mubr.bf16.mxu0 0
      %2210 = vmatmul.mubr.bf16.gmra.mxu0 %v2119
      %v2211 = vpop.f32.mrf.mxu0
      %v2212 = vadd.f32 %v2070, %v2211
      %v2213 = vpop.f32.mrf.mxu0
      %v2214 = vpop.f32.mrf.mxu0
      %v2215 = vadd.f32 %v2070, %v2214
      %v2216 = vpop.f32.mrf.mxu0
      %2217 = vdwg.mxu0
      %v2218 = vmax.f32 %v2156, 0.0
      %v2219 = vmax.f32 %v2159, 0.0
      %v2220 = vmax.f32 %v2164, 0.0
      %v2221 = vmax.f32 %v2167, 0.0
      %v2222 = vmax.f32 %v2172, 0.0
      %v2223 = vmax.f32 %v2175, 0.0
      %v2224 = vmax.f32 %v2180, 0.0
      %v2225 = vmax.f32 %v2183, 0.0
      %v2226 = vmax.f32 %v2188, 0.0
      %v2227 = vmax.f32 %v2191, 0.0
      %v2228 = vmax.f32 %v2196, 0.0
      %v2229 = vmax.f32 %v2199, 0.0
      %v2230 = vmax.f32 %v2204, 0.0
      %v2231 = vmax.f32 %v2207, 0.0
      %v2232 = vmax.f32 %v2212, 0.0
      %v2233 = vmax.f32 %v2215, 0.0
      %v2234 = vld [vmem:[%s8] sm:$0xf]
      %v2235 = vld [vmem:[%s8 + $0x4] sm:$0xf]
      %v2236 = vld [vmem:[%s8 + $0x8] sm:$0xf]
      %v2237 = vld [vmem:[%s8 + $0xc] sm:$0xf]
      %v2238 = vld [vmem:[%s8 + $0x10] sm:$0xf]
      %v2239 = vld [vmem:[%s8 + $0x14] sm:$0xf]
      %v2240 = vld [vmem:[%s8 + $0x18] sm:$0xf]
      %v2241 = vld [vmem:[%s8 + $0x1c] sm:$0xf]
      %v2242 = vpack.c.bf16 %v2219, %v2218
      %v2243 = vpack.c.bf16 %v2221, %v2220
      %v2244 = vpack.c.bf16 %v2223, %v2222
      %v2245 = vpack.c.bf16 %v2225, %v2224
      %v2246 = vpack.c.bf16 %v2227, %v2226
      %v2247 = vpack.c.bf16 %v2229, %v2228
      %v2248 = vpack.c.bf16 %v2231, %v2230
      %v2249 = vpack.c.bf16 %v2233, %v2232
      %v2250 = vld [vmem:[%s9] sm:$0x1]
      %v2252 = vlaneseq
      %v2253 = vshrl.u32 %v2252, 7
      %v2254 = vsub.s32 0, %v2253
      %v2255 = vrot.slane %v2250, %v2254
      %v2265 = vunpack.c.l.b16 %v2234
      %v2266 = vunpack.c.l.b16 %v2235
      %v2267 = vunpack.c.l.b16 %v2236
      %v2268 = vunpack.c.l.b16 %v2237
      %v2269 = vunpack.c.l.b16 %v2238
      %v2270 = vunpack.c.l.b16 %v2239
      %v2271 = vunpack.c.l.b16 %v2240
      %v2272 = vunpack.c.l.b16 %v2241
      %v2273 = vpack.c.b16 %v2266, %v2265
      %v2274 = vpack.c.b16 %v2268, %v2267
      %v2275 = vpack.c.b16 %v2270, %v2269
      %v2276 = vpack.c.b16 %v2272, %v2271
      %v2282 = vsel %vm2096, %v2242, 0
      %v2285 = vsel %vm2096, %v2243, 0
      %v2288 = vsel %vm2096, %v2244, 0
      %v2291 = vsel %vm2096, %v2245, 0
      %v2294 = vsel %vm2096, %v2246, 0
      %v2297 = vsel %vm2096, %v2247, 0
      %v2300 = vsel %vm2096, %v2248, 0
      %v2303 = vsel %vm2096, %v2249, 0
      %2305 = vmatprep.subr.bf16.mxu0 0
      %2306 = vmatpush1.bf16.msra.mxu0 0
      %2307 = vmatprep.subr.bf16.mxu0 0
      %2308 = vmatpush1.bf16.msra.mxu0 0
      %2309 = vmatprep.subr.bf16.mxu0 0
      %2310 = vmatpush1.bf16.msra.mxu0 0
      %2311 = vmatprep.subr.bf16.mxu0 0
      %2312 = vmatpush1.bf16.msra.mxu0 0
      %2313 = vmatprep.subr.bf16.mxu0 0
      %2314 = vmatpush1.bf16.msra.mxu0 %v2276
      %2315 = vmatprep.subr.bf16.mxu0 0
      %2316 = vmatpush1.bf16.msra.mxu0 %v2275
      %2317 = vmatprep.subr.bf16.mxu0 0
      %2318 = vmatpush1.bf16.msra.mxu0 %v2274
      %2319 = vmatprep.subr.bf16.mxu0 0
      %2320 = vmatpush1.bf16.msra.mxu0 %v2273
      %2321 = vmatprep.subr.bf16.mxu0 0
      %2322 = vmatpush2.bf16.msra.mxu0 0
      %2323 = vmatprep.subr.bf16.mxu0 0
      %2324 = vmatpush2.bf16.msra.mxu0 0
      %2325 = vmatprep.subr.bf16.mxu0 0
      %2326 = vmatpush2.bf16.msra.mxu0 0
      %2327 = vmatprep.subr.bf16.mxu0 0
      %2328 = vmatpush2.bf16.msra.mxu0 0
      %2329 = vmatprep.subr.bf16.mxu0 0
      %2330 = vmatpush2.bf16.msra.mxu0 0
      %2331 = vmatprep.subr.bf16.mxu0 0
      %2332 = vmatpush2.bf16.msra.mxu0 0
      %2333 = vmatprep.subr.bf16.mxu0 0
      %2334 = vmatpush2.bf16.msra.mxu0 0
      %2335 = vmatprep.subr.bf16.mxu0 0
      %2336 = vmatpush2.bf16.msra.mxu0 0
      %2337 = vmatprep.mubr.bf16.mxu0 0
      %2338 = vmatmul.mubr.bf16.gmra.mxu0 %v2282
      %v2339 = vpop.f32.mrf.mxu0
      %v2340 = vadd.f32 %v2255, %v2339
      %v2341 = vpop.f32.mrf.mxu0
      %v2342 = vpop.f32.mrf.mxu0
      %v2343 = vadd.f32 %v2255, %v2342
      %v2344 = vpop.f32.mrf.mxu0
      %2345 = vmatprep.mubr.bf16.mxu0 0
      %2346 = vmatmul.mubr.bf16.gmra.mxu0 %v2285
      %v2347 = vpop.f32.mrf.mxu0
      %v2348 = vadd.f32 %v2255, %v2347
      %v2349 = vpop.f32.mrf.mxu0
      %v2350 = vpop.f32.mrf.mxu0
      %v2351 = vadd.f32 %v2255, %v2350
      %v2352 = vpop.f32.mrf.mxu0
      %2353 = vmatprep.mubr.bf16.mxu0 0
      %2354 = vmatmul.mubr.bf16.gmra.mxu0 %v2288
      %v2355 = vpop.f32.mrf.mxu0
      %v2356 = vadd.f32 %v2255, %v2355
      %v2357 = vpop.f32.mrf.mxu0
      %v2358 = vpop.f32.mrf.mxu0
      %v2359 = vadd.f32 %v2255, %v2358
      %v2360 = vpop.f32.mrf.mxu0
      %2361 = vmatprep.mubr.bf16.mxu0 0
      %2362 = vmatmul.mubr.bf16.gmra.mxu0 %v2291
      %v2363 = vpop.f32.mrf.mxu0
      %v2364 = vadd.f32 %v2255, %v2363
      %v2365 = vpop.f32.mrf.mxu0
      %v2366 = vpop.f32.mrf.mxu0
      %v2367 = vadd.f32 %v2255, %v2366
      %v2368 = vpop.f32.mrf.mxu0
      %2369 = vmatprep.mubr.bf16.mxu0 0
      %2370 = vmatmul.mubr.bf16.gmra.mxu0 %v2294
      %v2371 = vpop.f32.mrf.mxu0
      %v2372 = vadd.f32 %v2255, %v2371
      %v2373 = vpop.f32.mrf.mxu0
      %v2374 = vpop.f32.mrf.mxu0
      %v2375 = vadd.f32 %v2255, %v2374
      %v2376 = vpop.f32.mrf.mxu0
      %2377 = vmatprep.mubr.bf16.mxu0 0
      %2378 = vmatmul.mubr.bf16.gmra.mxu0 %v2297
      %v2379 = vpop.f32.mrf.mxu0
      %v2380 = vadd.f32 %v2255, %v2379
      %v2381 = vpop.f32.mrf.mxu0
      %v2382 = vpop.f32.mrf.mxu0
      %v2383 = vadd.f32 %v2255, %v2382
      %v2384 = vpop.f32.mrf.mxu0
      %2385 = vmatprep.mubr.bf16.mxu0 0
      %2386 = vmatmul.mubr.bf16.gmra.mxu0 %v2300
      %v2387 = vpop.f32.mrf.mxu0
      %v2388 = vadd.f32 %v2255, %v2387
      %v2389 = vpop.f32.mrf.mxu0
      %v2390 = vpop.f32.mrf.mxu0
      %v2391 = vadd.f32 %v2255, %v2390
      %v2392 = vpop.f32.mrf.mxu0
      %2393 = vmatprep.mubr.bf16.mxu0 0
      %2394 = vmatmul.mubr.bf16.gmra.mxu0 %v2303
      %v2395 = vpop.f32.mrf.mxu0
      %v2396 = vadd.f32 %v2255, %v2395
      %v2397 = vpop.f32.mrf.mxu0
      %v2398 = vpop.f32.mrf.mxu0
      %v2399 = vadd.f32 %v2255, %v2398
      %v2400 = vpop.f32.mrf.mxu0
      %2401 = vdwg.mxu0
      %v2402 = vmax.f32 %v2340, 0.0
      %v2403 = vmax.f32 %v2343, 0.0
      %v2404 = vmax.f32 %v2348, 0.0
      %v2405 = vmax.f32 %v2351, 0.0
      %v2406 = vmax.f32 %v2356, 0.0
      %v2407 = vmax.f32 %v2359, 0.0
      %v2408 = vmax.f32 %v2364, 0.0
      %v2409 = vmax.f32 %v2367, 0.0
      %v2410 = vmax.f32 %v2372, 0.0
      %v2411 = vmax.f32 %v2375, 0.0
      %v2412 = vmax.f32 %v2380, 0.0
      %v2413 = vmax.f32 %v2383, 0.0
      %v2414 = vmax.f32 %v2388, 0.0
      %v2415 = vmax.f32 %v2391, 0.0
      %v2416 = vmax.f32 %v2396, 0.0
      %v2417 = vmax.f32 %v2399, 0.0
      %v2418 = vld [vmem:[%s10] sm:$0xf]
      %v2419 = vld [vmem:[%s10 + $0x4] sm:$0xf]
      %v2420 = vld [vmem:[%s10 + $0x8] sm:$0xf]
      %v2421 = vld [vmem:[%s10 + $0xc] sm:$0xf]
      %v2422 = vld [vmem:[%s10 + $0x10] sm:$0xf]
      %v2423 = vld [vmem:[%s10 + $0x14] sm:$0xf]
      %v2424 = vld [vmem:[%s10 + $0x18] sm:$0xf]
      %v2425 = vld [vmem:[%s10 + $0x1c] sm:$0xf]
      %v2426 = vpack.c.bf16 %v2403, %v2402
      %v2427 = vpack.c.bf16 %v2405, %v2404
      %v2428 = vpack.c.bf16 %v2407, %v2406
      %v2429 = vpack.c.bf16 %v2409, %v2408
      %v2430 = vpack.c.bf16 %v2411, %v2410
      %v2431 = vpack.c.bf16 %v2413, %v2412
      %v2432 = vpack.c.bf16 %v2415, %v2414
      %v2433 = vpack.c.bf16 %v2417, %v2416
      %v2434 = vld [vmem:[%s11] sm:$0x1]
      %v2436 = vlaneseq
      %v2437 = vshrl.u32 %v2436, 7
      %v2438 = vsub.s32 0, %v2437
      %v2439 = vrot.slane %v2434, %v2438
      %v2449 = vunpack.c.l.b16 %v2418
      %v2450 = vunpack.c.l.b16 %v2419
      %v2451 = vunpack.c.l.b16 %v2420
      %v2452 = vunpack.c.l.b16 %v2421
      %v2453 = vunpack.c.l.b16 %v2422
      %v2454 = vunpack.c.l.b16 %v2423
      %v2455 = vunpack.c.l.b16 %v2424
      %v2456 = vunpack.c.l.b16 %v2425
      %v2457 = vpack.c.b16 %v2450, %v2449
      %v2458 = vpack.c.b16 %v2452, %v2451
      %v2459 = vpack.c.b16 %v2454, %v2453
      %v2460 = vpack.c.b16 %v2456, %v2455
      %v2466 = vsel %vm2096, %v2426, 0
      %v2469 = vsel %vm2096, %v2427, 0
      %v2472 = vsel %vm2096, %v2428, 0
      %v2475 = vsel %vm2096, %v2429, 0
      %v2478 = vsel %vm2096, %v2430, 0
      %v2481 = vsel %vm2096, %v2431, 0
      %v2484 = vsel %vm2096, %v2432, 0
      %v2487 = vsel %vm2096, %v2433, 0
      %2489 = vmatprep.subr.bf16.mxu0 0
      %2490 = vmatpush1.bf16.msra.mxu0 0
      %2491 = vmatprep.subr.bf16.mxu0 0
      %2492 = vmatpush1.bf16.msra.mxu0 0
      %2493 = vmatprep.subr.bf16.mxu0 0
      %2494 = vmatpush1.bf16.msra.mxu0 0
      %2495 = vmatprep.subr.bf16.mxu0 0
      %2496 = vmatpush1.bf16.msra.mxu0 0
      %2497 = vmatprep.subr.bf16.mxu0 0
      %2498 = vmatpush1.bf16.msra.mxu0 %v2460
      %2499 = vmatprep.subr.bf16.mxu0 0
      %2500 = vmatpush1.bf16.msra.mxu0 %v2459
      %2501 = vmatprep.subr.bf16.mxu0 0
      %2502 = vmatpush1.bf16.msra.mxu0 %v2458
      %2503 = vmatprep.subr.bf16.mxu0 0
      %2504 = vmatpush1.bf16.msra.mxu0 %v2457
      %2505 = vmatprep.subr.bf16.mxu0 0
      %2506 = vmatpush2.bf16.msra.mxu0 0
      %2507 = vmatprep.subr.bf16.mxu0 0
      %2508 = vmatpush2.bf16.msra.mxu0 0
      %2509 = vmatprep.subr.bf16.mxu0 0
      %2510 = vmatpush2.bf16.msra.mxu0 0
      %2511 = vmatprep.subr.bf16.mxu0 0
      %2512 = vmatpush2.bf16.msra.mxu0 0
      %2513 = vmatprep.subr.bf16.mxu0 0
      %2514 = vmatpush2.bf16.msra.mxu0 0
      %2515 = vmatprep.subr.bf16.mxu0 0
      %2516 = vmatpush2.bf16.msra.mxu0 0
      %2517 = vmatprep.subr.bf16.mxu0 0
      %2518 = vmatpush2.bf16.msra.mxu0 0
      %2519 = vmatprep.subr.bf16.mxu0 0
      %2520 = vmatpush2.bf16.msra.mxu0 0
      %2521 = vmatprep.mubr.bf16.mxu0 0
      %2522 = vmatmul.mubr.bf16.gmra.mxu0 %v2466
      %v2523 = vpop.f32.mrf.mxu0
      %v2524 = vadd.f32 %v2439, %v2523
      %v2525 = vpop.f32.mrf.mxu0
      %v2526 = vpop.f32.mrf.mxu0
      %v2527 = vadd.f32 %v2439, %v2526
      %v2528 = vpop.f32.mrf.mxu0
      %2529 = vmatprep.mubr.bf16.mxu0 0
      %2530 = vmatmul.mubr.bf16.gmra.mxu0 %v2469
      %v2531 = vpop.f32.mrf.mxu0
      %v2532 = vadd.f32 %v2439, %v2531
      %v2533 = vpop.f32.mrf.mxu0
      %v2534 = vpop.f32.mrf.mxu0
      %v2535 = vadd.f32 %v2439, %v2534
      %v2536 = vpop.f32.mrf.mxu0
      %2537 = vmatprep.mubr.bf16.mxu0 0
      %2538 = vmatmul.mubr.bf16.gmra.mxu0 %v2472
      %v2539 = vpop.f32.mrf.mxu0
      %v2540 = vadd.f32 %v2439, %v2539
      %v2541 = vpop.f32.mrf.mxu0
      %v2542 = vpop.f32.mrf.mxu0
      %v2543 = vadd.f32 %v2439, %v2542
      %v2544 = vpop.f32.mrf.mxu0
      %2545 = vmatprep.mubr.bf16.mxu0 0
      %2546 = vmatmul.mubr.bf16.gmra.mxu0 %v2475
      %v2547 = vpop.f32.mrf.mxu0
      %v2548 = vadd.f32 %v2439, %v2547
      %v2549 = vpop.f32.mrf.mxu0
      %v2550 = vpop.f32.mrf.mxu0
      %v2551 = vadd.f32 %v2439, %v2550
      %v2552 = vpop.f32.mrf.mxu0
      %2553 = vmatprep.mubr.bf16.mxu0 0
      %2554 = vmatmul.mubr.bf16.gmra.mxu0 %v2478
      %v2555 = vpop.f32.mrf.mxu0
      %v2556 = vadd.f32 %v2439, %v2555
      %v2557 = vpop.f32.mrf.mxu0
      %v2558 = vpop.f32.mrf.mxu0
      %v2559 = vadd.f32 %v2439, %v2558
      %v2560 = vpop.f32.mrf.mxu0
      %2561 = vmatprep.mubr.bf16.mxu0 0
      %2562 = vmatmul.mubr.bf16.gmra.mxu0 %v2481
      %v2563 = vpop.f32.mrf.mxu0
      %v2564 = vadd.f32 %v2439, %v2563
      %v2565 = vpop.f32.mrf.mxu0
      %v2566 = vpop.f32.mrf.mxu0
      %v2567 = vadd.f32 %v2439, %v2566
      %v2568 = vpop.f32.mrf.mxu0
      %2569 = vmatprep.mubr.bf16.mxu0 0
      %2570 = vmatmul.mubr.bf16.gmra.mxu0 %v2484
      %v2571 = vpop.f32.mrf.mxu0
      %v2572 = vadd.f32 %v2439, %v2571
      %v2573 = vpop.f32.mrf.mxu0
      %v2574 = vpop.f32.mrf.mxu0
      %v2575 = vadd.f32 %v2439, %v2574
      %v2576 = vpop.f32.mrf.mxu0
      %2577 = vmatprep.mubr.bf16.mxu0 0
      %2578 = vmatmul.mubr.bf16.gmra.mxu0 %v2487
      %v2579 = vpop.f32.mrf.mxu0
      %v2580 = vadd.f32 %v2439, %v2579
      %v2581 = vpop.f32.mrf.mxu0
      %v2582 = vpop.f32.mrf.mxu0
      %v2583 = vadd.f32 %v2439, %v2582
      %v2584 = vpop.f32.mrf.mxu0
      %2585 = vdwg.mxu0
      %v2586 = vmax.f32 %v2524, 0.0
      %v2587 = vmax.f32 %v2527, 0.0
      %v2588 = vmax.f32 %v2532, 0.0
      %v2589 = vmax.f32 %v2535, 0.0
      %v2590 = vmax.f32 %v2540, 0.0
      %v2591 = vmax.f32 %v2543, 0.0
      %v2592 = vmax.f32 %v2548, 0.0
      %v2593 = vmax.f32 %v2551, 0.0
      %v2594 = vmax.f32 %v2556, 0.0
      %v2595 = vmax.f32 %v2559, 0.0
      %v2596 = vmax.f32 %v2564, 0.0
      %v2597 = vmax.f32 %v2567, 0.0
      %v2598 = vmax.f32 %v2572, 0.0
      %v2599 = vmax.f32 %v2575, 0.0
      %v2600 = vmax.f32 %v2580, 0.0
      %v2601 = vmax.f32 %v2583, 0.0
      %v2602 = vld [vmem:[%s12] sm:$0xf]
      %v2603 = vld [vmem:[%s12 + $0x4] sm:$0xf]
      %v2604 = vld [vmem:[%s12 + $0x8] sm:$0xf]
      %v2605 = vld [vmem:[%s12 + $0xc] sm:$0xf]
      %v2606 = vld [vmem:[%s12 + $0x10] sm:$0xf]
      %v2607 = vld [vmem:[%s12 + $0x14] sm:$0xf]
      %v2608 = vld [vmem:[%s12 + $0x18] sm:$0xf]
      %v2609 = vld [vmem:[%s12 + $0x1c] sm:$0xf]
      %v2610 = vld [vmem:[%s12 + $0x20] sm:$0xf]
      %v2611 = vld [vmem:[%s12 + $0x24] sm:$0xf]
      %v2612 = vld [vmem:[%s12 + $0x28] sm:$0xf]
      %v2613 = vld [vmem:[%s12 + $0x2c] sm:$0xf]
      %v2614 = vld [vmem:[%s12 + $0x30] sm:$0xf]
      %v2615 = vld [vmem:[%s12 + $0x34] sm:$0xf]
      %v2616 = vld [vmem:[%s12 + $0x38] sm:$0xf]
      %v2617 = vld [vmem:[%s12 + $0x3c] sm:$0xf]
      %v2618 = vpack.c.bf16 %v2587, %v2586
      %v2619 = vpack.c.bf16 %v2589, %v2588
      %v2620 = vpack.c.bf16 %v2591, %v2590
      %v2621 = vpack.c.bf16 %v2593, %v2592
      %v2622 = vpack.c.bf16 %v2595, %v2594
      %v2623 = vpack.c.bf16 %v2597, %v2596
      %v2624 = vpack.c.bf16 %v2599, %v2598
      %v2625 = vpack.c.bf16 %v2601, %v2600
      %v2626 = vld [vmem:[%s13] sm:$0x1]
      %v2628 = vlaneseq
      %v2629 = vshrl.u32 %v2628, 7
      %v2630 = vsub.s32 0, %v2629
      %v2631 = vrot.slane %v2626, %v2630
      %v2649 = vunpack.c.l.b16 %v2602
      %v2650 = vunpack.c.l.b16 %v2603
      %v2651 = vunpack.c.l.b16 %v2604
      %v2652 = vunpack.c.l.b16 %v2605
      %v2653 = vunpack.c.l.b16 %v2606
      %v2654 = vunpack.c.l.b16 %v2607
      %v2655 = vunpack.c.l.b16 %v2608
      %v2656 = vunpack.c.l.b16 %v2609
      %v2657 = vunpack.c.l.b16 %v2610
      %v2658 = vunpack.c.l.b16 %v2611
      %v2659 = vunpack.c.l.b16 %v2612
      %v2660 = vunpack.c.l.b16 %v2613
      %v2661 = vunpack.c.l.b16 %v2614
      %v2662 = vunpack.c.l.b16 %v2615
      %v2663 = vunpack.c.l.b16 %v2616
      %v2664 = vunpack.c.l.b16 %v2617
      %v2665 = vpack.c.b16 %v2650, %v2649
      %v2666 = vpack.c.b16 %v2652, %v2651
      %v2667 = vpack.c.b16 %v2654, %v2653
      %v2668 = vpack.c.b16 %v2656, %v2655
      %v2669 = vpack.c.b16 %v2658, %v2657
      %v2670 = vpack.c.b16 %v2660, %v2659
      %v2671 = vpack.c.b16 %v2662, %v2661
      %v2672 = vpack.c.b16 %v2664, %v2663
      %2681 = vmatprep.subr.bf16.mxu0 0
      %2682 = vmatpush1.bf16.msra.mxu0 %v2672
      %2683 = vmatprep.subr.bf16.mxu0 0
      %2684 = vmatpush1.bf16.msra.mxu0 %v2671
      %2685 = vmatprep.subr.bf16.mxu0 0
      %2686 = vmatpush1.bf16.msra.mxu0 %v2670
      %2687 = vmatprep.subr.bf16.mxu0 0
      %2688 = vmatpush1.bf16.msra.mxu0 %v2669
      %2689 = vmatprep.subr.bf16.mxu0 0
      %2690 = vmatpush1.bf16.msra.mxu0 %v2668
      %2691 = vmatprep.subr.bf16.mxu0 0
      %2692 = vmatpush1.bf16.msra.mxu0 %v2667
      %2693 = vmatprep.subr.bf16.mxu0 0
      %2694 = vmatpush1.bf16.msra.mxu0 %v2666
      %2695 = vmatprep.subr.bf16.mxu0 0
      %2696 = vmatpush1.bf16.msra.mxu0 %v2665
      %2697 = vmatprep.subr.bf16.mxu0 0
      %2698 = vmatpush2.bf16.msra.mxu0 0
      %2699 = vmatprep.subr.bf16.mxu0 0
      %2700 = vmatpush2.bf16.msra.mxu0 0
      %2701 = vmatprep.subr.bf16.mxu0 0
      %2702 = vmatpush2.bf16.msra.mxu0 0
      %2703 = vmatprep.subr.bf16.mxu0 0
      %2704 = vmatpush2.bf16.msra.mxu0 0
      %2705 = vmatprep.subr.bf16.mxu0 0
      %2706 = vmatpush2.bf16.msra.mxu0 0
      %2707 = vmatprep.subr.bf16.mxu0 0
      %2708 = vmatpush2.bf16.msra.mxu0 0
      %2709 = vmatprep.subr.bf16.mxu0 0
      %2710 = vmatpush2.bf16.msra.mxu0 0
      %2711 = vmatprep.subr.bf16.mxu0 0
      %2712 = vmatpush2.bf16.msra.mxu0 0
      %2713 = vmatprep.mubr.bf16.mxu0 0
      %2714 = vmatmul.mubr.bf16.gmra.mxu0 %v2618
      %v2715 = vpop.f32.mrf.mxu0
      %v2716 = vadd.f32 %v2631, %v2715
      %v2717 = vpop.f32.mrf.mxu0
      %v2718 = vpop.f32.mrf.mxu0
      %v2719 = vadd.f32 %v2631, %v2718
      %v2720 = vpop.f32.mrf.mxu0
      %2721 = vmatprep.mubr.bf16.mxu0 0
      %2722 = vmatmul.mubr.bf16.gmra.mxu0 %v2619
      %v2723 = vpop.f32.mrf.mxu0
      %v2724 = vadd.f32 %v2631, %v2723
      %v2725 = vpop.f32.mrf.mxu0
      %v2726 = vpop.f32.mrf.mxu0
      %v2727 = vadd.f32 %v2631, %v2726
      %v2728 = vpop.f32.mrf.mxu0
      %2729 = vmatprep.mubr.bf16.mxu0 0
      %2730 = vmatmul.mubr.bf16.gmra.mxu0 %v2620
      %v2731 = vpop.f32.mrf.mxu0
      %v2732 = vadd.f32 %v2631, %v2731
      %v2733 = vpop.f32.mrf.mxu0
      %v2734 = vpop.f32.mrf.mxu0
      %v2735 = vadd.f32 %v2631, %v2734
      %v2736 = vpop.f32.mrf.mxu0
      %2737 = vmatprep.mubr.bf16.mxu0 0
      %2738 = vmatmul.mubr.bf16.gmra.mxu0 %v2621
      %v2739 = vpop.f32.mrf.mxu0
      %v2740 = vadd.f32 %v2631, %v2739
      %v2741 = vpop.f32.mrf.mxu0
      %v2742 = vpop.f32.mrf.mxu0
      %v2743 = vadd.f32 %v2631, %v2742
      %v2744 = vpop.f32.mrf.mxu0
      %2745 = vmatprep.mubr.bf16.mxu0 0
      %2746 = vmatmul.mubr.bf16.gmra.mxu0 %v2622
      %v2747 = vpop.f32.mrf.mxu0
      %v2748 = vadd.f32 %v2631, %v2747
      %v2749 = vpop.f32.mrf.mxu0
      %v2750 = vpop.f32.mrf.mxu0
      %v2751 = vadd.f32 %v2631, %v2750
      %v2752 = vpop.f32.mrf.mxu0
      %2753 = vmatprep.mubr.bf16.mxu0 0
      %2754 = vmatmul.mubr.bf16.gmra.mxu0 %v2623
      %v2755 = vpop.f32.mrf.mxu0
      %v2756 = vadd.f32 %v2631, %v2755
      %v2757 = vpop.f32.mrf.mxu0
      %v2758 = vpop.f32.mrf.mxu0
      %v2759 = vadd.f32 %v2631, %v2758
      %v2760 = vpop.f32.mrf.mxu0
      %2761 = vmatprep.mubr.bf16.mxu0 0
      %2762 = vmatmul.mubr.bf16.gmra.mxu0 %v2624
      %v2763 = vpop.f32.mrf.mxu0
      %v2764 = vadd.f32 %v2631, %v2763
      %v2765 = vpop.f32.mrf.mxu0
      %v2766 = vpop.f32.mrf.mxu0
      %v2767 = vadd.f32 %v2631, %v2766
      %v2768 = vpop.f32.mrf.mxu0
      %2769 = vmatprep.mubr.bf16.mxu0 0
      %2770 = vmatmul.mubr.bf16.gmra.mxu0 %v2625
      %v2771 = vpop.f32.mrf.mxu0
      %v2772 = vadd.f32 %v2631, %v2771
      %v2773 = vpop.f32.mrf.mxu0
      %v2774 = vpop.f32.mrf.mxu0
      %v2775 = vadd.f32 %v2631, %v2774
      %v2776 = vpop.f32.mrf.mxu0
      %2777 = vdwg.mxu0
      %v2778 = vmax.f32 %v2716, 0.0
      %v2779 = vmax.f32 %v2719, 0.0
      %v2780 = vmax.f32 %v2724, 0.0
      %v2781 = vmax.f32 %v2727, 0.0
      %v2782 = vmax.f32 %v2732, 0.0
      %v2783 = vmax.f32 %v2735, 0.0
      %v2784 = vmax.f32 %v2740, 0.0
      %v2785 = vmax.f32 %v2743, 0.0
      %v2786 = vmax.f32 %v2748, 0.0
      %v2787 = vmax.f32 %v2751, 0.0
      %v2788 = vmax.f32 %v2756, 0.0
      %v2789 = vmax.f32 %v2759, 0.0
      %v2790 = vmax.f32 %v2764, 0.0
      %v2791 = vmax.f32 %v2767, 0.0
      %v2792 = vmax.f32 %v2772, 0.0
      %v2793 = vmax.f32 %v2775, 0.0
      %v2794 = vld [vmem:[%s14] sm:$0xf]
      %v2795 = vld [vmem:[%s14 + $0x4] sm:$0xf]
      %v2796 = vld [vmem:[%s14 + $0x8] sm:$0xf]
      %v2797 = vld [vmem:[%s14 + $0xc] sm:$0xf]
      %v2798 = vld [vmem:[%s14 + $0x10] sm:$0xf]
      %v2799 = vld [vmem:[%s14 + $0x14] sm:$0xf]
      %v2800 = vld [vmem:[%s14 + $0x18] sm:$0xf]
      %v2801 = vld [vmem:[%s14 + $0x1c] sm:$0xf]
      %v2802 = vld [vmem:[%s14 + $0x20] sm:$0xf]
      %v2803 = vld [vmem:[%s14 + $0x24] sm:$0xf]
      %v2804 = vld [vmem:[%s14 + $0x28] sm:$0xf]
      %v2805 = vld [vmem:[%s14 + $0x2c] sm:$0xf]
      %v2806 = vld [vmem:[%s14 + $0x30] sm:$0xf]
      %v2807 = vld [vmem:[%s14 + $0x34] sm:$0xf]
      %v2808 = vld [vmem:[%s14 + $0x38] sm:$0xf]
      %v2809 = vld [vmem:[%s14 + $0x3c] sm:$0xf]
      %v2810 = vpack.c.bf16 %v2779, %v2778
      %v2811 = vpack.c.bf16 %v2781, %v2780
      %v2812 = vpack.c.bf16 %v2783, %v2782
      %v2813 = vpack.c.bf16 %v2785, %v2784
      %v2814 = vpack.c.bf16 %v2787, %v2786
      %v2815 = vpack.c.bf16 %v2789, %v2788
      %v2816 = vpack.c.bf16 %v2791, %v2790
      %v2817 = vpack.c.bf16 %v2793, %v2792
      %v2818 = vld [vmem:[%s15] sm:$0x1]
      %v2820 = vlaneseq
      %v2821 = vshrl.u32 %v2820, 7
      %v2822 = vsub.s32 0, %v2821
      %v2823 = vrot.slane %v2818, %v2822
      %v2841 = vunpack.c.l.b16 %v2794
      %v2842 = vunpack.c.l.b16 %v2795
      %v2843 = vunpack.c.l.b16 %v2796
      %v2844 = vunpack.c.l.b16 %v2797
      %v2845 = vunpack.c.l.b16 %v2798
      %v2846 = vunpack.c.l.b16 %v2799
      %v2847 = vunpack.c.l.b16 %v2800
      %v2848 = vunpack.c.l.b16 %v2801
      %v2849 = vunpack.c.l.b16 %v2802
      %v2850 = vunpack.c.l.b16 %v2803
      %v2851 = vunpack.c.l.b16 %v2804
      %v2852 = vunpack.c.l.b16 %v2805
      %v2853 = vunpack.c.l.b16 %v2806
      %v2854 = vunpack.c.l.b16 %v2807
      %v2855 = vunpack.c.l.b16 %v2808
      %v2856 = vunpack.c.l.b16 %v2809
      %v2857 = vpack.c.b16 %v2842, %v2841
      %v2858 = vpack.c.b16 %v2844, %v2843
      %v2859 = vpack.c.b16 %v2846, %v2845
      %v2860 = vpack.c.b16 %v2848, %v2847
      %v2861 = vpack.c.b16 %v2850, %v2849
      %v2862 = vpack.c.b16 %v2852, %v2851
      %v2863 = vpack.c.b16 %v2854, %v2853
      %v2864 = vpack.c.b16 %v2856, %v2855
      %2873 = vmatprep.subr.bf16.mxu0 0
      %2874 = vmatpush1.bf16.msra.mxu0 %v2864
      %2875 = vmatprep.subr.bf16.mxu0 0
      %2876 = vmatpush1.bf16.msra.mxu0 %v2863
      %2877 = vmatprep.subr.bf16.mxu0 0
      %2878 = vmatpush1.bf16.msra.mxu0 %v2862
      %2879 = vmatprep.subr.bf16.mxu0 0
      %2880 = vmatpush1.bf16.msra.mxu0 %v2861
      %2881 = vmatprep.subr.bf16.mxu0 0
      %2882 = vmatpush1.bf16.msra.mxu0 %v2860
      %2883 = vmatprep.subr.bf16.mxu0 0
      %2884 = vmatpush1.bf16.msra.mxu0 %v2859
      %2885 = vmatprep.subr.bf16.mxu0 0
      %2886 = vmatpush1.bf16.msra.mxu0 %v2858
      %2887 = vmatprep.subr.bf16.mxu0 0
      %2888 = vmatpush1.bf16.msra.mxu0 %v2857
      %2889 = vmatprep.subr.bf16.mxu0 0
      %2890 = vmatpush2.bf16.msra.mxu0 0
      %2891 = vmatprep.subr.bf16.mxu0 0
      %2892 = vmatpush2.bf16.msra.mxu0 0
      %2893 = vmatprep.subr.bf16.mxu0 0
      %2894 = vmatpush2.bf16.msra.mxu0 0
      %2895 = vmatprep.subr.bf16.mxu0 0
      %2896 = vmatpush2.bf16.msra.mxu0 0
      %2897 = vmatprep.subr.bf16.mxu0 0
      %2898 = vmatpush2.bf16.msra.mxu0 0
      %2899 = vmatprep.subr.bf16.mxu0 0
      %2900 = vmatpush2.bf16.msra.mxu0 0
      %2901 = vmatprep.subr.bf16.mxu0 0
      %2902 = vmatpush2.bf16.msra.mxu0 0
      %2903 = vmatprep.subr.bf16.mxu0 0
      %2904 = vmatpush2.bf16.msra.mxu0 0
      %2905 = vmatprep.mubr.bf16.mxu0 0
      %2906 = vmatmul.mubr.bf16.gmra.mxu0 %v2810
      %v2907 = vpop.f32.mrf.mxu0
      %v2908 = vadd.f32 %v2823, %v2907
      %v2909 = vpop.f32.mrf.mxu0
      %v2910 = vpop.f32.mrf.mxu0
      %v2911 = vadd.f32 %v2823, %v2910
      %v2912 = vpop.f32.mrf.mxu0
      %2913 = vmatprep.mubr.bf16.mxu0 0
      %2914 = vmatmul.mubr.bf16.gmra.mxu0 %v2811
      %v2915 = vpop.f32.mrf.mxu0
      %v2916 = vadd.f32 %v2823, %v2915
      %v2917 = vpop.f32.mrf.mxu0
      %v2918 = vpop.f32.mrf.mxu0
      %v2919 = vadd.f32 %v2823, %v2918
      %v2920 = vpop.f32.mrf.mxu0
      %2921 = vmatprep.mubr.bf16.mxu0 0
      %2922 = vmatmul.mubr.bf16.gmra.mxu0 %v2812
      %v2923 = vpop.f32.mrf.mxu0
      %v2924 = vadd.f32 %v2823, %v2923
      %v2925 = vpop.f32.mrf.mxu0
      %v2926 = vpop.f32.mrf.mxu0
      %v2927 = vadd.f32 %v2823, %v2926
      %v2928 = vpop.f32.mrf.mxu0
      %2929 = vmatprep.mubr.bf16.mxu0 0
      %2930 = vmatmul.mubr.bf16.gmra.mxu0 %v2813
      %v2931 = vpop.f32.mrf.mxu0
      %v2932 = vadd.f32 %v2823, %v2931
      %v2933 = vpop.f32.mrf.mxu0
      %v2934 = vpop.f32.mrf.mxu0
      %v2935 = vadd.f32 %v2823, %v2934
      %v2936 = vpop.f32.mrf.mxu0
      %2937 = vmatprep.mubr.bf16.mxu0 0
      %2938 = vmatmul.mubr.bf16.gmra.mxu0 %v2814
      %v2939 = vpop.f32.mrf.mxu0
      %v2940 = vadd.f32 %v2823, %v2939
      %v2941 = vpop.f32.mrf.mxu0
      %v2942 = vpop.f32.mrf.mxu0
      %v2943 = vadd.f32 %v2823, %v2942
      %v2944 = vpop.f32.mrf.mxu0
      %2945 = vmatprep.mubr.bf16.mxu0 0
      %2946 = vmatmul.mubr.bf16.gmra.mxu0 %v2815
      %v2947 = vpop.f32.mrf.mxu0
      %v2948 = vadd.f32 %v2823, %v2947
      %v2949 = vpop.f32.mrf.mxu0
      %v2950 = vpop.f32.mrf.mxu0
      %v2951 = vadd.f32 %v2823, %v2950
      %v2952 = vpop.f32.mrf.mxu0
      %2953 = vmatprep.mubr.bf16.mxu0 0
      %2954 = vmatmul.mubr.bf16.gmra.mxu0 %v2816
      %v2955 = vpop.f32.mrf.mxu0
      %v2956 = vadd.f32 %v2823, %v2955
      %v2957 = vpop.f32.mrf.mxu0
      %v2958 = vpop.f32.mrf.mxu0
      %v2959 = vadd.f32 %v2823, %v2958
      %v2960 = vpop.f32.mrf.mxu0
      %2961 = vmatprep.mubr.bf16.mxu0 0
      %2962 = vmatmul.mubr.bf16.gmra.mxu0 %v2817
      %v2963 = vpop.f32.mrf.mxu0
      %v2964 = vadd.f32 %v2823, %v2963
      %v2965 = vpop.f32.mrf.mxu0
      %v2966 = vpop.f32.mrf.mxu0
      %v2967 = vadd.f32 %v2823, %v2966
      %v2968 = vpop.f32.mrf.mxu0
      %2969 = vdwg.mxu0
      %v2970 = vmax.f32 %v2908, 0.0
      %v2971 = vmax.f32 %v2911, 0.0
      %v2972 = vmax.f32 %v2916, 0.0
      %v2973 = vmax.f32 %v2919, 0.0
      %v2974 = vmax.f32 %v2924, 0.0
      %v2975 = vmax.f32 %v2927, 0.0
      %v2976 = vmax.f32 %v2932, 0.0
      %v2977 = vmax.f32 %v2935, 0.0
      %v2978 = vmax.f32 %v2940, 0.0
      %v2979 = vmax.f32 %v2943, 0.0
      %v2980 = vmax.f32 %v2948, 0.0
      %v2981 = vmax.f32 %v2951, 0.0
      %v2982 = vmax.f32 %v2956, 0.0
      %v2983 = vmax.f32 %v2959, 0.0
      %v2984 = vmax.f32 %v2964, 0.0
      %v2985 = vmax.f32 %v2967, 0.0
      %v2986 = vlaneseq
      %v2987 = vand.u32 %v2986, 127
      %vm2988 = vcmp.ge.s32.totalorder %v2987, 3
      %vm2989 = vcmp.lt.s32.totalorder %v2987, 6
      %vm2990 = vmand %vm2988, %vm2989
      %vm2991 = vcmp.ge.s32.totalorder %v2987, 6
      %vm2992 = vcmp.lt.s32.totalorder %v2987, 10
      %vm2993 = vmand %vm2991, %vm2992
      %v2994 = vsel %vm2993, %v2970, 0.0
      %v2995 = vsel %vm2993, %v2971, 0.0
      %v2996 = vsel %vm2993, %v2972, 0.0
      %v2997 = vsel %vm2993, %v2973, 0.0
      %v2998 = vsel %vm2993, %v2974, 0.0
      %v2999 = vsel %vm2993, %v2975, 0.0
      %v3000 = vsel %vm2993, %v2976, 0.0
      %v3001 = vsel %vm2993, %v2977, 0.0
      %v3002 = vsel %vm2993, %v2978, 0.0
      %v3003 = vsel %vm2993, %v2979, 0.0
      %v3004 = vsel %vm2993, %v2980, 0.0
      %v3005 = vsel %vm2993, %v2981, 0.0
      %v3006 = vsel %vm2993, %v2982, 0.0
      %v3007 = vsel %vm2993, %v2983, 0.0
      %v3008 = vsel %vm2993, %v2984, 0.0
      %v3009 = vsel %vm2993, %v2985, 0.0
      %v3010 = vmul.f32 %v2994, %v2994
      %v3011 = vmul.f32 %v2995, %v2995
      %v3012 = vmul.f32 %v2996, %v2996
      %v3013 = vmul.f32 %v2997, %v2997
      %v3014 = vmul.f32 %v2998, %v2998
      %v3015 = vmul.f32 %v2999, %v2999
      %v3016 = vmul.f32 %v3000, %v3000
      %v3017 = vmul.f32 %v3001, %v3001
      %v3018 = vmul.f32 %v3002, %v3002
      %v3019 = vmul.f32 %v3003, %v3003
      %v3020 = vmul.f32 %v3004, %v3004
      %v3021 = vmul.f32 %v3005, %v3005
      %v3022 = vmul.f32 %v3006, %v3006
      %v3023 = vmul.f32 %v3007, %v3007
      %v3024 = vmul.f32 %v3008, %v3008
      %v3025 = vmul.f32 %v3009, %v3009
      %v3026 = vsel %vm588, %v3010, 0.0
      %3027 = vadd.xlane.f32.xlu0 %v3026
      %v3028 = vpop.xlane.xlu0 %3027
      %v3029 = vsel %vm588, %v3011, 0.0
      %3030 = vadd.xlane.f32.xlu0 %v3029
      %v3031 = vpop.xlane.xlu0 %3030
      %v3032 = vsel %vm588, %v3012, 0.0
      %3033 = vadd.xlane.f32.xlu0 %v3032
      %v3034 = vpop.xlane.xlu0 %3033
      %v3035 = vsel %vm588, %v3013, 0.0
      %3036 = vadd.xlane.f32.xlu0 %v3035
      %v3037 = vpop.xlane.xlu0 %3036
      %v3038 = vsel %vm588, %v3014, 0.0
      %3039 = vadd.xlane.f32.xlu0 %v3038
      %v3040 = vpop.xlane.xlu0 %3039
      %v3041 = vsel %vm588, %v3015, 0.0
      %3042 = vadd.xlane.f32.xlu0 %v3041
      %v3043 = vpop.xlane.xlu0 %3042
      %v3044 = vsel %vm588, %v3016, 0.0
      %3045 = vadd.xlane.f32.xlu0 %v3044
      %v3046 = vpop.xlane.xlu0 %3045
      %v3047 = vsel %vm588, %v3017, 0.0
      %3048 = vadd.xlane.f32.xlu0 %v3047
      %v3049 = vpop.xlane.xlu0 %3048
      %v3050 = vsel %vm588, %v3018, 0.0
      %3051 = vadd.xlane.f32.xlu0 %v3050
      %v3052 = vpop.xlane.xlu0 %3051
      %v3053 = vsel %vm588, %v3019, 0.0
      %3054 = vadd.xlane.f32.xlu0 %v3053
      %v3055 = vpop.xlane.xlu0 %3054
      %v3056 = vsel %vm588, %v3020, 0.0
      %3057 = vadd.xlane.f32.xlu0 %v3056
      %v3058 = vpop.xlane.xlu0 %3057
      %v3059 = vsel %vm588, %v3021, 0.0
      %3060 = vadd.xlane.f32.xlu0 %v3059
      %v3061 = vpop.xlane.xlu0 %3060
      %v3062 = vsel %vm588, %v3022, 0.0
      %3063 = vadd.xlane.f32.xlu0 %v3062
      %v3064 = vpop.xlane.xlu0 %3063
      %v3065 = vsel %vm588, %v3023, 0.0
      %3066 = vadd.xlane.f32.xlu0 %v3065
      %v3067 = vpop.xlane.xlu0 %3066
      %v3068 = vsel %vm588, %v3024, 0.0
      %3069 = vadd.xlane.f32.xlu0 %v3068
      %v3070 = vpop.xlane.xlu0 %3069
      %v3071 = vsel %vm588, %v3025, 0.0
      %3072 = vadd.xlane.f32.xlu0 %v3071
      %v3073 = vpop.xlane.xlu0 %3072
      %v3074 = vadd.f32 %v3028, 1e-24
      %v3075 = vadd.f32 %v3031, 1e-24
      %v3076 = vadd.f32 %v3034, 1e-24
      %v3077 = vadd.f32 %v3037, 1e-24
      %v3078 = vadd.f32 %v3040, 1e-24
      %v3079 = vadd.f32 %v3043, 1e-24
      %v3080 = vadd.f32 %v3046, 1e-24
      %v3081 = vadd.f32 %v3049, 1e-24
      %v3082 = vadd.f32 %v3052, 1e-24
      %v3083 = vadd.f32 %v3055, 1e-24
      %v3084 = vadd.f32 %v3058, 1e-24
      %v3085 = vadd.f32 %v3061, 1e-24
      %v3086 = vadd.f32 %v3064, 1e-24
      %v3087 = vadd.f32 %v3067, 1e-24
      %v3088 = vadd.f32 %v3070, 1e-24
      %v3089 = vadd.f32 %v3073, 1e-24
      %v3090 = vrsqrt.pop %v3074
      %v3091 = vrsqrt.pop %v3075
      %v3092 = vrsqrt.pop %v3076
      %v3093 = vrsqrt.pop %v3077
      %v3094 = vrsqrt.pop %v3078
      %v3095 = vrsqrt.pop %v3079
      %v3096 = vrsqrt.pop %v3080
      %v3097 = vrsqrt.pop %v3081
      %v3098 = vrsqrt.pop %v3082
      %v3099 = vrsqrt.pop %v3083
      %v3100 = vrsqrt.pop %v3084
      %v3101 = vrsqrt.pop %v3085
      %v3102 = vrsqrt.pop %v3086
      %v3103 = vrsqrt.pop %v3087
      %v3104 = vrsqrt.pop %v3088
      %v3105 = vrsqrt.pop %v3089
      %v3106 = vxor.u32 %v2970, 2147483648
      %v3107 = vxor.u32 %v2971, 2147483648
      %v3108 = vxor.u32 %v2972, 2147483648
      %v3109 = vxor.u32 %v2973, 2147483648
      %v3110 = vxor.u32 %v2974, 2147483648
      %v3111 = vxor.u32 %v2975, 2147483648
      %v3112 = vxor.u32 %v2976, 2147483648
      %v3113 = vxor.u32 %v2977, 2147483648
      %v3114 = vxor.u32 %v2978, 2147483648
      %v3115 = vxor.u32 %v2979, 2147483648
      %v3116 = vxor.u32 %v2980, 2147483648
      %v3117 = vxor.u32 %v2981, 2147483648
      %v3118 = vxor.u32 %v2982, 2147483648
      %v3119 = vxor.u32 %v2983, 2147483648
      %v3120 = vxor.u32 %v2984, 2147483648
      %v3121 = vxor.u32 %v2985, 2147483648
      %v3122 = vmul.f32 %v3106, 1.442695
      %v3123 = vpow.pop %v3122
      %v3124 = vmul.f32 %v3107, 1.442695
      %v3125 = vpow.pop %v3124
      %v3126 = vmul.f32 %v3108, 1.442695
      %v3127 = vpow.pop %v3126
      %v3128 = vmul.f32 %v3109, 1.442695
      %v3129 = vpow.pop %v3128
      %v3130 = vmul.f32 %v3110, 1.442695
      %v3131 = vpow.pop %v3130
      %v3132 = vmul.f32 %v3111, 1.442695
      %v3133 = vpow.pop %v3132
      %v3134 = vmul.f32 %v3112, 1.442695
      %v3135 = vpow.pop %v3134
      %v3136 = vmul.f32 %v3113, 1.442695
      %v3137 = vpow.pop %v3136
      %v3138 = vmul.f32 %v3114, 1.442695
      %v3139 = vpow.pop %v3138
      %v3140 = vmul.f32 %v3115, 1.442695
      %v3141 = vpow.pop %v3140
      %v3142 = vmul.f32 %v3116, 1.442695
      %v3143 = vpow.pop %v3142
      %v3144 = vmul.f32 %v3117, 1.442695
      %v3145 = vpow.pop %v3144
      %v3146 = vmul.f32 %v3118, 1.442695
      %v3147 = vpow.pop %v3146
      %v3148 = vmul.f32 %v3119, 1.442695
      %v3149 = vpow.pop %v3148
      %v3150 = vmul.f32 %v3120, 1.442695
      %v3151 = vpow.pop %v3150
      %v3152 = vmul.f32 %v3121, 1.442695
      %v3153 = vpow.pop %v3152
      %v3154 = vadd.f32 %v3123, 1.0
      %v3155 = vadd.f32 %v3125, 1.0
      %v3156 = vadd.f32 %v3127, 1.0
      %v3157 = vadd.f32 %v3129, 1.0
      %v3158 = vadd.f32 %v3131, 1.0
      %v3159 = vadd.f32 %v3133, 1.0
      %v3160 = vadd.f32 %v3135, 1.0
      %v3161 = vadd.f32 %v3137, 1.0
      %v3162 = vadd.f32 %v3139, 1.0
      %v3163 = vadd.f32 %v3141, 1.0
      %v3164 = vadd.f32 %v3143, 1.0
      %v3165 = vadd.f32 %v3145, 1.0
      %v3166 = vadd.f32 %v3147, 1.0
      %v3167 = vadd.f32 %v3149, 1.0
      %v3168 = vadd.f32 %v3151, 1.0
      %v3169 = vadd.f32 %v3153, 1.0
      %v3170 = vrcp.pop %v3154
      %v3171 = vmul.f32 1.0, %v3170
      %v3172 = vrcp.pop %v3155
      %v3173 = vmul.f32 1.0, %v3172
      %v3174 = vrcp.pop %v3156
      %v3175 = vmul.f32 1.0, %v3174
      %v3176 = vrcp.pop %v3157
      %v3177 = vmul.f32 1.0, %v3176
      %v3178 = vrcp.pop %v3158
      %v3179 = vmul.f32 1.0, %v3178
      %v3180 = vrcp.pop %v3159
      %v3181 = vmul.f32 1.0, %v3180
      %v3182 = vrcp.pop %v3160
      %v3183 = vmul.f32 1.0, %v3182
      %v3184 = vrcp.pop %v3161
      %v3185 = vmul.f32 1.0, %v3184
      %v3186 = vrcp.pop %v3162
      %v3187 = vmul.f32 1.0, %v3186
      %v3188 = vrcp.pop %v3163
      %v3189 = vmul.f32 1.0, %v3188
      %v3190 = vrcp.pop %v3164
      %v3191 = vmul.f32 1.0, %v3190
      %v3192 = vrcp.pop %v3165
      %v3193 = vmul.f32 1.0, %v3192
      %v3194 = vrcp.pop %v3166
      %v3195 = vmul.f32 1.0, %v3194
      %v3196 = vrcp.pop %v3167
      %v3197 = vmul.f32 1.0, %v3196
      %v3198 = vrcp.pop %v3168
      %v3199 = vmul.f32 1.0, %v3198
      %v3200 = vrcp.pop %v3169
      %v3201 = vmul.f32 1.0, %v3200
      %v3202 = vmul.f32 %v2994, %v3090
      %v3203 = vmul.f32 %v2995, %v3091
      %v3204 = vmul.f32 %v2996, %v3092
      %v3205 = vmul.f32 %v2997, %v3093
      %v3206 = vmul.f32 %v2998, %v3094
      %v3207 = vmul.f32 %v2999, %v3095
      %v3208 = vmul.f32 %v3000, %v3096
      %v3209 = vmul.f32 %v3001, %v3097
      %v3210 = vmul.f32 %v3002, %v3098
      %v3211 = vmul.f32 %v3003, %v3099
      %v3212 = vmul.f32 %v3004, %v3100
      %v3213 = vmul.f32 %v3005, %v3101
      %v3214 = vmul.f32 %v3006, %v3102
      %v3215 = vmul.f32 %v3007, %v3103
      %v3216 = vmul.f32 %v3008, %v3104
      %v3217 = vmul.f32 %v3009, %v3105
      %v3218 = vsel %vm2990, %v3171, %v3202
      %v3219 = vsel %vm2990, %v3173, %v3203
      %v3220 = vsel %vm2990, %v3175, %v3204
      %v3221 = vsel %vm2990, %v3177, %v3205
      %v3222 = vsel %vm2990, %v3179, %v3206
      %v3223 = vsel %vm2990, %v3181, %v3207
      %v3224 = vsel %vm2990, %v3183, %v3208
      %v3225 = vsel %vm2990, %v3185, %v3209
      %v3226 = vsel %vm2990, %v3187, %v3210
      %v3227 = vsel %vm2990, %v3189, %v3211
      %v3228 = vsel %vm2990, %v3191, %v3212
      %v3229 = vsel %vm2990, %v3193, %v3213
      %v3230 = vsel %vm2990, %v3195, %v3214
      %v3231 = vsel %vm2990, %v3197, %v3215
      %v3232 = vsel %vm2990, %v3199, %v3216
      %v3233 = vsel %vm2990, %v3201, %v3217
      %v3234 = vsel %vm1792, %v1648, 0.0
      %v3235 = vsel %vm1792, %v1649, 0.0
      %v3236 = vsel %vm1792, %v1650, 0.0
      %v3237 = vsel %vm1792, %v1651, 0.0
      %v3238 = vsel %vm1792, %v1652, 0.0
      %v3239 = vsel %vm1792, %v1653, 0.0
      %v3240 = vsel %vm1792, %v1654, 0.0
      %v3241 = vsel %vm1792, %v1655, 0.0
      %v3242 = vsel %vm1792, %v1656, 0.0
      %v3243 = vsel %vm1792, %v1657, 0.0
      %v3244 = vsel %vm1792, %v1658, 0.0
      %v3245 = vsel %vm1792, %v1659, 0.0
      %v3246 = vsel %vm1792, %v1660, 0.0
      %v3247 = vsel %vm1792, %v1661, 0.0
      %v3248 = vsel %vm1792, %v1662, 0.0
      %v3249 = vsel %vm1792, %v1663, 0.0
      %v3250 = vadd.f32 %v3234, %v3218
      %v3251 = vadd.f32 %v3235, %v3219
      %v3252 = vadd.f32 %v3236, %v3220
      %v3253 = vadd.f32 %v3237, %v3221
      %v3254 = vadd.f32 %v3238, %v3222
      %v3255 = vadd.f32 %v3239, %v3223
      %v3256 = vadd.f32 %v3240, %v3224
      %v3257 = vadd.f32 %v3241, %v3225
      %v3258 = vadd.f32 %v3242, %v3226
      %v3259 = vadd.f32 %v3243, %v3227
      %v3260 = vadd.f32 %v3244, %v3228
      %v3261 = vadd.f32 %v3245, %v3229
      %v3262 = vadd.f32 %v3246, %v3230
      %v3263 = vadd.f32 %v3247, %v3231
      %v3264 = vadd.f32 %v3248, %v3232
      %v3265 = vadd.f32 %v3249, %v3233
      %v3266 = vmul.f32 %v3250, 0.01
      %v3267 = vmul.f32 %v3251, 0.01
      %v3268 = vmul.f32 %v3252, 0.01
      %v3269 = vmul.f32 %v3253, 0.01
      %v3270 = vmul.f32 %v3254, 0.01
      %v3271 = vmul.f32 %v3255, 0.01
      %v3272 = vmul.f32 %v3256, 0.01
      %v3273 = vmul.f32 %v3257, 0.01
      %v3274 = vmul.f32 %v3258, 0.01
      %v3275 = vmul.f32 %v3259, 0.01
      %v3276 = vmul.f32 %v3260, 0.01
      %v3277 = vmul.f32 %v3261, 0.01
      %v3278 = vmul.f32 %v3262, 0.01
      %v3279 = vmul.f32 %v3263, 0.01
      %v3280 = vmul.f32 %v3264, 0.01
      %v3281 = vmul.f32 %v3265, 0.01
      %3282 = vst.msk [vmem:[%s567] sm:$0xff] %vm588, %v3266
      %3283 = vst.msk [vmem:[%s567 + $0x8] sm:$0xff] %vm588, %v3267
      %3284 = vst.msk [vmem:[%s567 + $0x10] sm:$0xff] %vm588, %v3268
      %3285 = vst.msk [vmem:[%s567 + $0x18] sm:$0xff] %vm588, %v3269
      %3286 = vst.msk [vmem:[%s567 + $0x20] sm:$0xff] %vm588, %v3270
      %3287 = vst.msk [vmem:[%s567 + $0x28] sm:$0xff] %vm588, %v3271
      %3288 = vst.msk [vmem:[%s567 + $0x30] sm:$0xff] %vm588, %v3272
      %3289 = vst.msk [vmem:[%s567 + $0x38] sm:$0xff] %vm588, %v3273
      %3290 = vst.msk [vmem:[%s567 + $0x40] sm:$0xff] %vm588, %v3274
      %3291 = vst.msk [vmem:[%s567 + $0x48] sm:$0xff] %vm588, %v3275
      %3292 = vst.msk [vmem:[%s567 + $0x50] sm:$0xff] %vm588, %v3276
      %3293 = vst.msk [vmem:[%s567 + $0x58] sm:$0xff] %vm588, %v3277
      %3294 = vst.msk [vmem:[%s567 + $0x60] sm:$0xff] %vm588, %v3278
      %3295 = vst.msk [vmem:[%s567 + $0x68] sm:$0xff] %vm588, %v3279
      %3296 = vst.msk [vmem:[%s567 + $0x70] sm:$0xff] %vm588, %v3280
      %3297 = vst.msk [vmem:[%s567 + $0x78] sm:$0xff] %vm588, %v3281
      %s3298 = smul.u32 16, %s27
      %p3299 = scmp.lt.s32.totalorder %s3298, 31
      %s3300 = scalar_select %p3299, %s3298, 31
      %s3301 = smul.addr %s3300, 8
      %s3302 = scalar_lea.vmem %s16, %s3301
      // Predicated region
      $region85: #{my_deform_forward.3} parent=83 // pred_check
        %p3303 = pneg %p396
      $region86: #{my_deform_forward.3} parent=83 // pred_check_branch
        %3305 = sbr.rel (%p3303) target = $region88
      $region87: #{my_deform_forward.3} parent=83 // pred_region
        %s3306 = smul.u32 16, %s27
      $region88: #{my_deform_forward.3} parent=83 // pred_fallthru
        _
    $region84: #{my_deform_forward.3} parent=5 // pred_fallthru
      _
    %p3307 = scmp.le.s32.totalorder 2, %s22
    // Predicated region
    $region89: #{my_deform_forward.3} parent=5 // pred_check
      %p3308 = pneg %p3307
    $region90: #{my_deform_forward.3} parent=5 // pred_check_branch
      %3310 = sbr.rel (%p3308) target = $region92
    $region91: #{my_deform_forward.3} parent=5 // pred_region
      %s3311 = ssub.s32 %s22, 2
      // Predicated region
      $region93: #{my_deform_forward.3} parent=91 // pred_check
        %p3312 = pneg %p402
      $region94: #{my_deform_forward.3} parent=91 // pred_check_branch
        %3314 = sbr.rel (%p3312) target = $region96
      $region95: #{my_deform_forward.3} parent=91 // pred_region
        %s3315 = smul.u32 16, %s28
        %p3316 = scmp.lt.s32.totalorder %s3315, 31
        %s3317 = scalar_select %p3316, %s3315, 31
        %s3318 = smul.addr %s3317, 8
        %s3319 = scalar_lea.vmem %s16, %s3318
      $region96: #{my_deform_forward.3} parent=91 // pred_fallthru
        _
    $region92: #{my_deform_forward.3} parent=5 // pred_fallthru
      _
  $region6: #{my_deform_forward.3} parent=0 // loop_footer
    %s26 = sadd.s32 1, %s22
  $region7: #{my_deform_forward.3} parent=0 // loop_footer_branch
    %21 = sbr.rel target = $region3
  $region8: #{my_deform_forward.3} parent=0 // loop_exit
    _

</llo_original>
